<compile_context>
chip_gen: v7x
topology: tpu7x:2x2x1
jax: 0.10.0
libtpu: 0.0.40
codegen_flags: <defaults>
</compile_context>

<pallas_src>
import numpy as np
import jax
import jax.numpy as jnp
from jax.experimental import pallas as pl
from jax.experimental.pallas import tpu as pltpu


def _round_up(x, mult):
    return ((x + mult - 1) // mult) * mult


# ----------------------------------------------------------------------------
# Kernel 1: retrieval hot path
#   F.normalize(input, -1) @ F.normalize(phrase, -1).T followed by a max over
#   the token axis (== sim.T.max(-1).values in the torch code).
# ----------------------------------------------------------------------------
def _sim_score_kernel(x_ref, pt_ref, score_ref):
    # x_ref:     (TB, k, d)     raw input embeddings for TB batch elements
    # pt_ref:    (d, m_pad)     pre-normalized, transposed phrase table (bf16)
    # score_ref: (1, TB, m_pad) per-phrase max cosine similarity
    tb, k, d = x_ref.shape
    x = x_ref[...].reshape(tb * k, d).astype(jnp.float32)
    # F.normalize(x, dim=-1) semantics: x / max(||x||, 1e-12), via rsqrt (EUP).
    sumsq = jnp.sum(x * x, axis=-1, keepdims=True)
    xn = x * jax.lax.rsqrt(jnp.maximum(sumsq, 1e-24))
    # Single big bf16 MXU matmul for all TB*k rows at once.
    sim = jnp.dot(xn.astype(jnp.bfloat16), pt_ref[...],
                  preferred_element_type=jnp.float32)            # (TB*k, m_pad)
    sim = sim.reshape(tb, k, sim.shape[-1])
    score_ref[0] = jnp.max(sim, axis=1).astype(score_ref.dtype)  # (TB, m_pad)


def similarity_scores(input_embeddings, phrase_embeddings, tb=None):
    N, k, d = input_embeddings.shape
    m, _ = phrase_embeddings.shape

    # Batch TB instances per grid step so each matmul has >= ~256 MXU rows.
    # (With tiny N this collapses to one grid step; for realistic N the
    # "parallel" axis keeps both v7x TensorCores busy.)
    if tb is None:
        tb = max(1, 256 // max(k, 1))
    tb = max(1, min(tb, N))
    n_pad = _round_up(N, tb)
    m_pad = _round_up(m, 128)          # lane-dense score stores

    x = input_embeddings
    if n_pad != N:
        x = jnp.pad(x, ((0, n_pad - N), (0, 0), (0, 0)))

    # Normalize the phrase table ONCE (not per grid step), transpose so the
    # kernel sees a plain (K, N) MXU operand, pad lanes to 128 and cast to
    # bf16 for native MXU throughput (cosine scores tolerate bf16 easily).
    p = phrase_embeddings.astype(jnp.float32)
    p = p * jax.lax.rsqrt(jnp.maximum(jnp.sum(p * p, axis=-1, keepdims=True),
                                      1e-24))
    pt = jnp.pad(p.T, ((0, 0), (0, m_pad - m))).astype(jnp.bfloat16)  # (d, m_pad)

    n_blocks = n_pad // tb
    scores = pl.pallas_call(
        _sim_score_kernel,
        out_shape=jax.ShapeDtypeStruct((n_blocks, tb, m_pad), jnp.float32),
        grid_spec=pltpu.PrefetchScalarGridSpec(
            num_scalar_prefetch=0,
            grid=(n_blocks,),
            in_specs=[
                pl.BlockSpec((tb, k, d), lambda i: (i, 0, 0)),
                # Grid-invariant phrase table: block index constant -> DMA'd
                # once and kept resident across grid steps.
                # TODO(synk): on v7x with very large phrase tables, request
                # single-buffering (pipeline_mode=pl.Buffered(1)) to halve its
                # VMEM footprint.
                pl.BlockSpec((d, m_pad), lambda i: (0, 0)),
            ],
            out_specs=pl.BlockSpec((1, tb, m_pad), lambda i: (i, 0, 0)),
        ),
        compiler_params=pltpu.CompilerParams(
            dimension_semantics=("parallel",)),
    )(x, pt)
    return scores.reshape(n_pad, m_pad)[:N, :m]     # (N, m)


# ----------------------------------------------------------------------------
# Kernel 2: pairwise-rank counts over the flattened graph probabilities.
# For every element i we compute, over all M elements j:
#   all_ge_i = #{ p_j >= p_i },  pos_ge_i = #{ p_j >= p_i, t_j = 1 },
#   neg_eq_i = #{ p_j == p_i, t_j = 0 }.
# These are sufficient statistics for binary AUROC (Mann-Whitney U) and binary
# Average Precision with tie grouping.  The weighted column sums run on the
# MXU: ge @ W_ge + eq @ W_eq with W columns [valid, t*valid, (1-t)*valid],
# producing a lane-dense (tm, 128) f32 output block that doubles as the
# accumulator across the column-chunk ("arbitrary") grid axis.
# ----------------------------------------------------------------------------
def _pair_count_kernel(p_col_ref, p_row_ref, w_ge_ref, w_eq_ref, out_ref):
    j = pl.program_id(1)

    @pl.when(j == 0)
    def _():
        out_ref[...] = jnp.zeros_like(out_ref)

    p_i = p_col_ref[...]                           # (tm, 1)  row-block scores
    p_j = p_row_ref[...]                           # (1, tc)  column-chunk scores
    # Exact float equality is valid here: both views come from the SAME padded
    # f32 array, so tied values are bit-identical.
    ge = (p_j >= p_i).astype(jnp.bfloat16)         # (tm, tc)
    eq = (p_j == p_i).astype(jnp.bfloat16)
    # 0/1 lhs and 0/1 weights are exact in bf16; accumulate in f32 (exact for
    # counts up to 2^24).
    out_ref[...] += (
        jnp.dot(ge, w_ge_ref[...], preferred_element_type=jnp.float32)
        + jnp.dot(eq, w_eq_ref[...], preferred_element_type=jnp.float32))


def pairwise_counts(probs_flat, targets_flat, tm=512, tc=2048):
    """Returns (all_ge, pos_ge, neg_eq), each of shape (M,).

    tm/tc are sweepable tile sizes (tm multiple of 8, tc multiple of 128).
    The two (M, 128) bf16 weight matrices are re-streamed once per row block,
    so total weight HBM traffic ~ 512*M^2/tm bytes: prefer large tm.
    """
    M = probs_flat.shape[0]
    tm = max(8, min(tm, _round_up(M, 8)))          # don't over-pad tiny M
    m_row_pad = _round_up(M, tm)                   # padded row (p_i) axis
    tc = max(128, min(tc, _round_up(M, 128)))      # column chunk (mult of 128)
    m_col_pad = _round_up(M, tc)                   # padded column (p_j) axis

    p = probs_flat.astype(jnp.float32)
    t = targets_flat.astype(jnp.float32)

    p_col = jnp.pad(p, (0, m_row_pad - M)).reshape(m_row_pad, 1)
    p_row = jnp.pad(p, (0, m_col_pad - M)).reshape(1, m_col_pad)
    t_pad = jnp.pad(t, (0, m_col_pad - M))
    valid = (jnp.arange(m_col_pad) < M).astype(jnp.float32)  # sentinel mask

    # Lane-dense (m_col_pad, 128) weight matrices; only 3 columns are nonzero.
    w_ge = jnp.zeros((m_col_pad, 128), jnp.float32)
    w_ge = w_ge.at[:, 0].set(valid)                  # -> all_ge
    w_ge = w_ge.at[:, 1].set(t_pad * valid)          # -> pos_ge
    w_eq = jnp.zeros((m_col_pad, 128), jnp.float32)
    w_eq = w_eq.at[:, 2].set((1.0 - t_pad) * valid)  # -> neg_eq
    w_ge = w_ge.astype(jnp.bfloat16)                 # 0/1 values: exact in bf16
    w_eq = w_eq.astype(jnp.bfloat16)

    grid = (m_row_pad // tm, m_col_pad // tc)
    out = pl.pallas_call(
        _pair_count_kernel,
        out_shape=jax.ShapeDtypeStruct((m_row_pad, 128), jnp.float32),
        grid_spec=pltpu.PrefetchScalarGridSpec(
            num_scalar_prefetch=0,
            grid=grid,
            in_specs=[
                pl.BlockSpec((tm, 1), lambda i, j: (i, 0)),
                pl.BlockSpec((1, tc), lambda i, j: (0, j)),
                pl.BlockSpec((tc, 128), lambda i, j: (j, 0)),
                pl.BlockSpec((tc, 128), lambda i, j: (j, 0)),
            ],
            out_specs=pl.BlockSpec((tm, 128), lambda i, j: (i, 0)),
        ),
        compiler_params=pltpu.CompilerParams(
            dimension_semantics=("parallel", "arbitrary")),
    )(p_col, p_row, w_ge, w_eq)

    all_ge = out[:M, 0]
    pos_ge = out[:M, 1]
    neg_eq = out[:M, 2]
    return all_ge, pos_ge, neg_eq


def graph_metrics(graph_probs, graph_target):
    p = graph_probs.reshape(-1)
    t = graph_target.reshape(-1).astype(jnp.float32)
    all_ge, pos_ge, neg_eq = pairwise_counts(p, t)
    n_pos = jnp.sum(t)
    n_neg = jnp.float32(t.shape[0]) - n_pos
    # neg_lt derived algebraically (saves a third compare + matmul in-kernel):
    neg_ge = all_ge - pos_ge
    neg_lt = n_neg - neg_ge
    # AUROC = P(score_pos > score_neg) with 0.5 credit for ties (Mann-Whitney U)
    auroc = jnp.sum(t * (neg_lt + 0.5 * neg_eq)) / jnp.maximum(n_pos * n_neg, 1.0)
    # Binary AP with ties grouped at the same threshold (all_ge >= 1 always,
    # since every element compares >= to itself).
    ap = jnp.sum(t * pos_ge / all_ge) / jnp.maximum(n_pos, 1.0)
    return auroc, ap


# ----------------------------------------------------------------------------
# Retrieval metric reductions (plain-JAX glue: data-dependent filtering +
# per-group ranking has no clean Pallas equivalent).
# ----------------------------------------------------------------------------
def _group_retrieval_metrics(scores, gts):
    # scores: (m,) max-similarity per phrase; gts: (m,) 0/1 relevance.
    m = scores.shape[0]
    valid = scores > 0.0                           # `val > 0.0` filter from torch code
    s = jnp.where(valid, scores, -jnp.inf)
    order = jnp.argsort(-s)                        # descending; invalid sink to bottom
    rel = jnp.where(valid, gts.astype(jnp.float32), 0.0)
    rel_sorted = rel[order]
    ranks = jnp.arange(1, m + 1, dtype=jnp.float32)
    cum_rel = jnp.cumsum(rel_sorted)
    n_rel = jnp.sum(rel_sorted)
    has_rel = n_rel > 0
    ap = jnp.where(has_rel,
                   jnp.sum((cum_rel / ranks) * rel_sorted) / jnp.maximum(n_rel, 1.0),
                   0.0)
    mrr = jnp.where(has_rel, jnp.max(rel_sorted / ranks), 0.0)
    discount = 1.0 / jnp.log2(ranks + 1.0)
    dcg = jnp.sum(rel_sorted * discount)
    idcg = jnp.sum(jnp.where(ranks <= n_rel, discount, 0.0))
    ndcg = jnp.where(has_rel, dcg / jnp.maximum(idcg, 1e-12), 0.0)
    return ap, mrr, ndcg


# ----------------------------------------------------------------------------
# Graph target construction (host-side, from Python SVO lists — mirrors the
# torch loop exactly).
# ----------------------------------------------------------------------------
def build_graph_target(shape, svos, indices):
    batch_idxs, phrase_emb_idxs, input_emb_idxs = indices
    target = np.zeros(shape, dtype=np.int32)
    emb_idx_mapping = {}
    for b, p_idx, e_idx in zip(batch_idxs, phrase_emb_idxs, input_emb_idxs):
        emb_idx_mapping.setdefault(p_idx, {})[b] = e_idx
    for i, svos_i in enumerate(svos):
        for s, v, o in svos_i:
            target[i,
                   emb_idx_mapping[s][i],
                   emb_idx_mapping[o][i],
                   emb_idx_mapping[v][i]] = 1
    return jnp.asarray(target)


# ----------------------------------------------------------------------------
# Full forward
# ----------------------------------------------------------------------------
def doin_metrics_forward(input_embeddings, phrase_embeddings, graph_probs,
                         positives, svos, indices):
    # TODO(synk): Matcher.get_indices is not defined in the reference snippet;
    # the (batch_idxs, phrase_emb_idxs, input_emb_idxs) tuple is supplied
    # explicitly with a deterministic synthetic mapping.
    graph_target = build_graph_target(graph_probs.shape, svos, indices)
    graph_auroc, graph_ap = graph_metrics(graph_probs, graph_target)

    scores = similarity_scores(input_embeddings, phrase_embeddings)  # (N, m)
    m = phrase_embeddings.shape[0]
    gts = jnp.asarray(
        np.array([[1.0 if j in pos else 0.0 for j in range(m)] for pos in positives],
                 dtype=np.float32))
    aps, mrrs, ndcgs = jax.vmap(_group_retrieval_metrics)(scores, gts)
    # TODO(synk): torchmetrics drops groups that end up empty after the val>0
    # filter; here every batch instance is averaged (empty groups score 0).
    return dict(
        graph_auroc=graph_auroc,
        graph_ap=graph_ap,
        retrieval_map=jnp.mean(aps),
        retrieval_mrr=jnp.mean(mrrs),
        retrieval_dcg=jnp.mean(ndcgs),
    )


if __name__ == "__main__":
    N, k, d, m = 2, 8, 32, 16
    key = jax.random.PRNGKey(0)
    k1, k2, k3 = jax.random.split(key, 3)
    input_embeddings = jax.random.normal(k1, (N, k, d), dtype=jnp.float32)
    phrase_embeddings = jax.random.normal(k2, (m, d), dtype=jnp.float32)
    graph_probs = jax.random.uniform(k3, (N, k, k, k), dtype=jnp.float32)

    # Deterministic synthetic Matcher.get_indices output:
    # in every batch element, input-embedding slot j holds phrase-embedding j.
    batch_idxs = [i for i in range(N) for _ in range(k)]
    phrase_emb_idxs = [j for _ in range(N) for j in range(k)]
    input_emb_idxs = [j for _ in range(N) for j in range(k)]
    indices = (batch_idxs, phrase_emb_idxs, input_emb_idxs)

    positives = [[0, 3, 5, 9], [1, 2, 7, 12]]            # phrase indices per batch
    svos = [[(0, 3, 5), (3, 5, 0)], [(1, 2, 7), (2, 7, 1)]]  # use phrase idx < k

    metrics = doin_metrics_forward(input_embeddings, phrase_embeddings,
                                   graph_probs, positives, svos, indices)
    jax.block_until_ready(metrics)
    print("KERNEL_OK")
</pallas_src>

<mosaic_0001>
module attributes {stable_mosaic.version = 11 : i64} {
  func.func @_pair_count_kernel(%arg0: i32, %arg1: i32, %arg2: memref<512x1xf32, #tpu.memory_space<vmem>>, %arg3: memref<1x1024xf32, #tpu.memory_space<vmem>>, %arg4: memref<1024x128xbf16, #tpu.memory_space<vmem>>, %arg5: memref<1024x128xbf16, #tpu.memory_space<vmem>>, %arg6: memref<512x128xf32, #tpu.memory_space<vmem>>) attributes {dimension_semantics = [#tpu.dimension_semantics<parallel>, #tpu.dimension_semantics<arbitrary>], iteration_bounds = array<i64: 2, 1>, scalar_prefetch = 0 : i64, scratch_operands = 0 : i64, tpu.core_type = #tpu.core_type<tc>, window_params = [{transform_indices = @transform_0, window_bounds = array<i64: 512, 1>}, {transform_indices = @transform_1, window_bounds = array<i64: 1, 1024>}, {transform_indices = @transform_2, window_bounds = array<i64: 1024, 128>}, {transform_indices = @transform_3, window_bounds = array<i64: 1024, 128>}, {transform_indices = @transform_4, window_bounds = array<i64: 512, 128>}]} {
    %c0_i32 = arith.constant 0 : i32
    %0 = arith.cmpi eq, %arg1, %c0_i32 : i32
    %1 = arith.extui %0 : i1 to i32
    %c0_i32_0 = arith.constant 0 : i32
    %2 = arith.cmpi ne, %1, %c0_i32_0 : i32
    scf.if %2 {
      %cst_13 = arith.constant 0.000000e+00 : f32
      %25 = vector.broadcast %cst_13 : f32 to vector<512x128xf32>
      %c0_14 = arith.constant 0 : index
      %c0_15 = arith.constant 0 : index
      %26 = vector.load %arg6[%c0_14, %c0_15] : memref<512x128xf32, #tpu.memory_space<vmem>>, vector<512x128xf32>
      tpu.vector_store %arg6[%c0_14, %c0_15], %25 {strides = array<i32>} : memref<512x128xf32, #tpu.memory_space<vmem>>, vector<512x128xf32>,
    } else {
    }
    %c0 = arith.constant 0 : index
    %c0_1 = arith.constant 0 : index
    %3 = vector.load %arg2[%c0, %c0_1] : memref<512x1xf32, #tpu.memory_space<vmem>>, vector<512x1xf32>
    %c0_2 = arith.constant 0 : index
    %c0_3 = arith.constant 0 : index
    %4 = vector.load %arg3[%c0_2, %c0_3] : memref<1x1024xf32, #tpu.memory_space<vmem>>, vector<1x1024xf32>
    %5 = vector.broadcast %4 : vector<1x1024xf32> to vector<512x1024xf32>
    %6 = vector.broadcast %3 : vector<512x1xf32> to vector<512x1024xf32>
    %7 = arith.cmpf oge, %5, %6 : vector<512x1024xf32>
    %8 = arith.extui %7 : vector<512x1024xi1> to vector<512x1024xi32>
    %9 = arith.sitofp %8 : vector<512x1024xi32> to vector<512x1024xf32>
    %10 = arith.truncf %9 : vector<512x1024xf32> to vector<512x1024xbf16>
    %11 = vector.broadcast %4 : vector<1x1024xf32> to vector<512x1024xf32>
    %12 = vector.broadcast %3 : vector<512x1xf32> to vector<512x1024xf32>
    %13 = arith.cmpf oeq, %11, %12 : vector<512x1024xf32>
    %14 = arith.extui %13 : vector<512x1024xi1> to vector<512x1024xi32>
    %15 = arith.sitofp %14 : vector<512x1024xi32> to vector<512x1024xf32>
    %16 = arith.truncf %15 : vector<512x1024xf32> to vector<512x1024xbf16>
    %c0_4 = arith.constant 0 : index
    %c0_5 = arith.constant 0 : index
    %17 = vector.load %arg6[%c0_4, %c0_5] : memref<512x128xf32, #tpu.memory_space<vmem>>, vector<512x128xf32>
    %c0_6 = arith.constant 0 : index
    %c0_7 = arith.constant 0 : index
    %18 = vector.load %arg4[%c0_6, %c0_7] : memref<1024x128xbf16, #tpu.memory_space<vmem>>, vector<1024x128xbf16>
    %cst = arith.constant dense<0.000000e+00> : vector<512x128xf32>
    %19 = tpu.matmul %10, %18, %cst {dimension_numbers = #tpu.dot_dimension_numbers<[1], [0], [0], [1], [0, 0, 1, 1], [], []>} : vector<512x1024xbf16>, vector<1024x128xbf16>, vector<512x128xf32> -> vector<512x128xf32>
    %c0_8 = arith.constant 0 : index
    %c0_9 = arith.constant 0 : index
    %20 = vector.load %arg5[%c0_8, %c0_9] : memref<1024x128xbf16, #tpu.memory_space<vmem>>, vector<1024x128xbf16>
    %cst_10 = arith.constant dense<0.000000e+00> : vector<512x128xf32>
    %21 = tpu.matmul %16, %20, %cst_10 {dimension_numbers = #tpu.dot_dimension_numbers<[1], [0], [0], [1], [0, 0, 1, 1], [], []>} : vector<512x1024xbf16>, vector<1024x128xbf16>, vector<512x128xf32> -> vector<512x128xf32>
    %22 = arith.addf %19, %21 : vector<512x128xf32>
    %23 = arith.addf %17, %22 : vector<512x128xf32>
    %c0_11 = arith.constant 0 : index
    %c0_12 = arith.constant 0 : index
    %24 = vector.load %arg6[%c0_11, %c0_12] : memref<512x128xf32, #tpu.memory_space<vmem>>, vector<512x128xf32>
    tpu.vector_store %arg6[%c0_11, %c0_12], %23 {strides = array<i32>} : memref<512x128xf32, #tpu.memory_space<vmem>>, vector<512x128xf32>,
    return
  }
  func.func @transform_0(%arg0: i32, %arg1: i32) -> (i32, i32) {
    %c0_i32 = arith.constant 0 : i32
    %c0_i32_0 = arith.constant 0 : i32
    return %arg0, %c0_i32 : i32, i32
  }
  func.func @transform_1(%arg0: i32, %arg1: i32) -> (i32, i32) {
    %c0_i32 = arith.constant 0 : i32
    %c0_i32_0 = arith.constant 0 : i32
    return %c0_i32, %arg1 : i32, i32
  }
  func.func @transform_2(%arg0: i32, %arg1: i32) -> (i32, i32) {
    %c0_i32 = arith.constant 0 : i32
    %c0_i32_0 = arith.constant 0 : i32
    return %arg1, %c0_i32 : i32, i32
  }
  func.func @transform_3(%arg0: i32, %arg1: i32) -> (i32, i32) {
    %c0_i32 = arith.constant 0 : i32
    %c0_i32_0 = arith.constant 0 : i32
    return %arg1, %c0_i32 : i32, i32
  }
  func.func @transform_4(%arg0: i32, %arg1: i32) -> (i32, i32) {
    %c0_i32 = arith.constant 0 : i32
    %c0_i32_0 = arith.constant 0 : i32
    return %arg0, %c0_i32 : i32, i32
  }
}

</mosaic_0001>

<llo_original>
// kernel: tpu_custom_call.1
$region0: #{tpu_custom_call.1}
  #allocation0 [shape = 'u32[]', space=smem, size = 0x4, offset = 0x4, fixed_abs, tag = 'smem constant byte address 0x4 - core index']
  #allocation1 [shape = 'u32[144,128]{1,0:T(1,128)}', space=vmem, size = 0x12000, scoped, tag = 'internal scratch']
  %s0 = inlined_call_operand.vmem [shape: f32[1024,1], index: 0, kind: input, shape index: {}]
  %s1 = inlined_call_operand.vmem [shape: f32[1,1024], index: 1, kind: input, shape index: {}]
  %s2 = inlined_call_operand.vmem [shape: bf16[1024,128], index: 2, kind: input, shape index: {}]
  %s3 = inlined_call_operand.vmem [shape: bf16[1024,128], index: 3, kind: input, shape index: {}]
  %s4 = inlined_call_operand.hbm [shape: f32[1024,128], index: 4, kind: output, shape index: {}]
  %s5 = sld [smem:[#allocation0]]
  $region53: #{tpu_custom_call.1} parent=0
    _
  %s7 = ssub.s32 1, %s5
  %s8 = scalar_select 0, %s7, %s5
  $region1: #{tpu_custom_call.1} parent=0
    #allocation2 [shape = 'u8[524288]{0}', space=vmem, size = 0x80000, scoped, tag = 'output window, operand 0']
    #allocation3 [shape = 's32[2]{0}', space=sflag, size = 0x8, scoped, tag = 'scoped memory for tpu_custom_call.1']
    %9 = vsyncpa [#allocation3], 0
    %s10 = scalar_lea.sflag [#allocation3], 1
    %11 = vsyncpa %s10, 0
    loop: start=0, step=1, limit=4
    $region2: #{tpu_custom_call.1} parent=1 // loop_pre_header
      _
    $region3: #{tpu_custom_call.1} parent=1 // loop_header
      %s13 = sphi 0, %s17
      %p14 = scmp.ge.s32.totalorder %s13, 4
      %s20 = sphi 0, %s32
      %s21 = sphi 0, %s28
      %s22 = sphi 0, %s20
      %s23 = sphi 0, %s21
      %s24 = sphi 0, %s22
      %s25 = sphi 0, %s23
      %s35 = sphi 0, %s37
      %s38 = sphi 0, %s35
      %s39 = sphi 0, %s38
      %s55 = sphi 0, %s39
      %s61 = sphi 0, %s63
      %s64 = sphi 0, %s61
      %s65 = sphi 0, %s64
      %s81 = sphi 0, %s65
      %s87 = sphi 0, %s89
      %s90 = sphi 0, %s87
      %s91 = sphi 0, %s90
      %s107 = sphi 0, %s91
      %s113 = sphi 0, %s115
      %s116 = sphi 0, %s113
      %s117 = sphi 0, %s116
      %s133 = sphi 0, %s117
      %s139 = sphi 0, %s141
      %s142 = sphi 0, %s139
      %s143 = sphi 0, %s142
      %s159 = sphi 0, %s143
    $region4: #{tpu_custom_call.1} parent=1 // loop_header_branch
      %16 = sbr.rel (%p14) target = $region8
    $region5: #{tpu_custom_call.1} parent=1 // loop_body
      %s18 = ssub.s32 %s13, 1
      %s19 = ssub.s32 %s13, 2
      %s26 = sadd.s32 1, %s21
      %p27 = scmp.ge.s32.totalorder %s26, 1
      %s28 = scalar_select %p27, 0, %s26
      %s29 = sadd.s32 1, %s20
      %s30 = scalar_select %p27, %s29, %s20
      %p31 = scmp.ge.s32.totalorder %s30, 2
      %s32 = scalar_select %p31, 0, %s30
      %s33 = ssub.s32 %s20, %s32
      %p34 = scmp.eq.s32.totalorder %s33, 0
      %s36 = sadd.s32 %s35, 1
      %s37 = scalar_select %p34, %s35, %s36
      %p40 = pneg %p34
      %p41 = scmp.eq.s32.totalorder %s13, 1
      %p42 = por %p40, %p41
      %p43 = scmp.ne.s32.totalorder %s35, %s38
      %p44 = scmp.eq.s32.totalorder %s13, 0
      %p45 = por %p43, %p44
      %p46 = scmp.ne.s32.totalorder %s35, %s38
      %p47 = scmp.eq.s32.totalorder %s18, 1
      %p48 = por %p46, %p47
      %p49 = scmp.ne.s32.totalorder %s38, %s39
      %p50 = scmp.eq.s32.totalorder %s18, 0
      %p51 = por %p49, %p50
      %p52 = scmp.ne.s32.totalorder %s38, %s39
      %p53 = scmp.eq.s32.totalorder %s19, 1
      %p54 = por %p52, %p53
      %p56 = scmp.ne.s32.totalorder %s39, %s55
      %p57 = scmp.eq.s32.totalorder %s19, 0
      %p58 = por %p56, %p57
      %s59 = ssub.s32 %s21, %s28
      %p60 = scmp.eq.s32.totalorder %s59, 0
      %s62 = sadd.s32 %s61, 1
      %s63 = scalar_select %p60, %s61, %s62
      %p66 = pneg %p60
      %p67 = scmp.eq.s32.totalorder %s13, 1
      %p68 = por %p66, %p67
      %p69 = scmp.ne.s32.totalorder %s61, %s64
      %p70 = scmp.eq.s32.totalorder %s13, 0
      %p71 = por %p69, %p70
      %p72 = scmp.ne.s32.totalorder %s61, %s64
      %p73 = scmp.eq.s32.totalorder %s18, 1
      %p74 = por %p72, %p73
      %p75 = scmp.ne.s32.totalorder %s64, %s65
      %p76 = scmp.eq.s32.totalorder %s18, 0
      %p77 = por %p75, %p76
      %p78 = scmp.ne.s32.totalorder %s64, %s65
      %p79 = scmp.eq.s32.totalorder %s19, 1
      %p80 = por %p78, %p79
      %p82 = scmp.ne.s32.totalorder %s65, %s81
      %p83 = scmp.eq.s32.totalorder %s19, 0
      %p84 = por %p82, %p83
      %s85 = ssub.s32 %s21, %s28
      %p86 = scmp.eq.s32.totalorder %s85, 0
      %s88 = sadd.s32 %s87, 1
      %s89 = scalar_select %p86, %s87, %s88
      %p92 = pneg %p86
      %p93 = scmp.eq.s32.totalorder %s13, 1
      %p94 = por %p92, %p93
      %p95 = scmp.ne.s32.totalorder %s87, %s90
      %p96 = scmp.eq.s32.totalorder %s13, 0
      %p97 = por %p95, %p96
      %p98 = scmp.ne.s32.totalorder %s87, %s90
      %p99 = scmp.eq.s32.totalorder %s18, 1
      %p100 = por %p98, %p99
      %p101 = scmp.ne.s32.totalorder %s90, %s91
      %p102 = scmp.eq.s32.totalorder %s18, 0
      %p103 = por %p101, %p102
      %p104 = scmp.ne.s32.totalorder %s90, %s91
      %p105 = scmp.eq.s32.totalorder %s19, 1
      %p106 = por %p104, %p105
      %p108 = scmp.ne.s32.totalorder %s91, %s107
      %p109 = scmp.eq.s32.totalorder %s19, 0
      %p110 = por %p108, %p109
      %s111 = ssub.s32 %s21, %s28
      %p112 = scmp.eq.s32.totalorder %s111, 0
      %s114 = sadd.s32 %s113, 1
      %s115 = scalar_select %p112, %s113, %s114
      %p118 = pneg %p112
      %p119 = scmp.eq.s32.totalorder %s13, 1
      %p120 = por %p118, %p119
      %p121 = scmp.ne.s32.totalorder %s113, %s116
      %p122 = scmp.eq.s32.totalorder %s13, 0
      %p123 = por %p121, %p122
      %p124 = scmp.ne.s32.totalorder %s113, %s116
      %p125 = scmp.eq.s32.totalorder %s18, 1
      %p126 = por %p124, %p125
      %p127 = scmp.ne.s32.totalorder %s116, %s117
      %p128 = scmp.eq.s32.totalorder %s18, 0
      %p129 = por %p127, %p128
      %p130 = scmp.ne.s32.totalorder %s116, %s117
      %p131 = scmp.eq.s32.totalorder %s19, 1
      %p132 = por %p130, %p131
      %p134 = scmp.ne.s32.totalorder %s117, %s133
      %p135 = scmp.eq.s32.totalorder %s19, 0
      %p136 = por %p134, %p135
      %s137 = ssub.s32 %s20, %s32
      %p138 = scmp.eq.s32.totalorder %s137, 0
      %s140 = sadd.s32 %s139, 1
      %s141 = scalar_select %p138, %s139, %s140
      %p144 = pneg %p138
      %p145 = scmp.eq.s32.totalorder %s13, 1
      %p146 = por %p144, %p145
      %p147 = scmp.ne.s32.totalorder %s139, %s142
      %p148 = scmp.eq.s32.totalorder %s13, 0
      %p149 = por %p147, %p148
      %p150 = scmp.ne.s32.totalorder %s139, %s142
      %p151 = scmp.eq.s32.totalorder %s18, 1
      %p152 = por %p150, %p151
      %p153 = scmp.ne.s32.totalorder %s142, %s143
      %p154 = scmp.eq.s32.totalorder %s18, 0
      %p155 = por %p153, %p154
      %p156 = scmp.ne.s32.totalorder %s142, %s143
      %p157 = scmp.eq.s32.totalorder %s19, 1
      %p158 = por %p156, %p157
      %p160 = scmp.ne.s32.totalorder %s143, %s159
      %p161 = scmp.eq.s32.totalorder %s19, 0
      %p162 = por %p160, %p161
      %p163 = scmp.le.s32.totalorder 1, %s13
      %p164 = scmp.lt.s32.totalorder %s13, 3
      %p165 = pnand %p163, %p164
      %p166 = pneg %p165
      // Predicated region
      $region9: #{tpu_custom_call.1} parent=5 // pred_check
        _
      $region10: #{tpu_custom_call.1} parent=5 // pred_check_branch
        %168 = sbr.rel (%p165) target = $region12
      $region11: #{tpu_custom_call.1} parent=5 // pred_region
        %s169 = ssub.s32 %s13, 1
        // Predicated region
        $region13: #{tpu_custom_call.1} parent=11 // pred_check
          %p170 = pneg %p77
        $region14: #{tpu_custom_call.1} parent=11 // pred_check_branch
          %172 = sbr.rel (%p170) target = $region16
        $region15: #{tpu_custom_call.1} parent=11 // pred_region
          %s173 = smul.u32 8, %s23
          %p174 = scmp.lt.s32.totalorder %s173, 7
          %s175 = scalar_select %p174, %s173, 7
          %s176 = scalar_lea.vmem %s1, %s175
          %s177 = smul.u32 8, %s23
        $region16: #{tpu_custom_call.1} parent=11 // pred_fallthru
          _
        // Predicated region
        $region17: #{tpu_custom_call.1} parent=11 // pred_check
          %p178 = pneg %p103
        $region18: #{tpu_custom_call.1} parent=11 // pred_check_branch
          %180 = sbr.rel (%p178) target = $region20
        $region19: #{tpu_custom_call.1} parent=11 // pred_region
          %s181 = smul.u32 128, %s23
          %p182 = scmp.lt.s32.totalorder %s181, 127
          %s183 = scalar_select %p182, %s181, 127
          %s184 = smul.addr %s183, 4
          %s185 = scalar_lea.vmem %s2, %s184
          %s186 = smul.u32 128, %s23
        $region20: #{tpu_custom_call.1} parent=11 // pred_fallthru
          _
        // Predicated region
        $region21: #{tpu_custom_call.1} parent=11 // pred_check
          %p187 = pneg %p129
        $region22: #{tpu_custom_call.1} parent=11 // pred_check_branch
          %189 = sbr.rel (%p187) target = $region24
        $region23: #{tpu_custom_call.1} parent=11 // pred_region
          %s190 = smul.u32 128, %s23
          %p191 = scmp.lt.s32.totalorder %s190, 127
          %s192 = scalar_select %p191, %s190, 127
          %s193 = smul.addr %s192, 4
          %s194 = scalar_lea.vmem %s3, %s193
          %s195 = smul.u32 128, %s23
        $region24: #{tpu_custom_call.1} parent=11 // pred_fallthru
          _
      $region12: #{tpu_custom_call.1} parent=5 // pred_fallthru
        _
      %p196 = scmp.lt.s32.totalorder %s13, 2
      // Predicated region
      $region25: #{tpu_custom_call.1} parent=5 // pred_check
        %p197 = pneg %p196
      $region26: #{tpu_custom_call.1} parent=5 // pred_check_branch
        %199 = sbr.rel (%p197) target = $region28
      $region27: #{tpu_custom_call.1} parent=5 // pred_region
        // Predicated region
        $region29: #{tpu_custom_call.1} parent=27 // pred_check
          %p200 = pneg %p45
        $region30: #{tpu_custom_call.1} parent=27 // pred_check_branch
          %202 = sbr.rel (%p200) target = $region32
        $region31: #{tpu_custom_call.1} parent=27 // pred_region
          %s203 = smul.u32 64, %s20
          %p204 = scmp.lt.s32.totalorder %s203, 127
          %s205 = scalar_select %p204, %s203, 127
          %s206 = smul.addr %s205, 8
          %s207 = scalar_lea.vmem %s0, %s206
          %s208 = smul.u32 64, %s20
        $region32: #{tpu_custom_call.1} parent=27 // pred_fallthru
          _
      $region28: #{tpu_custom_call.1} parent=5 // pred_fallthru
        _
      %p209 = scmp.le.s32.totalorder 1, %s13
      %p210 = scmp.lt.s32.totalorder %s13, 3
      %p211 = pnand %p209, %p210
      %p212 = pneg %p211
      // Predicated region
      $region33: #{tpu_custom_call.1} parent=5 // pred_check
        _
      $region34: #{tpu_custom_call.1} parent=5 // pred_check_branch
        %214 = sbr.rel (%p211) target = $region36
      $region35: #{tpu_custom_call.1} parent=5 // pred_region
        %s215 = ssub.s32 %s13, 1
        %s216 = smul.u32 64, %s22
        %p217 = scmp.lt.s32.totalorder %s216, 127
        %s218 = scalar_select %p217, %s216, 127
        %s219 = smul.addr %s218, 8
        %s220 = scalar_lea.vmem %s0, %s219
        %p221 = pneg %p51
        %p222 = pneg %p48
        %s223 = smul.u32 8, %s23
        %p224 = scmp.lt.s32.totalorder %s223, 7
        %s225 = scalar_select %p224, %s223, 7
        %s226 = scalar_lea.vmem %s1, %s225
        %p227 = pneg %p77
        %p228 = pneg %p74
        %s229 = smul.u32 128, %s23
        %p230 = scmp.lt.s32.totalorder %s229, 127
        %s231 = scalar_select %p230, %s229, 127
        %s232 = smul.addr %s231, 4
        %s233 = scalar_lea.vmem %s2, %s232
        %p234 = pneg %p103
        %p235 = pneg %p100
        %s236 = smul.u32 128, %s23
        %p237 = scmp.lt.s32.totalorder %s236, 127
        %s238 = scalar_select %p237, %s236, 127
        %s239 = smul.addr %s238, 4
        %s240 = scalar_lea.vmem %s3, %s239
        %p241 = pneg %p129
        %p242 = pneg %p126
        %p243 = pneg %p155
        %p244 = pneg %p152
        %s245 = sand.u32 %s142, 1
        %s246 = scalar_lea.sflag [#allocation3], %s245
        %s247 = sand.u32 %s142, 1
        %s248 = smul.addr %s247, 512
        %s249 = scalar_lea.vmem [#allocation2], %s248
        %s250 = smul.u32 64, %s22
        %p251 = scmp.lt.s32.totalorder %s250, 127
        %s252 = scalar_select %p251, %s250, 127
        %s253 = smul.addr %s252, 8
        %s254 = scalar_lea.vmem %s0, %s253
        %s255 = smul.u32 64, %s22
        %s256 = smul.u32 8, %s23
        %p257 = scmp.lt.s32.totalorder %s256, 7
        %s258 = scalar_select %p257, %s256, 7
        %s259 = scalar_lea.vmem %s1, %s258
        %s260 = smul.u32 8, %s23
        %s261 = smul.u32 128, %s23
        %p262 = scmp.lt.s32.totalorder %s261, 127
        %s263 = scalar_select %p262, %s261, 127
        %s264 = smul.addr %s263, 4
        %s265 = scalar_lea.vmem %s2, %s264
        %s266 = smul.u32 128, %s23
        %s267 = smul.u32 128, %s23
        %p268 = scmp.lt.s32.totalorder %s267, 127
        %s269 = scalar_select %p268, %s267, 127
        %s270 = smul.addr %s269, 4
        %s271 = scalar_lea.vmem %s3, %s270
        %s272 = smul.u32 128, %s23
        %s273 = smul.u32 64, %s22
        %p275 = scmp.eq.s32.totalorder %s23, 0
        // Predicated region
        $region37: #{tpu_custom_call.1} parent=35 // pred_check
          %p276 = pneg %p275
        $region38: #{tpu_custom_call.1} parent=35 // pred_check_branch
          %278 = sbr.rel (%p276) target = $region40
        $region39: #{tpu_custom_call.1} parent=35 // pred_region
          %279 = vst [vmem:[%s249] sm:$0xff] 0.0
          %280 = vst [vmem:[%s249 + $0x8] sm:$0xff] 0.0
          %281 = vst [vmem:[%s249 + $0x10] sm:$0xff] 0.0
          %282 = vst [vmem:[%s249 + $0x18] sm:$0xff] 0.0
          %283 = vst [vmem:[%s249 + $0x20] sm:$0xff] 0.0
          %284 = vst [vmem:[%s249 + $0x28] sm:$0xff] 0.0
          %285 = vst [vmem:[%s249 + $0x30] sm:$0xff] 0.0
          %286 = vst [vmem:[%s249 + $0x38] sm:$0xff] 0.0
          %287 = vst [vmem:[%s249 + $0x40] sm:$0xff] 0.0
          %288 = vst [vmem:[%s249 + $0x48] sm:$0xff] 0.0
          %289 = vst [vmem:[%s249 + $0x50] sm:$0xff] 0.0
          %290 = vst [vmem:[%s249 + $0x58] sm:$0xff] 0.0
          %291 = vst [vmem:[%s249 + $0x60] sm:$0xff] 0.0
          %292 = vst [vmem:[%s249 + $0x68] sm:$0xff] 0.0
          %293 = vst [vmem:[%s249 + $0x70] sm:$0xff] 0.0
          %294 = vst [vmem:[%s249 + $0x78] sm:$0xff] 0.0
          %295 = vst [vmem:[%s249 + $0x80] sm:$0xff] 0.0
          %296 = vst [vmem:[%s249 + $0x88] sm:$0xff] 0.0
          %297 = vst [vmem:[%s249 + $0x90] sm:$0xff] 0.0
          %298 = vst [vmem:[%s249 + $0x98] sm:$0xff] 0.0
          %299 = vst [vmem:[%s249 + $0xa0] sm:$0xff] 0.0
          %300 = vst [vmem:[%s249 + $0xa8] sm:$0xff] 0.0
          %301 = vst [vmem:[%s249 + $0xb0] sm:$0xff] 0.0
          %302 = vst [vmem:[%s249 + $0xb8] sm:$0xff] 0.0
          %303 = vst [vmem:[%s249 + $0xc0] sm:$0xff] 0.0
          %304 = vst [vmem:[%s249 + $0xc8] sm:$0xff] 0.0
          %305 = vst [vmem:[%s249 + $0xd0] sm:$0xff] 0.0
          %306 = vst [vmem:[%s249 + $0xd8] sm:$0xff] 0.0
          %307 = vst [vmem:[%s249 + $0xe0] sm:$0xff] 0.0
          %308 = vst [vmem:[%s249 + $0xe8] sm:$0xff] 0.0
          %309 = vst [vmem:[%s249 + $0xf0] sm:$0xff] 0.0
          %310 = vst [vmem:[%s249 + $0xf8] sm:$0xff] 0.0
          %311 = vst [vmem:[%s249 + $0x100] sm:$0xff] 0.0
          %312 = vst [vmem:[%s249 + $0x108] sm:$0xff] 0.0
          %313 = vst [vmem:[%s249 + $0x110] sm:$0xff] 0.0
          %314 = vst [vmem:[%s249 + $0x118] sm:$0xff] 0.0
          %315 = vst [vmem:[%s249 + $0x120] sm:$0xff] 0.0
          %316 = vst [vmem:[%s249 + $0x128] sm:$0xff] 0.0
          %317 = vst [vmem:[%s249 + $0x130] sm:$0xff] 0.0
          %318 = vst [vmem:[%s249 + $0x138] sm:$0xff] 0.0
          %319 = vst [vmem:[%s249 + $0x140] sm:$0xff] 0.0
          %320 = vst [vmem:[%s249 + $0x148] sm:$0xff] 0.0
          %321 = vst [vmem:[%s249 + $0x150] sm:$0xff] 0.0
          %322 = vst [vmem:[%s249 + $0x158] sm:$0xff] 0.0
          %323 = vst [vmem:[%s249 + $0x160] sm:$0xff] 0.0
          %324 = vst [vmem:[%s249 + $0x168] sm:$0xff] 0.0
          %325 = vst [vmem:[%s249 + $0x170] sm:$0xff] 0.0
          %326 = vst [vmem:[%s249 + $0x178] sm:$0xff] 0.0
          %327 = vst [vmem:[%s249 + $0x180] sm:$0xff] 0.0
          %328 = vst [vmem:[%s249 + $0x188] sm:$0xff] 0.0
          %329 = vst [vmem:[%s249 + $0x190] sm:$0xff] 0.0
          %330 = vst [vmem:[%s249 + $0x198] sm:$0xff] 0.0
          %331 = vst [vmem:[%s249 + $0x1a0] sm:$0xff] 0.0
          %332 = vst [vmem:[%s249 + $0x1a8] sm:$0xff] 0.0
          %333 = vst [vmem:[%s249 + $0x1b0] sm:$0xff] 0.0
          %334 = vst [vmem:[%s249 + $0x1b8] sm:$0xff] 0.0
          %335 = vst [vmem:[%s249 + $0x1c0] sm:$0xff] 0.0
          %336 = vst [vmem:[%s249 + $0x1c8] sm:$0xff] 0.0
          %337 = vst [vmem:[%s249 + $0x1d0] sm:$0xff] 0.0
          %338 = vst [vmem:[%s249 + $0x1d8] sm:$0xff] 0.0
          %339 = vst [vmem:[%s249 + $0x1e0] sm:$0xff] 0.0
          %340 = vst [vmem:[%s249 + $0x1e8] sm:$0xff] 0.0
          %341 = vst [vmem:[%s249 + $0x1f0] sm:$0xff] 0.0
          %342 = vst [vmem:[%s249 + $0x1f8] sm:$0xff] 0.0
        $region40: #{tpu_custom_call.1} parent=35 // pred_fallthru
          _
        %v343 = vld [vmem:[%s254] sm:$0xff]
        %v344 = vld [vmem:[%s254 + $0x8] sm:$0xff]
        %v345 = vld [vmem:[%s254 + $0x10] sm:$0xff]
        %v346 = vld [vmem:[%s254 + $0x18] sm:$0xff]
        %v347 = vld [vmem:[%s254 + $0x20] sm:$0xff]
        %v348 = vld [vmem:[%s254 + $0x28] sm:$0xff]
        %v349 = vld [vmem:[%s254 + $0x30] sm:$0xff]
        %v350 = vld [vmem:[%s254 + $0x38] sm:$0xff]
        %v351 = vld [vmem:[%s254 + $0x40] sm:$0xff]
        %v352 = vld [vmem:[%s254 + $0x48] sm:$0xff]
        %v353 = vld [vmem:[%s254 + $0x50] sm:$0xff]
        %v354 = vld [vmem:[%s254 + $0x58] sm:$0xff]
        %v355 = vld [vmem:[%s254 + $0x60] sm:$0xff]
        %v356 = vld [vmem:[%s254 + $0x68] sm:$0xff]
        %v357 = vld [vmem:[%s254 + $0x70] sm:$0xff]
        %v358 = vld [vmem:[%s254 + $0x78] sm:$0xff]
        %v359 = vld [vmem:[%s254 + $0x80] sm:$0xff]
        %v360 = vld [vmem:[%s254 + $0x88] sm:$0xff]
        %v361 = vld [vmem:[%s254 + $0x90] sm:$0xff]
        %v362 = vld [vmem:[%s254 + $0x98] sm:$0xff]
        %v363 = vld [vmem:[%s254 + $0xa0] sm:$0xff]
        %v364 = vld [vmem:[%s254 + $0xa8] sm:$0xff]
        %v365 = vld [vmem:[%s254 + $0xb0] sm:$0xff]
        %v366 = vld [vmem:[%s254 + $0xb8] sm:$0xff]
        %v367 = vld [vmem:[%s254 + $0xc0] sm:$0xff]
        %v368 = vld [vmem:[%s254 + $0xc8] sm:$0xff]
        %v369 = vld [vmem:[%s254 + $0xd0] sm:$0xff]
        %v370 = vld [vmem:[%s254 + $0xd8] sm:$0xff]
        %v371 = vld [vmem:[%s254 + $0xe0] sm:$0xff]
        %v372 = vld [vmem:[%s254 + $0xe8] sm:$0xff]
        %v373 = vld [vmem:[%s254 + $0xf0] sm:$0xff]
        %v374 = vld [vmem:[%s254 + $0xf8] sm:$0xff]
        %v375 = vld [vmem:[%s254 + $0x100] sm:$0xff]
        %v376 = vld [vmem:[%s254 + $0x108] sm:$0xff]
        %v377 = vld [vmem:[%s254 + $0x110] sm:$0xff]
        %v378 = vld [vmem:[%s254 + $0x118] sm:$0xff]
        %v379 = vld [vmem:[%s254 + $0x120] sm:$0xff]
        %v380 = vld [vmem:[%s254 + $0x128] sm:$0xff]
        %v381 = vld [vmem:[%s254 + $0x130] sm:$0xff]
        %v382 = vld [vmem:[%s254 + $0x138] sm:$0xff]
        %v383 = vld [vmem:[%s254 + $0x140] sm:$0xff]
        %v384 = vld [vmem:[%s254 + $0x148] sm:$0xff]
        %v385 = vld [vmem:[%s254 + $0x150] sm:$0xff]
        %v386 = vld [vmem:[%s254 + $0x158] sm:$0xff]
        %v387 = vld [vmem:[%s254 + $0x160] sm:$0xff]
        %v388 = vld [vmem:[%s254 + $0x168] sm:$0xff]
        %v389 = vld [vmem:[%s254 + $0x170] sm:$0xff]
        %v390 = vld [vmem:[%s254 + $0x178] sm:$0xff]
        %v391 = vld [vmem:[%s254 + $0x180] sm:$0xff]
        %v392 = vld [vmem:[%s254 + $0x188] sm:$0xff]
        %v393 = vld [vmem:[%s254 + $0x190] sm:$0xff]
        %v394 = vld [vmem:[%s254 + $0x198] sm:$0xff]
        %v395 = vld [vmem:[%s254 + $0x1a0] sm:$0xff]
        %v396 = vld [vmem:[%s254 + $0x1a8] sm:$0xff]
        %v397 = vld [vmem:[%s254 + $0x1b0] sm:$0xff]
        %v398 = vld [vmem:[%s254 + $0x1b8] sm:$0xff]
        %v399 = vld [vmem:[%s254 + $0x1c0] sm:$0xff]
        %v400 = vld [vmem:[%s254 + $0x1c8] sm:$0xff]
        %v401 = vld [vmem:[%s254 + $0x1d0] sm:$0xff]
        %v402 = vld [vmem:[%s254 + $0x1d8] sm:$0xff]
        %v403 = vld [vmem:[%s254 + $0x1e0] sm:$0xff]
        %v404 = vld [vmem:[%s254 + $0x1e8] sm:$0xff]
        %v405 = vld [vmem:[%s254 + $0x1f0] sm:$0xff]
        %v406 = vld [vmem:[%s254 + $0x1f8] sm:$0xff]
        %v407 = vld [vmem:[%s259] sm:$0xff]
        %v409 = vlaneseq
        %v410 = vshrl.u32 %v409, 7
        %v411 = vsub.s32 0, %v410
        %v412 = vrot.slane %v407, %v411
        %v413 = vlaneseq
        %v414 = vshrl.u32 %v413, 7
        %v415 = vsub.s32 1, %v414
        %v416 = vrot.slane %v407, %v415
        %v417 = vlaneseq
        %v418 = vshrl.u32 %v417, 7
        %v419 = vsub.s32 2, %v418
        %v420 = vrot.slane %v407, %v419
        %v421 = vlaneseq
        %v422 = vshrl.u32 %v421, 7
        %v423 = vsub.s32 3, %v422
        %v424 = vrot.slane %v407, %v423
        %v425 = vlaneseq
        %v426 = vshrl.u32 %v425, 7
        %v427 = vsub.s32 4, %v426
        %v428 = vrot.slane %v407, %v427
        %v429 = vlaneseq
        %v430 = vshrl.u32 %v429, 7
        %v431 = vsub.s32 5, %v430
        %v432 = vrot.slane %v407, %v431
        %v433 = vlaneseq
        %v434 = vshrl.u32 %v433, 7
        %v435 = vsub.s32 6, %v434
        %v436 = vrot.slane %v407, %v435
        %v437 = vlaneseq
        %v438 = vshrl.u32 %v437, 7
        %v439 = vsub.s32 7, %v438
        %v440 = vrot.slane %v407, %v439
        %450 = vset.pattern.permute.xlu0 0
        %451 = vperm.xlu0 %450, %v343
        %v452 = vpop.permute.xlu0 %451
        %455 = vset.pattern.permute.xlu0 0
        %456 = vperm.xlu0 %455, %v344
        %v457 = vpop.permute.xlu0 %456
        %460 = vset.pattern.permute.xlu0 0
        %461 = vperm.xlu0 %460, %v345
        %v462 = vpop.permute.xlu0 %461
        %465 = vset.pattern.permute.xlu0 0
        %466 = vperm.xlu0 %465, %v346
        %v467 = vpop.permute.xlu0 %466
        %470 = vset.pattern.permute.xlu0 0
        %471 = vperm.xlu0 %470, %v347
        %v472 = vpop.permute.xlu0 %471
        %475 = vset.pattern.permute.xlu0 0
        %476 = vperm.xlu0 %475, %v348
        %v477 = vpop.permute.xlu0 %476
        %480 = vset.pattern.permute.xlu0 0
        %481 = vperm.xlu0 %480, %v349
        %v482 = vpop.permute.xlu0 %481
        %485 = vset.pattern.permute.xlu0 0
        %486 = vperm.xlu0 %485, %v350
        %v487 = vpop.permute.xlu0 %486
        %490 = vset.pattern.permute.xlu0 0
        %491 = vperm.xlu0 %490, %v351
        %v492 = vpop.permute.xlu0 %491
        %495 = vset.pattern.permute.xlu0 0
        %496 = vperm.xlu0 %495, %v352
        %v497 = vpop.permute.xlu0 %496
        %500 = vset.pattern.permute.xlu0 0
        %501 = vperm.xlu0 %500, %v353
        %v502 = vpop.permute.xlu0 %501
        %505 = vset.pattern.permute.xlu0 0
        %506 = vperm.xlu0 %505, %v354
        %v507 = vpop.permute.xlu0 %506
        %510 = vset.pattern.permute.xlu0 0
        %511 = vperm.xlu0 %510, %v355
        %v512 = vpop.permute.xlu0 %511
        %515 = vset.pattern.permute.xlu0 0
        %516 = vperm.xlu0 %515, %v356
        %v517 = vpop.permute.xlu0 %516
        %520 = vset.pattern.permute.xlu0 0
        %521 = vperm.xlu0 %520, %v357
        %v522 = vpop.permute.xlu0 %521
        %525 = vset.pattern.permute.xlu0 0
        %526 = vperm.xlu0 %525, %v358
        %v527 = vpop.permute.xlu0 %526
        %530 = vset.pattern.permute.xlu0 0
        %531 = vperm.xlu0 %530, %v359
        %v532 = vpop.permute.xlu0 %531
        %535 = vset.pattern.permute.xlu0 0
        %536 = vperm.xlu0 %535, %v360
        %v537 = vpop.permute.xlu0 %536
        %540 = vset.pattern.permute.xlu0 0
        %541 = vperm.xlu0 %540, %v361
        %v542 = vpop.permute.xlu0 %541
        %545 = vset.pattern.permute.xlu0 0
        %546 = vperm.xlu0 %545, %v362
        %v547 = vpop.permute.xlu0 %546
        %550 = vset.pattern.permute.xlu0 0
        %551 = vperm.xlu0 %550, %v363
        %v552 = vpop.permute.xlu0 %551
        %555 = vset.pattern.permute.xlu0 0
        %556 = vperm.xlu0 %555, %v364
        %v557 = vpop.permute.xlu0 %556
        %560 = vset.pattern.permute.xlu0 0
        %561 = vperm.xlu0 %560, %v365
        %v562 = vpop.permute.xlu0 %561
        %565 = vset.pattern.permute.xlu0 0
        %566 = vperm.xlu0 %565, %v366
        %v567 = vpop.permute.xlu0 %566
        %570 = vset.pattern.permute.xlu0 0
        %571 = vperm.xlu0 %570, %v367
        %v572 = vpop.permute.xlu0 %571
        %575 = vset.pattern.permute.xlu0 0
        %576 = vperm.xlu0 %575, %v368
        %v577 = vpop.permute.xlu0 %576
        %580 = vset.pattern.permute.xlu0 0
        %581 = vperm.xlu0 %580, %v369
        %v582 = vpop.permute.xlu0 %581
        %585 = vset.pattern.permute.xlu0 0
        %586 = vperm.xlu0 %585, %v370
        %v587 = vpop.permute.xlu0 %586
        %590 = vset.pattern.permute.xlu0 0
        %591 = vperm.xlu0 %590, %v371
        %v592 = vpop.permute.xlu0 %591
        %595 = vset.pattern.permute.xlu0 0
        %596 = vperm.xlu0 %595, %v372
        %v597 = vpop.permute.xlu0 %596
        %600 = vset.pattern.permute.xlu0 0
        %601 = vperm.xlu0 %600, %v373
        %v602 = vpop.permute.xlu0 %601
        %605 = vset.pattern.permute.xlu0 0
        %606 = vperm.xlu0 %605, %v374
        %v607 = vpop.permute.xlu0 %606
        %610 = vset.pattern.permute.xlu0 0
        %611 = vperm.xlu0 %610, %v375
        %v612 = vpop.permute.xlu0 %611
        %615 = vset.pattern.permute.xlu0 0
        %616 = vperm.xlu0 %615, %v376
        %v617 = vpop.permute.xlu0 %616
        %620 = vset.pattern.permute.xlu0 0
        %621 = vperm.xlu0 %620, %v377
        %v622 = vpop.permute.xlu0 %621
        %625 = vset.pattern.permute.xlu0 0
        %626 = vperm.xlu0 %625, %v378
        %v627 = vpop.permute.xlu0 %626
        %630 = vset.pattern.permute.xlu0 0
        %631 = vperm.xlu0 %630, %v379
        %v632 = vpop.permute.xlu0 %631
        %635 = vset.pattern.permute.xlu0 0
        %636 = vperm.xlu0 %635, %v380
        %v637 = vpop.permute.xlu0 %636
        %640 = vset.pattern.permute.xlu0 0
        %641 = vperm.xlu0 %640, %v381
        %v642 = vpop.permute.xlu0 %641
        %645 = vset.pattern.permute.xlu0 0
        %646 = vperm.xlu0 %645, %v382
        %v647 = vpop.permute.xlu0 %646
        %650 = vset.pattern.permute.xlu0 0
        %651 = vperm.xlu0 %650, %v383
        %v652 = vpop.permute.xlu0 %651
        %655 = vset.pattern.permute.xlu0 0
        %656 = vperm.xlu0 %655, %v384
        %v657 = vpop.permute.xlu0 %656
        %660 = vset.pattern.permute.xlu0 0
        %661 = vperm.xlu0 %660, %v385
        %v662 = vpop.permute.xlu0 %661
        %665 = vset.pattern.permute.xlu0 0
        %666 = vperm.xlu0 %665, %v386
        %v667 = vpop.permute.xlu0 %666
        %670 = vset.pattern.permute.xlu0 0
        %671 = vperm.xlu0 %670, %v387
        %v672 = vpop.permute.xlu0 %671
        %675 = vset.pattern.permute.xlu0 0
        %676 = vperm.xlu0 %675, %v388
        %v677 = vpop.permute.xlu0 %676
        %680 = vset.pattern.permute.xlu0 0
        %681 = vperm.xlu0 %680, %v389
        %v682 = vpop.permute.xlu0 %681
        %685 = vset.pattern.permute.xlu0 0
        %686 = vperm.xlu0 %685, %v390
        %v687 = vpop.permute.xlu0 %686
        %690 = vset.pattern.permute.xlu0 0
        %691 = vperm.xlu0 %690, %v391
        %v692 = vpop.permute.xlu0 %691
        %695 = vset.pattern.permute.xlu0 0
        %696 = vperm.xlu0 %695, %v392
        %v697 = vpop.permute.xlu0 %696
        %700 = vset.pattern.permute.xlu0 0
        %701 = vperm.xlu0 %700, %v393
        %v702 = vpop.permute.xlu0 %701
        %705 = vset.pattern.permute.xlu0 0
        %706 = vperm.xlu0 %705, %v394
        %v707 = vpop.permute.xlu0 %706
        %710 = vset.pattern.permute.xlu0 0
        %711 = vperm.xlu0 %710, %v395
        %v712 = vpop.permute.xlu0 %711
        %715 = vset.pattern.permute.xlu0 0
        %716 = vperm.xlu0 %715, %v396
        %v717 = vpop.permute.xlu0 %716
        %720 = vset.pattern.permute.xlu0 0
        %721 = vperm.xlu0 %720, %v397
        %v722 = vpop.permute.xlu0 %721
        %725 = vset.pattern.permute.xlu0 0
        %726 = vperm.xlu0 %725, %v398
        %v727 = vpop.permute.xlu0 %726
        %730 = vset.pattern.permute.xlu0 0
        %731 = vperm.xlu0 %730, %v399
        %v732 = vpop.permute.xlu0 %731
        %735 = vset.pattern.permute.xlu0 0
        %736 = vperm.xlu0 %735, %v400
        %v737 = vpop.permute.xlu0 %736
        %740 = vset.pattern.permute.xlu0 0
        %741 = vperm.xlu0 %740, %v401
        %v742 = vpop.permute.xlu0 %741
        %745 = vset.pattern.permute.xlu0 0
        %746 = vperm.xlu0 %745, %v402
        %v747 = vpop.permute.xlu0 %746
        %750 = vset.pattern.permute.xlu0 0
        %751 = vperm.xlu0 %750, %v403
        %v752 = vpop.permute.xlu0 %751
        %755 = vset.pattern.permute.xlu0 0
        %756 = vperm.xlu0 %755, %v404
        %v757 = vpop.permute.xlu0 %756
        %760 = vset.pattern.permute.xlu0 0
        %761 = vperm.xlu0 %760, %v405
        %v762 = vpop.permute.xlu0 %761
        %765 = vset.pattern.permute.xlu0 0
        %766 = vperm.xlu0 %765, %v406
        %v767 = vpop.permute.xlu0 %766
        %vm769 = vcmp.ge.f32.partialorder %v412, %v452
        %vm770 = vcmp.ge.f32.partialorder %v416, %v452
        %vm771 = vcmp.ge.f32.partialorder %v420, %v452
        %vm772 = vcmp.ge.f32.partialorder %v424, %v452
        %vm773 = vcmp.ge.f32.partialorder %v428, %v452
        %vm774 = vcmp.ge.f32.partialorder %v432, %v452
        %vm775 = vcmp.ge.f32.partialorder %v436, %v452
        %vm776 = vcmp.ge.f32.partialorder %v440, %v452
        %vm777 = vcmp.ge.f32.partialorder %v412, %v457
        %vm778 = vcmp.ge.f32.partialorder %v416, %v457
        %vm779 = vcmp.ge.f32.partialorder %v420, %v457
        %vm780 = vcmp.ge.f32.partialorder %v424, %v457
        %vm781 = vcmp.ge.f32.partialorder %v428, %v457
        %vm782 = vcmp.ge.f32.partialorder %v432, %v457
        %vm783 = vcmp.ge.f32.partialorder %v436, %v457
        %vm784 = vcmp.ge.f32.partialorder %v440, %v457
        %vm785 = vcmp.ge.f32.partialorder %v412, %v462
        %vm786 = vcmp.ge.f32.partialorder %v416, %v462
        %vm787 = vcmp.ge.f32.partialorder %v420, %v462
        %vm788 = vcmp.ge.f32.partialorder %v424, %v462
        %vm789 = vcmp.ge.f32.partialorder %v428, %v462
        %vm790 = vcmp.ge.f32.partialorder %v432, %v462
        %vm791 = vcmp.ge.f32.partialorder %v436, %v462
        %vm792 = vcmp.ge.f32.partialorder %v440, %v462
        %vm793 = vcmp.ge.f32.partialorder %v412, %v467
        %vm794 = vcmp.ge.f32.partialorder %v416, %v467
        %vm795 = vcmp.ge.f32.partialorder %v420, %v467
        %vm796 = vcmp.ge.f32.partialorder %v424, %v467
        %vm797 = vcmp.ge.f32.partialorder %v428, %v467
        %vm798 = vcmp.ge.f32.partialorder %v432, %v467
        %vm799 = vcmp.ge.f32.partialorder %v436, %v467
        %vm800 = vcmp.ge.f32.partialorder %v440, %v467
        %vm801 = vcmp.ge.f32.partialorder %v412, %v472
        %vm802 = vcmp.ge.f32.partialorder %v416, %v472
        %vm803 = vcmp.ge.f32.partialorder %v420, %v472
        %vm804 = vcmp.ge.f32.partialorder %v424, %v472
        %vm805 = vcmp.ge.f32.partialorder %v428, %v472
        %vm806 = vcmp.ge.f32.partialorder %v432, %v472
        %vm807 = vcmp.ge.f32.partialorder %v436, %v472
        %vm808 = vcmp.ge.f32.partialorder %v440, %v472
        %vm809 = vcmp.ge.f32.partialorder %v412, %v477
        %vm810 = vcmp.ge.f32.partialorder %v416, %v477
        %vm811 = vcmp.ge.f32.partialorder %v420, %v477
        %vm812 = vcmp.ge.f32.partialorder %v424, %v477
        %vm813 = vcmp.ge.f32.partialorder %v428, %v477
        %vm814 = vcmp.ge.f32.partialorder %v432, %v477
        %vm815 = vcmp.ge.f32.partialorder %v436, %v477
        %vm816 = vcmp.ge.f32.partialorder %v440, %v477
        %vm817 = vcmp.ge.f32.partialorder %v412, %v482
        %vm818 = vcmp.ge.f32.partialorder %v416, %v482
        %vm819 = vcmp.ge.f32.partialorder %v420, %v482
        %vm820 = vcmp.ge.f32.partialorder %v424, %v482
        %vm821 = vcmp.ge.f32.partialorder %v428, %v482
        %vm822 = vcmp.ge.f32.partialorder %v432, %v482
        %vm823 = vcmp.ge.f32.partialorder %v436, %v482
        %vm824 = vcmp.ge.f32.partialorder %v440, %v482
        %vm825 = vcmp.ge.f32.partialorder %v412, %v487
        %vm826 = vcmp.ge.f32.partialorder %v416, %v487
        %vm827 = vcmp.ge.f32.partialorder %v420, %v487
        %vm828 = vcmp.ge.f32.partialorder %v424, %v487
        %vm829 = vcmp.ge.f32.partialorder %v428, %v487
        %vm830 = vcmp.ge.f32.partialorder %v432, %v487
        %vm831 = vcmp.ge.f32.partialorder %v436, %v487
        %vm832 = vcmp.ge.f32.partialorder %v440, %v487
        %vm833 = vcmp.ge.f32.partialorder %v412, %v492
        %vm834 = vcmp.ge.f32.partialorder %v416, %v492
        %vm835 = vcmp.ge.f32.partialorder %v420, %v492
        %vm836 = vcmp.ge.f32.partialorder %v424, %v492
        %vm837 = vcmp.ge.f32.partialorder %v428, %v492
        %vm838 = vcmp.ge.f32.partialorder %v432, %v492
        %vm839 = vcmp.ge.f32.partialorder %v436, %v492
        %vm840 = vcmp.ge.f32.partialorder %v440, %v492
        %vm841 = vcmp.ge.f32.partialorder %v412, %v497
        %vm842 = vcmp.ge.f32.partialorder %v416, %v497
        %vm843 = vcmp.ge.f32.partialorder %v420, %v497
        %vm844 = vcmp.ge.f32.partialorder %v424, %v497
        %vm845 = vcmp.ge.f32.partialorder %v428, %v497
        %vm846 = vcmp.ge.f32.partialorder %v432, %v497
        %vm847 = vcmp.ge.f32.partialorder %v436, %v497
        %vm848 = vcmp.ge.f32.partialorder %v440, %v497
        %vm849 = vcmp.ge.f32.partialorder %v412, %v502
        %vm850 = vcmp.ge.f32.partialorder %v416, %v502
        %vm851 = vcmp.ge.f32.partialorder %v420, %v502
        %vm852 = vcmp.ge.f32.partialorder %v424, %v502
        %vm853 = vcmp.ge.f32.partialorder %v428, %v502
        %vm854 = vcmp.ge.f32.partialorder %v432, %v502
        %vm855 = vcmp.ge.f32.partialorder %v436, %v502
        %vm856 = vcmp.ge.f32.partialorder %v440, %v502
        %vm857 = vcmp.ge.f32.partialorder %v412, %v507
        %vm858 = vcmp.ge.f32.partialorder %v416, %v507
        %vm859 = vcmp.ge.f32.partialorder %v420, %v507
        %vm860 = vcmp.ge.f32.partialorder %v424, %v507
        %vm861 = vcmp.ge.f32.partialorder %v428, %v507
        %vm862 = vcmp.ge.f32.partialorder %v432, %v507
        %vm863 = vcmp.ge.f32.partialorder %v436, %v507
        %vm864 = vcmp.ge.f32.partialorder %v440, %v507
        %vm865 = vcmp.ge.f32.partialorder %v412, %v512
        %vm866 = vcmp.ge.f32.partialorder %v416, %v512
        %vm867 = vcmp.ge.f32.partialorder %v420, %v512
        %vm868 = vcmp.ge.f32.partialorder %v424, %v512
        %vm869 = vcmp.ge.f32.partialorder %v428, %v512
        %vm870 = vcmp.ge.f32.partialorder %v432, %v512
        %vm871 = vcmp.ge.f32.partialorder %v436, %v512
        %vm872 = vcmp.ge.f32.partialorder %v440, %v512
        %vm873 = vcmp.ge.f32.partialorder %v412, %v517
        %vm874 = vcmp.ge.f32.partialorder %v416, %v517
        %vm875 = vcmp.ge.f32.partialorder %v420, %v517
        %vm876 = vcmp.ge.f32.partialorder %v424, %v517
        %vm877 = vcmp.ge.f32.partialorder %v428, %v517
        %vm878 = vcmp.ge.f32.partialorder %v432, %v517
        %vm879 = vcmp.ge.f32.partialorder %v436, %v517
        %vm880 = vcmp.ge.f32.partialorder %v440, %v517
        %vm881 = vcmp.ge.f32.partialorder %v412, %v522
        %vm882 = vcmp.ge.f32.partialorder %v416, %v522
        %vm883 = vcmp.ge.f32.partialorder %v420, %v522
        %vm884 = vcmp.ge.f32.partialorder %v424, %v522
        %vm885 = vcmp.ge.f32.partialorder %v428, %v522
        %vm886 = vcmp.ge.f32.partialorder %v432, %v522
        %vm887 = vcmp.ge.f32.partialorder %v436, %v522
        %vm888 = vcmp.ge.f32.partialorder %v440, %v522
        %vm889 = vcmp.ge.f32.partialorder %v412, %v527
        %vm890 = vcmp.ge.f32.partialorder %v416, %v527
        %vm891 = vcmp.ge.f32.partialorder %v420, %v527
        %vm892 = vcmp.ge.f32.partialorder %v424, %v527
        %vm893 = vcmp.ge.f32.partialorder %v428, %v527
        %vm894 = vcmp.ge.f32.partialorder %v432, %v527
        %vm895 = vcmp.ge.f32.partialorder %v436, %v527
        %vm896 = vcmp.ge.f32.partialorder %v440, %v527
        %vm897 = vcmp.ge.f32.partialorder %v412, %v532
        %vm898 = vcmp.ge.f32.partialorder %v416, %v532
        %vm899 = vcmp.ge.f32.partialorder %v420, %v532
        %vm900 = vcmp.ge.f32.partialorder %v424, %v532
        %vm901 = vcmp.ge.f32.partialorder %v428, %v532
        %vm902 = vcmp.ge.f32.partialorder %v432, %v532
        %vm903 = vcmp.ge.f32.partialorder %v436, %v532
        %vm904 = vcmp.ge.f32.partialorder %v440, %v532
        %vm905 = vcmp.ge.f32.partialorder %v412, %v537
        %vm906 = vcmp.ge.f32.partialorder %v416, %v537
        %vm907 = vcmp.ge.f32.partialorder %v420, %v537
        %vm908 = vcmp.ge.f32.partialorder %v424, %v537
        %vm909 = vcmp.ge.f32.partialorder %v428, %v537
        %vm910 = vcmp.ge.f32.partialorder %v432, %v537
        %vm911 = vcmp.ge.f32.partialorder %v436, %v537
        %vm912 = vcmp.ge.f32.partialorder %v440, %v537
        %vm913 = vcmp.ge.f32.partialorder %v412, %v542
        %vm914 = vcmp.ge.f32.partialorder %v416, %v542
        %vm915 = vcmp.ge.f32.partialorder %v420, %v542
        %vm916 = vcmp.ge.f32.partialorder %v424, %v542
        %vm917 = vcmp.ge.f32.partialorder %v428, %v542
        %vm918 = vcmp.ge.f32.partialorder %v432, %v542
        %vm919 = vcmp.ge.f32.partialorder %v436, %v542
        %vm920 = vcmp.ge.f32.partialorder %v440, %v542
        %vm921 = vcmp.ge.f32.partialorder %v412, %v547
        %vm922 = vcmp.ge.f32.partialorder %v416, %v547
        %vm923 = vcmp.ge.f32.partialorder %v420, %v547
        %vm924 = vcmp.ge.f32.partialorder %v424, %v547
        %vm925 = vcmp.ge.f32.partialorder %v428, %v547
        %vm926 = vcmp.ge.f32.partialorder %v432, %v547
        %vm927 = vcmp.ge.f32.partialorder %v436, %v547
        %vm928 = vcmp.ge.f32.partialorder %v440, %v547
        %vm929 = vcmp.ge.f32.partialorder %v412, %v552
        %vm930 = vcmp.ge.f32.partialorder %v416, %v552
        %vm931 = vcmp.ge.f32.partialorder %v420, %v552
        %vm932 = vcmp.ge.f32.partialorder %v424, %v552
        %vm933 = vcmp.ge.f32.partialorder %v428, %v552
        %vm934 = vcmp.ge.f32.partialorder %v432, %v552
        %vm935 = vcmp.ge.f32.partialorder %v436, %v552
        %vm936 = vcmp.ge.f32.partialorder %v440, %v552
        %vm937 = vcmp.ge.f32.partialorder %v412, %v557
        %vm938 = vcmp.ge.f32.partialorder %v416, %v557
        %vm939 = vcmp.ge.f32.partialorder %v420, %v557
        %vm940 = vcmp.ge.f32.partialorder %v424, %v557
        %vm941 = vcmp.ge.f32.partialorder %v428, %v557
        %vm942 = vcmp.ge.f32.partialorder %v432, %v557
        %vm943 = vcmp.ge.f32.partialorder %v436, %v557
        %vm944 = vcmp.ge.f32.partialorder %v440, %v557
        %vm945 = vcmp.ge.f32.partialorder %v412, %v562
        %vm946 = vcmp.ge.f32.partialorder %v416, %v562
        %vm947 = vcmp.ge.f32.partialorder %v420, %v562
        %vm948 = vcmp.ge.f32.partialorder %v424, %v562
        %vm949 = vcmp.ge.f32.partialorder %v428, %v562
        %vm950 = vcmp.ge.f32.partialorder %v432, %v562
        %vm951 = vcmp.ge.f32.partialorder %v436, %v562
        %vm952 = vcmp.ge.f32.partialorder %v440, %v562
        %vm953 = vcmp.ge.f32.partialorder %v412, %v567
        %vm954 = vcmp.ge.f32.partialorder %v416, %v567
        %vm955 = vcmp.ge.f32.partialorder %v420, %v567
        %vm956 = vcmp.ge.f32.partialorder %v424, %v567
        %vm957 = vcmp.ge.f32.partialorder %v428, %v567
        %vm958 = vcmp.ge.f32.partialorder %v432, %v567
        %vm959 = vcmp.ge.f32.partialorder %v436, %v567
        %vm960 = vcmp.ge.f32.partialorder %v440, %v567
        %vm961 = vcmp.ge.f32.partialorder %v412, %v572
        %vm962 = vcmp.ge.f32.partialorder %v416, %v572
        %vm963 = vcmp.ge.f32.partialorder %v420, %v572
        %vm964 = vcmp.ge.f32.partialorder %v424, %v572
        %vm965 = vcmp.ge.f32.partialorder %v428, %v572
        %vm966 = vcmp.ge.f32.partialorder %v432, %v572
        %vm967 = vcmp.ge.f32.partialorder %v436, %v572
        %vm968 = vcmp.ge.f32.partialorder %v440, %v572
        %vm969 = vcmp.ge.f32.partialorder %v412, %v577
        %vm970 = vcmp.ge.f32.partialorder %v416, %v577
        %vm971 = vcmp.ge.f32.partialorder %v420, %v577
        %vm972 = vcmp.ge.f32.partialorder %v424, %v577
        %vm973 = vcmp.ge.f32.partialorder %v428, %v577
        %vm974 = vcmp.ge.f32.partialorder %v432, %v577
        %vm975 = vcmp.ge.f32.partialorder %v436, %v577
        %vm976 = vcmp.ge.f32.partialorder %v440, %v577
        %vm977 = vcmp.ge.f32.partialorder %v412, %v582
        %vm978 = vcmp.ge.f32.partialorder %v416, %v582
        %vm979 = vcmp.ge.f32.partialorder %v420, %v582
        %vm980 = vcmp.ge.f32.partialorder %v424, %v582
        %vm981 = vcmp.ge.f32.partialorder %v428, %v582
        %vm982 = vcmp.ge.f32.partialorder %v432, %v582
        %vm983 = vcmp.ge.f32.partialorder %v436, %v582
        %vm984 = vcmp.ge.f32.partialorder %v440, %v582
        %vm985 = vcmp.ge.f32.partialorder %v412, %v587
        %vm986 = vcmp.ge.f32.partialorder %v416, %v587
        %vm987 = vcmp.ge.f32.partialorder %v420, %v587
        %vm988 = vcmp.ge.f32.partialorder %v424, %v587
        %vm989 = vcmp.ge.f32.partialorder %v428, %v587
        %vm990 = vcmp.ge.f32.partialorder %v432, %v587
        %vm991 = vcmp.ge.f32.partialorder %v436, %v587
        %vm992 = vcmp.ge.f32.partialorder %v440, %v587
        %vm993 = vcmp.ge.f32.partialorder %v412, %v592
        %vm994 = vcmp.ge.f32.partialorder %v416, %v592
        %vm995 = vcmp.ge.f32.partialorder %v420, %v592
        %vm996 = vcmp.ge.f32.partialorder %v424, %v592
        %vm997 = vcmp.ge.f32.partialorder %v428, %v592
        %vm998 = vcmp.ge.f32.partialorder %v432, %v592
        %vm999 = vcmp.ge.f32.partialorder %v436, %v592
        %vm1000 = vcmp.ge.f32.partialorder %v440, %v592
        %vm1001 = vcmp.ge.f32.partialorder %v412, %v597
        %vm1002 = vcmp.ge.f32.partialorder %v416, %v597
        %vm1003 = vcmp.ge.f32.partialorder %v420, %v597
        %vm1004 = vcmp.ge.f32.partialorder %v424, %v597
        %vm1005 = vcmp.ge.f32.partialorder %v428, %v597
        %vm1006 = vcmp.ge.f32.partialorder %v432, %v597
        %vm1007 = vcmp.ge.f32.partialorder %v436, %v597
        %vm1008 = vcmp.ge.f32.partialorder %v440, %v597
        %vm1009 = vcmp.ge.f32.partialorder %v412, %v602
        %vm1010 = vcmp.ge.f32.partialorder %v416, %v602
        %vm1011 = vcmp.ge.f32.partialorder %v420, %v602
        %vm1012 = vcmp.ge.f32.partialorder %v424, %v602
        %vm1013 = vcmp.ge.f32.partialorder %v428, %v602
        %vm1014 = vcmp.ge.f32.partialorder %v432, %v602
        %vm1015 = vcmp.ge.f32.partialorder %v436, %v602
        %vm1016 = vcmp.ge.f32.partialorder %v440, %v602
        %vm1017 = vcmp.ge.f32.partialorder %v412, %v607
        %vm1018 = vcmp.ge.f32.partialorder %v416, %v607
        %vm1019 = vcmp.ge.f32.partialorder %v420, %v607
        %vm1020 = vcmp.ge.f32.partialorder %v424, %v607
        %vm1021 = vcmp.ge.f32.partialorder %v428, %v607
        %vm1022 = vcmp.ge.f32.partialorder %v432, %v607
        %vm1023 = vcmp.ge.f32.partialorder %v436, %v607
        %vm1024 = vcmp.ge.f32.partialorder %v440, %v607
        %vm1025 = vcmp.ge.f32.partialorder %v412, %v612
        %vm1026 = vcmp.ge.f32.partialorder %v416, %v612
        %vm1027 = vcmp.ge.f32.partialorder %v420, %v612
        %vm1028 = vcmp.ge.f32.partialorder %v424, %v612
        %vm1029 = vcmp.ge.f32.partialorder %v428, %v612
        %vm1030 = vcmp.ge.f32.partialorder %v432, %v612
        %vm1031 = vcmp.ge.f32.partialorder %v436, %v612
        %vm1032 = vcmp.ge.f32.partialorder %v440, %v612
        %vm1033 = vcmp.ge.f32.partialorder %v412, %v617
        %vm1034 = vcmp.ge.f32.partialorder %v416, %v617
        %vm1035 = vcmp.ge.f32.partialorder %v420, %v617
        %vm1036 = vcmp.ge.f32.partialorder %v424, %v617
        %vm1037 = vcmp.ge.f32.partialorder %v428, %v617
        %vm1038 = vcmp.ge.f32.partialorder %v432, %v617
        %vm1039 = vcmp.ge.f32.partialorder %v436, %v617
        %vm1040 = vcmp.ge.f32.partialorder %v440, %v617
        %vm1041 = vcmp.ge.f32.partialorder %v412, %v622
        %vm1042 = vcmp.ge.f32.partialorder %v416, %v622
        %vm1043 = vcmp.ge.f32.partialorder %v420, %v622
        %vm1044 = vcmp.ge.f32.partialorder %v424, %v622
        %vm1045 = vcmp.ge.f32.partialorder %v428, %v622
        %vm1046 = vcmp.ge.f32.partialorder %v432, %v622
        %vm1047 = vcmp.ge.f32.partialorder %v436, %v622
        %vm1048 = vcmp.ge.f32.partialorder %v440, %v622
        %vm1049 = vcmp.ge.f32.partialorder %v412, %v627
        %vm1050 = vcmp.ge.f32.partialorder %v416, %v627
        %vm1051 = vcmp.ge.f32.partialorder %v420, %v627
        %vm1052 = vcmp.ge.f32.partialorder %v424, %v627
        %vm1053 = vcmp.ge.f32.partialorder %v428, %v627
        %vm1054 = vcmp.ge.f32.partialorder %v432, %v627
        %vm1055 = vcmp.ge.f32.partialorder %v436, %v627
        %vm1056 = vcmp.ge.f32.partialorder %v440, %v627
        %vm1057 = vcmp.ge.f32.partialorder %v412, %v632
        %vm1058 = vcmp.ge.f32.partialorder %v416, %v632
        %vm1059 = vcmp.ge.f32.partialorder %v420, %v632
        %vm1060 = vcmp.ge.f32.partialorder %v424, %v632
        %vm1061 = vcmp.ge.f32.partialorder %v428, %v632
        %vm1062 = vcmp.ge.f32.partialorder %v432, %v632
        %vm1063 = vcmp.ge.f32.partialorder %v436, %v632
        %vm1064 = vcmp.ge.f32.partialorder %v440, %v632
        %vm1065 = vcmp.ge.f32.partialorder %v412, %v637
        %vm1066 = vcmp.ge.f32.partialorder %v416, %v637
        %vm1067 = vcmp.ge.f32.partialorder %v420, %v637
        %vm1068 = vcmp.ge.f32.partialorder %v424, %v637
        %vm1069 = vcmp.ge.f32.partialorder %v428, %v637
        %vm1070 = vcmp.ge.f32.partialorder %v432, %v637
        %vm1071 = vcmp.ge.f32.partialorder %v436, %v637
        %vm1072 = vcmp.ge.f32.partialorder %v440, %v637
        %vm1073 = vcmp.ge.f32.partialorder %v412, %v642
        %vm1074 = vcmp.ge.f32.partialorder %v416, %v642
        %vm1075 = vcmp.ge.f32.partialorder %v420, %v642
        %vm1076 = vcmp.ge.f32.partialorder %v424, %v642
        %vm1077 = vcmp.ge.f32.partialorder %v428, %v642
        %vm1078 = vcmp.ge.f32.partialorder %v432, %v642
        %vm1079 = vcmp.ge.f32.partialorder %v436, %v642
        %vm1080 = vcmp.ge.f32.partialorder %v440, %v642
        %vm1081 = vcmp.ge.f32.partialorder %v412, %v647
        %vm1082 = vcmp.ge.f32.partialorder %v416, %v647
        %vm1083 = vcmp.ge.f32.partialorder %v420, %v647
        %vm1084 = vcmp.ge.f32.partialorder %v424, %v647
        %vm1085 = vcmp.ge.f32.partialorder %v428, %v647
        %vm1086 = vcmp.ge.f32.partialorder %v432, %v647
        %vm1087 = vcmp.ge.f32.partialorder %v436, %v647
        %vm1088 = vcmp.ge.f32.partialorder %v440, %v647
        %vm1089 = vcmp.ge.f32.partialorder %v412, %v652
        %vm1090 = vcmp.ge.f32.partialorder %v416, %v652
        %vm1091 = vcmp.ge.f32.partialorder %v420, %v652
        %vm1092 = vcmp.ge.f32.partialorder %v424, %v652
        %vm1093 = vcmp.ge.f32.partialorder %v428, %v652
        %vm1094 = vcmp.ge.f32.partialorder %v432, %v652
        %vm1095 = vcmp.ge.f32.partialorder %v436, %v652
        %vm1096 = vcmp.ge.f32.partialorder %v440, %v652
        %vm1097 = vcmp.ge.f32.partialorder %v412, %v657
        %vm1098 = vcmp.ge.f32.partialorder %v416, %v657
        %vm1099 = vcmp.ge.f32.partialorder %v420, %v657
        %vm1100 = vcmp.ge.f32.partialorder %v424, %v657
        %vm1101 = vcmp.ge.f32.partialorder %v428, %v657
        %vm1102 = vcmp.ge.f32.partialorder %v432, %v657
        %vm1103 = vcmp.ge.f32.partialorder %v436, %v657
        %vm1104 = vcmp.ge.f32.partialorder %v440, %v657
        %vm1105 = vcmp.ge.f32.partialorder %v412, %v662
        %vm1106 = vcmp.ge.f32.partialorder %v416, %v662
        %vm1107 = vcmp.ge.f32.partialorder %v420, %v662
        %vm1108 = vcmp.ge.f32.partialorder %v424, %v662
        %vm1109 = vcmp.ge.f32.partialorder %v428, %v662
        %vm1110 = vcmp.ge.f32.partialorder %v432, %v662
        %vm1111 = vcmp.ge.f32.partialorder %v436, %v662
        %vm1112 = vcmp.ge.f32.partialorder %v440, %v662
        %vm1113 = vcmp.ge.f32.partialorder %v412, %v667
        %vm1114 = vcmp.ge.f32.partialorder %v416, %v667
        %vm1115 = vcmp.ge.f32.partialorder %v420, %v667
        %vm1116 = vcmp.ge.f32.partialorder %v424, %v667
        %vm1117 = vcmp.ge.f32.partialorder %v428, %v667
        %vm1118 = vcmp.ge.f32.partialorder %v432, %v667
        %vm1119 = vcmp.ge.f32.partialorder %v436, %v667
        %vm1120 = vcmp.ge.f32.partialorder %v440, %v667
        %vm1121 = vcmp.ge.f32.partialorder %v412, %v672
        %vm1122 = vcmp.ge.f32.partialorder %v416, %v672
        %vm1123 = vcmp.ge.f32.partialorder %v420, %v672
        %vm1124 = vcmp.ge.f32.partialorder %v424, %v672
        %vm1125 = vcmp.ge.f32.partialorder %v428, %v672
        %vm1126 = vcmp.ge.f32.partialorder %v432, %v672
        %vm1127 = vcmp.ge.f32.partialorder %v436, %v672
        %vm1128 = vcmp.ge.f32.partialorder %v440, %v672
        %vm1129 = vcmp.ge.f32.partialorder %v412, %v677
        %vm1130 = vcmp.ge.f32.partialorder %v416, %v677
        %vm1131 = vcmp.ge.f32.partialorder %v420, %v677
        %vm1132 = vcmp.ge.f32.partialorder %v424, %v677
        %vm1133 = vcmp.ge.f32.partialorder %v428, %v677
        %vm1134 = vcmp.ge.f32.partialorder %v432, %v677
        %vm1135 = vcmp.ge.f32.partialorder %v436, %v677
        %vm1136 = vcmp.ge.f32.partialorder %v440, %v677
        %vm1137 = vcmp.ge.f32.partialorder %v412, %v682
        %vm1138 = vcmp.ge.f32.partialorder %v416, %v682
        %vm1139 = vcmp.ge.f32.partialorder %v420, %v682
        %vm1140 = vcmp.ge.f32.partialorder %v424, %v682
        %vm1141 = vcmp.ge.f32.partialorder %v428, %v682
        %vm1142 = vcmp.ge.f32.partialorder %v432, %v682
        %vm1143 = vcmp.ge.f32.partialorder %v436, %v682
        %vm1144 = vcmp.ge.f32.partialorder %v440, %v682
        %vm1145 = vcmp.ge.f32.partialorder %v412, %v687
        %vm1146 = vcmp.ge.f32.partialorder %v416, %v687
        %vm1147 = vcmp.ge.f32.partialorder %v420, %v687
        %vm1148 = vcmp.ge.f32.partialorder %v424, %v687
        %vm1149 = vcmp.ge.f32.partialorder %v428, %v687
        %vm1150 = vcmp.ge.f32.partialorder %v432, %v687
        %vm1151 = vcmp.ge.f32.partialorder %v436, %v687
        %vm1152 = vcmp.ge.f32.partialorder %v440, %v687
        %vm1153 = vcmp.ge.f32.partialorder %v412, %v692
        %vm1154 = vcmp.ge.f32.partialorder %v416, %v692
        %vm1155 = vcmp.ge.f32.partialorder %v420, %v692
        %vm1156 = vcmp.ge.f32.partialorder %v424, %v692
        %vm1157 = vcmp.ge.f32.partialorder %v428, %v692
        %vm1158 = vcmp.ge.f32.partialorder %v432, %v692
        %vm1159 = vcmp.ge.f32.partialorder %v436, %v692
        %vm1160 = vcmp.ge.f32.partialorder %v440, %v692
        %vm1161 = vcmp.ge.f32.partialorder %v412, %v697
        %vm1162 = vcmp.ge.f32.partialorder %v416, %v697
        %vm1163 = vcmp.ge.f32.partialorder %v420, %v697
        %vm1164 = vcmp.ge.f32.partialorder %v424, %v697
        %vm1165 = vcmp.ge.f32.partialorder %v428, %v697
        %vm1166 = vcmp.ge.f32.partialorder %v432, %v697
        %vm1167 = vcmp.ge.f32.partialorder %v436, %v697
        %vm1168 = vcmp.ge.f32.partialorder %v440, %v697
        %vm1169 = vcmp.ge.f32.partialorder %v412, %v702
        %vm1170 = vcmp.ge.f32.partialorder %v416, %v702
        %vm1171 = vcmp.ge.f32.partialorder %v420, %v702
        %vm1172 = vcmp.ge.f32.partialorder %v424, %v702
        %vm1173 = vcmp.ge.f32.partialorder %v428, %v702
        %vm1174 = vcmp.ge.f32.partialorder %v432, %v702
        %vm1175 = vcmp.ge.f32.partialorder %v436, %v702
        %vm1176 = vcmp.ge.f32.partialorder %v440, %v702
        %vm1177 = vcmp.ge.f32.partialorder %v412, %v707
        %vm1178 = vcmp.ge.f32.partialorder %v416, %v707
        %vm1179 = vcmp.ge.f32.partialorder %v420, %v707
        %vm1180 = vcmp.ge.f32.partialorder %v424, %v707
        %vm1181 = vcmp.ge.f32.partialorder %v428, %v707
        %vm1182 = vcmp.ge.f32.partialorder %v432, %v707
        %vm1183 = vcmp.ge.f32.partialorder %v436, %v707
        %vm1184 = vcmp.ge.f32.partialorder %v440, %v707
        %vm1185 = vcmp.ge.f32.partialorder %v412, %v712
        %vm1186 = vcmp.ge.f32.partialorder %v416, %v712
        %vm1187 = vcmp.ge.f32.partialorder %v420, %v712
        %vm1188 = vcmp.ge.f32.partialorder %v424, %v712
        %vm1189 = vcmp.ge.f32.partialorder %v428, %v712
        %vm1190 = vcmp.ge.f32.partialorder %v432, %v712
        %vm1191 = vcmp.ge.f32.partialorder %v436, %v712
        %vm1192 = vcmp.ge.f32.partialorder %v440, %v712
        %vm1193 = vcmp.ge.f32.partialorder %v412, %v717
        %vm1194 = vcmp.ge.f32.partialorder %v416, %v717
        %vm1195 = vcmp.ge.f32.partialorder %v420, %v717
        %vm1196 = vcmp.ge.f32.partialorder %v424, %v717
        %vm1197 = vcmp.ge.f32.partialorder %v428, %v717
        %vm1198 = vcmp.ge.f32.partialorder %v432, %v717
        %vm1199 = vcmp.ge.f32.partialorder %v436, %v717
        %vm1200 = vcmp.ge.f32.partialorder %v440, %v717
        %vm1201 = vcmp.ge.f32.partialorder %v412, %v722
        %vm1202 = vcmp.ge.f32.partialorder %v416, %v722
        %vm1203 = vcmp.ge.f32.partialorder %v420, %v722
        %vm1204 = vcmp.ge.f32.partialorder %v424, %v722
        %vm1205 = vcmp.ge.f32.partialorder %v428, %v722
        %vm1206 = vcmp.ge.f32.partialorder %v432, %v722
        %vm1207 = vcmp.ge.f32.partialorder %v436, %v722
        %vm1208 = vcmp.ge.f32.partialorder %v440, %v722
        %vm1209 = vcmp.ge.f32.partialorder %v412, %v727
        %vm1210 = vcmp.ge.f32.partialorder %v416, %v727
        %vm1211 = vcmp.ge.f32.partialorder %v420, %v727
        %vm1212 = vcmp.ge.f32.partialorder %v424, %v727
        %vm1213 = vcmp.ge.f32.partialorder %v428, %v727
        %vm1214 = vcmp.ge.f32.partialorder %v432, %v727
        %vm1215 = vcmp.ge.f32.partialorder %v436, %v727
        %vm1216 = vcmp.ge.f32.partialorder %v440, %v727
        %vm1217 = vcmp.ge.f32.partialorder %v412, %v732
        %vm1218 = vcmp.ge.f32.partialorder %v416, %v732
        %vm1219 = vcmp.ge.f32.partialorder %v420, %v732
        %vm1220 = vcmp.ge.f32.partialorder %v424, %v732
        %vm1221 = vcmp.ge.f32.partialorder %v428, %v732
        %vm1222 = vcmp.ge.f32.partialorder %v432, %v732
        %vm1223 = vcmp.ge.f32.partialorder %v436, %v732
        %vm1224 = vcmp.ge.f32.partialorder %v440, %v732
        %vm1225 = vcmp.ge.f32.partialorder %v412, %v737
        %vm1226 = vcmp.ge.f32.partialorder %v416, %v737
        %vm1227 = vcmp.ge.f32.partialorder %v420, %v737
        %vm1228 = vcmp.ge.f32.partialorder %v424, %v737
        %vm1229 = vcmp.ge.f32.partialorder %v428, %v737
        %vm1230 = vcmp.ge.f32.partialorder %v432, %v737
        %vm1231 = vcmp.ge.f32.partialorder %v436, %v737
        %vm1232 = vcmp.ge.f32.partialorder %v440, %v737
        %vm1233 = vcmp.ge.f32.partialorder %v412, %v742
        %vm1234 = vcmp.ge.f32.partialorder %v416, %v742
        %vm1235 = vcmp.ge.f32.partialorder %v420, %v742
        %vm1236 = vcmp.ge.f32.partialorder %v424, %v742
        %vm1237 = vcmp.ge.f32.partialorder %v428, %v742
        %vm1238 = vcmp.ge.f32.partialorder %v432, %v742
        %vm1239 = vcmp.ge.f32.partialorder %v436, %v742
        %vm1240 = vcmp.ge.f32.partialorder %v440, %v742
        %vm1241 = vcmp.ge.f32.partialorder %v412, %v747
        %vm1242 = vcmp.ge.f32.partialorder %v416, %v747
        %vm1243 = vcmp.ge.f32.partialorder %v420, %v747
        %vm1244 = vcmp.ge.f32.partialorder %v424, %v747
        %vm1245 = vcmp.ge.f32.partialorder %v428, %v747
        %vm1246 = vcmp.ge.f32.partialorder %v432, %v747
        %vm1247 = vcmp.ge.f32.partialorder %v436, %v747
        %vm1248 = vcmp.ge.f32.partialorder %v440, %v747
        %vm1249 = vcmp.ge.f32.partialorder %v412, %v752
        %vm1250 = vcmp.ge.f32.partialorder %v416, %v752
        %vm1251 = vcmp.ge.f32.partialorder %v420, %v752
        %vm1252 = vcmp.ge.f32.partialorder %v424, %v752
        %vm1253 = vcmp.ge.f32.partialorder %v428, %v752
        %vm1254 = vcmp.ge.f32.partialorder %v432, %v752
        %vm1255 = vcmp.ge.f32.partialorder %v436, %v752
        %vm1256 = vcmp.ge.f32.partialorder %v440, %v752
        %vm1257 = vcmp.ge.f32.partialorder %v412, %v757
        %vm1258 = vcmp.ge.f32.partialorder %v416, %v757
        %vm1259 = vcmp.ge.f32.partialorder %v420, %v757
        %vm1260 = vcmp.ge.f32.partialorder %v424, %v757
        %vm1261 = vcmp.ge.f32.partialorder %v428, %v757
        %vm1262 = vcmp.ge.f32.partialorder %v432, %v757
        %vm1263 = vcmp.ge.f32.partialorder %v436, %v757
        %vm1264 = vcmp.ge.f32.partialorder %v440, %v757
        %vm1265 = vcmp.ge.f32.partialorder %v412, %v762
        %vm1266 = vcmp.ge.f32.partialorder %v416, %v762
        %vm1267 = vcmp.ge.f32.partialorder %v420, %v762
        %vm1268 = vcmp.ge.f32.partialorder %v424, %v762
        %vm1269 = vcmp.ge.f32.partialorder %v428, %v762
        %vm1270 = vcmp.ge.f32.partialorder %v432, %v762
        %vm1271 = vcmp.ge.f32.partialorder %v436, %v762
        %vm1272 = vcmp.ge.f32.partialorder %v440, %v762
        %vm1273 = vcmp.ge.f32.partialorder %v412, %v767
        %vm1274 = vcmp.ge.f32.partialorder %v416, %v767
        %vm1275 = vcmp.ge.f32.partialorder %v420, %v767
        %vm1276 = vcmp.ge.f32.partialorder %v424, %v767
        %vm1277 = vcmp.ge.f32.partialorder %v428, %v767
        %vm1278 = vcmp.ge.f32.partialorder %v432, %v767
        %vm1279 = vcmp.ge.f32.partialorder %v436, %v767
        %vm1280 = vcmp.ge.f32.partialorder %v440, %v767
        %v1281 = vsel %vm769, 1, 0
        %v1282 = vsel %vm770, 1, 0
        %v1283 = vsel %vm771, 1, 0
        %v1284 = vsel %vm772, 1, 0
        %v1285 = vsel %vm773, 1, 0
        %v1286 = vsel %vm774, 1, 0
        %v1287 = vsel %vm775, 1, 0
        %v1288 = vsel %vm776, 1, 0
        %v1289 = vsel %vm777, 1, 0
        %v1290 = vsel %vm778, 1, 0
        %v1291 = vsel %vm779, 1, 0
        %v1292 = vsel %vm780, 1, 0
        %v1293 = vsel %vm781, 1, 0
        %v1294 = vsel %vm782, 1, 0
        %v1295 = vsel %vm783, 1, 0
        %v1296 = vsel %vm784, 1, 0
        %v1297 = vsel %vm785, 1, 0
        %v1298 = vsel %vm786, 1, 0
        %v1299 = vsel %vm787, 1, 0
        %v1300 = vsel %vm788, 1, 0
        %v1301 = vsel %vm789, 1, 0
        %v1302 = vsel %vm790, 1, 0
        %v1303 = vsel %vm791, 1, 0
        %v1304 = vsel %vm792, 1, 0
        %v1305 = vsel %vm793, 1, 0
        %v1306 = vsel %vm794, 1, 0
        %v1307 = vsel %vm795, 1, 0
        %v1308 = vsel %vm796, 1, 0
        %v1309 = vsel %vm797, 1, 0
        %v1310 = vsel %vm798, 1, 0
        %v1311 = vsel %vm799, 1, 0
        %v1312 = vsel %vm800, 1, 0
        %v1313 = vsel %vm801, 1, 0
        %v1314 = vsel %vm802, 1, 0
        %v1315 = vsel %vm803, 1, 0
        %v1316 = vsel %vm804, 1, 0
        %v1317 = vsel %vm805, 1, 0
        %v1318 = vsel %vm806, 1, 0
        %v1319 = vsel %vm807, 1, 0
        %v1320 = vsel %vm808, 1, 0
        %v1321 = vsel %vm809, 1, 0
        %v1322 = vsel %vm810, 1, 0
        %v1323 = vsel %vm811, 1, 0
        %v1324 = vsel %vm812, 1, 0
        %v1325 = vsel %vm813, 1, 0
        %v1326 = vsel %vm814, 1, 0
        %v1327 = vsel %vm815, 1, 0
        %v1328 = vsel %vm816, 1, 0
        %v1329 = vsel %vm817, 1, 0
        %v1330 = vsel %vm818, 1, 0
        %v1331 = vsel %vm819, 1, 0
        %v1332 = vsel %vm820, 1, 0
        %v1333 = vsel %vm821, 1, 0
        %v1334 = vsel %vm822, 1, 0
        %v1335 = vsel %vm823, 1, 0
        %v1336 = vsel %vm824, 1, 0
        %v1337 = vsel %vm825, 1, 0
        %v1338 = vsel %vm826, 1, 0
        %v1339 = vsel %vm827, 1, 0
        %v1340 = vsel %vm828, 1, 0
        %v1341 = vsel %vm829, 1, 0
        %v1342 = vsel %vm830, 1, 0
        %v1343 = vsel %vm831, 1, 0
        %v1344 = vsel %vm832, 1, 0
        %v1345 = vsel %vm833, 1, 0
        %v1346 = vsel %vm834, 1, 0
        %v1347 = vsel %vm835, 1, 0
        %v1348 = vsel %vm836, 1, 0
        %v1349 = vsel %vm837, 1, 0
        %v1350 = vsel %vm838, 1, 0
        %v1351 = vsel %vm839, 1, 0
        %v1352 = vsel %vm840, 1, 0
        %v1353 = vsel %vm841, 1, 0
        %v1354 = vsel %vm842, 1, 0
        %v1355 = vsel %vm843, 1, 0
        %v1356 = vsel %vm844, 1, 0
        %v1357 = vsel %vm845, 1, 0
        %v1358 = vsel %vm846, 1, 0
        %v1359 = vsel %vm847, 1, 0
        %v1360 = vsel %vm848, 1, 0
        %v1361 = vsel %vm849, 1, 0
        %v1362 = vsel %vm850, 1, 0
        %v1363 = vsel %vm851, 1, 0
        %v1364 = vsel %vm852, 1, 0
        %v1365 = vsel %vm853, 1, 0
        %v1366 = vsel %vm854, 1, 0
        %v1367 = vsel %vm855, 1, 0
        %v1368 = vsel %vm856, 1, 0
        %v1369 = vsel %vm857, 1, 0
        %v1370 = vsel %vm858, 1, 0
        %v1371 = vsel %vm859, 1, 0
        %v1372 = vsel %vm860, 1, 0
        %v1373 = vsel %vm861, 1, 0
        %v1374 = vsel %vm862, 1, 0
        %v1375 = vsel %vm863, 1, 0
        %v1376 = vsel %vm864, 1, 0
        %v1377 = vsel %vm865, 1, 0
        %v1378 = vsel %vm866, 1, 0
        %v1379 = vsel %vm867, 1, 0
        %v1380 = vsel %vm868, 1, 0
        %v1381 = vsel %vm869, 1, 0
        %v1382 = vsel %vm870, 1, 0
        %v1383 = vsel %vm871, 1, 0
        %v1384 = vsel %vm872, 1, 0
        %v1385 = vsel %vm873, 1, 0
        %v1386 = vsel %vm874, 1, 0
        %v1387 = vsel %vm875, 1, 0
        %v1388 = vsel %vm876, 1, 0
        %v1389 = vsel %vm877, 1, 0
        %v1390 = vsel %vm878, 1, 0
        %v1391 = vsel %vm879, 1, 0
        %v1392 = vsel %vm880, 1, 0
        %v1393 = vsel %vm881, 1, 0
        %v1394 = vsel %vm882, 1, 0
        %v1395 = vsel %vm883, 1, 0
        %v1396 = vsel %vm884, 1, 0
        %v1397 = vsel %vm885, 1, 0
        %v1398 = vsel %vm886, 1, 0
        %v1399 = vsel %vm887, 1, 0
        %v1400 = vsel %vm888, 1, 0
        %v1401 = vsel %vm889, 1, 0
        %v1402 = vsel %vm890, 1, 0
        %v1403 = vsel %vm891, 1, 0
        %v1404 = vsel %vm892, 1, 0
        %v1405 = vsel %vm893, 1, 0
        %v1406 = vsel %vm894, 1, 0
        %v1407 = vsel %vm895, 1, 0
        %v1408 = vsel %vm896, 1, 0
        %v1409 = vsel %vm897, 1, 0
        %v1410 = vsel %vm898, 1, 0
        %v1411 = vsel %vm899, 1, 0
        %v1412 = vsel %vm900, 1, 0
        %v1413 = vsel %vm901, 1, 0
        %v1414 = vsel %vm902, 1, 0
        %v1415 = vsel %vm903, 1, 0
        %v1416 = vsel %vm904, 1, 0
        %v1417 = vsel %vm905, 1, 0
        %v1418 = vsel %vm906, 1, 0
        %v1419 = vsel %vm907, 1, 0
        %v1420 = vsel %vm908, 1, 0
        %v1421 = vsel %vm909, 1, 0
        %v1422 = vsel %vm910, 1, 0
        %v1423 = vsel %vm911, 1, 0
        %v1424 = vsel %vm912, 1, 0
        %v1425 = vsel %vm913, 1, 0
        %v1426 = vsel %vm914, 1, 0
        %v1427 = vsel %vm915, 1, 0
        %v1428 = vsel %vm916, 1, 0
        %v1429 = vsel %vm917, 1, 0
        %v1430 = vsel %vm918, 1, 0
        %v1431 = vsel %vm919, 1, 0
        %v1432 = vsel %vm920, 1, 0
        %v1433 = vsel %vm921, 1, 0
        %v1434 = vsel %vm922, 1, 0
        %v1435 = vsel %vm923, 1, 0
        %v1436 = vsel %vm924, 1, 0
        %v1437 = vsel %vm925, 1, 0
        %v1438 = vsel %vm926, 1, 0
        %v1439 = vsel %vm927, 1, 0
        %v1440 = vsel %vm928, 1, 0
        %v1441 = vsel %vm929, 1, 0
        %v1442 = vsel %vm930, 1, 0
        %v1443 = vsel %vm931, 1, 0
        %v1444 = vsel %vm932, 1, 0
        %v1445 = vsel %vm933, 1, 0
        %v1446 = vsel %vm934, 1, 0
        %v1447 = vsel %vm935, 1, 0
        %v1448 = vsel %vm936, 1, 0
        %v1449 = vsel %vm937, 1, 0
        %v1450 = vsel %vm938, 1, 0
        %v1451 = vsel %vm939, 1, 0
        %v1452 = vsel %vm940, 1, 0
        %v1453 = vsel %vm941, 1, 0
        %v1454 = vsel %vm942, 1, 0
        %v1455 = vsel %vm943, 1, 0
        %v1456 = vsel %vm944, 1, 0
        %v1457 = vsel %vm945, 1, 0
        %v1458 = vsel %vm946, 1, 0
        %v1459 = vsel %vm947, 1, 0
        %v1460 = vsel %vm948, 1, 0
        %v1461 = vsel %vm949, 1, 0
        %v1462 = vsel %vm950, 1, 0
        %v1463 = vsel %vm951, 1, 0
        %v1464 = vsel %vm952, 1, 0
        %v1465 = vsel %vm953, 1, 0
        %v1466 = vsel %vm954, 1, 0
        %v1467 = vsel %vm955, 1, 0
        %v1468 = vsel %vm956, 1, 0
        %v1469 = vsel %vm957, 1, 0
        %v1470 = vsel %vm958, 1, 0
        %v1471 = vsel %vm959, 1, 0
        %v1472 = vsel %vm960, 1, 0
        %v1473 = vsel %vm961, 1, 0
        %v1474 = vsel %vm962, 1, 0
        %v1475 = vsel %vm963, 1, 0
        %v1476 = vsel %vm964, 1, 0
        %v1477 = vsel %vm965, 1, 0
        %v1478 = vsel %vm966, 1, 0
        %v1479 = vsel %vm967, 1, 0
        %v1480 = vsel %vm968, 1, 0
        %v1481 = vsel %vm969, 1, 0
        %v1482 = vsel %vm970, 1, 0
        %v1483 = vsel %vm971, 1, 0
        %v1484 = vsel %vm972, 1, 0
        %v1485 = vsel %vm973, 1, 0
        %v1486 = vsel %vm974, 1, 0
        %v1487 = vsel %vm975, 1, 0
        %v1488 = vsel %vm976, 1, 0
        %v1489 = vsel %vm977, 1, 0
        %v1490 = vsel %vm978, 1, 0
        %v1491 = vsel %vm979, 1, 0
        %v1492 = vsel %vm980, 1, 0
        %v1493 = vsel %vm981, 1, 0
        %v1494 = vsel %vm982, 1, 0
        %v1495 = vsel %vm983, 1, 0
        %v1496 = vsel %vm984, 1, 0
        %v1497 = vsel %vm985, 1, 0
        %v1498 = vsel %vm986, 1, 0
        %v1499 = vsel %vm987, 1, 0
        %v1500 = vsel %vm988, 1, 0
        %v1501 = vsel %vm989, 1, 0
        %v1502 = vsel %vm990, 1, 0
        %v1503 = vsel %vm991, 1, 0
        %v1504 = vsel %vm992, 1, 0
        %v1505 = vsel %vm993, 1, 0
        %v1506 = vsel %vm994, 1, 0
        %v1507 = vsel %vm995, 1, 0
        %v1508 = vsel %vm996, 1, 0
        %v1509 = vsel %vm997, 1, 0
        %v1510 = vsel %vm998, 1, 0
        %v1511 = vsel %vm999, 1, 0
        %v1512 = vsel %vm1000, 1, 0
        %v1513 = vsel %vm1001, 1, 0
        %v1514 = vsel %vm1002, 1, 0
        %v1515 = vsel %vm1003, 1, 0
        %v1516 = vsel %vm1004, 1, 0
        %v1517 = vsel %vm1005, 1, 0
        %v1518 = vsel %vm1006, 1, 0
        %v1519 = vsel %vm1007, 1, 0
        %v1520 = vsel %vm1008, 1, 0
        %v1521 = vsel %vm1009, 1, 0
        %v1522 = vsel %vm1010, 1, 0
        %v1523 = vsel %vm1011, 1, 0
        %v1524 = vsel %vm1012, 1, 0
        %v1525 = vsel %vm1013, 1, 0
        %v1526 = vsel %vm1014, 1, 0
        %v1527 = vsel %vm1015, 1, 0
        %v1528 = vsel %vm1016, 1, 0
        %v1529 = vsel %vm1017, 1, 0
        %v1530 = vsel %vm1018, 1, 0
        %v1531 = vsel %vm1019, 1, 0
        %v1532 = vsel %vm1020, 1, 0
        %v1533 = vsel %vm1021, 1, 0
        %v1534 = vsel %vm1022, 1, 0
        %v1535 = vsel %vm1023, 1, 0
        %v1536 = vsel %vm1024, 1, 0
        %v1537 = vsel %vm1025, 1, 0
        %v1538 = vsel %vm1026, 1, 0
        %v1539 = vsel %vm1027, 1, 0
        %v1540 = vsel %vm1028, 1, 0
        %v1541 = vsel %vm1029, 1, 0
        %v1542 = vsel %vm1030, 1, 0
        %v1543 = vsel %vm1031, 1, 0
        %v1544 = vsel %vm1032, 1, 0
        %v1545 = vsel %vm1033, 1, 0
        %v1546 = vsel %vm1034, 1, 0
        %v1547 = vsel %vm1035, 1, 0
        %v1548 = vsel %vm1036, 1, 0
        %v1549 = vsel %vm1037, 1, 0
        %v1550 = vsel %vm1038, 1, 0
        %v1551 = vsel %vm1039, 1, 0
        %v1552 = vsel %vm1040, 1, 0
        %v1553 = vsel %vm1041, 1, 0
        %v1554 = vsel %vm1042, 1, 0
        %v1555 = vsel %vm1043, 1, 0
        %v1556 = vsel %vm1044, 1, 0
        %v1557 = vsel %vm1045, 1, 0
        %v1558 = vsel %vm1046, 1, 0
        %v1559 = vsel %vm1047, 1, 0
        %v1560 = vsel %vm1048, 1, 0
        %v1561 = vsel %vm1049, 1, 0
        %v1562 = vsel %vm1050, 1, 0
        %v1563 = vsel %vm1051, 1, 0
        %v1564 = vsel %vm1052, 1, 0
        %v1565 = vsel %vm1053, 1, 0
        %v1566 = vsel %vm1054, 1, 0
        %v1567 = vsel %vm1055, 1, 0
        %v1568 = vsel %vm1056, 1, 0
        %v1569 = vsel %vm1057, 1, 0
        %v1570 = vsel %vm1058, 1, 0
        %v1571 = vsel %vm1059, 1, 0
        %v1572 = vsel %vm1060, 1, 0
        %v1573 = vsel %vm1061, 1, 0
        %v1574 = vsel %vm1062, 1, 0
        %v1575 = vsel %vm1063, 1, 0
        %v1576 = vsel %vm1064, 1, 0
        %v1577 = vsel %vm1065, 1, 0
        %v1578 = vsel %vm1066, 1, 0
        %v1579 = vsel %vm1067, 1, 0
        %v1580 = vsel %vm1068, 1, 0
        %v1581 = vsel %vm1069, 1, 0
        %v1582 = vsel %vm1070, 1, 0
        %v1583 = vsel %vm1071, 1, 0
        %v1584 = vsel %vm1072, 1, 0
        %v1585 = vsel %vm1073, 1, 0
        %v1586 = vsel %vm1074, 1, 0
        %v1587 = vsel %vm1075, 1, 0
        %v1588 = vsel %vm1076, 1, 0
        %v1589 = vsel %vm1077, 1, 0
        %v1590 = vsel %vm1078, 1, 0
        %v1591 = vsel %vm1079, 1, 0
        %v1592 = vsel %vm1080, 1, 0
        %v1593 = vsel %vm1081, 1, 0
        %v1594 = vsel %vm1082, 1, 0
        %v1595 = vsel %vm1083, 1, 0
        %v1596 = vsel %vm1084, 1, 0
        %v1597 = vsel %vm1085, 1, 0
        %v1598 = vsel %vm1086, 1, 0
        %v1599 = vsel %vm1087, 1, 0
        %v1600 = vsel %vm1088, 1, 0
        %v1601 = vsel %vm1089, 1, 0
        %v1602 = vsel %vm1090, 1, 0
        %v1603 = vsel %vm1091, 1, 0
        %v1604 = vsel %vm1092, 1, 0
        %v1605 = vsel %vm1093, 1, 0
        %v1606 = vsel %vm1094, 1, 0
        %v1607 = vsel %vm1095, 1, 0
        %v1608 = vsel %vm1096, 1, 0
        %v1609 = vsel %vm1097, 1, 0
        %v1610 = vsel %vm1098, 1, 0
        %v1611 = vsel %vm1099, 1, 0
        %v1612 = vsel %vm1100, 1, 0
        %v1613 = vsel %vm1101, 1, 0
        %v1614 = vsel %vm1102, 1, 0
        %v1615 = vsel %vm1103, 1, 0
        %v1616 = vsel %vm1104, 1, 0
        %v1617 = vsel %vm1105, 1, 0
        %v1618 = vsel %vm1106, 1, 0
        %v1619 = vsel %vm1107, 1, 0
        %v1620 = vsel %vm1108, 1, 0
        %v1621 = vsel %vm1109, 1, 0
        %v1622 = vsel %vm1110, 1, 0
        %v1623 = vsel %vm1111, 1, 0
        %v1624 = vsel %vm1112, 1, 0
        %v1625 = vsel %vm1113, 1, 0
        %v1626 = vsel %vm1114, 1, 0
        %v1627 = vsel %vm1115, 1, 0
        %v1628 = vsel %vm1116, 1, 0
        %v1629 = vsel %vm1117, 1, 0
        %v1630 = vsel %vm1118, 1, 0
        %v1631 = vsel %vm1119, 1, 0
        %v1632 = vsel %vm1120, 1, 0
        %v1633 = vsel %vm1121, 1, 0
        %v1634 = vsel %vm1122, 1, 0
        %v1635 = vsel %vm1123, 1, 0
        %v1636 = vsel %vm1124, 1, 0
        %v1637 = vsel %vm1125, 1, 0
        %v1638 = vsel %vm1126, 1, 0
        %v1639 = vsel %vm1127, 1, 0
        %v1640 = vsel %vm1128, 1, 0
        %v1641 = vsel %vm1129, 1, 0
        %v1642 = vsel %vm1130, 1, 0
        %v1643 = vsel %vm1131, 1, 0
        %v1644 = vsel %vm1132, 1, 0
        %v1645 = vsel %vm1133, 1, 0
        %v1646 = vsel %vm1134, 1, 0
        %v1647 = vsel %vm1135, 1, 0
        %v1648 = vsel %vm1136, 1, 0
        %v1649 = vsel %vm1137, 1, 0
        %v1650 = vsel %vm1138, 1, 0
        %v1651 = vsel %vm1139, 1, 0
        %v1652 = vsel %vm1140, 1, 0
        %v1653 = vsel %vm1141, 1, 0
        %v1654 = vsel %vm1142, 1, 0
        %v1655 = vsel %vm1143, 1, 0
        %v1656 = vsel %vm1144, 1, 0
        %v1657 = vsel %vm1145, 1, 0
        %v1658 = vsel %vm1146, 1, 0
        %v1659 = vsel %vm1147, 1, 0
        %v1660 = vsel %vm1148, 1, 0
        %v1661 = vsel %vm1149, 1, 0
        %v1662 = vsel %vm1150, 1, 0
        %v1663 = vsel %vm1151, 1, 0
        %v1664 = vsel %vm1152, 1, 0
        %v1665 = vsel %vm1153, 1, 0
        %v1666 = vsel %vm1154, 1, 0
        %v1667 = vsel %vm1155, 1, 0
        %v1668 = vsel %vm1156, 1, 0
        %v1669 = vsel %vm1157, 1, 0
        %v1670 = vsel %vm1158, 1, 0
        %v1671 = vsel %vm1159, 1, 0
        %v1672 = vsel %vm1160, 1, 0
        %v1673 = vsel %vm1161, 1, 0
        %v1674 = vsel %vm1162, 1, 0
        %v1675 = vsel %vm1163, 1, 0
        %v1676 = vsel %vm1164, 1, 0
        %v1677 = vsel %vm1165, 1, 0
        %v1678 = vsel %vm1166, 1, 0
        %v1679 = vsel %vm1167, 1, 0
        %v1680 = vsel %vm1168, 1, 0
        %v1681 = vsel %vm1169, 1, 0
        %v1682 = vsel %vm1170, 1, 0
        %v1683 = vsel %vm1171, 1, 0
        %v1684 = vsel %vm1172, 1, 0
        %v1685 = vsel %vm1173, 1, 0
        %v1686 = vsel %vm1174, 1, 0
        %v1687 = vsel %vm1175, 1, 0
        %v1688 = vsel %vm1176, 1, 0
        %v1689 = vsel %vm1177, 1, 0
        %v1690 = vsel %vm1178, 1, 0
        %v1691 = vsel %vm1179, 1, 0
        %v1692 = vsel %vm1180, 1, 0
        %v1693 = vsel %vm1181, 1, 0
        %v1694 = vsel %vm1182, 1, 0
        %v1695 = vsel %vm1183, 1, 0
        %v1696 = vsel %vm1184, 1, 0
        %v1697 = vsel %vm1185, 1, 0
        %v1698 = vsel %vm1186, 1, 0
        %v1699 = vsel %vm1187, 1, 0
        %v1700 = vsel %vm1188, 1, 0
        %v1701 = vsel %vm1189, 1, 0
        %v1702 = vsel %vm1190, 1, 0
        %v1703 = vsel %vm1191, 1, 0
        %v1704 = vsel %vm1192, 1, 0
        %v1705 = vsel %vm1193, 1, 0
        %v1706 = vsel %vm1194, 1, 0
        %v1707 = vsel %vm1195, 1, 0
        %v1708 = vsel %vm1196, 1, 0
        %v1709 = vsel %vm1197, 1, 0
        %v1710 = vsel %vm1198, 1, 0
        %v1711 = vsel %vm1199, 1, 0
        %v1712 = vsel %vm1200, 1, 0
        %v1713 = vsel %vm1201, 1, 0
        %v1714 = vsel %vm1202, 1, 0
        %v1715 = vsel %vm1203, 1, 0
        %v1716 = vsel %vm1204, 1, 0
        %v1717 = vsel %vm1205, 1, 0
        %v1718 = vsel %vm1206, 1, 0
        %v1719 = vsel %vm1207, 1, 0
        %v1720 = vsel %vm1208, 1, 0
        %v1721 = vsel %vm1209, 1, 0
        %v1722 = vsel %vm1210, 1, 0
        %v1723 = vsel %vm1211, 1, 0
        %v1724 = vsel %vm1212, 1, 0
        %v1725 = vsel %vm1213, 1, 0
        %v1726 = vsel %vm1214, 1, 0
        %v1727 = vsel %vm1215, 1, 0
        %v1728 = vsel %vm1216, 1, 0
        %v1729 = vsel %vm1217, 1, 0
        %v1730 = vsel %vm1218, 1, 0
        %v1731 = vsel %vm1219, 1, 0
        %v1732 = vsel %vm1220, 1, 0
        %v1733 = vsel %vm1221, 1, 0
        %v1734 = vsel %vm1222, 1, 0
        %v1735 = vsel %vm1223, 1, 0
        %v1736 = vsel %vm1224, 1, 0
        %v1737 = vsel %vm1225, 1, 0
        %v1738 = vsel %vm1226, 1, 0
        %v1739 = vsel %vm1227, 1, 0
        %v1740 = vsel %vm1228, 1, 0
        %v1741 = vsel %vm1229, 1, 0
        %v1742 = vsel %vm1230, 1, 0
        %v1743 = vsel %vm1231, 1, 0
        %v1744 = vsel %vm1232, 1, 0
        %v1745 = vsel %vm1233, 1, 0
        %v1746 = vsel %vm1234, 1, 0
        %v1747 = vsel %vm1235, 1, 0
        %v1748 = vsel %vm1236, 1, 0
        %v1749 = vsel %vm1237, 1, 0
        %v1750 = vsel %vm1238, 1, 0
        %v1751 = vsel %vm1239, 1, 0
        %v1752 = vsel %vm1240, 1, 0
        %v1753 = vsel %vm1241, 1, 0
        %v1754 = vsel %vm1242, 1, 0
        %v1755 = vsel %vm1243, 1, 0
        %v1756 = vsel %vm1244, 1, 0
        %v1757 = vsel %vm1245, 1, 0
        %v1758 = vsel %vm1246, 1, 0
        %v1759 = vsel %vm1247, 1, 0
        %v1760 = vsel %vm1248, 1, 0
        %v1761 = vsel %vm1249, 1, 0
        %v1762 = vsel %vm1250, 1, 0
        %v1763 = vsel %vm1251, 1, 0
        %v1764 = vsel %vm1252, 1, 0
        %v1765 = vsel %vm1253, 1, 0
        %v1766 = vsel %vm1254, 1, 0
        %v1767 = vsel %vm1255, 1, 0
        %v1768 = vsel %vm1256, 1, 0
        %v1769 = vsel %vm1257, 1, 0
        %v1770 = vsel %vm1258, 1, 0
        %v1771 = vsel %vm1259, 1, 0
        %v1772 = vsel %vm1260, 1, 0
        %v1773 = vsel %vm1261, 1, 0
        %v1774 = vsel %vm1262, 1, 0
        %v1775 = vsel %vm1263, 1, 0
        %v1776 = vsel %vm1264, 1, 0
        %v1777 = vsel %vm1265, 1, 0
        %v1778 = vsel %vm1266, 1, 0
        %v1779 = vsel %vm1267, 1, 0
        %v1780 = vsel %vm1268, 1, 0
        %v1781 = vsel %vm1269, 1, 0
        %v1782 = vsel %vm1270, 1, 0
        %v1783 = vsel %vm1271, 1, 0
        %v1784 = vsel %vm1272, 1, 0
        %v1785 = vsel %vm1273, 1, 0
        %v1786 = vsel %vm1274, 1, 0
        %v1787 = vsel %vm1275, 1, 0
        %v1788 = vsel %vm1276, 1, 0
        %v1789 = vsel %vm1277, 1, 0
        %v1790 = vsel %vm1278, 1, 0
        %v1791 = vsel %vm1279, 1, 0
        %v1792 = vsel %vm1280, 1, 0
        %v1793 = vcvt.s32.f32 %v1281
        %v1794 = vcvt.s32.f32 %v1282
        %v1795 = vcvt.s32.f32 %v1283
        %v1796 = vcvt.s32.f32 %v1284
        %v1797 = vcvt.s32.f32 %v1285
        %v1798 = vcvt.s32.f32 %v1286
        %v1799 = vcvt.s32.f32 %v1287
        %v1800 = vcvt.s32.f32 %v1288
        %v1801 = vcvt.s32.f32 %v1289
        %v1802 = vcvt.s32.f32 %v1290
        %v1803 = vcvt.s32.f32 %v1291
        %v1804 = vcvt.s32.f32 %v1292
        %v1805 = vcvt.s32.f32 %v1293
        %v1806 = vcvt.s32.f32 %v1294
        %v1807 = vcvt.s32.f32 %v1295
        %v1808 = vcvt.s32.f32 %v1296
        %v1809 = vcvt.s32.f32 %v1297
        %v1810 = vcvt.s32.f32 %v1298
        %v1811 = vcvt.s32.f32 %v1299
        %v1812 = vcvt.s32.f32 %v1300
        %v1813 = vcvt.s32.f32 %v1301
        %v1814 = vcvt.s32.f32 %v1302
        %v1815 = vcvt.s32.f32 %v1303
        %v1816 = vcvt.s32.f32 %v1304
        %v1817 = vcvt.s32.f32 %v1305
        %v1818 = vcvt.s32.f32 %v1306
        %v1819 = vcvt.s32.f32 %v1307
        %v1820 = vcvt.s32.f32 %v1308
        %v1821 = vcvt.s32.f32 %v1309
        %v1822 = vcvt.s32.f32 %v1310
        %v1823 = vcvt.s32.f32 %v1311
        %v1824 = vcvt.s32.f32 %v1312
        %v1825 = vcvt.s32.f32 %v1313
        %v1826 = vcvt.s32.f32 %v1314
        %v1827 = vcvt.s32.f32 %v1315
        %v1828 = vcvt.s32.f32 %v1316
        %v1829 = vcvt.s32.f32 %v1317
        %v1830 = vcvt.s32.f32 %v1318
        %v1831 = vcvt.s32.f32 %v1319
        %v1832 = vcvt.s32.f32 %v1320
        %v1833 = vcvt.s32.f32 %v1321
        %v1834 = vcvt.s32.f32 %v1322
        %v1835 = vcvt.s32.f32 %v1323
        %v1836 = vcvt.s32.f32 %v1324
        %v1837 = vcvt.s32.f32 %v1325
        %v1838 = vcvt.s32.f32 %v1326
        %v1839 = vcvt.s32.f32 %v1327
        %v1840 = vcvt.s32.f32 %v1328
        %v1841 = vcvt.s32.f32 %v1329
        %v1842 = vcvt.s32.f32 %v1330
        %v1843 = vcvt.s32.f32 %v1331
        %v1844 = vcvt.s32.f32 %v1332
        %v1845 = vcvt.s32.f32 %v1333
        %v1846 = vcvt.s32.f32 %v1334
        %v1847 = vcvt.s32.f32 %v1335
        %v1848 = vcvt.s32.f32 %v1336
        %v1849 = vcvt.s32.f32 %v1337
        %v1850 = vcvt.s32.f32 %v1338
        %v1851 = vcvt.s32.f32 %v1339
        %v1852 = vcvt.s32.f32 %v1340
        %v1853 = vcvt.s32.f32 %v1341
        %v1854 = vcvt.s32.f32 %v1342
        %v1855 = vcvt.s32.f32 %v1343
        %v1856 = vcvt.s32.f32 %v1344
        %v1857 = vcvt.s32.f32 %v1345
        %v1858 = vcvt.s32.f32 %v1346
        %v1859 = vcvt.s32.f32 %v1347
        %v1860 = vcvt.s32.f32 %v1348
        %v1861 = vcvt.s32.f32 %v1349
        %v1862 = vcvt.s32.f32 %v1350
        %v1863 = vcvt.s32.f32 %v1351
        %v1864 = vcvt.s32.f32 %v1352
        %v1865 = vcvt.s32.f32 %v1353
        %v1866 = vcvt.s32.f32 %v1354
        %v1867 = vcvt.s32.f32 %v1355
        %v1868 = vcvt.s32.f32 %v1356
        %v1869 = vcvt.s32.f32 %v1357
        %v1870 = vcvt.s32.f32 %v1358
        %v1871 = vcvt.s32.f32 %v1359
        %v1872 = vcvt.s32.f32 %v1360
        %v1873 = vcvt.s32.f32 %v1361
        %v1874 = vcvt.s32.f32 %v1362
        %v1875 = vcvt.s32.f32 %v1363
        %v1876 = vcvt.s32.f32 %v1364
        %v1877 = vcvt.s32.f32 %v1365
        %v1878 = vcvt.s32.f32 %v1366
        %v1879 = vcvt.s32.f32 %v1367
        %v1880 = vcvt.s32.f32 %v1368
        %v1881 = vcvt.s32.f32 %v1369
        %v1882 = vcvt.s32.f32 %v1370
        %v1883 = vcvt.s32.f32 %v1371
        %v1884 = vcvt.s32.f32 %v1372
        %v1885 = vcvt.s32.f32 %v1373
        %v1886 = vcvt.s32.f32 %v1374
        %v1887 = vcvt.s32.f32 %v1375
        %v1888 = vcvt.s32.f32 %v1376
        %v1889 = vcvt.s32.f32 %v1377
        %v1890 = vcvt.s32.f32 %v1378
        %v1891 = vcvt.s32.f32 %v1379
        %v1892 = vcvt.s32.f32 %v1380
        %v1893 = vcvt.s32.f32 %v1381
        %v1894 = vcvt.s32.f32 %v1382
        %v1895 = vcvt.s32.f32 %v1383
        %v1896 = vcvt.s32.f32 %v1384
        %v1897 = vcvt.s32.f32 %v1385
        %v1898 = vcvt.s32.f32 %v1386
        %v1899 = vcvt.s32.f32 %v1387
        %v1900 = vcvt.s32.f32 %v1388
        %v1901 = vcvt.s32.f32 %v1389
        %v1902 = vcvt.s32.f32 %v1390
        %v1903 = vcvt.s32.f32 %v1391
        %v1904 = vcvt.s32.f32 %v1392
        %v1905 = vcvt.s32.f32 %v1393
        %v1906 = vcvt.s32.f32 %v1394
        %v1907 = vcvt.s32.f32 %v1395
        %v1908 = vcvt.s32.f32 %v1396
        %v1909 = vcvt.s32.f32 %v1397
        %v1910 = vcvt.s32.f32 %v1398
        %v1911 = vcvt.s32.f32 %v1399
        %v1912 = vcvt.s32.f32 %v1400
        %v1913 = vcvt.s32.f32 %v1401
        %v1914 = vcvt.s32.f32 %v1402
        %v1915 = vcvt.s32.f32 %v1403
        %v1916 = vcvt.s32.f32 %v1404
        %v1917 = vcvt.s32.f32 %v1405
        %v1918 = vcvt.s32.f32 %v1406
        %v1919 = vcvt.s32.f32 %v1407
        %v1920 = vcvt.s32.f32 %v1408
        %v1921 = vcvt.s32.f32 %v1409
        %v1922 = vcvt.s32.f32 %v1410
        %v1923 = vcvt.s32.f32 %v1411
        %v1924 = vcvt.s32.f32 %v1412
        %v1925 = vcvt.s32.f32 %v1413
        %v1926 = vcvt.s32.f32 %v1414
        %v1927 = vcvt.s32.f32 %v1415
        %v1928 = vcvt.s32.f32 %v1416
        %v1929 = vcvt.s32.f32 %v1417
        %v1930 = vcvt.s32.f32 %v1418
        %v1931 = vcvt.s32.f32 %v1419
        %v1932 = vcvt.s32.f32 %v1420
        %v1933 = vcvt.s32.f32 %v1421
        %v1934 = vcvt.s32.f32 %v1422
        %v1935 = vcvt.s32.f32 %v1423
        %v1936 = vcvt.s32.f32 %v1424
        %v1937 = vcvt.s32.f32 %v1425
        %v1938 = vcvt.s32.f32 %v1426
        %v1939 = vcvt.s32.f32 %v1427
        %v1940 = vcvt.s32.f32 %v1428
        %v1941 = vcvt.s32.f32 %v1429
        %v1942 = vcvt.s32.f32 %v1430
        %v1943 = vcvt.s32.f32 %v1431
        %v1944 = vcvt.s32.f32 %v1432
        %v1945 = vcvt.s32.f32 %v1433
        %v1946 = vcvt.s32.f32 %v1434
        %v1947 = vcvt.s32.f32 %v1435
        %v1948 = vcvt.s32.f32 %v1436
        %v1949 = vcvt.s32.f32 %v1437
        %v1950 = vcvt.s32.f32 %v1438
        %v1951 = vcvt.s32.f32 %v1439
        %v1952 = vcvt.s32.f32 %v1440
        %v1953 = vcvt.s32.f32 %v1441
        %v1954 = vcvt.s32.f32 %v1442
        %v1955 = vcvt.s32.f32 %v1443
        %v1956 = vcvt.s32.f32 %v1444
        %v1957 = vcvt.s32.f32 %v1445
        %v1958 = vcvt.s32.f32 %v1446
        %v1959 = vcvt.s32.f32 %v1447
        %v1960 = vcvt.s32.f32 %v1448
        %v1961 = vcvt.s32.f32 %v1449
        %v1962 = vcvt.s32.f32 %v1450
        %v1963 = vcvt.s32.f32 %v1451
        %v1964 = vcvt.s32.f32 %v1452
        %v1965 = vcvt.s32.f32 %v1453
        %v1966 = vcvt.s32.f32 %v1454
        %v1967 = vcvt.s32.f32 %v1455
        %v1968 = vcvt.s32.f32 %v1456
        %v1969 = vcvt.s32.f32 %v1457
        %v1970 = vcvt.s32.f32 %v1458
        %v1971 = vcvt.s32.f32 %v1459
        %v1972 = vcvt.s32.f32 %v1460
        %v1973 = vcvt.s32.f32 %v1461
        %v1974 = vcvt.s32.f32 %v1462
        %v1975 = vcvt.s32.f32 %v1463
        %v1976 = vcvt.s32.f32 %v1464
        %v1977 = vcvt.s32.f32 %v1465
        %v1978 = vcvt.s32.f32 %v1466
        %v1979 = vcvt.s32.f32 %v1467
        %v1980 = vcvt.s32.f32 %v1468
        %v1981 = vcvt.s32.f32 %v1469
        %v1982 = vcvt.s32.f32 %v1470
        %v1983 = vcvt.s32.f32 %v1471
        %v1984 = vcvt.s32.f32 %v1472
        %v1985 = vcvt.s32.f32 %v1473
        %v1986 = vcvt.s32.f32 %v1474
        %v1987 = vcvt.s32.f32 %v1475
        %v1988 = vcvt.s32.f32 %v1476
        %v1989 = vcvt.s32.f32 %v1477
        %v1990 = vcvt.s32.f32 %v1478
        %v1991 = vcvt.s32.f32 %v1479
        %v1992 = vcvt.s32.f32 %v1480
        %v1993 = vcvt.s32.f32 %v1481
        %v1994 = vcvt.s32.f32 %v1482
        %v1995 = vcvt.s32.f32 %v1483
        %v1996 = vcvt.s32.f32 %v1484
        %v1997 = vcvt.s32.f32 %v1485
        %v1998 = vcvt.s32.f32 %v1486
        %v1999 = vcvt.s32.f32 %v1487
        %v2000 = vcvt.s32.f32 %v1488
        %v2001 = vcvt.s32.f32 %v1489
        %v2002 = vcvt.s32.f32 %v1490
        %v2003 = vcvt.s32.f32 %v1491
        %v2004 = vcvt.s32.f32 %v1492
        %v2005 = vcvt.s32.f32 %v1493
        %v2006 = vcvt.s32.f32 %v1494
        %v2007 = vcvt.s32.f32 %v1495
        %v2008 = vcvt.s32.f32 %v1496
        %v2009 = vcvt.s32.f32 %v1497
        %v2010 = vcvt.s32.f32 %v1498
        %v2011 = vcvt.s32.f32 %v1499
        %v2012 = vcvt.s32.f32 %v1500
        %v2013 = vcvt.s32.f32 %v1501
        %v2014 = vcvt.s32.f32 %v1502
        %v2015 = vcvt.s32.f32 %v1503
        %v2016 = vcvt.s32.f32 %v1504
        %v2017 = vcvt.s32.f32 %v1505
        %v2018 = vcvt.s32.f32 %v1506
        %v2019 = vcvt.s32.f32 %v1507
        %v2020 = vcvt.s32.f32 %v1508
        %v2021 = vcvt.s32.f32 %v1509
        %v2022 = vcvt.s32.f32 %v1510
        %v2023 = vcvt.s32.f32 %v1511
        %v2024 = vcvt.s32.f32 %v1512
        %v2025 = vcvt.s32.f32 %v1513
        %v2026 = vcvt.s32.f32 %v1514
        %v2027 = vcvt.s32.f32 %v1515
        %v2028 = vcvt.s32.f32 %v1516
        %v2029 = vcvt.s32.f32 %v1517
        %v2030 = vcvt.s32.f32 %v1518
        %v2031 = vcvt.s32.f32 %v1519
        %v2032 = vcvt.s32.f32 %v1520
        %v2033 = vcvt.s32.f32 %v1521
        %v2034 = vcvt.s32.f32 %v1522
        %v2035 = vcvt.s32.f32 %v1523
        %v2036 = vcvt.s32.f32 %v1524
        %v2037 = vcvt.s32.f32 %v1525
        %v2038 = vcvt.s32.f32 %v1526
        %v2039 = vcvt.s32.f32 %v1527
        %v2040 = vcvt.s32.f32 %v1528
        %v2041 = vcvt.s32.f32 %v1529
        %v2042 = vcvt.s32.f32 %v1530
        %v2043 = vcvt.s32.f32 %v1531
        %v2044 = vcvt.s32.f32 %v1532
        %v2045 = vcvt.s32.f32 %v1533
        %v2046 = vcvt.s32.f32 %v1534
        %v2047 = vcvt.s32.f32 %v1535
        %v2048 = vcvt.s32.f32 %v1536
        %v2049 = vcvt.s32.f32 %v1537
        %v2050 = vcvt.s32.f32 %v1538
        %v2051 = vcvt.s32.f32 %v1539
        %v2052 = vcvt.s32.f32 %v1540
        %v2053 = vcvt.s32.f32 %v1541
        %v2054 = vcvt.s32.f32 %v1542
        %v2055 = vcvt.s32.f32 %v1543
        %v2056 = vcvt.s32.f32 %v1544
        %v2057 = vcvt.s32.f32 %v1545
        %v2058 = vcvt.s32.f32 %v1546
        %v2059 = vcvt.s32.f32 %v1547
        %v2060 = vcvt.s32.f32 %v1548
        %v2061 = vcvt.s32.f32 %v1549
        %v2062 = vcvt.s32.f32 %v1550
        %v2063 = vcvt.s32.f32 %v1551
        %v2064 = vcvt.s32.f32 %v1552
        %v2065 = vcvt.s32.f32 %v1553
        %v2066 = vcvt.s32.f32 %v1554
        %v2067 = vcvt.s32.f32 %v1555
        %v2068 = vcvt.s32.f32 %v1556
        %v2069 = vcvt.s32.f32 %v1557
        %v2070 = vcvt.s32.f32 %v1558
        %v2071 = vcvt.s32.f32 %v1559
        %v2072 = vcvt.s32.f32 %v1560
        %v2073 = vcvt.s32.f32 %v1561
        %v2074 = vcvt.s32.f32 %v1562
        %v2075 = vcvt.s32.f32 %v1563
        %v2076 = vcvt.s32.f32 %v1564
        %v2077 = vcvt.s32.f32 %v1565
        %v2078 = vcvt.s32.f32 %v1566
        %v2079 = vcvt.s32.f32 %v1567
        %v2080 = vcvt.s32.f32 %v1568
        %v2081 = vcvt.s32.f32 %v1569
        %v2082 = vcvt.s32.f32 %v1570
        %v2083 = vcvt.s32.f32 %v1571
        %v2084 = vcvt.s32.f32 %v1572
        %v2085 = vcvt.s32.f32 %v1573
        %v2086 = vcvt.s32.f32 %v1574
        %v2087 = vcvt.s32.f32 %v1575
        %v2088 = vcvt.s32.f32 %v1576
        %v2089 = vcvt.s32.f32 %v1577
        %v2090 = vcvt.s32.f32 %v1578
        %v2091 = vcvt.s32.f32 %v1579
        %v2092 = vcvt.s32.f32 %v1580
        %v2093 = vcvt.s32.f32 %v1581
        %v2094 = vcvt.s32.f32 %v1582
        %v2095 = vcvt.s32.f32 %v1583
        %v2096 = vcvt.s32.f32 %v1584
        %v2097 = vcvt.s32.f32 %v1585
        %v2098 = vcvt.s32.f32 %v1586
        %v2099 = vcvt.s32.f32 %v1587
        %v2100 = vcvt.s32.f32 %v1588
        %v2101 = vcvt.s32.f32 %v1589
        %v2102 = vcvt.s32.f32 %v1590
        %v2103 = vcvt.s32.f32 %v1591
        %v2104 = vcvt.s32.f32 %v1592
        %v2105 = vcvt.s32.f32 %v1593
        %v2106 = vcvt.s32.f32 %v1594
        %v2107 = vcvt.s32.f32 %v1595
        %v2108 = vcvt.s32.f32 %v1596
        %v2109 = vcvt.s32.f32 %v1597
        %v2110 = vcvt.s32.f32 %v1598
        %v2111 = vcvt.s32.f32 %v1599
        %v2112 = vcvt.s32.f32 %v1600
        %v2113 = vcvt.s32.f32 %v1601
        %v2114 = vcvt.s32.f32 %v1602
        %v2115 = vcvt.s32.f32 %v1603
        %v2116 = vcvt.s32.f32 %v1604
        %v2117 = vcvt.s32.f32 %v1605
        %v2118 = vcvt.s32.f32 %v1606
        %v2119 = vcvt.s32.f32 %v1607
        %v2120 = vcvt.s32.f32 %v1608
        %v2121 = vcvt.s32.f32 %v1609
        %v2122 = vcvt.s32.f32 %v1610
        %v2123 = vcvt.s32.f32 %v1611
        %v2124 = vcvt.s32.f32 %v1612
        %v2125 = vcvt.s32.f32 %v1613
        %v2126 = vcvt.s32.f32 %v1614
        %v2127 = vcvt.s32.f32 %v1615
        %v2128 = vcvt.s32.f32 %v1616
        %v2129 = vcvt.s32.f32 %v1617
        %v2130 = vcvt.s32.f32 %v1618
        %v2131 = vcvt.s32.f32 %v1619
        %v2132 = vcvt.s32.f32 %v1620
        %v2133 = vcvt.s32.f32 %v1621
        %v2134 = vcvt.s32.f32 %v1622
        %v2135 = vcvt.s32.f32 %v1623
        %v2136 = vcvt.s32.f32 %v1624
        %v2137 = vcvt.s32.f32 %v1625
        %v2138 = vcvt.s32.f32 %v1626
        %v2139 = vcvt.s32.f32 %v1627
        %v2140 = vcvt.s32.f32 %v1628
        %v2141 = vcvt.s32.f32 %v1629
        %v2142 = vcvt.s32.f32 %v1630
        %v2143 = vcvt.s32.f32 %v1631
        %v2144 = vcvt.s32.f32 %v1632
        %v2145 = vcvt.s32.f32 %v1633
        %v2146 = vcvt.s32.f32 %v1634
        %v2147 = vcvt.s32.f32 %v1635
        %v2148 = vcvt.s32.f32 %v1636
        %v2149 = vcvt.s32.f32 %v1637
        %v2150 = vcvt.s32.f32 %v1638
        %v2151 = vcvt.s32.f32 %v1639
        %v2152 = vcvt.s32.f32 %v1640
        %v2153 = vcvt.s32.f32 %v1641
        %v2154 = vcvt.s32.f32 %v1642
        %v2155 = vcvt.s32.f32 %v1643
        %v2156 = vcvt.s32.f32 %v1644
        %v2157 = vcvt.s32.f32 %v1645
        %v2158 = vcvt.s32.f32 %v1646
        %v2159 = vcvt.s32.f32 %v1647
        %v2160 = vcvt.s32.f32 %v1648
        %v2161 = vcvt.s32.f32 %v1649
        %v2162 = vcvt.s32.f32 %v1650
        %v2163 = vcvt.s32.f32 %v1651
        %v2164 = vcvt.s32.f32 %v1652
        %v2165 = vcvt.s32.f32 %v1653
        %v2166 = vcvt.s32.f32 %v1654
        %v2167 = vcvt.s32.f32 %v1655
        %v2168 = vcvt.s32.f32 %v1656
        %v2169 = vcvt.s32.f32 %v1657
        %v2170 = vcvt.s32.f32 %v1658
        %v2171 = vcvt.s32.f32 %v1659
        %v2172 = vcvt.s32.f32 %v1660
        %v2173 = vcvt.s32.f32 %v1661
        %v2174 = vcvt.s32.f32 %v1662
        %v2175 = vcvt.s32.f32 %v1663
        %v2176 = vcvt.s32.f32 %v1664
        %v2177 = vcvt.s32.f32 %v1665
        %v2178 = vcvt.s32.f32 %v1666
        %v2179 = vcvt.s32.f32 %v1667
        %v2180 = vcvt.s32.f32 %v1668
        %v2181 = vcvt.s32.f32 %v1669
        %v2182 = vcvt.s32.f32 %v1670
        %v2183 = vcvt.s32.f32 %v1671
        %v2184 = vcvt.s32.f32 %v1672
        %v2185 = vcvt.s32.f32 %v1673
        %v2186 = vcvt.s32.f32 %v1674
        %v2187 = vcvt.s32.f32 %v1675
        %v2188 = vcvt.s32.f32 %v1676
        %v2189 = vcvt.s32.f32 %v1677
        %v2190 = vcvt.s32.f32 %v1678
        %v2191 = vcvt.s32.f32 %v1679
        %v2192 = vcvt.s32.f32 %v1680
        %v2193 = vcvt.s32.f32 %v1681
        %v2194 = vcvt.s32.f32 %v1682
        %v2195 = vcvt.s32.f32 %v1683
        %v2196 = vcvt.s32.f32 %v1684
        %v2197 = vcvt.s32.f32 %v1685
        %v2198 = vcvt.s32.f32 %v1686
        %v2199 = vcvt.s32.f32 %v1687
        %v2200 = vcvt.s32.f32 %v1688
        %v2201 = vcvt.s32.f32 %v1689
        %v2202 = vcvt.s32.f32 %v1690
        %v2203 = vcvt.s32.f32 %v1691
        %v2204 = vcvt.s32.f32 %v1692
        %v2205 = vcvt.s32.f32 %v1693
        %v2206 = vcvt.s32.f32 %v1694
        %v2207 = vcvt.s32.f32 %v1695
        %v2208 = vcvt.s32.f32 %v1696
        %v2209 = vcvt.s32.f32 %v1697
        %v2210 = vcvt.s32.f32 %v1698
        %v2211 = vcvt.s32.f32 %v1699
        %v2212 = vcvt.s32.f32 %v1700
        %v2213 = vcvt.s32.f32 %v1701
        %v2214 = vcvt.s32.f32 %v1702
        %v2215 = vcvt.s32.f32 %v1703
        %v2216 = vcvt.s32.f32 %v1704
        %v2217 = vcvt.s32.f32 %v1705
        %v2218 = vcvt.s32.f32 %v1706
        %v2219 = vcvt.s32.f32 %v1707
        %v2220 = vcvt.s32.f32 %v1708
        %v2221 = vcvt.s32.f32 %v1709
        %v2222 = vcvt.s32.f32 %v1710
        %v2223 = vcvt.s32.f32 %v1711
        %v2224 = vcvt.s32.f32 %v1712
        %v2225 = vcvt.s32.f32 %v1713
        %v2226 = vcvt.s32.f32 %v1714
        %v2227 = vcvt.s32.f32 %v1715
        %v2228 = vcvt.s32.f32 %v1716
        %v2229 = vcvt.s32.f32 %v1717
        %v2230 = vcvt.s32.f32 %v1718
        %v2231 = vcvt.s32.f32 %v1719
        %v2232 = vcvt.s32.f32 %v1720
        %v2233 = vcvt.s32.f32 %v1721
        %v2234 = vcvt.s32.f32 %v1722
        %v2235 = vcvt.s32.f32 %v1723
        %v2236 = vcvt.s32.f32 %v1724
        %v2237 = vcvt.s32.f32 %v1725
        %v2238 = vcvt.s32.f32 %v1726
        %v2239 = vcvt.s32.f32 %v1727
        %v2240 = vcvt.s32.f32 %v1728
        %v2241 = vcvt.s32.f32 %v1729
        %v2242 = vcvt.s32.f32 %v1730
        %v2243 = vcvt.s32.f32 %v1731
        %v2244 = vcvt.s32.f32 %v1732
        %v2245 = vcvt.s32.f32 %v1733
        %v2246 = vcvt.s32.f32 %v1734
        %v2247 = vcvt.s32.f32 %v1735
        %v2248 = vcvt.s32.f32 %v1736
        %v2249 = vcvt.s32.f32 %v1737
        %v2250 = vcvt.s32.f32 %v1738
        %v2251 = vcvt.s32.f32 %v1739
        %v2252 = vcvt.s32.f32 %v1740
        %v2253 = vcvt.s32.f32 %v1741
        %v2254 = vcvt.s32.f32 %v1742
        %v2255 = vcvt.s32.f32 %v1743
        %v2256 = vcvt.s32.f32 %v1744
        %v2257 = vcvt.s32.f32 %v1745
        %v2258 = vcvt.s32.f32 %v1746
        %v2259 = vcvt.s32.f32 %v1747
        %v2260 = vcvt.s32.f32 %v1748
        %v2261 = vcvt.s32.f32 %v1749
        %v2262 = vcvt.s32.f32 %v1750
        %v2263 = vcvt.s32.f32 %v1751
        %v2264 = vcvt.s32.f32 %v1752
        %v2265 = vcvt.s32.f32 %v1753
        %v2266 = vcvt.s32.f32 %v1754
        %v2267 = vcvt.s32.f32 %v1755
        %v2268 = vcvt.s32.f32 %v1756
        %v2269 = vcvt.s32.f32 %v1757
        %v2270 = vcvt.s32.f32 %v1758
        %v2271 = vcvt.s32.f32 %v1759
        %v2272 = vcvt.s32.f32 %v1760
        %v2273 = vcvt.s32.f32 %v1761
        %v2274 = vcvt.s32.f32 %v1762
        %v2275 = vcvt.s32.f32 %v1763
        %v2276 = vcvt.s32.f32 %v1764
        %v2277 = vcvt.s32.f32 %v1765
        %v2278 = vcvt.s32.f32 %v1766
        %v2279 = vcvt.s32.f32 %v1767
        %v2280 = vcvt.s32.f32 %v1768
        %v2281 = vcvt.s32.f32 %v1769
        %v2282 = vcvt.s32.f32 %v1770
        %v2283 = vcvt.s32.f32 %v1771
        %v2284 = vcvt.s32.f32 %v1772
        %v2285 = vcvt.s32.f32 %v1773
        %v2286 = vcvt.s32.f32 %v1774
        %v2287 = vcvt.s32.f32 %v1775
        %v2288 = vcvt.s32.f32 %v1776
        %v2289 = vcvt.s32.f32 %v1777
        %v2290 = vcvt.s32.f32 %v1778
        %v2291 = vcvt.s32.f32 %v1779
        %v2292 = vcvt.s32.f32 %v1780
        %v2293 = vcvt.s32.f32 %v1781
        %v2294 = vcvt.s32.f32 %v1782
        %v2295 = vcvt.s32.f32 %v1783
        %v2296 = vcvt.s32.f32 %v1784
        %v2297 = vcvt.s32.f32 %v1785
        %v2298 = vcvt.s32.f32 %v1786
        %v2299 = vcvt.s32.f32 %v1787
        %v2300 = vcvt.s32.f32 %v1788
        %v2301 = vcvt.s32.f32 %v1789
        %v2302 = vcvt.s32.f32 %v1790
        %v2303 = vcvt.s32.f32 %v1791
        %v2304 = vcvt.s32.f32 %v1792
        %v2305 = vpack.c.bf16 %v1801, %v1793
        %v2306 = vpack.c.bf16 %v1802, %v1794
        %v2307 = vpack.c.bf16 %v1803, %v1795
        %v2308 = vpack.c.bf16 %v1804, %v1796
        %v2309 = vpack.c.bf16 %v1805, %v1797
        %v2310 = vpack.c.bf16 %v1806, %v1798
        %v2311 = vpack.c.bf16 %v1807, %v1799
        %v2312 = vpack.c.bf16 %v1808, %v1800
        %v2313 = vpack.c.bf16 %v1817, %v1809
        %v2314 = vpack.c.bf16 %v1818, %v1810
        %v2315 = vpack.c.bf16 %v1819, %v1811
        %v2316 = vpack.c.bf16 %v1820, %v1812
        %v2317 = vpack.c.bf16 %v1821, %v1813
        %v2318 = vpack.c.bf16 %v1822, %v1814
        %v2319 = vpack.c.bf16 %v1823, %v1815
        %v2320 = vpack.c.bf16 %v1824, %v1816
        %v2321 = vpack.c.bf16 %v1833, %v1825
        %v2322 = vpack.c.bf16 %v1834, %v1826
        %v2323 = vpack.c.bf16 %v1835, %v1827
        %v2324 = vpack.c.bf16 %v1836, %v1828
        %v2325 = vpack.c.bf16 %v1837, %v1829
        %v2326 = vpack.c.bf16 %v1838, %v1830
        %v2327 = vpack.c.bf16 %v1839, %v1831
        %v2328 = vpack.c.bf16 %v1840, %v1832
        %v2329 = vpack.c.bf16 %v1849, %v1841
        %v2330 = vpack.c.bf16 %v1850, %v1842
        %v2331 = vpack.c.bf16 %v1851, %v1843
        %v2332 = vpack.c.bf16 %v1852, %v1844
        %v2333 = vpack.c.bf16 %v1853, %v1845
        %v2334 = vpack.c.bf16 %v1854, %v1846
        %v2335 = vpack.c.bf16 %v1855, %v1847
        %v2336 = vpack.c.bf16 %v1856, %v1848
        %v2337 = vpack.c.bf16 %v1865, %v1857
        %v2338 = vpack.c.bf16 %v1866, %v1858
        %v2339 = vpack.c.bf16 %v1867, %v1859
        %v2340 = vpack.c.bf16 %v1868, %v1860
        %v2341 = vpack.c.bf16 %v1869, %v1861
        %v2342 = vpack.c.bf16 %v1870, %v1862
        %v2343 = vpack.c.bf16 %v1871, %v1863
        %v2344 = vpack.c.bf16 %v1872, %v1864
        %v2345 = vpack.c.bf16 %v1881, %v1873
        %v2346 = vpack.c.bf16 %v1882, %v1874
        %v2347 = vpack.c.bf16 %v1883, %v1875
        %v2348 = vpack.c.bf16 %v1884, %v1876
        %v2349 = vpack.c.bf16 %v1885, %v1877
        %v2350 = vpack.c.bf16 %v1886, %v1878
        %v2351 = vpack.c.bf16 %v1887, %v1879
        %v2352 = vpack.c.bf16 %v1888, %v1880
        %v2353 = vpack.c.bf16 %v1897, %v1889
        %v2354 = vpack.c.bf16 %v1898, %v1890
        %v2355 = vpack.c.bf16 %v1899, %v1891
        %v2356 = vpack.c.bf16 %v1900, %v1892
        %v2357 = vpack.c.bf16 %v1901, %v1893
        %v2358 = vpack.c.bf16 %v1902, %v1894
        %v2359 = vpack.c.bf16 %v1903, %v1895
        %v2360 = vpack.c.bf16 %v1904, %v1896
        %v2361 = vpack.c.bf16 %v1913, %v1905
        %v2362 = vpack.c.bf16 %v1914, %v1906
        %v2363 = vpack.c.bf16 %v1915, %v1907
        %v2364 = vpack.c.bf16 %v1916, %v1908
        %v2365 = vpack.c.bf16 %v1917, %v1909
        %v2366 = vpack.c.bf16 %v1918, %v1910
        %v2367 = vpack.c.bf16 %v1919, %v1911
        %v2368 = vpack.c.bf16 %v1920, %v1912
        %v2369 = vpack.c.bf16 %v1929, %v1921
        %v2370 = vpack.c.bf16 %v1930, %v1922
        %v2371 = vpack.c.bf16 %v1931, %v1923
        %v2372 = vpack.c.bf16 %v1932, %v1924
        %v2373 = vpack.c.bf16 %v1933, %v1925
        %v2374 = vpack.c.bf16 %v1934, %v1926
        %v2375 = vpack.c.bf16 %v1935, %v1927
        %v2376 = vpack.c.bf16 %v1936, %v1928
        %v2377 = vpack.c.bf16 %v1945, %v1937
        %v2378 = vpack.c.bf16 %v1946, %v1938
        %v2379 = vpack.c.bf16 %v1947, %v1939
        %v2380 = vpack.c.bf16 %v1948, %v1940
        %v2381 = vpack.c.bf16 %v1949, %v1941
        %v2382 = vpack.c.bf16 %v1950, %v1942
        %v2383 = vpack.c.bf16 %v1951, %v1943
        %v2384 = vpack.c.bf16 %v1952, %v1944
        %v2385 = vpack.c.bf16 %v1961, %v1953
        %v2386 = vpack.c.bf16 %v1962, %v1954
        %v2387 = vpack.c.bf16 %v1963, %v1955
        %v2388 = vpack.c.bf16 %v1964, %v1956
        %v2389 = vpack.c.bf16 %v1965, %v1957
        %v2390 = vpack.c.bf16 %v1966, %v1958
        %v2391 = vpack.c.bf16 %v1967, %v1959
        %v2392 = vpack.c.bf16 %v1968, %v1960
        %v2393 = vpack.c.bf16 %v1977, %v1969
        %v2394 = vpack.c.bf16 %v1978, %v1970
        %v2395 = vpack.c.bf16 %v1979, %v1971
        %v2396 = vpack.c.bf16 %v1980, %v1972
        %v2397 = vpack.c.bf16 %v1981, %v1973
        %v2398 = vpack.c.bf16 %v1982, %v1974
        %v2399 = vpack.c.bf16 %v1983, %v1975
        %v2400 = vpack.c.bf16 %v1984, %v1976
        %v2401 = vpack.c.bf16 %v1993, %v1985
        %v2402 = vpack.c.bf16 %v1994, %v1986
        %v2403 = vpack.c.bf16 %v1995, %v1987
        %v2404 = vpack.c.bf16 %v1996, %v1988
        %v2405 = vpack.c.bf16 %v1997, %v1989
        %v2406 = vpack.c.bf16 %v1998, %v1990
        %v2407 = vpack.c.bf16 %v1999, %v1991
        %v2408 = vpack.c.bf16 %v2000, %v1992
        %v2409 = vpack.c.bf16 %v2009, %v2001
        %v2410 = vpack.c.bf16 %v2010, %v2002
        %v2411 = vpack.c.bf16 %v2011, %v2003
        %v2412 = vpack.c.bf16 %v2012, %v2004
        %v2413 = vpack.c.bf16 %v2013, %v2005
        %v2414 = vpack.c.bf16 %v2014, %v2006
        %v2415 = vpack.c.bf16 %v2015, %v2007
        %v2416 = vpack.c.bf16 %v2016, %v2008
        %v2417 = vpack.c.bf16 %v2025, %v2017
        %v2418 = vpack.c.bf16 %v2026, %v2018
        %v2419 = vpack.c.bf16 %v2027, %v2019
        %v2420 = vpack.c.bf16 %v2028, %v2020
        %v2421 = vpack.c.bf16 %v2029, %v2021
        %v2422 = vpack.c.bf16 %v2030, %v2022
        %v2423 = vpack.c.bf16 %v2031, %v2023
        %v2424 = vpack.c.bf16 %v2032, %v2024
        %v2425 = vpack.c.bf16 %v2041, %v2033
        %v2426 = vpack.c.bf16 %v2042, %v2034
        %v2427 = vpack.c.bf16 %v2043, %v2035
        %v2428 = vpack.c.bf16 %v2044, %v2036
        %v2429 = vpack.c.bf16 %v2045, %v2037
        %v2430 = vpack.c.bf16 %v2046, %v2038
        %v2431 = vpack.c.bf16 %v2047, %v2039
        %v2432 = vpack.c.bf16 %v2048, %v2040
        %v2433 = vpack.c.bf16 %v2057, %v2049
        %v2434 = vpack.c.bf16 %v2058, %v2050
        %v2435 = vpack.c.bf16 %v2059, %v2051
        %v2436 = vpack.c.bf16 %v2060, %v2052
        %v2437 = vpack.c.bf16 %v2061, %v2053
        %v2438 = vpack.c.bf16 %v2062, %v2054
        %v2439 = vpack.c.bf16 %v2063, %v2055
        %v2440 = vpack.c.bf16 %v2064, %v2056
        %v2441 = vpack.c.bf16 %v2073, %v2065
        %v2442 = vpack.c.bf16 %v2074, %v2066
        %v2443 = vpack.c.bf16 %v2075, %v2067
        %v2444 = vpack.c.bf16 %v2076, %v2068
        %v2445 = vpack.c.bf16 %v2077, %v2069
        %v2446 = vpack.c.bf16 %v2078, %v2070
        %v2447 = vpack.c.bf16 %v2079, %v2071
        %v2448 = vpack.c.bf16 %v2080, %v2072
        %v2449 = vpack.c.bf16 %v2089, %v2081
        %v2450 = vpack.c.bf16 %v2090, %v2082
        %v2451 = vpack.c.bf16 %v2091, %v2083
        %v2452 = vpack.c.bf16 %v2092, %v2084
        %v2453 = vpack.c.bf16 %v2093, %v2085
        %v2454 = vpack.c.bf16 %v2094, %v2086
        %v2455 = vpack.c.bf16 %v2095, %v2087
        %v2456 = vpack.c.bf16 %v2096, %v2088
        %v2457 = vpack.c.bf16 %v2105, %v2097
        %v2458 = vpack.c.bf16 %v2106, %v2098
        %v2459 = vpack.c.bf16 %v2107, %v2099
        %v2460 = vpack.c.bf16 %v2108, %v2100
        %v2461 = vpack.c.bf16 %v2109, %v2101
        %v2462 = vpack.c.bf16 %v2110, %v2102
        %v2463 = vpack.c.bf16 %v2111, %v2103
        %v2464 = vpack.c.bf16 %v2112, %v2104
        %v2465 = vpack.c.bf16 %v2121, %v2113
        %v2466 = vpack.c.bf16 %v2122, %v2114
        %v2467 = vpack.c.bf16 %v2123, %v2115
        %v2468 = vpack.c.bf16 %v2124, %v2116
        %v2469 = vpack.c.bf16 %v2125, %v2117
        %v2470 = vpack.c.bf16 %v2126, %v2118
        %v2471 = vpack.c.bf16 %v2127, %v2119
        %v2472 = vpack.c.bf16 %v2128, %v2120
        %v2473 = vpack.c.bf16 %v2137, %v2129
        %v2474 = vpack.c.bf16 %v2138, %v2130
        %v2475 = vpack.c.bf16 %v2139, %v2131
        %v2476 = vpack.c.bf16 %v2140, %v2132
        %v2477 = vpack.c.bf16 %v2141, %v2133
        %v2478 = vpack.c.bf16 %v2142, %v2134
        %v2479 = vpack.c.bf16 %v2143, %v2135
        %v2480 = vpack.c.bf16 %v2144, %v2136
        %v2481 = vpack.c.bf16 %v2153, %v2145
        %v2482 = vpack.c.bf16 %v2154, %v2146
        %v2483 = vpack.c.bf16 %v2155, %v2147
        %v2484 = vpack.c.bf16 %v2156, %v2148
        %v2485 = vpack.c.bf16 %v2157, %v2149
        %v2486 = vpack.c.bf16 %v2158, %v2150
        %v2487 = vpack.c.bf16 %v2159, %v2151
        %v2488 = vpack.c.bf16 %v2160, %v2152
        %v2489 = vpack.c.bf16 %v2169, %v2161
        %v2490 = vpack.c.bf16 %v2170, %v2162
        %v2491 = vpack.c.bf16 %v2171, %v2163
        %v2492 = vpack.c.bf16 %v2172, %v2164
        %v2493 = vpack.c.bf16 %v2173, %v2165
        %v2494 = vpack.c.bf16 %v2174, %v2166
        %v2495 = vpack.c.bf16 %v2175, %v2167
        %v2496 = vpack.c.bf16 %v2176, %v2168
        %v2497 = vpack.c.bf16 %v2185, %v2177
        %v2498 = vpack.c.bf16 %v2186, %v2178
        %v2499 = vpack.c.bf16 %v2187, %v2179
        %v2500 = vpack.c.bf16 %v2188, %v2180
        %v2501 = vpack.c.bf16 %v2189, %v2181
        %v2502 = vpack.c.bf16 %v2190, %v2182
        %v2503 = vpack.c.bf16 %v2191, %v2183
        %v2504 = vpack.c.bf16 %v2192, %v2184
        %v2505 = vpack.c.bf16 %v2201, %v2193
        %v2506 = vpack.c.bf16 %v2202, %v2194
        %v2507 = vpack.c.bf16 %v2203, %v2195
        %v2508 = vpack.c.bf16 %v2204, %v2196
        %v2509 = vpack.c.bf16 %v2205, %v2197
        %v2510 = vpack.c.bf16 %v2206, %v2198
        %v2511 = vpack.c.bf16 %v2207, %v2199
        %v2512 = vpack.c.bf16 %v2208, %v2200
        %v2513 = vpack.c.bf16 %v2217, %v2209
        %v2514 = vpack.c.bf16 %v2218, %v2210
        %v2515 = vpack.c.bf16 %v2219, %v2211
        %v2516 = vpack.c.bf16 %v2220, %v2212
        %v2517 = vpack.c.bf16 %v2221, %v2213
        %v2518 = vpack.c.bf16 %v2222, %v2214
        %v2519 = vpack.c.bf16 %v2223, %v2215
        %v2520 = vpack.c.bf16 %v2224, %v2216
        %v2521 = vpack.c.bf16 %v2233, %v2225
        %v2522 = vpack.c.bf16 %v2234, %v2226
        %v2523 = vpack.c.bf16 %v2235, %v2227
        %v2524 = vpack.c.bf16 %v2236, %v2228
        %v2525 = vpack.c.bf16 %v2237, %v2229
        %v2526 = vpack.c.bf16 %v2238, %v2230
        %v2527 = vpack.c.bf16 %v2239, %v2231
        %v2528 = vpack.c.bf16 %v2240, %v2232
        %v2529 = vpack.c.bf16 %v2249, %v2241
        %v2530 = vpack.c.bf16 %v2250, %v2242
        %v2531 = vpack.c.bf16 %v2251, %v2243
        %v2532 = vpack.c.bf16 %v2252, %v2244
        %v2533 = vpack.c.bf16 %v2253, %v2245
        %v2534 = vpack.c.bf16 %v2254, %v2246
        %v2535 = vpack.c.bf16 %v2255, %v2247
        %v2536 = vpack.c.bf16 %v2256, %v2248
        %v2537 = vpack.c.bf16 %v2265, %v2257
        %v2538 = vpack.c.bf16 %v2266, %v2258
        %v2539 = vpack.c.bf16 %v2267, %v2259
        %v2540 = vpack.c.bf16 %v2268, %v2260
        %v2541 = vpack.c.bf16 %v2269, %v2261
        %v2542 = vpack.c.bf16 %v2270, %v2262
        %v2543 = vpack.c.bf16 %v2271, %v2263
        %v2544 = vpack.c.bf16 %v2272, %v2264
        %v2545 = vpack.c.bf16 %v2281, %v2273
        %v2546 = vpack.c.bf16 %v2282, %v2274
        %v2547 = vpack.c.bf16 %v2283, %v2275
        %v2548 = vpack.c.bf16 %v2284, %v2276
        %v2549 = vpack.c.bf16 %v2285, %v2277
        %v2550 = vpack.c.bf16 %v2286, %v2278
        %v2551 = vpack.c.bf16 %v2287, %v2279
        %v2552 = vpack.c.bf16 %v2288, %v2280
        %v2553 = vpack.c.bf16 %v2297, %v2289
        %v2554 = vpack.c.bf16 %v2298, %v2290
        %v2555 = vpack.c.bf16 %v2299, %v2291
        %v2556 = vpack.c.bf16 %v2300, %v2292
        %v2557 = vpack.c.bf16 %v2301, %v2293
        %v2558 = vpack.c.bf16 %v2302, %v2294
        %v2559 = vpack.c.bf16 %v2303, %v2295
        %v2560 = vpack.c.bf16 %v2304, %v2296
        %vm2561 = vcmp.eq.f32.partialorder %v412, %v452
        %vm2562 = vcmp.eq.f32.partialorder %v416, %v452
        %vm2563 = vcmp.eq.f32.partialorder %v420, %v452
        %vm2564 = vcmp.eq.f32.partialorder %v424, %v452
        %vm2565 = vcmp.eq.f32.partialorder %v428, %v452
        %vm2566 = vcmp.eq.f32.partialorder %v432, %v452
        %vm2567 = vcmp.eq.f32.partialorder %v436, %v452
        %vm2568 = vcmp.eq.f32.partialorder %v440, %v452
        %vm2569 = vcmp.eq.f32.partialorder %v412, %v457
        %vm2570 = vcmp.eq.f32.partialorder %v416, %v457
        %vm2571 = vcmp.eq.f32.partialorder %v420, %v457
        %vm2572 = vcmp.eq.f32.partialorder %v424, %v457
        %vm2573 = vcmp.eq.f32.partialorder %v428, %v457
        %vm2574 = vcmp.eq.f32.partialorder %v432, %v457
        %vm2575 = vcmp.eq.f32.partialorder %v436, %v457
        %vm2576 = vcmp.eq.f32.partialorder %v440, %v457
        %vm2577 = vcmp.eq.f32.partialorder %v412, %v462
        %vm2578 = vcmp.eq.f32.partialorder %v416, %v462
        %vm2579 = vcmp.eq.f32.partialorder %v420, %v462
        %vm2580 = vcmp.eq.f32.partialorder %v424, %v462
        %vm2581 = vcmp.eq.f32.partialorder %v428, %v462
        %vm2582 = vcmp.eq.f32.partialorder %v432, %v462
        %vm2583 = vcmp.eq.f32.partialorder %v436, %v462
        %vm2584 = vcmp.eq.f32.partialorder %v440, %v462
        %vm2585 = vcmp.eq.f32.partialorder %v412, %v467
        %vm2586 = vcmp.eq.f32.partialorder %v416, %v467
        %vm2587 = vcmp.eq.f32.partialorder %v420, %v467
        %vm2588 = vcmp.eq.f32.partialorder %v424, %v467
        %vm2589 = vcmp.eq.f32.partialorder %v428, %v467
        %vm2590 = vcmp.eq.f32.partialorder %v432, %v467
        %vm2591 = vcmp.eq.f32.partialorder %v436, %v467
        %vm2592 = vcmp.eq.f32.partialorder %v440, %v467
        %vm2593 = vcmp.eq.f32.partialorder %v412, %v472
        %vm2594 = vcmp.eq.f32.partialorder %v416, %v472
        %vm2595 = vcmp.eq.f32.partialorder %v420, %v472
        %vm2596 = vcmp.eq.f32.partialorder %v424, %v472
        %vm2597 = vcmp.eq.f32.partialorder %v428, %v472
        %vm2598 = vcmp.eq.f32.partialorder %v432, %v472
        %vm2599 = vcmp.eq.f32.partialorder %v436, %v472
        %vm2600 = vcmp.eq.f32.partialorder %v440, %v472
        %vm2601 = vcmp.eq.f32.partialorder %v412, %v477
        %vm2602 = vcmp.eq.f32.partialorder %v416, %v477
        %vm2603 = vcmp.eq.f32.partialorder %v420, %v477
        %vm2604 = vcmp.eq.f32.partialorder %v424, %v477
        %vm2605 = vcmp.eq.f32.partialorder %v428, %v477
        %vm2606 = vcmp.eq.f32.partialorder %v432, %v477
        %vm2607 = vcmp.eq.f32.partialorder %v436, %v477
        %vm2608 = vcmp.eq.f32.partialorder %v440, %v477
        %vm2609 = vcmp.eq.f32.partialorder %v412, %v482
        %vm2610 = vcmp.eq.f32.partialorder %v416, %v482
        %vm2611 = vcmp.eq.f32.partialorder %v420, %v482
        %vm2612 = vcmp.eq.f32.partialorder %v424, %v482
        %vm2613 = vcmp.eq.f32.partialorder %v428, %v482
        %vm2614 = vcmp.eq.f32.partialorder %v432, %v482
        %vm2615 = vcmp.eq.f32.partialorder %v436, %v482
        %vm2616 = vcmp.eq.f32.partialorder %v440, %v482
        %vm2617 = vcmp.eq.f32.partialorder %v412, %v487
        %vm2618 = vcmp.eq.f32.partialorder %v416, %v487
        %vm2619 = vcmp.eq.f32.partialorder %v420, %v487
        %vm2620 = vcmp.eq.f32.partialorder %v424, %v487
        %vm2621 = vcmp.eq.f32.partialorder %v428, %v487
        %vm2622 = vcmp.eq.f32.partialorder %v432, %v487
        %vm2623 = vcmp.eq.f32.partialorder %v436, %v487
        %vm2624 = vcmp.eq.f32.partialorder %v440, %v487
        %vm2625 = vcmp.eq.f32.partialorder %v412, %v492
        %vm2626 = vcmp.eq.f32.partialorder %v416, %v492
        %vm2627 = vcmp.eq.f32.partialorder %v420, %v492
        %vm2628 = vcmp.eq.f32.partialorder %v424, %v492
        %vm2629 = vcmp.eq.f32.partialorder %v428, %v492
        %vm2630 = vcmp.eq.f32.partialorder %v432, %v492
        %vm2631 = vcmp.eq.f32.partialorder %v436, %v492
        %vm2632 = vcmp.eq.f32.partialorder %v440, %v492
        %vm2633 = vcmp.eq.f32.partialorder %v412, %v497
        %vm2634 = vcmp.eq.f32.partialorder %v416, %v497
        %vm2635 = vcmp.eq.f32.partialorder %v420, %v497
        %vm2636 = vcmp.eq.f32.partialorder %v424, %v497
        %vm2637 = vcmp.eq.f32.partialorder %v428, %v497
        %vm2638 = vcmp.eq.f32.partialorder %v432, %v497
        %vm2639 = vcmp.eq.f32.partialorder %v436, %v497
        %vm2640 = vcmp.eq.f32.partialorder %v440, %v497
        %vm2641 = vcmp.eq.f32.partialorder %v412, %v502
        %vm2642 = vcmp.eq.f32.partialorder %v416, %v502
        %vm2643 = vcmp.eq.f32.partialorder %v420, %v502
        %vm2644 = vcmp.eq.f32.partialorder %v424, %v502
        %vm2645 = vcmp.eq.f32.partialorder %v428, %v502
        %vm2646 = vcmp.eq.f32.partialorder %v432, %v502
        %vm2647 = vcmp.eq.f32.partialorder %v436, %v502
        %vm2648 = vcmp.eq.f32.partialorder %v440, %v502
        %vm2649 = vcmp.eq.f32.partialorder %v412, %v507
        %vm2650 = vcmp.eq.f32.partialorder %v416, %v507
        %vm2651 = vcmp.eq.f32.partialorder %v420, %v507
        %vm2652 = vcmp.eq.f32.partialorder %v424, %v507
        %vm2653 = vcmp.eq.f32.partialorder %v428, %v507
        %vm2654 = vcmp.eq.f32.partialorder %v432, %v507
        %vm2655 = vcmp.eq.f32.partialorder %v436, %v507
        %vm2656 = vcmp.eq.f32.partialorder %v440, %v507
        %vm2657 = vcmp.eq.f32.partialorder %v412, %v512
        %vm2658 = vcmp.eq.f32.partialorder %v416, %v512
        %vm2659 = vcmp.eq.f32.partialorder %v420, %v512
        %vm2660 = vcmp.eq.f32.partialorder %v424, %v512
        %vm2661 = vcmp.eq.f32.partialorder %v428, %v512
        %vm2662 = vcmp.eq.f32.partialorder %v432, %v512
        %vm2663 = vcmp.eq.f32.partialorder %v436, %v512
        %vm2664 = vcmp.eq.f32.partialorder %v440, %v512
        %vm2665 = vcmp.eq.f32.partialorder %v412, %v517
        %vm2666 = vcmp.eq.f32.partialorder %v416, %v517
        %vm2667 = vcmp.eq.f32.partialorder %v420, %v517
        %vm2668 = vcmp.eq.f32.partialorder %v424, %v517
        %vm2669 = vcmp.eq.f32.partialorder %v428, %v517
        %vm2670 = vcmp.eq.f32.partialorder %v432, %v517
        %vm2671 = vcmp.eq.f32.partialorder %v436, %v517
        %vm2672 = vcmp.eq.f32.partialorder %v440, %v517
        %vm2673 = vcmp.eq.f32.partialorder %v412, %v522
        %vm2674 = vcmp.eq.f32.partialorder %v416, %v522
        %vm2675 = vcmp.eq.f32.partialorder %v420, %v522
        %vm2676 = vcmp.eq.f32.partialorder %v424, %v522
        %vm2677 = vcmp.eq.f32.partialorder %v428, %v522
        %vm2678 = vcmp.eq.f32.partialorder %v432, %v522
        %vm2679 = vcmp.eq.f32.partialorder %v436, %v522
        %vm2680 = vcmp.eq.f32.partialorder %v440, %v522
        %vm2681 = vcmp.eq.f32.partialorder %v412, %v527
        %vm2682 = vcmp.eq.f32.partialorder %v416, %v527
        %vm2683 = vcmp.eq.f32.partialorder %v420, %v527
        %vm2684 = vcmp.eq.f32.partialorder %v424, %v527
        %vm2685 = vcmp.eq.f32.partialorder %v428, %v527
        %vm2686 = vcmp.eq.f32.partialorder %v432, %v527
        %vm2687 = vcmp.eq.f32.partialorder %v436, %v527
        %vm2688 = vcmp.eq.f32.partialorder %v440, %v527
        %vm2689 = vcmp.eq.f32.partialorder %v412, %v532
        %vm2690 = vcmp.eq.f32.partialorder %v416, %v532
        %vm2691 = vcmp.eq.f32.partialorder %v420, %v532
        %vm2692 = vcmp.eq.f32.partialorder %v424, %v532
        %vm2693 = vcmp.eq.f32.partialorder %v428, %v532
        %vm2694 = vcmp.eq.f32.partialorder %v432, %v532
        %vm2695 = vcmp.eq.f32.partialorder %v436, %v532
        %vm2696 = vcmp.eq.f32.partialorder %v440, %v532
        %vm2697 = vcmp.eq.f32.partialorder %v412, %v537
        %vm2698 = vcmp.eq.f32.partialorder %v416, %v537
        %vm2699 = vcmp.eq.f32.partialorder %v420, %v537
        %vm2700 = vcmp.eq.f32.partialorder %v424, %v537
        %vm2701 = vcmp.eq.f32.partialorder %v428, %v537
        %vm2702 = vcmp.eq.f32.partialorder %v432, %v537
        %vm2703 = vcmp.eq.f32.partialorder %v436, %v537
        %vm2704 = vcmp.eq.f32.partialorder %v440, %v537
        %vm2705 = vcmp.eq.f32.partialorder %v412, %v542
        %vm2706 = vcmp.eq.f32.partialorder %v416, %v542
        %vm2707 = vcmp.eq.f32.partialorder %v420, %v542
        %vm2708 = vcmp.eq.f32.partialorder %v424, %v542
        %vm2709 = vcmp.eq.f32.partialorder %v428, %v542
        %vm2710 = vcmp.eq.f32.partialorder %v432, %v542
        %vm2711 = vcmp.eq.f32.partialorder %v436, %v542
        %vm2712 = vcmp.eq.f32.partialorder %v440, %v542
        %vm2713 = vcmp.eq.f32.partialorder %v412, %v547
        %vm2714 = vcmp.eq.f32.partialorder %v416, %v547
        %vm2715 = vcmp.eq.f32.partialorder %v420, %v547
        %vm2716 = vcmp.eq.f32.partialorder %v424, %v547
        %vm2717 = vcmp.eq.f32.partialorder %v428, %v547
        %vm2718 = vcmp.eq.f32.partialorder %v432, %v547
        %vm2719 = vcmp.eq.f32.partialorder %v436, %v547
        %vm2720 = vcmp.eq.f32.partialorder %v440, %v547
        %vm2721 = vcmp.eq.f32.partialorder %v412, %v552
        %vm2722 = vcmp.eq.f32.partialorder %v416, %v552
        %vm2723 = vcmp.eq.f32.partialorder %v420, %v552
        %vm2724 = vcmp.eq.f32.partialorder %v424, %v552
        %vm2725 = vcmp.eq.f32.partialorder %v428, %v552
        %vm2726 = vcmp.eq.f32.partialorder %v432, %v552
        %vm2727 = vcmp.eq.f32.partialorder %v436, %v552
        %vm2728 = vcmp.eq.f32.partialorder %v440, %v552
        %vm2729 = vcmp.eq.f32.partialorder %v412, %v557
        %vm2730 = vcmp.eq.f32.partialorder %v416, %v557
        %vm2731 = vcmp.eq.f32.partialorder %v420, %v557
        %vm2732 = vcmp.eq.f32.partialorder %v424, %v557
        %vm2733 = vcmp.eq.f32.partialorder %v428, %v557
        %vm2734 = vcmp.eq.f32.partialorder %v432, %v557
        %vm2735 = vcmp.eq.f32.partialorder %v436, %v557
        %vm2736 = vcmp.eq.f32.partialorder %v440, %v557
        %vm2737 = vcmp.eq.f32.partialorder %v412, %v562
        %vm2738 = vcmp.eq.f32.partialorder %v416, %v562
        %vm2739 = vcmp.eq.f32.partialorder %v420, %v562
        %vm2740 = vcmp.eq.f32.partialorder %v424, %v562
        %vm2741 = vcmp.eq.f32.partialorder %v428, %v562
        %vm2742 = vcmp.eq.f32.partialorder %v432, %v562
        %vm2743 = vcmp.eq.f32.partialorder %v436, %v562
        %vm2744 = vcmp.eq.f32.partialorder %v440, %v562
        %vm2745 = vcmp.eq.f32.partialorder %v412, %v567
        %vm2746 = vcmp.eq.f32.partialorder %v416, %v567
        %vm2747 = vcmp.eq.f32.partialorder %v420, %v567
        %vm2748 = vcmp.eq.f32.partialorder %v424, %v567
        %vm2749 = vcmp.eq.f32.partialorder %v428, %v567
        %vm2750 = vcmp.eq.f32.partialorder %v432, %v567
        %vm2751 = vcmp.eq.f32.partialorder %v436, %v567
        %vm2752 = vcmp.eq.f32.partialorder %v440, %v567
        %vm2753 = vcmp.eq.f32.partialorder %v412, %v572
        %vm2754 = vcmp.eq.f32.partialorder %v416, %v572
        %vm2755 = vcmp.eq.f32.partialorder %v420, %v572
        %vm2756 = vcmp.eq.f32.partialorder %v424, %v572
        %vm2757 = vcmp.eq.f32.partialorder %v428, %v572
        %vm2758 = vcmp.eq.f32.partialorder %v432, %v572
        %vm2759 = vcmp.eq.f32.partialorder %v436, %v572
        %vm2760 = vcmp.eq.f32.partialorder %v440, %v572
        %vm2761 = vcmp.eq.f32.partialorder %v412, %v577
        %vm2762 = vcmp.eq.f32.partialorder %v416, %v577
        %vm2763 = vcmp.eq.f32.partialorder %v420, %v577
        %vm2764 = vcmp.eq.f32.partialorder %v424, %v577
        %vm2765 = vcmp.eq.f32.partialorder %v428, %v577
        %vm2766 = vcmp.eq.f32.partialorder %v432, %v577
        %vm2767 = vcmp.eq.f32.partialorder %v436, %v577
        %vm2768 = vcmp.eq.f32.partialorder %v440, %v577
        %vm2769 = vcmp.eq.f32.partialorder %v412, %v582
        %vm2770 = vcmp.eq.f32.partialorder %v416, %v582
        %vm2771 = vcmp.eq.f32.partialorder %v420, %v582
        %vm2772 = vcmp.eq.f32.partialorder %v424, %v582
        %vm2773 = vcmp.eq.f32.partialorder %v428, %v582
        %vm2774 = vcmp.eq.f32.partialorder %v432, %v582
        %vm2775 = vcmp.eq.f32.partialorder %v436, %v582
        %vm2776 = vcmp.eq.f32.partialorder %v440, %v582
        %vm2777 = vcmp.eq.f32.partialorder %v412, %v587
        %vm2778 = vcmp.eq.f32.partialorder %v416, %v587
        %vm2779 = vcmp.eq.f32.partialorder %v420, %v587
        %vm2780 = vcmp.eq.f32.partialorder %v424, %v587
        %vm2781 = vcmp.eq.f32.partialorder %v428, %v587
        %vm2782 = vcmp.eq.f32.partialorder %v432, %v587
        %vm2783 = vcmp.eq.f32.partialorder %v436, %v587
        %vm2784 = vcmp.eq.f32.partialorder %v440, %v587
        %vm2785 = vcmp.eq.f32.partialorder %v412, %v592
        %vm2786 = vcmp.eq.f32.partialorder %v416, %v592
        %vm2787 = vcmp.eq.f32.partialorder %v420, %v592
        %vm2788 = vcmp.eq.f32.partialorder %v424, %v592
        %vm2789 = vcmp.eq.f32.partialorder %v428, %v592
        %vm2790 = vcmp.eq.f32.partialorder %v432, %v592
        %vm2791 = vcmp.eq.f32.partialorder %v436, %v592
        %vm2792 = vcmp.eq.f32.partialorder %v440, %v592
        %vm2793 = vcmp.eq.f32.partialorder %v412, %v597
        %vm2794 = vcmp.eq.f32.partialorder %v416, %v597
        %vm2795 = vcmp.eq.f32.partialorder %v420, %v597
        %vm2796 = vcmp.eq.f32.partialorder %v424, %v597
        %vm2797 = vcmp.eq.f32.partialorder %v428, %v597
        %vm2798 = vcmp.eq.f32.partialorder %v432, %v597
        %vm2799 = vcmp.eq.f32.partialorder %v436, %v597
        %vm2800 = vcmp.eq.f32.partialorder %v440, %v597
        %vm2801 = vcmp.eq.f32.partialorder %v412, %v602
        %vm2802 = vcmp.eq.f32.partialorder %v416, %v602
        %vm2803 = vcmp.eq.f32.partialorder %v420, %v602
        %vm2804 = vcmp.eq.f32.partialorder %v424, %v602
        %vm2805 = vcmp.eq.f32.partialorder %v428, %v602
        %vm2806 = vcmp.eq.f32.partialorder %v432, %v602
        %vm2807 = vcmp.eq.f32.partialorder %v436, %v602
        %vm2808 = vcmp.eq.f32.partialorder %v440, %v602
        %vm2809 = vcmp.eq.f32.partialorder %v412, %v607
        %vm2810 = vcmp.eq.f32.partialorder %v416, %v607
        %vm2811 = vcmp.eq.f32.partialorder %v420, %v607
        %vm2812 = vcmp.eq.f32.partialorder %v424, %v607
        %vm2813 = vcmp.eq.f32.partialorder %v428, %v607
        %vm2814 = vcmp.eq.f32.partialorder %v432, %v607
        %vm2815 = vcmp.eq.f32.partialorder %v436, %v607
        %vm2816 = vcmp.eq.f32.partialorder %v440, %v607
        %vm2817 = vcmp.eq.f32.partialorder %v412, %v612
        %vm2818 = vcmp.eq.f32.partialorder %v416, %v612
        %vm2819 = vcmp.eq.f32.partialorder %v420, %v612
        %vm2820 = vcmp.eq.f32.partialorder %v424, %v612
        %vm2821 = vcmp.eq.f32.partialorder %v428, %v612
        %vm2822 = vcmp.eq.f32.partialorder %v432, %v612
        %vm2823 = vcmp.eq.f32.partialorder %v436, %v612
        %vm2824 = vcmp.eq.f32.partialorder %v440, %v612
        %vm2825 = vcmp.eq.f32.partialorder %v412, %v617
        %vm2826 = vcmp.eq.f32.partialorder %v416, %v617
        %vm2827 = vcmp.eq.f32.partialorder %v420, %v617
        %vm2828 = vcmp.eq.f32.partialorder %v424, %v617
        %vm2829 = vcmp.eq.f32.partialorder %v428, %v617
        %vm2830 = vcmp.eq.f32.partialorder %v432, %v617
        %vm2831 = vcmp.eq.f32.partialorder %v436, %v617
        %vm2832 = vcmp.eq.f32.partialorder %v440, %v617
        %vm2833 = vcmp.eq.f32.partialorder %v412, %v622
        %vm2834 = vcmp.eq.f32.partialorder %v416, %v622
        %vm2835 = vcmp.eq.f32.partialorder %v420, %v622
        %vm2836 = vcmp.eq.f32.partialorder %v424, %v622
        %vm2837 = vcmp.eq.f32.partialorder %v428, %v622
        %vm2838 = vcmp.eq.f32.partialorder %v432, %v622
        %vm2839 = vcmp.eq.f32.partialorder %v436, %v622
        %vm2840 = vcmp.eq.f32.partialorder %v440, %v622
        %vm2841 = vcmp.eq.f32.partialorder %v412, %v627
        %vm2842 = vcmp.eq.f32.partialorder %v416, %v627
        %vm2843 = vcmp.eq.f32.partialorder %v420, %v627
        %vm2844 = vcmp.eq.f32.partialorder %v424, %v627
        %vm2845 = vcmp.eq.f32.partialorder %v428, %v627
        %vm2846 = vcmp.eq.f32.partialorder %v432, %v627
        %vm2847 = vcmp.eq.f32.partialorder %v436, %v627
        %vm2848 = vcmp.eq.f32.partialorder %v440, %v627
        %vm2849 = vcmp.eq.f32.partialorder %v412, %v632
        %vm2850 = vcmp.eq.f32.partialorder %v416, %v632
        %vm2851 = vcmp.eq.f32.partialorder %v420, %v632
        %vm2852 = vcmp.eq.f32.partialorder %v424, %v632
        %vm2853 = vcmp.eq.f32.partialorder %v428, %v632
        %vm2854 = vcmp.eq.f32.partialorder %v432, %v632
        %vm2855 = vcmp.eq.f32.partialorder %v436, %v632
        %vm2856 = vcmp.eq.f32.partialorder %v440, %v632
        %vm2857 = vcmp.eq.f32.partialorder %v412, %v637
        %vm2858 = vcmp.eq.f32.partialorder %v416, %v637
        %vm2859 = vcmp.eq.f32.partialorder %v420, %v637
        %vm2860 = vcmp.eq.f32.partialorder %v424, %v637
        %vm2861 = vcmp.eq.f32.partialorder %v428, %v637
        %vm2862 = vcmp.eq.f32.partialorder %v432, %v637
        %vm2863 = vcmp.eq.f32.partialorder %v436, %v637
        %vm2864 = vcmp.eq.f32.partialorder %v440, %v637
        %vm2865 = vcmp.eq.f32.partialorder %v412, %v642
        %vm2866 = vcmp.eq.f32.partialorder %v416, %v642
        %vm2867 = vcmp.eq.f32.partialorder %v420, %v642
        %vm2868 = vcmp.eq.f32.partialorder %v424, %v642
        %vm2869 = vcmp.eq.f32.partialorder %v428, %v642
        %vm2870 = vcmp.eq.f32.partialorder %v432, %v642
        %vm2871 = vcmp.eq.f32.partialorder %v436, %v642
        %vm2872 = vcmp.eq.f32.partialorder %v440, %v642
        %vm2873 = vcmp.eq.f32.partialorder %v412, %v647
        %vm2874 = vcmp.eq.f32.partialorder %v416, %v647
        %vm2875 = vcmp.eq.f32.partialorder %v420, %v647
        %vm2876 = vcmp.eq.f32.partialorder %v424, %v647
        %vm2877 = vcmp.eq.f32.partialorder %v428, %v647
        %vm2878 = vcmp.eq.f32.partialorder %v432, %v647
        %vm2879 = vcmp.eq.f32.partialorder %v436, %v647
        %vm2880 = vcmp.eq.f32.partialorder %v440, %v647
        %vm2881 = vcmp.eq.f32.partialorder %v412, %v652
        %vm2882 = vcmp.eq.f32.partialorder %v416, %v652
        %vm2883 = vcmp.eq.f32.partialorder %v420, %v652
        %vm2884 = vcmp.eq.f32.partialorder %v424, %v652
        %vm2885 = vcmp.eq.f32.partialorder %v428, %v652
        %vm2886 = vcmp.eq.f32.partialorder %v432, %v652
        %vm2887 = vcmp.eq.f32.partialorder %v436, %v652
        %vm2888 = vcmp.eq.f32.partialorder %v440, %v652
        %vm2889 = vcmp.eq.f32.partialorder %v412, %v657
        %vm2890 = vcmp.eq.f32.partialorder %v416, %v657
        %vm2891 = vcmp.eq.f32.partialorder %v420, %v657
        %vm2892 = vcmp.eq.f32.partialorder %v424, %v657
        %vm2893 = vcmp.eq.f32.partialorder %v428, %v657
        %vm2894 = vcmp.eq.f32.partialorder %v432, %v657
        %vm2895 = vcmp.eq.f32.partialorder %v436, %v657
        %vm2896 = vcmp.eq.f32.partialorder %v440, %v657
        %vm2897 = vcmp.eq.f32.partialorder %v412, %v662
        %vm2898 = vcmp.eq.f32.partialorder %v416, %v662
        %vm2899 = vcmp.eq.f32.partialorder %v420, %v662
        %vm2900 = vcmp.eq.f32.partialorder %v424, %v662
        %vm2901 = vcmp.eq.f32.partialorder %v428, %v662
        %vm2902 = vcmp.eq.f32.partialorder %v432, %v662
        %vm2903 = vcmp.eq.f32.partialorder %v436, %v662
        %vm2904 = vcmp.eq.f32.partialorder %v440, %v662
        %vm2905 = vcmp.eq.f32.partialorder %v412, %v667
        %vm2906 = vcmp.eq.f32.partialorder %v416, %v667
        %vm2907 = vcmp.eq.f32.partialorder %v420, %v667
        %vm2908 = vcmp.eq.f32.partialorder %v424, %v667
        %vm2909 = vcmp.eq.f32.partialorder %v428, %v667
        %vm2910 = vcmp.eq.f32.partialorder %v432, %v667
        %vm2911 = vcmp.eq.f32.partialorder %v436, %v667
        %vm2912 = vcmp.eq.f32.partialorder %v440, %v667
        %vm2913 = vcmp.eq.f32.partialorder %v412, %v672
        %vm2914 = vcmp.eq.f32.partialorder %v416, %v672
        %vm2915 = vcmp.eq.f32.partialorder %v420, %v672
        %vm2916 = vcmp.eq.f32.partialorder %v424, %v672
        %vm2917 = vcmp.eq.f32.partialorder %v428, %v672
        %vm2918 = vcmp.eq.f32.partialorder %v432, %v672
        %vm2919 = vcmp.eq.f32.partialorder %v436, %v672
        %vm2920 = vcmp.eq.f32.partialorder %v440, %v672
        %vm2921 = vcmp.eq.f32.partialorder %v412, %v677
        %vm2922 = vcmp.eq.f32.partialorder %v416, %v677
        %vm2923 = vcmp.eq.f32.partialorder %v420, %v677
        %vm2924 = vcmp.eq.f32.partialorder %v424, %v677
        %vm2925 = vcmp.eq.f32.partialorder %v428, %v677
        %vm2926 = vcmp.eq.f32.partialorder %v432, %v677
        %vm2927 = vcmp.eq.f32.partialorder %v436, %v677
        %vm2928 = vcmp.eq.f32.partialorder %v440, %v677
        %vm2929 = vcmp.eq.f32.partialorder %v412, %v682
        %vm2930 = vcmp.eq.f32.partialorder %v416, %v682
        %vm2931 = vcmp.eq.f32.partialorder %v420, %v682
        %vm2932 = vcmp.eq.f32.partialorder %v424, %v682
        %vm2933 = vcmp.eq.f32.partialorder %v428, %v682
        %vm2934 = vcmp.eq.f32.partialorder %v432, %v682
        %vm2935 = vcmp.eq.f32.partialorder %v436, %v682
        %vm2936 = vcmp.eq.f32.partialorder %v440, %v682
        %vm2937 = vcmp.eq.f32.partialorder %v412, %v687
        %vm2938 = vcmp.eq.f32.partialorder %v416, %v687
        %vm2939 = vcmp.eq.f32.partialorder %v420, %v687
        %vm2940 = vcmp.eq.f32.partialorder %v424, %v687
        %vm2941 = vcmp.eq.f32.partialorder %v428, %v687
        %vm2942 = vcmp.eq.f32.partialorder %v432, %v687
        %vm2943 = vcmp.eq.f32.partialorder %v436, %v687
        %vm2944 = vcmp.eq.f32.partialorder %v440, %v687
        %vm2945 = vcmp.eq.f32.partialorder %v412, %v692
        %vm2946 = vcmp.eq.f32.partialorder %v416, %v692
        %vm2947 = vcmp.eq.f32.partialorder %v420, %v692
        %vm2948 = vcmp.eq.f32.partialorder %v424, %v692
        %vm2949 = vcmp.eq.f32.partialorder %v428, %v692
        %vm2950 = vcmp.eq.f32.partialorder %v432, %v692
        %vm2951 = vcmp.eq.f32.partialorder %v436, %v692
        %vm2952 = vcmp.eq.f32.partialorder %v440, %v692
        %vm2953 = vcmp.eq.f32.partialorder %v412, %v697
        %vm2954 = vcmp.eq.f32.partialorder %v416, %v697
        %vm2955 = vcmp.eq.f32.partialorder %v420, %v697
        %vm2956 = vcmp.eq.f32.partialorder %v424, %v697
        %vm2957 = vcmp.eq.f32.partialorder %v428, %v697
        %vm2958 = vcmp.eq.f32.partialorder %v432, %v697
        %vm2959 = vcmp.eq.f32.partialorder %v436, %v697
        %vm2960 = vcmp.eq.f32.partialorder %v440, %v697
        %vm2961 = vcmp.eq.f32.partialorder %v412, %v702
        %vm2962 = vcmp.eq.f32.partialorder %v416, %v702
        %vm2963 = vcmp.eq.f32.partialorder %v420, %v702
        %vm2964 = vcmp.eq.f32.partialorder %v424, %v702
        %vm2965 = vcmp.eq.f32.partialorder %v428, %v702
        %vm2966 = vcmp.eq.f32.partialorder %v432, %v702
        %vm2967 = vcmp.eq.f32.partialorder %v436, %v702
        %vm2968 = vcmp.eq.f32.partialorder %v440, %v702
        %vm2969 = vcmp.eq.f32.partialorder %v412, %v707
        %vm2970 = vcmp.eq.f32.partialorder %v416, %v707
        %vm2971 = vcmp.eq.f32.partialorder %v420, %v707
        %vm2972 = vcmp.eq.f32.partialorder %v424, %v707
        %vm2973 = vcmp.eq.f32.partialorder %v428, %v707
        %vm2974 = vcmp.eq.f32.partialorder %v432, %v707
        %vm2975 = vcmp.eq.f32.partialorder %v436, %v707
        %vm2976 = vcmp.eq.f32.partialorder %v440, %v707
        %vm2977 = vcmp.eq.f32.partialorder %v412, %v712
        %vm2978 = vcmp.eq.f32.partialorder %v416, %v712
        %vm2979 = vcmp.eq.f32.partialorder %v420, %v712
        %vm2980 = vcmp.eq.f32.partialorder %v424, %v712
        %vm2981 = vcmp.eq.f32.partialorder %v428, %v712
        %vm2982 = vcmp.eq.f32.partialorder %v432, %v712
        %vm2983 = vcmp.eq.f32.partialorder %v436, %v712
        %vm2984 = vcmp.eq.f32.partialorder %v440, %v712
        %vm2985 = vcmp.eq.f32.partialorder %v412, %v717
        %vm2986 = vcmp.eq.f32.partialorder %v416, %v717
        %vm2987 = vcmp.eq.f32.partialorder %v420, %v717
        %vm2988 = vcmp.eq.f32.partialorder %v424, %v717
        %vm2989 = vcmp.eq.f32.partialorder %v428, %v717
        %vm2990 = vcmp.eq.f32.partialorder %v432, %v717
        %vm2991 = vcmp.eq.f32.partialorder %v436, %v717
        %vm2992 = vcmp.eq.f32.partialorder %v440, %v717
        %vm2993 = vcmp.eq.f32.partialorder %v412, %v722
        %vm2994 = vcmp.eq.f32.partialorder %v416, %v722
        %vm2995 = vcmp.eq.f32.partialorder %v420, %v722
        %vm2996 = vcmp.eq.f32.partialorder %v424, %v722
        %vm2997 = vcmp.eq.f32.partialorder %v428, %v722
        %vm2998 = vcmp.eq.f32.partialorder %v432, %v722
        %vm2999 = vcmp.eq.f32.partialorder %v436, %v722
        %vm3000 = vcmp.eq.f32.partialorder %v440, %v722
        %vm3001 = vcmp.eq.f32.partialorder %v412, %v727
        %vm3002 = vcmp.eq.f32.partialorder %v416, %v727
        %vm3003 = vcmp.eq.f32.partialorder %v420, %v727
        %vm3004 = vcmp.eq.f32.partialorder %v424, %v727
        %vm3005 = vcmp.eq.f32.partialorder %v428, %v727
        %vm3006 = vcmp.eq.f32.partialorder %v432, %v727
        %vm3007 = vcmp.eq.f32.partialorder %v436, %v727
        %vm3008 = vcmp.eq.f32.partialorder %v440, %v727
        %vm3009 = vcmp.eq.f32.partialorder %v412, %v732
        %vm3010 = vcmp.eq.f32.partialorder %v416, %v732
        %vm3011 = vcmp.eq.f32.partialorder %v420, %v732
        %vm3012 = vcmp.eq.f32.partialorder %v424, %v732
        %vm3013 = vcmp.eq.f32.partialorder %v428, %v732
        %vm3014 = vcmp.eq.f32.partialorder %v432, %v732
        %vm3015 = vcmp.eq.f32.partialorder %v436, %v732
        %vm3016 = vcmp.eq.f32.partialorder %v440, %v732
        %vm3017 = vcmp.eq.f32.partialorder %v412, %v737
        %vm3018 = vcmp.eq.f32.partialorder %v416, %v737
        %vm3019 = vcmp.eq.f32.partialorder %v420, %v737
        %vm3020 = vcmp.eq.f32.partialorder %v424, %v737
        %vm3021 = vcmp.eq.f32.partialorder %v428, %v737
        %vm3022 = vcmp.eq.f32.partialorder %v432, %v737
        %vm3023 = vcmp.eq.f32.partialorder %v436, %v737
        %vm3024 = vcmp.eq.f32.partialorder %v440, %v737
        %vm3025 = vcmp.eq.f32.partialorder %v412, %v742
        %vm3026 = vcmp.eq.f32.partialorder %v416, %v742
        %vm3027 = vcmp.eq.f32.partialorder %v420, %v742
        %vm3028 = vcmp.eq.f32.partialorder %v424, %v742
        %vm3029 = vcmp.eq.f32.partialorder %v428, %v742
        %vm3030 = vcmp.eq.f32.partialorder %v432, %v742
        %vm3031 = vcmp.eq.f32.partialorder %v436, %v742
        %vm3032 = vcmp.eq.f32.partialorder %v440, %v742
        %vm3033 = vcmp.eq.f32.partialorder %v412, %v747
        %vm3034 = vcmp.eq.f32.partialorder %v416, %v747
        %vm3035 = vcmp.eq.f32.partialorder %v420, %v747
        %vm3036 = vcmp.eq.f32.partialorder %v424, %v747
        %vm3037 = vcmp.eq.f32.partialorder %v428, %v747
        %vm3038 = vcmp.eq.f32.partialorder %v432, %v747
        %vm3039 = vcmp.eq.f32.partialorder %v436, %v747
        %vm3040 = vcmp.eq.f32.partialorder %v440, %v747
        %vm3041 = vcmp.eq.f32.partialorder %v412, %v752
        %vm3042 = vcmp.eq.f32.partialorder %v416, %v752
        %vm3043 = vcmp.eq.f32.partialorder %v420, %v752
        %vm3044 = vcmp.eq.f32.partialorder %v424, %v752
        %vm3045 = vcmp.eq.f32.partialorder %v428, %v752
        %vm3046 = vcmp.eq.f32.partialorder %v432, %v752
        %vm3047 = vcmp.eq.f32.partialorder %v436, %v752
        %vm3048 = vcmp.eq.f32.partialorder %v440, %v752
        %vm3049 = vcmp.eq.f32.partialorder %v412, %v757
        %vm3050 = vcmp.eq.f32.partialorder %v416, %v757
        %vm3051 = vcmp.eq.f32.partialorder %v420, %v757
        %vm3052 = vcmp.eq.f32.partialorder %v424, %v757
        %vm3053 = vcmp.eq.f32.partialorder %v428, %v757
        %vm3054 = vcmp.eq.f32.partialorder %v432, %v757
        %vm3055 = vcmp.eq.f32.partialorder %v436, %v757
        %vm3056 = vcmp.eq.f32.partialorder %v440, %v757
        %vm3057 = vcmp.eq.f32.partialorder %v412, %v762
        %vm3058 = vcmp.eq.f32.partialorder %v416, %v762
        %vm3059 = vcmp.eq.f32.partialorder %v420, %v762
        %vm3060 = vcmp.eq.f32.partialorder %v424, %v762
        %vm3061 = vcmp.eq.f32.partialorder %v428, %v762
        %vm3062 = vcmp.eq.f32.partialorder %v432, %v762
        %vm3063 = vcmp.eq.f32.partialorder %v436, %v762
        %vm3064 = vcmp.eq.f32.partialorder %v440, %v762
        %vm3065 = vcmp.eq.f32.partialorder %v412, %v767
        %vm3066 = vcmp.eq.f32.partialorder %v416, %v767
        %vm3067 = vcmp.eq.f32.partialorder %v420, %v767
        %vm3068 = vcmp.eq.f32.partialorder %v424, %v767
        %vm3069 = vcmp.eq.f32.partialorder %v428, %v767
        %vm3070 = vcmp.eq.f32.partialorder %v432, %v767
        %vm3071 = vcmp.eq.f32.partialorder %v436, %v767
        %vm3072 = vcmp.eq.f32.partialorder %v440, %v767
        %v3073 = vsel %vm2561, 1, 0
        %v3074 = vsel %vm2562, 1, 0
        %v3075 = vsel %vm2563, 1, 0
        %v3076 = vsel %vm2564, 1, 0
        %v3077 = vsel %vm2565, 1, 0
        %v3078 = vsel %vm2566, 1, 0
        %v3079 = vsel %vm2567, 1, 0
        %v3080 = vsel %vm2568, 1, 0
        %v3081 = vsel %vm2569, 1, 0
        %v3082 = vsel %vm2570, 1, 0
        %v3083 = vsel %vm2571, 1, 0
        %v3084 = vsel %vm2572, 1, 0
        %v3085 = vsel %vm2573, 1, 0
        %v3086 = vsel %vm2574, 1, 0
        %v3087 = vsel %vm2575, 1, 0
        %v3088 = vsel %vm2576, 1, 0
        %v3089 = vsel %vm2577, 1, 0
        %v3090 = vsel %vm2578, 1, 0
        %v3091 = vsel %vm2579, 1, 0
        %v3092 = vsel %vm2580, 1, 0
        %v3093 = vsel %vm2581, 1, 0
        %v3094 = vsel %vm2582, 1, 0
        %v3095 = vsel %vm2583, 1, 0
        %v3096 = vsel %vm2584, 1, 0
        %v3097 = vsel %vm2585, 1, 0
        %v3098 = vsel %vm2586, 1, 0
        %v3099 = vsel %vm2587, 1, 0
        %v3100 = vsel %vm2588, 1, 0
        %v3101 = vsel %vm2589, 1, 0
        %v3102 = vsel %vm2590, 1, 0
        %v3103 = vsel %vm2591, 1, 0
        %v3104 = vsel %vm2592, 1, 0
        %v3105 = vsel %vm2593, 1, 0
        %v3106 = vsel %vm2594, 1, 0
        %v3107 = vsel %vm2595, 1, 0
        %v3108 = vsel %vm2596, 1, 0
        %v3109 = vsel %vm2597, 1, 0
        %v3110 = vsel %vm2598, 1, 0
        %v3111 = vsel %vm2599, 1, 0
        %v3112 = vsel %vm2600, 1, 0
        %v3113 = vsel %vm2601, 1, 0
        %v3114 = vsel %vm2602, 1, 0
        %v3115 = vsel %vm2603, 1, 0
        %v3116 = vsel %vm2604, 1, 0
        %v3117 = vsel %vm2605, 1, 0
        %v3118 = vsel %vm2606, 1, 0
        %v3119 = vsel %vm2607, 1, 0
        %v3120 = vsel %vm2608, 1, 0
        %v3121 = vsel %vm2609, 1, 0
        %v3122 = vsel %vm2610, 1, 0
        %v3123 = vsel %vm2611, 1, 0
        %v3124 = vsel %vm2612, 1, 0
        %v3125 = vsel %vm2613, 1, 0
        %v3126 = vsel %vm2614, 1, 0
        %v3127 = vsel %vm2615, 1, 0
        %v3128 = vsel %vm2616, 1, 0
        %v3129 = vsel %vm2617, 1, 0
        %v3130 = vsel %vm2618, 1, 0
        %v3131 = vsel %vm2619, 1, 0
        %v3132 = vsel %vm2620, 1, 0
        %v3133 = vsel %vm2621, 1, 0
        %v3134 = vsel %vm2622, 1, 0
        %v3135 = vsel %vm2623, 1, 0
        %v3136 = vsel %vm2624, 1, 0
        %v3137 = vsel %vm2625, 1, 0
        %v3138 = vsel %vm2626, 1, 0
        %v3139 = vsel %vm2627, 1, 0
        %v3140 = vsel %vm2628, 1, 0
        %v3141 = vsel %vm2629, 1, 0
        %v3142 = vsel %vm2630, 1, 0
        %v3143 = vsel %vm2631, 1, 0
        %v3144 = vsel %vm2632, 1, 0
        %v3145 = vsel %vm2633, 1, 0
        %v3146 = vsel %vm2634, 1, 0
        %v3147 = vsel %vm2635, 1, 0
        %v3148 = vsel %vm2636, 1, 0
        %v3149 = vsel %vm2637, 1, 0
        %v3150 = vsel %vm2638, 1, 0
        %v3151 = vsel %vm2639, 1, 0
        %v3152 = vsel %vm2640, 1, 0
        %v3153 = vsel %vm2641, 1, 0
        %v3154 = vsel %vm2642, 1, 0
        %v3155 = vsel %vm2643, 1, 0
        %v3156 = vsel %vm2644, 1, 0
        %v3157 = vsel %vm2645, 1, 0
        %v3158 = vsel %vm2646, 1, 0
        %v3159 = vsel %vm2647, 1, 0
        %v3160 = vsel %vm2648, 1, 0
        %v3161 = vsel %vm2649, 1, 0
        %v3162 = vsel %vm2650, 1, 0
        %v3163 = vsel %vm2651, 1, 0
        %v3164 = vsel %vm2652, 1, 0
        %v3165 = vsel %vm2653, 1, 0
        %v3166 = vsel %vm2654, 1, 0
        %v3167 = vsel %vm2655, 1, 0
        %v3168 = vsel %vm2656, 1, 0
        %v3169 = vsel %vm2657, 1, 0
        %v3170 = vsel %vm2658, 1, 0
        %v3171 = vsel %vm2659, 1, 0
        %v3172 = vsel %vm2660, 1, 0
        %v3173 = vsel %vm2661, 1, 0
        %v3174 = vsel %vm2662, 1, 0
        %v3175 = vsel %vm2663, 1, 0
        %v3176 = vsel %vm2664, 1, 0
        %v3177 = vsel %vm2665, 1, 0
        %v3178 = vsel %vm2666, 1, 0
        %v3179 = vsel %vm2667, 1, 0
        %v3180 = vsel %vm2668, 1, 0
        %v3181 = vsel %vm2669, 1, 0
        %v3182 = vsel %vm2670, 1, 0
        %v3183 = vsel %vm2671, 1, 0
        %v3184 = vsel %vm2672, 1, 0
        %v3185 = vsel %vm2673, 1, 0
        %v3186 = vsel %vm2674, 1, 0
        %v3187 = vsel %vm2675, 1, 0
        %v3188 = vsel %vm2676, 1, 0
        %v3189 = vsel %vm2677, 1, 0
        %v3190 = vsel %vm2678, 1, 0
        %v3191 = vsel %vm2679, 1, 0
        %v3192 = vsel %vm2680, 1, 0
        %v3193 = vsel %vm2681, 1, 0
        %v3194 = vsel %vm2682, 1, 0
        %v3195 = vsel %vm2683, 1, 0
        %v3196 = vsel %vm2684, 1, 0
        %v3197 = vsel %vm2685, 1, 0
        %v3198 = vsel %vm2686, 1, 0
        %v3199 = vsel %vm2687, 1, 0
        %v3200 = vsel %vm2688, 1, 0
        %v3201 = vsel %vm2689, 1, 0
        %v3202 = vsel %vm2690, 1, 0
        %v3203 = vsel %vm2691, 1, 0
        %v3204 = vsel %vm2692, 1, 0
        %v3205 = vsel %vm2693, 1, 0
        %v3206 = vsel %vm2694, 1, 0
        %v3207 = vsel %vm2695, 1, 0
        %v3208 = vsel %vm2696, 1, 0
        %v3209 = vsel %vm2697, 1, 0
        %v3210 = vsel %vm2698, 1, 0
        %v3211 = vsel %vm2699, 1, 0
        %v3212 = vsel %vm2700, 1, 0
        %v3213 = vsel %vm2701, 1, 0
        %v3214 = vsel %vm2702, 1, 0
        %v3215 = vsel %vm2703, 1, 0
        %v3216 = vsel %vm2704, 1, 0
        %v3217 = vsel %vm2705, 1, 0
        %v3218 = vsel %vm2706, 1, 0
        %v3219 = vsel %vm2707, 1, 0
        %v3220 = vsel %vm2708, 1, 0
        %v3221 = vsel %vm2709, 1, 0
        %v3222 = vsel %vm2710, 1, 0
        %v3223 = vsel %vm2711, 1, 0
        %v3224 = vsel %vm2712, 1, 0
        %v3225 = vsel %vm2713, 1, 0
        %v3226 = vsel %vm2714, 1, 0
        %v3227 = vsel %vm2715, 1, 0
        %v3228 = vsel %vm2716, 1, 0
        %v3229 = vsel %vm2717, 1, 0
        %v3230 = vsel %vm2718, 1, 0
        %v3231 = vsel %vm2719, 1, 0
        %v3232 = vsel %vm2720, 1, 0
        %v3233 = vsel %vm2721, 1, 0
        %v3234 = vsel %vm2722, 1, 0
        %v3235 = vsel %vm2723, 1, 0
        %v3236 = vsel %vm2724, 1, 0
        %v3237 = vsel %vm2725, 1, 0
        %v3238 = vsel %vm2726, 1, 0
        %v3239 = vsel %vm2727, 1, 0
        %v3240 = vsel %vm2728, 1, 0
        %v3241 = vsel %vm2729, 1, 0
        %v3242 = vsel %vm2730, 1, 0
        %v3243 = vsel %vm2731, 1, 0
        %v3244 = vsel %vm2732, 1, 0
        %v3245 = vsel %vm2733, 1, 0
        %v3246 = vsel %vm2734, 1, 0
        %v3247 = vsel %vm2735, 1, 0
        %v3248 = vsel %vm2736, 1, 0
        %v3249 = vsel %vm2737, 1, 0
        %v3250 = vsel %vm2738, 1, 0
        %v3251 = vsel %vm2739, 1, 0
        %v3252 = vsel %vm2740, 1, 0
        %v3253 = vsel %vm2741, 1, 0
        %v3254 = vsel %vm2742, 1, 0
        %v3255 = vsel %vm2743, 1, 0
        %v3256 = vsel %vm2744, 1, 0
        %v3257 = vsel %vm2745, 1, 0
        %v3258 = vsel %vm2746, 1, 0
        %v3259 = vsel %vm2747, 1, 0
        %v3260 = vsel %vm2748, 1, 0
        %v3261 = vsel %vm2749, 1, 0
        %v3262 = vsel %vm2750, 1, 0
        %v3263 = vsel %vm2751, 1, 0
        %v3264 = vsel %vm2752, 1, 0
        %v3265 = vsel %vm2753, 1, 0
        %v3266 = vsel %vm2754, 1, 0
        %v3267 = vsel %vm2755, 1, 0
        %v3268 = vsel %vm2756, 1, 0
        %v3269 = vsel %vm2757, 1, 0
        %v3270 = vsel %vm2758, 1, 0
        %v3271 = vsel %vm2759, 1, 0
        %v3272 = vsel %vm2760, 1, 0
        %v3273 = vsel %vm2761, 1, 0
        %v3274 = vsel %vm2762, 1, 0
        %v3275 = vsel %vm2763, 1, 0
        %v3276 = vsel %vm2764, 1, 0
        %v3277 = vsel %vm2765, 1, 0
        %v3278 = vsel %vm2766, 1, 0
        %v3279 = vsel %vm2767, 1, 0
        %v3280 = vsel %vm2768, 1, 0
        %v3281 = vsel %vm2769, 1, 0
        %v3282 = vsel %vm2770, 1, 0
        %v3283 = vsel %vm2771, 1, 0
        %v3284 = vsel %vm2772, 1, 0
        %v3285 = vsel %vm2773, 1, 0
        %v3286 = vsel %vm2774, 1, 0
        %v3287 = vsel %vm2775, 1, 0
        %v3288 = vsel %vm2776, 1, 0
        %v3289 = vsel %vm2777, 1, 0
        %v3290 = vsel %vm2778, 1, 0
        %v3291 = vsel %vm2779, 1, 0
        %v3292 = vsel %vm2780, 1, 0
        %v3293 = vsel %vm2781, 1, 0
        %v3294 = vsel %vm2782, 1, 0
        %v3295 = vsel %vm2783, 1, 0
        %v3296 = vsel %vm2784, 1, 0
        %v3297 = vsel %vm2785, 1, 0
        %v3298 = vsel %vm2786, 1, 0
        %v3299 = vsel %vm2787, 1, 0
        %v3300 = vsel %vm2788, 1, 0
        %v3301 = vsel %vm2789, 1, 0
        %v3302 = vsel %vm2790, 1, 0
        %v3303 = vsel %vm2791, 1, 0
        %v3304 = vsel %vm2792, 1, 0
        %v3305 = vsel %vm2793, 1, 0
        %v3306 = vsel %vm2794, 1, 0
        %v3307 = vsel %vm2795, 1, 0
        %v3308 = vsel %vm2796, 1, 0
        %v3309 = vsel %vm2797, 1, 0
        %v3310 = vsel %vm2798, 1, 0
        %v3311 = vsel %vm2799, 1, 0
        %v3312 = vsel %vm2800, 1, 0
        %v3313 = vsel %vm2801, 1, 0
        %v3314 = vsel %vm2802, 1, 0
        %v3315 = vsel %vm2803, 1, 0
        %v3316 = vsel %vm2804, 1, 0
        %v3317 = vsel %vm2805, 1, 0
        %v3318 = vsel %vm2806, 1, 0
        %v3319 = vsel %vm2807, 1, 0
        %v3320 = vsel %vm2808, 1, 0
        %v3321 = vsel %vm2809, 1, 0
        %v3322 = vsel %vm2810, 1, 0
        %v3323 = vsel %vm2811, 1, 0
        %v3324 = vsel %vm2812, 1, 0
        %v3325 = vsel %vm2813, 1, 0
        %v3326 = vsel %vm2814, 1, 0
        %v3327 = vsel %vm2815, 1, 0
        %v3328 = vsel %vm2816, 1, 0
        %v3329 = vsel %vm2817, 1, 0
        %v3330 = vsel %vm2818, 1, 0
        %v3331 = vsel %vm2819, 1, 0
        %v3332 = vsel %vm2820, 1, 0
        %v3333 = vsel %vm2821, 1, 0
        %v3334 = vsel %vm2822, 1, 0
        %v3335 = vsel %vm2823, 1, 0
        %v3336 = vsel %vm2824, 1, 0
        %v3337 = vsel %vm2825, 1, 0
        %v3338 = vsel %vm2826, 1, 0
        %v3339 = vsel %vm2827, 1, 0
        %v3340 = vsel %vm2828, 1, 0
        %v3341 = vsel %vm2829, 1, 0
        %v3342 = vsel %vm2830, 1, 0
        %v3343 = vsel %vm2831, 1, 0
        %v3344 = vsel %vm2832, 1, 0
        %v3345 = vsel %vm2833, 1, 0
        %v3346 = vsel %vm2834, 1, 0
        %v3347 = vsel %vm2835, 1, 0
        %v3348 = vsel %vm2836, 1, 0
        %v3349 = vsel %vm2837, 1, 0
        %v3350 = vsel %vm2838, 1, 0
        %v3351 = vsel %vm2839, 1, 0
        %v3352 = vsel %vm2840, 1, 0
        %v3353 = vsel %vm2841, 1, 0
        %v3354 = vsel %vm2842, 1, 0
        %v3355 = vsel %vm2843, 1, 0
        %v3356 = vsel %vm2844, 1, 0
        %v3357 = vsel %vm2845, 1, 0
        %v3358 = vsel %vm2846, 1, 0
        %v3359 = vsel %vm2847, 1, 0
        %v3360 = vsel %vm2848, 1, 0
        %v3361 = vsel %vm2849, 1, 0
        %v3362 = vsel %vm2850, 1, 0
        %v3363 = vsel %vm2851, 1, 0
        %v3364 = vsel %vm2852, 1, 0
        %v3365 = vsel %vm2853, 1, 0
        %v3366 = vsel %vm2854, 1, 0
        %v3367 = vsel %vm2855, 1, 0
        %v3368 = vsel %vm2856, 1, 0
        %v3369 = vsel %vm2857, 1, 0
        %v3370 = vsel %vm2858, 1, 0
        %v3371 = vsel %vm2859, 1, 0
        %v3372 = vsel %vm2860, 1, 0
        %v3373 = vsel %vm2861, 1, 0
        %v3374 = vsel %vm2862, 1, 0
        %v3375 = vsel %vm2863, 1, 0
        %v3376 = vsel %vm2864, 1, 0
        %v3377 = vsel %vm2865, 1, 0
        %v3378 = vsel %vm2866, 1, 0
        %v3379 = vsel %vm2867, 1, 0
        %v3380 = vsel %vm2868, 1, 0
        %v3381 = vsel %vm2869, 1, 0
        %v3382 = vsel %vm2870, 1, 0
        %v3383 = vsel %vm2871, 1, 0
        %v3384 = vsel %vm2872, 1, 0
        %v3385 = vsel %vm2873, 1, 0
        %v3386 = vsel %vm2874, 1, 0
        %v3387 = vsel %vm2875, 1, 0
        %v3388 = vsel %vm2876, 1, 0
        %v3389 = vsel %vm2877, 1, 0
        %v3390 = vsel %vm2878, 1, 0
        %v3391 = vsel %vm2879, 1, 0
        %v3392 = vsel %vm2880, 1, 0
        %v3393 = vsel %vm2881, 1, 0
        %v3394 = vsel %vm2882, 1, 0
        %v3395 = vsel %vm2883, 1, 0
        %v3396 = vsel %vm2884, 1, 0
        %v3397 = vsel %vm2885, 1, 0
        %v3398 = vsel %vm2886, 1, 0
        %v3399 = vsel %vm2887, 1, 0
        %v3400 = vsel %vm2888, 1, 0
        %v3401 = vsel %vm2889, 1, 0
        %v3402 = vsel %vm2890, 1, 0
        %v3403 = vsel %vm2891, 1, 0
        %v3404 = vsel %vm2892, 1, 0
        %v3405 = vsel %vm2893, 1, 0
        %v3406 = vsel %vm2894, 1, 0
        %v3407 = vsel %vm2895, 1, 0
        %v3408 = vsel %vm2896, 1, 0
        %v3409 = vsel %vm2897, 1, 0
        %v3410 = vsel %vm2898, 1, 0
        %v3411 = vsel %vm2899, 1, 0
        %v3412 = vsel %vm2900, 1, 0
        %v3413 = vsel %vm2901, 1, 0
        %v3414 = vsel %vm2902, 1, 0
        %v3415 = vsel %vm2903, 1, 0
        %v3416 = vsel %vm2904, 1, 0
        %v3417 = vsel %vm2905, 1, 0
        %v3418 = vsel %vm2906, 1, 0
        %v3419 = vsel %vm2907, 1, 0
        %v3420 = vsel %vm2908, 1, 0
        %v3421 = vsel %vm2909, 1, 0
        %v3422 = vsel %vm2910, 1, 0
        %v3423 = vsel %vm2911, 1, 0
        %v3424 = vsel %vm2912, 1, 0
        %v3425 = vsel %vm2913, 1, 0
        %v3426 = vsel %vm2914, 1, 0
        %v3427 = vsel %vm2915, 1, 0
        %v3428 = vsel %vm2916, 1, 0
        %v3429 = vsel %vm2917, 1, 0
        %v3430 = vsel %vm2918, 1, 0
        %v3431 = vsel %vm2919, 1, 0
        %v3432 = vsel %vm2920, 1, 0
        %v3433 = vsel %vm2921, 1, 0
        %v3434 = vsel %vm2922, 1, 0
        %v3435 = vsel %vm2923, 1, 0
        %v3436 = vsel %vm2924, 1, 0
        %v3437 = vsel %vm2925, 1, 0
        %v3438 = vsel %vm2926, 1, 0
        %v3439 = vsel %vm2927, 1, 0
        %v3440 = vsel %vm2928, 1, 0
        %v3441 = vsel %vm2929, 1, 0
        %v3442 = vsel %vm2930, 1, 0
        %v3443 = vsel %vm2931, 1, 0
        %v3444 = vsel %vm2932, 1, 0
        %v3445 = vsel %vm2933, 1, 0
        %v3446 = vsel %vm2934, 1, 0
        %v3447 = vsel %vm2935, 1, 0
        %v3448 = vsel %vm2936, 1, 0
        %v3449 = vsel %vm2937, 1, 0
        %v3450 = vsel %vm2938, 1, 0
        %v3451 = vsel %vm2939, 1, 0
        %v3452 = vsel %vm2940, 1, 0
        %v3453 = vsel %vm2941, 1, 0
        %v3454 = vsel %vm2942, 1, 0
        %v3455 = vsel %vm2943, 1, 0
        %v3456 = vsel %vm2944, 1, 0
        %v3457 = vsel %vm2945, 1, 0
        %v3458 = vsel %vm2946, 1, 0
        %v3459 = vsel %vm2947, 1, 0
        %v3460 = vsel %vm2948, 1, 0
        %v3461 = vsel %vm2949, 1, 0
        %v3462 = vsel %vm2950, 1, 0
        %v3463 = vsel %vm2951, 1, 0
        %v3464 = vsel %vm2952, 1, 0
        %v3465 = vsel %vm2953, 1, 0
        %v3466 = vsel %vm2954, 1, 0
        %v3467 = vsel %vm2955, 1, 0
        %v3468 = vsel %vm2956, 1, 0
        %v3469 = vsel %vm2957, 1, 0
        %v3470 = vsel %vm2958, 1, 0
        %v3471 = vsel %vm2959, 1, 0
        %v3472 = vsel %vm2960, 1, 0
        %v3473 = vsel %vm2961, 1, 0
        %v3474 = vsel %vm2962, 1, 0
        %v3475 = vsel %vm2963, 1, 0
        %v3476 = vsel %vm2964, 1, 0
        %v3477 = vsel %vm2965, 1, 0
        %v3478 = vsel %vm2966, 1, 0
        %v3479 = vsel %vm2967, 1, 0
        %v3480 = vsel %vm2968, 1, 0
        %v3481 = vsel %vm2969, 1, 0
        %v3482 = vsel %vm2970, 1, 0
        %v3483 = vsel %vm2971, 1, 0
        %v3484 = vsel %vm2972, 1, 0
        %v3485 = vsel %vm2973, 1, 0
        %v3486 = vsel %vm2974, 1, 0
        %v3487 = vsel %vm2975, 1, 0
        %v3488 = vsel %vm2976, 1, 0
        %v3489 = vsel %vm2977, 1, 0
        %v3490 = vsel %vm2978, 1, 0
        %v3491 = vsel %vm2979, 1, 0
        %v3492 = vsel %vm2980, 1, 0
        %v3493 = vsel %vm2981, 1, 0
        %v3494 = vsel %vm2982, 1, 0
        %v3495 = vsel %vm2983, 1, 0
        %v3496 = vsel %vm2984, 1, 0
        %v3497 = vsel %vm2985, 1, 0
        %v3498 = vsel %vm2986, 1, 0
        %v3499 = vsel %vm2987, 1, 0
        %v3500 = vsel %vm2988, 1, 0
        %v3501 = vsel %vm2989, 1, 0
        %v3502 = vsel %vm2990, 1, 0
        %v3503 = vsel %vm2991, 1, 0
        %v3504 = vsel %vm2992, 1, 0
        %v3505 = vsel %vm2993, 1, 0
        %v3506 = vsel %vm2994, 1, 0
        %v3507 = vsel %vm2995, 1, 0
        %v3508 = vsel %vm2996, 1, 0
        %v3509 = vsel %vm2997, 1, 0
        %v3510 = vsel %vm2998, 1, 0
        %v3511 = vsel %vm2999, 1, 0
        %v3512 = vsel %vm3000, 1, 0
        %v3513 = vsel %vm3001, 1, 0
        %v3514 = vsel %vm3002, 1, 0
        %v3515 = vsel %vm3003, 1, 0
        %v3516 = vsel %vm3004, 1, 0
        %v3517 = vsel %vm3005, 1, 0
        %v3518 = vsel %vm3006, 1, 0
        %v3519 = vsel %vm3007, 1, 0
        %v3520 = vsel %vm3008, 1, 0
        %v3521 = vsel %vm3009, 1, 0
        %v3522 = vsel %vm3010, 1, 0
        %v3523 = vsel %vm3011, 1, 0
        %v3524 = vsel %vm3012, 1, 0
        %v3525 = vsel %vm3013, 1, 0
        %v3526 = vsel %vm3014, 1, 0
        %v3527 = vsel %vm3015, 1, 0
        %v3528 = vsel %vm3016, 1, 0
        %v3529 = vsel %vm3017, 1, 0
        %v3530 = vsel %vm3018, 1, 0
        %v3531 = vsel %vm3019, 1, 0
        %v3532 = vsel %vm3020, 1, 0
        %v3533 = vsel %vm3021, 1, 0
        %v3534 = vsel %vm3022, 1, 0
        %v3535 = vsel %vm3023, 1, 0
        %v3536 = vsel %vm3024, 1, 0
        %v3537 = vsel %vm3025, 1, 0
        %v3538 = vsel %vm3026, 1, 0
        %v3539 = vsel %vm3027, 1, 0
        %v3540 = vsel %vm3028, 1, 0
        %v3541 = vsel %vm3029, 1, 0
        %v3542 = vsel %vm3030, 1, 0
        %v3543 = vsel %vm3031, 1, 0
        %v3544 = vsel %vm3032, 1, 0
        %v3545 = vsel %vm3033, 1, 0
        %v3546 = vsel %vm3034, 1, 0
        %v3547 = vsel %vm3035, 1, 0
        %v3548 = vsel %vm3036, 1, 0
        %v3549 = vsel %vm3037, 1, 0
        %v3550 = vsel %vm3038, 1, 0
        %v3551 = vsel %vm3039, 1, 0
        %v3552 = vsel %vm3040, 1, 0
        %v3553 = vsel %vm3041, 1, 0
        %v3554 = vsel %vm3042, 1, 0
        %v3555 = vsel %vm3043, 1, 0
        %v3556 = vsel %vm3044, 1, 0
        %v3557 = vsel %vm3045, 1, 0
        %v3558 = vsel %vm3046, 1, 0
        %v3559 = vsel %vm3047, 1, 0
        %v3560 = vsel %vm3048, 1, 0
        %v3561 = vsel %vm3049, 1, 0
        %v3562 = vsel %vm3050, 1, 0
        %v3563 = vsel %vm3051, 1, 0
        %v3564 = vsel %vm3052, 1, 0
        %v3565 = vsel %vm3053, 1, 0
        %v3566 = vsel %vm3054, 1, 0
        %v3567 = vsel %vm3055, 1, 0
        %v3568 = vsel %vm3056, 1, 0
        %v3569 = vsel %vm3057, 1, 0
        %v3570 = vsel %vm3058, 1, 0
        %v3571 = vsel %vm3059, 1, 0
        %v3572 = vsel %vm3060, 1, 0
        %v3573 = vsel %vm3061, 1, 0
        %v3574 = vsel %vm3062, 1, 0
        %v3575 = vsel %vm3063, 1, 0
        %v3576 = vsel %vm3064, 1, 0
        %v3577 = vsel %vm3065, 1, 0
        %v3578 = vsel %vm3066, 1, 0
        %v3579 = vsel %vm3067, 1, 0
        %v3580 = vsel %vm3068, 1, 0
        %v3581 = vsel %vm3069, 1, 0
        %v3582 = vsel %vm3070, 1, 0
        %v3583 = vsel %vm3071, 1, 0
        %v3584 = vsel %vm3072, 1, 0
        %v3585 = vcvt.s32.f32 %v3073
        %v3586 = vcvt.s32.f32 %v3074
        %v3587 = vcvt.s32.f32 %v3075
        %v3588 = vcvt.s32.f32 %v3076
        %v3589 = vcvt.s32.f32 %v3077
        %v3590 = vcvt.s32.f32 %v3078
        %v3591 = vcvt.s32.f32 %v3079
        %v3592 = vcvt.s32.f32 %v3080
        %v3593 = vcvt.s32.f32 %v3081
        %v3594 = vcvt.s32.f32 %v3082
        %v3595 = vcvt.s32.f32 %v3083
        %v3596 = vcvt.s32.f32 %v3084
        %v3597 = vcvt.s32.f32 %v3085
        %v3598 = vcvt.s32.f32 %v3086
        %v3599 = vcvt.s32.f32 %v3087
        %v3600 = vcvt.s32.f32 %v3088
        %v3601 = vcvt.s32.f32 %v3089
        %v3602 = vcvt.s32.f32 %v3090
        %v3603 = vcvt.s32.f32 %v3091
        %v3604 = vcvt.s32.f32 %v3092
        %v3605 = vcvt.s32.f32 %v3093
        %v3606 = vcvt.s32.f32 %v3094
        %v3607 = vcvt.s32.f32 %v3095
        %v3608 = vcvt.s32.f32 %v3096
        %v3609 = vcvt.s32.f32 %v3097
        %v3610 = vcvt.s32.f32 %v3098
        %v3611 = vcvt.s32.f32 %v3099
        %v3612 = vcvt.s32.f32 %v3100
        %v3613 = vcvt.s32.f32 %v3101
        %v3614 = vcvt.s32.f32 %v3102
        %v3615 = vcvt.s32.f32 %v3103
        %v3616 = vcvt.s32.f32 %v3104
        %v3617 = vcvt.s32.f32 %v3105
        %v3618 = vcvt.s32.f32 %v3106
        %v3619 = vcvt.s32.f32 %v3107
        %v3620 = vcvt.s32.f32 %v3108
        %v3621 = vcvt.s32.f32 %v3109
        %v3622 = vcvt.s32.f32 %v3110
        %v3623 = vcvt.s32.f32 %v3111
        %v3624 = vcvt.s32.f32 %v3112
        %v3625 = vcvt.s32.f32 %v3113
        %v3626 = vcvt.s32.f32 %v3114
        %v3627 = vcvt.s32.f32 %v3115
        %v3628 = vcvt.s32.f32 %v3116
        %v3629 = vcvt.s32.f32 %v3117
        %v3630 = vcvt.s32.f32 %v3118
        %v3631 = vcvt.s32.f32 %v3119
        %v3632 = vcvt.s32.f32 %v3120
        %v3633 = vcvt.s32.f32 %v3121
        %v3634 = vcvt.s32.f32 %v3122
        %v3635 = vcvt.s32.f32 %v3123
        %v3636 = vcvt.s32.f32 %v3124
        %v3637 = vcvt.s32.f32 %v3125
        %v3638 = vcvt.s32.f32 %v3126
        %v3639 = vcvt.s32.f32 %v3127
        %v3640 = vcvt.s32.f32 %v3128
        %v3641 = vcvt.s32.f32 %v3129
        %v3642 = vcvt.s32.f32 %v3130
        %v3643 = vcvt.s32.f32 %v3131
        %v3644 = vcvt.s32.f32 %v3132
        %v3645 = vcvt.s32.f32 %v3133
        %v3646 = vcvt.s32.f32 %v3134
        %v3647 = vcvt.s32.f32 %v3135
        %v3648 = vcvt.s32.f32 %v3136
        %v3649 = vcvt.s32.f32 %v3137
        %v3650 = vcvt.s32.f32 %v3138
        %v3651 = vcvt.s32.f32 %v3139
        %v3652 = vcvt.s32.f32 %v3140
        %v3653 = vcvt.s32.f32 %v3141
        %v3654 = vcvt.s32.f32 %v3142
        %v3655 = vcvt.s32.f32 %v3143
        %v3656 = vcvt.s32.f32 %v3144
        %v3657 = vcvt.s32.f32 %v3145
        %v3658 = vcvt.s32.f32 %v3146
        %v3659 = vcvt.s32.f32 %v3147
        %v3660 = vcvt.s32.f32 %v3148
        %v3661 = vcvt.s32.f32 %v3149
        %v3662 = vcvt.s32.f32 %v3150
        %v3663 = vcvt.s32.f32 %v3151
        %v3664 = vcvt.s32.f32 %v3152
        %v3665 = vcvt.s32.f32 %v3153
        %v3666 = vcvt.s32.f32 %v3154
        %v3667 = vcvt.s32.f32 %v3155
        %v3668 = vcvt.s32.f32 %v3156
        %v3669 = vcvt.s32.f32 %v3157
        %v3670 = vcvt.s32.f32 %v3158
        %v3671 = vcvt.s32.f32 %v3159
        %v3672 = vcvt.s32.f32 %v3160
        %v3673 = vcvt.s32.f32 %v3161
        %v3674 = vcvt.s32.f32 %v3162
        %v3675 = vcvt.s32.f32 %v3163
        %v3676 = vcvt.s32.f32 %v3164
        %v3677 = vcvt.s32.f32 %v3165
        %v3678 = vcvt.s32.f32 %v3166
        %v3679 = vcvt.s32.f32 %v3167
        %v3680 = vcvt.s32.f32 %v3168
        %v3681 = vcvt.s32.f32 %v3169
        %v3682 = vcvt.s32.f32 %v3170
        %v3683 = vcvt.s32.f32 %v3171
        %v3684 = vcvt.s32.f32 %v3172
        %v3685 = vcvt.s32.f32 %v3173
        %v3686 = vcvt.s32.f32 %v3174
        %v3687 = vcvt.s32.f32 %v3175
        %v3688 = vcvt.s32.f32 %v3176
        %v3689 = vcvt.s32.f32 %v3177
        %v3690 = vcvt.s32.f32 %v3178
        %v3691 = vcvt.s32.f32 %v3179
        %v3692 = vcvt.s32.f32 %v3180
        %v3693 = vcvt.s32.f32 %v3181
        %v3694 = vcvt.s32.f32 %v3182
        %v3695 = vcvt.s32.f32 %v3183
        %v3696 = vcvt.s32.f32 %v3184
        %v3697 = vcvt.s32.f32 %v3185
        %v3698 = vcvt.s32.f32 %v3186
        %v3699 = vcvt.s32.f32 %v3187
        %v3700 = vcvt.s32.f32 %v3188
        %v3701 = vcvt.s32.f32 %v3189
        %v3702 = vcvt.s32.f32 %v3190
        %v3703 = vcvt.s32.f32 %v3191
        %v3704 = vcvt.s32.f32 %v3192
        %v3705 = vcvt.s32.f32 %v3193
        %v3706 = vcvt.s32.f32 %v3194
        %v3707 = vcvt.s32.f32 %v3195
        %v3708 = vcvt.s32.f32 %v3196
        %v3709 = vcvt.s32.f32 %v3197
        %v3710 = vcvt.s32.f32 %v3198
        %v3711 = vcvt.s32.f32 %v3199
        %v3712 = vcvt.s32.f32 %v3200
        %v3713 = vcvt.s32.f32 %v3201
        %v3714 = vcvt.s32.f32 %v3202
        %v3715 = vcvt.s32.f32 %v3203
        %v3716 = vcvt.s32.f32 %v3204
        %v3717 = vcvt.s32.f32 %v3205
        %v3718 = vcvt.s32.f32 %v3206
        %v3719 = vcvt.s32.f32 %v3207
        %v3720 = vcvt.s32.f32 %v3208
        %v3721 = vcvt.s32.f32 %v3209
        %v3722 = vcvt.s32.f32 %v3210
        %v3723 = vcvt.s32.f32 %v3211
        %v3724 = vcvt.s32.f32 %v3212
        %v3725 = vcvt.s32.f32 %v3213
        %v3726 = vcvt.s32.f32 %v3214
        %v3727 = vcvt.s32.f32 %v3215
        %v3728 = vcvt.s32.f32 %v3216
        %v3729 = vcvt.s32.f32 %v3217
        %v3730 = vcvt.s32.f32 %v3218
        %v3731 = vcvt.s32.f32 %v3219
        %v3732 = vcvt.s32.f32 %v3220
        %v3733 = vcvt.s32.f32 %v3221
        %v3734 = vcvt.s32.f32 %v3222
        %v3735 = vcvt.s32.f32 %v3223
        %v3736 = vcvt.s32.f32 %v3224
        %v3737 = vcvt.s32.f32 %v3225
        %v3738 = vcvt.s32.f32 %v3226
        %v3739 = vcvt.s32.f32 %v3227
        %v3740 = vcvt.s32.f32 %v3228
        %v3741 = vcvt.s32.f32 %v3229
        %v3742 = vcvt.s32.f32 %v3230
        %v3743 = vcvt.s32.f32 %v3231
        %v3744 = vcvt.s32.f32 %v3232
        %v3745 = vcvt.s32.f32 %v3233
        %v3746 = vcvt.s32.f32 %v3234
        %v3747 = vcvt.s32.f32 %v3235
        %v3748 = vcvt.s32.f32 %v3236
        %v3749 = vcvt.s32.f32 %v3237
        %v3750 = vcvt.s32.f32 %v3238
        %v3751 = vcvt.s32.f32 %v3239
        %v3752 = vcvt.s32.f32 %v3240
        %v3753 = vcvt.s32.f32 %v3241
        %v3754 = vcvt.s32.f32 %v3242
        %v3755 = vcvt.s32.f32 %v3243
        %v3756 = vcvt.s32.f32 %v3244
        %v3757 = vcvt.s32.f32 %v3245
        %v3758 = vcvt.s32.f32 %v3246
        %v3759 = vcvt.s32.f32 %v3247
        %v3760 = vcvt.s32.f32 %v3248
        %v3761 = vcvt.s32.f32 %v3249
        %v3762 = vcvt.s32.f32 %v3250
        %v3763 = vcvt.s32.f32 %v3251
        %v3764 = vcvt.s32.f32 %v3252
        %v3765 = vcvt.s32.f32 %v3253
        %v3766 = vcvt.s32.f32 %v3254
        %v3767 = vcvt.s32.f32 %v3255
        %v3768 = vcvt.s32.f32 %v3256
        %v3769 = vcvt.s32.f32 %v3257
        %v3770 = vcvt.s32.f32 %v3258
        %v3771 = vcvt.s32.f32 %v3259
        %v3772 = vcvt.s32.f32 %v3260
        %v3773 = vcvt.s32.f32 %v3261
        %v3774 = vcvt.s32.f32 %v3262
        %v3775 = vcvt.s32.f32 %v3263
        %v3776 = vcvt.s32.f32 %v3264
        %v3777 = vcvt.s32.f32 %v3265
        %v3778 = vcvt.s32.f32 %v3266
        %v3779 = vcvt.s32.f32 %v3267
        %v3780 = vcvt.s32.f32 %v3268
        %v3781 = vcvt.s32.f32 %v3269
        %v3782 = vcvt.s32.f32 %v3270
        %v3783 = vcvt.s32.f32 %v3271
        %v3784 = vcvt.s32.f32 %v3272
        %v3785 = vcvt.s32.f32 %v3273
        %v3786 = vcvt.s32.f32 %v3274
        %v3787 = vcvt.s32.f32 %v3275
        %v3788 = vcvt.s32.f32 %v3276
        %v3789 = vcvt.s32.f32 %v3277
        %v3790 = vcvt.s32.f32 %v3278
        %v3791 = vcvt.s32.f32 %v3279
        %v3792 = vcvt.s32.f32 %v3280
        %v3793 = vcvt.s32.f32 %v3281
        %v3794 = vcvt.s32.f32 %v3282
        %v3795 = vcvt.s32.f32 %v3283
        %v3796 = vcvt.s32.f32 %v3284
        %v3797 = vcvt.s32.f32 %v3285
        %v3798 = vcvt.s32.f32 %v3286
        %v3799 = vcvt.s32.f32 %v3287
        %v3800 = vcvt.s32.f32 %v3288
        %v3801 = vcvt.s32.f32 %v3289
        %v3802 = vcvt.s32.f32 %v3290
        %v3803 = vcvt.s32.f32 %v3291
        %v3804 = vcvt.s32.f32 %v3292
        %v3805 = vcvt.s32.f32 %v3293
        %v3806 = vcvt.s32.f32 %v3294
        %v3807 = vcvt.s32.f32 %v3295
        %v3808 = vcvt.s32.f32 %v3296
        %v3809 = vcvt.s32.f32 %v3297
        %v3810 = vcvt.s32.f32 %v3298
        %v3811 = vcvt.s32.f32 %v3299
        %v3812 = vcvt.s32.f32 %v3300
        %v3813 = vcvt.s32.f32 %v3301
        %v3814 = vcvt.s32.f32 %v3302
        %v3815 = vcvt.s32.f32 %v3303
        %v3816 = vcvt.s32.f32 %v3304
        %v3817 = vcvt.s32.f32 %v3305
        %v3818 = vcvt.s32.f32 %v3306
        %v3819 = vcvt.s32.f32 %v3307
        %v3820 = vcvt.s32.f32 %v3308
        %v3821 = vcvt.s32.f32 %v3309
        %v3822 = vcvt.s32.f32 %v3310
        %v3823 = vcvt.s32.f32 %v3311
        %v3824 = vcvt.s32.f32 %v3312
        %v3825 = vcvt.s32.f32 %v3313
        %v3826 = vcvt.s32.f32 %v3314
        %v3827 = vcvt.s32.f32 %v3315
        %v3828 = vcvt.s32.f32 %v3316
        %v3829 = vcvt.s32.f32 %v3317
        %v3830 = vcvt.s32.f32 %v3318
        %v3831 = vcvt.s32.f32 %v3319
        %v3832 = vcvt.s32.f32 %v3320
        %v3833 = vcvt.s32.f32 %v3321
        %v3834 = vcvt.s32.f32 %v3322
        %v3835 = vcvt.s32.f32 %v3323
        %v3836 = vcvt.s32.f32 %v3324
        %v3837 = vcvt.s32.f32 %v3325
        %v3838 = vcvt.s32.f32 %v3326
        %v3839 = vcvt.s32.f32 %v3327
        %v3840 = vcvt.s32.f32 %v3328
        %v3841 = vcvt.s32.f32 %v3329
        %v3842 = vcvt.s32.f32 %v3330
        %v3843 = vcvt.s32.f32 %v3331
        %v3844 = vcvt.s32.f32 %v3332
        %v3845 = vcvt.s32.f32 %v3333
        %v3846 = vcvt.s32.f32 %v3334
        %v3847 = vcvt.s32.f32 %v3335
        %v3848 = vcvt.s32.f32 %v3336
        %v3849 = vcvt.s32.f32 %v3337
        %v3850 = vcvt.s32.f32 %v3338
        %v3851 = vcvt.s32.f32 %v3339
        %v3852 = vcvt.s32.f32 %v3340
        %v3853 = vcvt.s32.f32 %v3341
        %v3854 = vcvt.s32.f32 %v3342
        %v3855 = vcvt.s32.f32 %v3343
        %v3856 = vcvt.s32.f32 %v3344
        %v3857 = vcvt.s32.f32 %v3345
        %v3858 = vcvt.s32.f32 %v3346
        %v3859 = vcvt.s32.f32 %v3347
        %v3860 = vcvt.s32.f32 %v3348
        %v3861 = vcvt.s32.f32 %v3349
        %v3862 = vcvt.s32.f32 %v3350
        %v3863 = vcvt.s32.f32 %v3351
        %v3864 = vcvt.s32.f32 %v3352
        %v3865 = vcvt.s32.f32 %v3353
        %v3866 = vcvt.s32.f32 %v3354
        %v3867 = vcvt.s32.f32 %v3355
        %v3868 = vcvt.s32.f32 %v3356
        %v3869 = vcvt.s32.f32 %v3357
        %v3870 = vcvt.s32.f32 %v3358
        %v3871 = vcvt.s32.f32 %v3359
        %v3872 = vcvt.s32.f32 %v3360
        %v3873 = vcvt.s32.f32 %v3361
        %v3874 = vcvt.s32.f32 %v3362
        %v3875 = vcvt.s32.f32 %v3363
        %v3876 = vcvt.s32.f32 %v3364
        %v3877 = vcvt.s32.f32 %v3365
        %v3878 = vcvt.s32.f32 %v3366
        %v3879 = vcvt.s32.f32 %v3367
        %v3880 = vcvt.s32.f32 %v3368
        %v3881 = vcvt.s32.f32 %v3369
        %v3882 = vcvt.s32.f32 %v3370
        %v3883 = vcvt.s32.f32 %v3371
        %v3884 = vcvt.s32.f32 %v3372
        %v3885 = vcvt.s32.f32 %v3373
        %v3886 = vcvt.s32.f32 %v3374
        %v3887 = vcvt.s32.f32 %v3375
        %v3888 = vcvt.s32.f32 %v3376
        %v3889 = vcvt.s32.f32 %v3377
        %v3890 = vcvt.s32.f32 %v3378
        %v3891 = vcvt.s32.f32 %v3379
        %v3892 = vcvt.s32.f32 %v3380
        %v3893 = vcvt.s32.f32 %v3381
        %v3894 = vcvt.s32.f32 %v3382
        %v3895 = vcvt.s32.f32 %v3383
        %v3896 = vcvt.s32.f32 %v3384
        %v3897 = vcvt.s32.f32 %v3385
        %v3898 = vcvt.s32.f32 %v3386
        %v3899 = vcvt.s32.f32 %v3387
        %v3900 = vcvt.s32.f32 %v3388
        %v3901 = vcvt.s32.f32 %v3389
        %v3902 = vcvt.s32.f32 %v3390
        %v3903 = vcvt.s32.f32 %v3391
        %v3904 = vcvt.s32.f32 %v3392
        %v3905 = vcvt.s32.f32 %v3393
        %v3906 = vcvt.s32.f32 %v3394
        %v3907 = vcvt.s32.f32 %v3395
        %v3908 = vcvt.s32.f32 %v3396
        %v3909 = vcvt.s32.f32 %v3397
        %v3910 = vcvt.s32.f32 %v3398
        %v3911 = vcvt.s32.f32 %v3399
        %v3912 = vcvt.s32.f32 %v3400
        %v3913 = vcvt.s32.f32 %v3401
        %v3914 = vcvt.s32.f32 %v3402
        %v3915 = vcvt.s32.f32 %v3403
        %v3916 = vcvt.s32.f32 %v3404
        %v3917 = vcvt.s32.f32 %v3405
        %v3918 = vcvt.s32.f32 %v3406
        %v3919 = vcvt.s32.f32 %v3407
        %v3920 = vcvt.s32.f32 %v3408
        %v3921 = vcvt.s32.f32 %v3409
        %v3922 = vcvt.s32.f32 %v3410
        %v3923 = vcvt.s32.f32 %v3411
        %v3924 = vcvt.s32.f32 %v3412
        %v3925 = vcvt.s32.f32 %v3413
        %v3926 = vcvt.s32.f32 %v3414
        %v3927 = vcvt.s32.f32 %v3415
        %v3928 = vcvt.s32.f32 %v3416
        %v3929 = vcvt.s32.f32 %v3417
        %v3930 = vcvt.s32.f32 %v3418
        %v3931 = vcvt.s32.f32 %v3419
        %v3932 = vcvt.s32.f32 %v3420
        %v3933 = vcvt.s32.f32 %v3421
        %v3934 = vcvt.s32.f32 %v3422
        %v3935 = vcvt.s32.f32 %v3423
        %v3936 = vcvt.s32.f32 %v3424
        %v3937 = vcvt.s32.f32 %v3425
        %v3938 = vcvt.s32.f32 %v3426
        %v3939 = vcvt.s32.f32 %v3427
        %v3940 = vcvt.s32.f32 %v3428
        %v3941 = vcvt.s32.f32 %v3429
        %v3942 = vcvt.s32.f32 %v3430
        %v3943 = vcvt.s32.f32 %v3431
        %v3944 = vcvt.s32.f32 %v3432
        %v3945 = vcvt.s32.f32 %v3433
        %v3946 = vcvt.s32.f32 %v3434
        %v3947 = vcvt.s32.f32 %v3435
        %v3948 = vcvt.s32.f32 %v3436
        %v3949 = vcvt.s32.f32 %v3437
        %v3950 = vcvt.s32.f32 %v3438
        %v3951 = vcvt.s32.f32 %v3439
        %v3952 = vcvt.s32.f32 %v3440
        %v3953 = vcvt.s32.f32 %v3441
        %v3954 = vcvt.s32.f32 %v3442
        %v3955 = vcvt.s32.f32 %v3443
        %v3956 = vcvt.s32.f32 %v3444
        %v3957 = vcvt.s32.f32 %v3445
        %v3958 = vcvt.s32.f32 %v3446
        %v3959 = vcvt.s32.f32 %v3447
        %v3960 = vcvt.s32.f32 %v3448
        %v3961 = vcvt.s32.f32 %v3449
        %v3962 = vcvt.s32.f32 %v3450
        %v3963 = vcvt.s32.f32 %v3451
        %v3964 = vcvt.s32.f32 %v3452
        %v3965 = vcvt.s32.f32 %v3453
        %v3966 = vcvt.s32.f32 %v3454
        %v3967 = vcvt.s32.f32 %v3455
        %v3968 = vcvt.s32.f32 %v3456
        %v3969 = vcvt.s32.f32 %v3457
        %v3970 = vcvt.s32.f32 %v3458
        %v3971 = vcvt.s32.f32 %v3459
        %v3972 = vcvt.s32.f32 %v3460
        %v3973 = vcvt.s32.f32 %v3461
        %v3974 = vcvt.s32.f32 %v3462
        %v3975 = vcvt.s32.f32 %v3463
        %v3976 = vcvt.s32.f32 %v3464
        %v3977 = vcvt.s32.f32 %v3465
        %v3978 = vcvt.s32.f32 %v3466
        %v3979 = vcvt.s32.f32 %v3467
        %v3980 = vcvt.s32.f32 %v3468
        %v3981 = vcvt.s32.f32 %v3469
        %v3982 = vcvt.s32.f32 %v3470
        %v3983 = vcvt.s32.f32 %v3471
        %v3984 = vcvt.s32.f32 %v3472
        %v3985 = vcvt.s32.f32 %v3473
        %v3986 = vcvt.s32.f32 %v3474
        %v3987 = vcvt.s32.f32 %v3475
        %v3988 = vcvt.s32.f32 %v3476
        %v3989 = vcvt.s32.f32 %v3477
        %v3990 = vcvt.s32.f32 %v3478
        %v3991 = vcvt.s32.f32 %v3479
        %v3992 = vcvt.s32.f32 %v3480
        %v3993 = vcvt.s32.f32 %v3481
        %v3994 = vcvt.s32.f32 %v3482
        %v3995 = vcvt.s32.f32 %v3483
        %v3996 = vcvt.s32.f32 %v3484
        %v3997 = vcvt.s32.f32 %v3485
        %v3998 = vcvt.s32.f32 %v3486
        %v3999 = vcvt.s32.f32 %v3487
        %v4000 = vcvt.s32.f32 %v3488
        %v4001 = vcvt.s32.f32 %v3489
        %v4002 = vcvt.s32.f32 %v3490
        %v4003 = vcvt.s32.f32 %v3491
        %v4004 = vcvt.s32.f32 %v3492
        %v4005 = vcvt.s32.f32 %v3493
        %v4006 = vcvt.s32.f32 %v3494
        %v4007 = vcvt.s32.f32 %v3495
        %v4008 = vcvt.s32.f32 %v3496
        %v4009 = vcvt.s32.f32 %v3497
        %v4010 = vcvt.s32.f32 %v3498
        %v4011 = vcvt.s32.f32 %v3499
        %v4012 = vcvt.s32.f32 %v3500
        %v4013 = vcvt.s32.f32 %v3501
        %v4014 = vcvt.s32.f32 %v3502
        %v4015 = vcvt.s32.f32 %v3503
        %v4016 = vcvt.s32.f32 %v3504
        %v4017 = vcvt.s32.f32 %v3505
        %v4018 = vcvt.s32.f32 %v3506
        %v4019 = vcvt.s32.f32 %v3507
        %v4020 = vcvt.s32.f32 %v3508
        %v4021 = vcvt.s32.f32 %v3509
        %v4022 = vcvt.s32.f32 %v3510
        %v4023 = vcvt.s32.f32 %v3511
        %v4024 = vcvt.s32.f32 %v3512
        %v4025 = vcvt.s32.f32 %v3513
        %v4026 = vcvt.s32.f32 %v3514
        %v4027 = vcvt.s32.f32 %v3515
        %v4028 = vcvt.s32.f32 %v3516
        %v4029 = vcvt.s32.f32 %v3517
        %v4030 = vcvt.s32.f32 %v3518
        %v4031 = vcvt.s32.f32 %v3519
        %v4032 = vcvt.s32.f32 %v3520
        %v4033 = vcvt.s32.f32 %v3521
        %v4034 = vcvt.s32.f32 %v3522
        %v4035 = vcvt.s32.f32 %v3523
        %v4036 = vcvt.s32.f32 %v3524
        %v4037 = vcvt.s32.f32 %v3525
        %v4038 = vcvt.s32.f32 %v3526
        %v4039 = vcvt.s32.f32 %v3527
        %v4040 = vcvt.s32.f32 %v3528
        %v4041 = vcvt.s32.f32 %v3529
        %v4042 = vcvt.s32.f32 %v3530
        %v4043 = vcvt.s32.f32 %v3531
        %v4044 = vcvt.s32.f32 %v3532
        %v4045 = vcvt.s32.f32 %v3533
        %v4046 = vcvt.s32.f32 %v3534
        %v4047 = vcvt.s32.f32 %v3535
        %v4048 = vcvt.s32.f32 %v3536
        %v4049 = vcvt.s32.f32 %v3537
        %v4050 = vcvt.s32.f32 %v3538
        %v4051 = vcvt.s32.f32 %v3539
        %v4052 = vcvt.s32.f32 %v3540
        %v4053 = vcvt.s32.f32 %v3541
        %v4054 = vcvt.s32.f32 %v3542
        %v4055 = vcvt.s32.f32 %v3543
        %v4056 = vcvt.s32.f32 %v3544
        %v4057 = vcvt.s32.f32 %v3545
        %v4058 = vcvt.s32.f32 %v3546
        %v4059 = vcvt.s32.f32 %v3547
        %v4060 = vcvt.s32.f32 %v3548
        %v4061 = vcvt.s32.f32 %v3549
        %v4062 = vcvt.s32.f32 %v3550
        %v4063 = vcvt.s32.f32 %v3551
        %v4064 = vcvt.s32.f32 %v3552
        %v4065 = vcvt.s32.f32 %v3553
        %v4066 = vcvt.s32.f32 %v3554
        %v4067 = vcvt.s32.f32 %v3555
        %v4068 = vcvt.s32.f32 %v3556
        %v4069 = vcvt.s32.f32 %v3557
        %v4070 = vcvt.s32.f32 %v3558
        %v4071 = vcvt.s32.f32 %v3559
        %v4072 = vcvt.s32.f32 %v3560
        %v4073 = vcvt.s32.f32 %v3561
        %v4074 = vcvt.s32.f32 %v3562
        %v4075 = vcvt.s32.f32 %v3563
        %v4076 = vcvt.s32.f32 %v3564
        %v4077 = vcvt.s32.f32 %v3565
        %v4078 = vcvt.s32.f32 %v3566
        %v4079 = vcvt.s32.f32 %v3567
        %v4080 = vcvt.s32.f32 %v3568
        %v4081 = vcvt.s32.f32 %v3569
        %v4082 = vcvt.s32.f32 %v3570
        %v4083 = vcvt.s32.f32 %v3571
        %v4084 = vcvt.s32.f32 %v3572
        %v4085 = vcvt.s32.f32 %v3573
        %v4086 = vcvt.s32.f32 %v3574
        %v4087 = vcvt.s32.f32 %v3575
        %v4088 = vcvt.s32.f32 %v3576
        %v4089 = vcvt.s32.f32 %v3577
        %v4090 = vcvt.s32.f32 %v3578
        %v4091 = vcvt.s32.f32 %v3579
        %v4092 = vcvt.s32.f32 %v3580
        %v4093 = vcvt.s32.f32 %v3581
        %v4094 = vcvt.s32.f32 %v3582
        %v4095 = vcvt.s32.f32 %v3583
        %v4096 = vcvt.s32.f32 %v3584
        %v4097 = vpack.c.bf16 %v3593, %v3585
        %v4098 = vpack.c.bf16 %v3594, %v3586
        %v4099 = vpack.c.bf16 %v3595, %v3587
        %v4100 = vpack.c.bf16 %v3596, %v3588
        %v4101 = vpack.c.bf16 %v3597, %v3589
        %v4102 = vpack.c.bf16 %v3598, %v3590
        %v4103 = vpack.c.bf16 %v3599, %v3591
        %v4104 = vpack.c.bf16 %v3600, %v3592
        %v4105 = vpack.c.bf16 %v3609, %v3601
        %v4106 = vpack.c.bf16 %v3610, %v3602
        %v4107 = vpack.c.bf16 %v3611, %v3603
        %v4108 = vpack.c.bf16 %v3612, %v3604
        %v4109 = vpack.c.bf16 %v3613, %v3605
        %v4110 = vpack.c.bf16 %v3614, %v3606
        %v4111 = vpack.c.bf16 %v3615, %v3607
        %v4112 = vpack.c.bf16 %v3616, %v3608
        %v4113 = vpack.c.bf16 %v3625, %v3617
        %v4114 = vpack.c.bf16 %v3626, %v3618
        %v4115 = vpack.c.bf16 %v3627, %v3619
        %v4116 = vpack.c.bf16 %v3628, %v3620
        %v4117 = vpack.c.bf16 %v3629, %v3621
        %v4118 = vpack.c.bf16 %v3630, %v3622
        %v4119 = vpack.c.bf16 %v3631, %v3623
        %v4120 = vpack.c.bf16 %v3632, %v3624
        %v4121 = vpack.c.bf16 %v3641, %v3633
        %v4122 = vpack.c.bf16 %v3642, %v3634
        %v4123 = vpack.c.bf16 %v3643, %v3635
        %v4124 = vpack.c.bf16 %v3644, %v3636
        %v4125 = vpack.c.bf16 %v3645, %v3637
        %v4126 = vpack.c.bf16 %v3646, %v3638
        %v4127 = vpack.c.bf16 %v3647, %v3639
        %v4128 = vpack.c.bf16 %v3648, %v3640
        %v4129 = vpack.c.bf16 %v3657, %v3649
        %v4130 = vpack.c.bf16 %v3658, %v3650
        %v4131 = vpack.c.bf16 %v3659, %v3651
        %v4132 = vpack.c.bf16 %v3660, %v3652
        %v4133 = vpack.c.bf16 %v3661, %v3653
        %v4134 = vpack.c.bf16 %v3662, %v3654
        %v4135 = vpack.c.bf16 %v3663, %v3655
        %v4136 = vpack.c.bf16 %v3664, %v3656
        %v4137 = vpack.c.bf16 %v3673, %v3665
        %v4138 = vpack.c.bf16 %v3674, %v3666
        %v4139 = vpack.c.bf16 %v3675, %v3667
        %v4140 = vpack.c.bf16 %v3676, %v3668
        %v4141 = vpack.c.bf16 %v3677, %v3669
        %v4142 = vpack.c.bf16 %v3678, %v3670
        %v4143 = vpack.c.bf16 %v3679, %v3671
        %v4144 = vpack.c.bf16 %v3680, %v3672
        %v4145 = vpack.c.bf16 %v3689, %v3681
        %v4146 = vpack.c.bf16 %v3690, %v3682
        %v4147 = vpack.c.bf16 %v3691, %v3683
        %v4148 = vpack.c.bf16 %v3692, %v3684
        %v4149 = vpack.c.bf16 %v3693, %v3685
        %v4150 = vpack.c.bf16 %v3694, %v3686
        %v4151 = vpack.c.bf16 %v3695, %v3687
        %v4152 = vpack.c.bf16 %v3696, %v3688
        %v4153 = vpack.c.bf16 %v3705, %v3697
        %v4154 = vpack.c.bf16 %v3706, %v3698
        %v4155 = vpack.c.bf16 %v3707, %v3699
        %v4156 = vpack.c.bf16 %v3708, %v3700
        %v4157 = vpack.c.bf16 %v3709, %v3701
        %v4158 = vpack.c.bf16 %v3710, %v3702
        %v4159 = vpack.c.bf16 %v3711, %v3703
        %v4160 = vpack.c.bf16 %v3712, %v3704
        %v4161 = vpack.c.bf16 %v3721, %v3713
        %v4162 = vpack.c.bf16 %v3722, %v3714
        %v4163 = vpack.c.bf16 %v3723, %v3715
        %v4164 = vpack.c.bf16 %v3724, %v3716
        %v4165 = vpack.c.bf16 %v3725, %v3717
        %v4166 = vpack.c.bf16 %v3726, %v3718
        %v4167 = vpack.c.bf16 %v3727, %v3719
        %v4168 = vpack.c.bf16 %v3728, %v3720
        %v4169 = vpack.c.bf16 %v3737, %v3729
        %v4170 = vpack.c.bf16 %v3738, %v3730
        %v4171 = vpack.c.bf16 %v3739, %v3731
        %v4172 = vpack.c.bf16 %v3740, %v3732
        %v4173 = vpack.c.bf16 %v3741, %v3733
        %v4174 = vpack.c.bf16 %v3742, %v3734
        %v4175 = vpack.c.bf16 %v3743, %v3735
        %v4176 = vpack.c.bf16 %v3744, %v3736
        %v4177 = vpack.c.bf16 %v3753, %v3745
        %v4178 = vpack.c.bf16 %v3754, %v3746
        %v4179 = vpack.c.bf16 %v3755, %v3747
        %v4180 = vpack.c.bf16 %v3756, %v3748
        %v4181 = vpack.c.bf16 %v3757, %v3749
        %v4182 = vpack.c.bf16 %v3758, %v3750
        %v4183 = vpack.c.bf16 %v3759, %v3751
        %v4184 = vpack.c.bf16 %v3760, %v3752
        %v4185 = vpack.c.bf16 %v3769, %v3761
        %v4186 = vpack.c.bf16 %v3770, %v3762
        %v4187 = vpack.c.bf16 %v3771, %v3763
        %v4188 = vpack.c.bf16 %v3772, %v3764
        %v4189 = vpack.c.bf16 %v3773, %v3765
        %v4190 = vpack.c.bf16 %v3774, %v3766
        %v4191 = vpack.c.bf16 %v3775, %v3767
        %v4192 = vpack.c.bf16 %v3776, %v3768
        %v4193 = vpack.c.bf16 %v3785, %v3777
        %v4194 = vpack.c.bf16 %v3786, %v3778
        %v4195 = vpack.c.bf16 %v3787, %v3779
        %v4196 = vpack.c.bf16 %v3788, %v3780
        %v4197 = vpack.c.bf16 %v3789, %v3781
        %v4198 = vpack.c.bf16 %v3790, %v3782
        %v4199 = vpack.c.bf16 %v3791, %v3783
        %v4200 = vpack.c.bf16 %v3792, %v3784
        %v4201 = vpack.c.bf16 %v3801, %v3793
        %v4202 = vpack.c.bf16 %v3802, %v3794
        %v4203 = vpack.c.bf16 %v3803, %v3795
        %v4204 = vpack.c.bf16 %v3804, %v3796
        %v4205 = vpack.c.bf16 %v3805, %v3797
        %v4206 = vpack.c.bf16 %v3806, %v3798
        %v4207 = vpack.c.bf16 %v3807, %v3799
        %v4208 = vpack.c.bf16 %v3808, %v3800
        %v4209 = vpack.c.bf16 %v3817, %v3809
        %v4210 = vpack.c.bf16 %v3818, %v3810
        %v4211 = vpack.c.bf16 %v3819, %v3811
        %v4212 = vpack.c.bf16 %v3820, %v3812
        %v4213 = vpack.c.bf16 %v3821, %v3813
        %v4214 = vpack.c.bf16 %v3822, %v3814
        %v4215 = vpack.c.bf16 %v3823, %v3815
        %v4216 = vpack.c.bf16 %v3824, %v3816
        %v4217 = vpack.c.bf16 %v3833, %v3825
        %v4218 = vpack.c.bf16 %v3834, %v3826
        %v4219 = vpack.c.bf16 %v3835, %v3827
        %v4220 = vpack.c.bf16 %v3836, %v3828
        %v4221 = vpack.c.bf16 %v3837, %v3829
        %v4222 = vpack.c.bf16 %v3838, %v3830
        %v4223 = vpack.c.bf16 %v3839, %v3831
        %v4224 = vpack.c.bf16 %v3840, %v3832
        %v4225 = vpack.c.bf16 %v3849, %v3841
        %v4226 = vpack.c.bf16 %v3850, %v3842
        %v4227 = vpack.c.bf16 %v3851, %v3843
        %v4228 = vpack.c.bf16 %v3852, %v3844
        %v4229 = vpack.c.bf16 %v3853, %v3845
        %v4230 = vpack.c.bf16 %v3854, %v3846
        %v4231 = vpack.c.bf16 %v3855, %v3847
        %v4232 = vpack.c.bf16 %v3856, %v3848
        %v4233 = vpack.c.bf16 %v3865, %v3857
        %v4234 = vpack.c.bf16 %v3866, %v3858
        %v4235 = vpack.c.bf16 %v3867, %v3859
        %v4236 = vpack.c.bf16 %v3868, %v3860
        %v4237 = vpack.c.bf16 %v3869, %v3861
        %v4238 = vpack.c.bf16 %v3870, %v3862
        %v4239 = vpack.c.bf16 %v3871, %v3863
        %v4240 = vpack.c.bf16 %v3872, %v3864
        %v4241 = vpack.c.bf16 %v3881, %v3873
        %v4242 = vpack.c.bf16 %v3882, %v3874
        %v4243 = vpack.c.bf16 %v3883, %v3875
        %v4244 = vpack.c.bf16 %v3884, %v3876
        %v4245 = vpack.c.bf16 %v3885, %v3877
        %v4246 = vpack.c.bf16 %v3886, %v3878
        %v4247 = vpack.c.bf16 %v3887, %v3879
        %v4248 = vpack.c.bf16 %v3888, %v3880
        %v4249 = vpack.c.bf16 %v3897, %v3889
        %v4250 = vpack.c.bf16 %v3898, %v3890
        %v4251 = vpack.c.bf16 %v3899, %v3891
        %v4252 = vpack.c.bf16 %v3900, %v3892
        %v4253 = vpack.c.bf16 %v3901, %v3893
        %v4254 = vpack.c.bf16 %v3902, %v3894
        %v4255 = vpack.c.bf16 %v3903, %v3895
        %v4256 = vpack.c.bf16 %v3904, %v3896
        %v4257 = vpack.c.bf16 %v3913, %v3905
        %v4258 = vpack.c.bf16 %v3914, %v3906
        %v4259 = vpack.c.bf16 %v3915, %v3907
        %v4260 = vpack.c.bf16 %v3916, %v3908
        %v4261 = vpack.c.bf16 %v3917, %v3909
        %v4262 = vpack.c.bf16 %v3918, %v3910
        %v4263 = vpack.c.bf16 %v3919, %v3911
        %v4264 = vpack.c.bf16 %v3920, %v3912
        %v4265 = vpack.c.bf16 %v3929, %v3921
        %v4266 = vpack.c.bf16 %v3930, %v3922
        %v4267 = vpack.c.bf16 %v3931, %v3923
        %v4268 = vpack.c.bf16 %v3932, %v3924
        %v4269 = vpack.c.bf16 %v3933, %v3925
        %v4270 = vpack.c.bf16 %v3934, %v3926
        %v4271 = vpack.c.bf16 %v3935, %v3927
        %v4272 = vpack.c.bf16 %v3936, %v3928
        %v4273 = vpack.c.bf16 %v3945, %v3937
        %v4274 = vpack.c.bf16 %v3946, %v3938
        %v4275 = vpack.c.bf16 %v3947, %v3939
        %v4276 = vpack.c.bf16 %v3948, %v3940
        %v4277 = vpack.c.bf16 %v3949, %v3941
        %v4278 = vpack.c.bf16 %v3950, %v3942
        %v4279 = vpack.c.bf16 %v3951, %v3943
        %v4280 = vpack.c.bf16 %v3952, %v3944
        %v4281 = vpack.c.bf16 %v3961, %v3953
        %v4282 = vpack.c.bf16 %v3962, %v3954
        %v4283 = vpack.c.bf16 %v3963, %v3955
        %v4284 = vpack.c.bf16 %v3964, %v3956
        %v4285 = vpack.c.bf16 %v3965, %v3957
        %v4286 = vpack.c.bf16 %v3966, %v3958
        %v4287 = vpack.c.bf16 %v3967, %v3959
        %v4288 = vpack.c.bf16 %v3968, %v3960
        %v4289 = vpack.c.bf16 %v3977, %v3969
        %v4290 = vpack.c.bf16 %v3978, %v3970
        %v4291 = vpack.c.bf16 %v3979, %v3971
        %v4292 = vpack.c.bf16 %v3980, %v3972
        %v4293 = vpack.c.bf16 %v3981, %v3973
        %v4294 = vpack.c.bf16 %v3982, %v3974
        %v4295 = vpack.c.bf16 %v3983, %v3975
        %v4296 = vpack.c.bf16 %v3984, %v3976
        %v4297 = vpack.c.bf16 %v3993, %v3985
        %v4298 = vpack.c.bf16 %v3994, %v3986
        %v4299 = vpack.c.bf16 %v3995, %v3987
        %v4300 = vpack.c.bf16 %v3996, %v3988
        %v4301 = vpack.c.bf16 %v3997, %v3989
        %v4302 = vpack.c.bf16 %v3998, %v3990
        %v4303 = vpack.c.bf16 %v3999, %v3991
        %v4304 = vpack.c.bf16 %v4000, %v3992
        %v4305 = vpack.c.bf16 %v4009, %v4001
        %v4306 = vpack.c.bf16 %v4010, %v4002
        %v4307 = vpack.c.bf16 %v4011, %v4003
        %v4308 = vpack.c.bf16 %v4012, %v4004
        %v4309 = vpack.c.bf16 %v4013, %v4005
        %v4310 = vpack.c.bf16 %v4014, %v4006
        %v4311 = vpack.c.bf16 %v4015, %v4007
        %v4312 = vpack.c.bf16 %v4016, %v4008
        %v4313 = vpack.c.bf16 %v4025, %v4017
        %v4314 = vpack.c.bf16 %v4026, %v4018
        %v4315 = vpack.c.bf16 %v4027, %v4019
        %v4316 = vpack.c.bf16 %v4028, %v4020
        %v4317 = vpack.c.bf16 %v4029, %v4021
        %v4318 = vpack.c.bf16 %v4030, %v4022
        %v4319 = vpack.c.bf16 %v4031, %v4023
        %v4320 = vpack.c.bf16 %v4032, %v4024
        %v4321 = vpack.c.bf16 %v4041, %v4033
        %v4322 = vpack.c.bf16 %v4042, %v4034
        %v4323 = vpack.c.bf16 %v4043, %v4035
        %v4324 = vpack.c.bf16 %v4044, %v4036
        %v4325 = vpack.c.bf16 %v4045, %v4037
        %v4326 = vpack.c.bf16 %v4046, %v4038
        %v4327 = vpack.c.bf16 %v4047, %v4039
        %v4328 = vpack.c.bf16 %v4048, %v4040
        %v4329 = vpack.c.bf16 %v4057, %v4049
        %v4330 = vpack.c.bf16 %v4058, %v4050
        %v4331 = vpack.c.bf16 %v4059, %v4051
        %v4332 = vpack.c.bf16 %v4060, %v4052
        %v4333 = vpack.c.bf16 %v4061, %v4053
        %v4334 = vpack.c.bf16 %v4062, %v4054
        %v4335 = vpack.c.bf16 %v4063, %v4055
        %v4336 = vpack.c.bf16 %v4064, %v4056
        %v4337 = vpack.c.bf16 %v4073, %v4065
        %v4338 = vpack.c.bf16 %v4074, %v4066
        %v4339 = vpack.c.bf16 %v4075, %v4067
        %v4340 = vpack.c.bf16 %v4076, %v4068
        %v4341 = vpack.c.bf16 %v4077, %v4069
        %v4342 = vpack.c.bf16 %v4078, %v4070
        %v4343 = vpack.c.bf16 %v4079, %v4071
        %v4344 = vpack.c.bf16 %v4080, %v4072
        %v4345 = vpack.c.bf16 %v4089, %v4081
        %v4346 = vpack.c.bf16 %v4090, %v4082
        %v4347 = vpack.c.bf16 %v4091, %v4083
        %v4348 = vpack.c.bf16 %v4092, %v4084
        %v4349 = vpack.c.bf16 %v4093, %v4085
        %v4350 = vpack.c.bf16 %v4094, %v4086
        %v4351 = vpack.c.bf16 %v4095, %v4087
        %v4352 = vpack.c.bf16 %v4096, %v4088
        %v4353 = vld [vmem:[%s249] sm:$0xff]
        %v4354 = vld [vmem:[%s249 + $0x8] sm:$0xff]
        %v4355 = vld [vmem:[%s249 + $0x10] sm:$0xff]
        %v4356 = vld [vmem:[%s249 + $0x18] sm:$0xff]
        %v4357 = vld [vmem:[%s249 + $0x20] sm:$0xff]
        %v4358 = vld [vmem:[%s249 + $0x28] sm:$0xff]
        %v4359 = vld [vmem:[%s249 + $0x30] sm:$0xff]
        %v4360 = vld [vmem:[%s249 + $0x38] sm:$0xff]
        %v4361 = vld [vmem:[%s249 + $0x40] sm:$0xff]
        %v4362 = vld [vmem:[%s249 + $0x48] sm:$0xff]
        %v4363 = vld [vmem:[%s249 + $0x50] sm:$0xff]
        %v4364 = vld [vmem:[%s249 + $0x58] sm:$0xff]
        %v4365 = vld [vmem:[%s249 + $0x60] sm:$0xff]
        %v4366 = vld [vmem:[%s249 + $0x68] sm:$0xff]
        %v4367 = vld [vmem:[%s249 + $0x70] sm:$0xff]
        %v4368 = vld [vmem:[%s249 + $0x78] sm:$0xff]
        %v4369 = vld [vmem:[%s249 + $0x80] sm:$0xff]
        %v4370 = vld [vmem:[%s249 + $0x88] sm:$0xff]
        %v4371 = vld [vmem:[%s249 + $0x90] sm:$0xff]
        %v4372 = vld [vmem:[%s249 + $0x98] sm:$0xff]
        %v4373 = vld [vmem:[%s249 + $0xa0] sm:$0xff]
        %v4374 = vld [vmem:[%s249 + $0xa8] sm:$0xff]
        %v4375 = vld [vmem:[%s249 + $0xb0] sm:$0xff]
        %v4376 = vld [vmem:[%s249 + $0xb8] sm:$0xff]
        %v4377 = vld [vmem:[%s249 + $0xc0] sm:$0xff]
        %v4378 = vld [vmem:[%s249 + $0xc8] sm:$0xff]
        %v4379 = vld [vmem:[%s249 + $0xd0] sm:$0xff]
        %v4380 = vld [vmem:[%s249 + $0xd8] sm:$0xff]
        %v4381 = vld [vmem:[%s249 + $0xe0] sm:$0xff]
        %v4382 = vld [vmem:[%s249 + $0xe8] sm:$0xff]
        %v4383 = vld [vmem:[%s249 + $0xf0] sm:$0xff]
        %v4384 = vld [vmem:[%s249 + $0xf8] sm:$0xff]
        %v4385 = vld [vmem:[%s249 + $0x100] sm:$0xff]
        %v4386 = vld [vmem:[%s249 + $0x108] sm:$0xff]
        %v4387 = vld [vmem:[%s249 + $0x110] sm:$0xff]
        %v4388 = vld [vmem:[%s249 + $0x118] sm:$0xff]
        %v4389 = vld [vmem:[%s249 + $0x120] sm:$0xff]
        %v4390 = vld [vmem:[%s249 + $0x128] sm:$0xff]
        %v4391 = vld [vmem:[%s249 + $0x130] sm:$0xff]
        %v4392 = vld [vmem:[%s249 + $0x138] sm:$0xff]
        %v4393 = vld [vmem:[%s249 + $0x140] sm:$0xff]
        %v4394 = vld [vmem:[%s249 + $0x148] sm:$0xff]
        %v4395 = vld [vmem:[%s249 + $0x150] sm:$0xff]
        %v4396 = vld [vmem:[%s249 + $0x158] sm:$0xff]
        %v4397 = vld [vmem:[%s249 + $0x160] sm:$0xff]
        %v4398 = vld [vmem:[%s249 + $0x168] sm:$0xff]
        %v4399 = vld [vmem:[%s249 + $0x170] sm:$0xff]
        %v4400 = vld [vmem:[%s249 + $0x178] sm:$0xff]
        %v4401 = vld [vmem:[%s249 + $0x180] sm:$0xff]
        %v4402 = vld [vmem:[%s249 + $0x188] sm:$0xff]
        %v4403 = vld [vmem:[%s249 + $0x190] sm:$0xff]
        %v4404 = vld [vmem:[%s249 + $0x198] sm:$0xff]
        %v4405 = vld [vmem:[%s249 + $0x1a0] sm:$0xff]
        %v4406 = vld [vmem:[%s249 + $0x1a8] sm:$0xff]
        %v4407 = vld [vmem:[%s249 + $0x1b0] sm:$0xff]
        %v4408 = vld [vmem:[%s249 + $0x1b8] sm:$0xff]
        %v4409 = vld [vmem:[%s249 + $0x1c0] sm:$0xff]
        %v4410 = vld [vmem:[%s249 + $0x1c8] sm:$0xff]
        %v4411 = vld [vmem:[%s249 + $0x1d0] sm:$0xff]
        %v4412 = vld [vmem:[%s249 + $0x1d8] sm:$0xff]
        %v4413 = vld [vmem:[%s249 + $0x1e0] sm:$0xff]
        %v4414 = vld [vmem:[%s249 + $0x1e8] sm:$0xff]
        %v4415 = vld [vmem:[%s249 + $0x1f0] sm:$0xff]
        %v4416 = vld [vmem:[%s249 + $0x1f8] sm:$0xff]
        %v4417 = vld [vmem:[%s265] sm:$0xf]
        %v4418 = vld [vmem:[%s265 + $0x4] sm:$0xf]
        %v4419 = vld [vmem:[%s265 + $0x8] sm:$0xf]
        %v4420 = vld [vmem:[%s265 + $0xc] sm:$0xf]
        %v4421 = vld [vmem:[%s265 + $0x10] sm:$0xf]
        %v4422 = vld [vmem:[%s265 + $0x14] sm:$0xf]
        %v4423 = vld [vmem:[%s265 + $0x18] sm:$0xf]
        %v4424 = vld [vmem:[%s265 + $0x1c] sm:$0xf]
        %v4425 = vld [vmem:[%s265 + $0x20] sm:$0xf]
        %v4426 = vld [vmem:[%s265 + $0x24] sm:$0xf]
        %v4427 = vld [vmem:[%s265 + $0x28] sm:$0xf]
        %v4428 = vld [vmem:[%s265 + $0x2c] sm:$0xf]
        %v4429 = vld [vmem:[%s265 + $0x30] sm:$0xf]
        %v4430 = vld [vmem:[%s265 + $0x34] sm:$0xf]
        %v4431 = vld [vmem:[%s265 + $0x38] sm:$0xf]
        %v4432 = vld [vmem:[%s265 + $0x3c] sm:$0xf]
        %v4433 = vld [vmem:[%s265 + $0x40] sm:$0xf]
        %v4434 = vld [vmem:[%s265 + $0x44] sm:$0xf]
        %v4435 = vld [vmem:[%s265 + $0x48] sm:$0xf]
        %v4436 = vld [vmem:[%s265 + $0x4c] sm:$0xf]
        %v4437 = vld [vmem:[%s265 + $0x50] sm:$0xf]
        %v4438 = vld [vmem:[%s265 + $0x54] sm:$0xf]
        %v4439 = vld [vmem:[%s265 + $0x58] sm:$0xf]
        %v4440 = vld [vmem:[%s265 + $0x5c] sm:$0xf]
        %v4441 = vld [vmem:[%s265 + $0x60] sm:$0xf]
        %v4442 = vld [vmem:[%s265 + $0x64] sm:$0xf]
        %v4443 = vld [vmem:[%s265 + $0x68] sm:$0xf]
        %v4444 = vld [vmem:[%s265 + $0x6c] sm:$0xf]
        %v4445 = vld [vmem:[%s265 + $0x70] sm:$0xf]
        %v4446 = vld [vmem:[%s265 + $0x74] sm:$0xf]
        %v4447 = vld [vmem:[%s265 + $0x78] sm:$0xf]
        %v4448 = vld [vmem:[%s265 + $0x7c] sm:$0xf]
        %v4449 = vld [vmem:[%s265 + $0x80] sm:$0xf]
        %v4450 = vld [vmem:[%s265 + $0x84] sm:$0xf]
        %v4451 = vld [vmem:[%s265 + $0x88] sm:$0xf]
        %v4452 = vld [vmem:[%s265 + $0x8c] sm:$0xf]
        %v4453 = vld [vmem:[%s265 + $0x90] sm:$0xf]
        %v4454 = vld [vmem:[%s265 + $0x94] sm:$0xf]
        %v4455 = vld [vmem:[%s265 + $0x98] sm:$0xf]
        %v4456 = vld [vmem:[%s265 + $0x9c] sm:$0xf]
        %v4457 = vld [vmem:[%s265 + $0xa0] sm:$0xf]
        %v4458 = vld [vmem:[%s265 + $0xa4] sm:$0xf]
        %v4459 = vld [vmem:[%s265 + $0xa8] sm:$0xf]
        %v4460 = vld [vmem:[%s265 + $0xac] sm:$0xf]
        %v4461 = vld [vmem:[%s265 + $0xb0] sm:$0xf]
        %v4462 = vld [vmem:[%s265 + $0xb4] sm:$0xf]
        %v4463 = vld [vmem:[%s265 + $0xb8] sm:$0xf]
        %v4464 = vld [vmem:[%s265 + $0xbc] sm:$0xf]
        %v4465 = vld [vmem:[%s265 + $0xc0] sm:$0xf]
        %v4466 = vld [vmem:[%s265 + $0xc4] sm:$0xf]
        %v4467 = vld [vmem:[%s265 + $0xc8] sm:$0xf]
        %v4468 = vld [vmem:[%s265 + $0xcc] sm:$0xf]
        %v4469 = vld [vmem:[%s265 + $0xd0] sm:$0xf]
        %v4470 = vld [vmem:[%s265 + $0xd4] sm:$0xf]
        %v4471 = vld [vmem:[%s265 + $0xd8] sm:$0xf]
        %v4472 = vld [vmem:[%s265 + $0xdc] sm:$0xf]
        %v4473 = vld [vmem:[%s265 + $0xe0] sm:$0xf]
        %v4474 = vld [vmem:[%s265 + $0xe4] sm:$0xf]
        %v4475 = vld [vmem:[%s265 + $0xe8] sm:$0xf]
        %v4476 = vld [vmem:[%s265 + $0xec] sm:$0xf]
        %v4477 = vld [vmem:[%s265 + $0xf0] sm:$0xf]
        %v4478 = vld [vmem:[%s265 + $0xf4] sm:$0xf]
        %v4479 = vld [vmem:[%s265 + $0xf8] sm:$0xf]
        %v4480 = vld [vmem:[%s265 + $0xfc] sm:$0xf]
        %v4481 = vld [vmem:[%s265 + $0x100] sm:$0xf]
        %v4482 = vld [vmem:[%s265 + $0x104] sm:$0xf]
        %v4483 = vld [vmem:[%s265 + $0x108] sm:$0xf]
        %v4484 = vld [vmem:[%s265 + $0x10c] sm:$0xf]
        %v4485 = vld [vmem:[%s265 + $0x110] sm:$0xf]
        %v4486 = vld [vmem:[%s265 + $0x114] sm:$0xf]
        %v4487 = vld [vmem:[%s265 + $0x118] sm:$0xf]
        %v4488 = vld [vmem:[%s265 + $0x11c] sm:$0xf]
        %v4489 = vld [vmem:[%s265 + $0x120] sm:$0xf]
        %v4490 = vld [vmem:[%s265 + $0x124] sm:$0xf]
        %v4491 = vld [vmem:[%s265 + $0x128] sm:$0xf]
        %v4492 = vld [vmem:[%s265 + $0x12c] sm:$0xf]
        %v4493 = vld [vmem:[%s265 + $0x130] sm:$0xf]
        %v4494 = vld [vmem:[%s265 + $0x134] sm:$0xf]
        %v4495 = vld [vmem:[%s265 + $0x138] sm:$0xf]
        %v4496 = vld [vmem:[%s265 + $0x13c] sm:$0xf]
        %v4497 = vld [vmem:[%s265 + $0x140] sm:$0xf]
        %v4498 = vld [vmem:[%s265 + $0x144] sm:$0xf]
        %v4499 = vld [vmem:[%s265 + $0x148] sm:$0xf]
        %v4500 = vld [vmem:[%s265 + $0x14c] sm:$0xf]
        %v4501 = vld [vmem:[%s265 + $0x150] sm:$0xf]
        %v4502 = vld [vmem:[%s265 + $0x154] sm:$0xf]
        %v4503 = vld [vmem:[%s265 + $0x158] sm:$0xf]
        %v4504 = vld [vmem:[%s265 + $0x15c] sm:$0xf]
        %v4505 = vld [vmem:[%s265 + $0x160] sm:$0xf]
        %v4506 = vld [vmem:[%s265 + $0x164] sm:$0xf]
        %v4507 = vld [vmem:[%s265 + $0x168] sm:$0xf]
        %v4508 = vld [vmem:[%s265 + $0x16c] sm:$0xf]
        %v4509 = vld [vmem:[%s265 + $0x170] sm:$0xf]
        %v4510 = vld [vmem:[%s265 + $0x174] sm:$0xf]
        %v4511 = vld [vmem:[%s265 + $0x178] sm:$0xf]
        %v4512 = vld [vmem:[%s265 + $0x17c] sm:$0xf]
        %v4513 = vld [vmem:[%s265 + $0x180] sm:$0xf]
        %v4514 = vld [vmem:[%s265 + $0x184] sm:$0xf]
        %v4515 = vld [vmem:[%s265 + $0x188] sm:$0xf]
        %v4516 = vld [vmem:[%s265 + $0x18c] sm:$0xf]
        %v4517 = vld [vmem:[%s265 + $0x190] sm:$0xf]
        %v4518 = vld [vmem:[%s265 + $0x194] sm:$0xf]
        %v4519 = vld [vmem:[%s265 + $0x198] sm:$0xf]
        %v4520 = vld [vmem:[%s265 + $0x19c] sm:$0xf]
        %v4521 = vld [vmem:[%s265 + $0x1a0] sm:$0xf]
        %v4522 = vld [vmem:[%s265 + $0x1a4] sm:$0xf]
        %v4523 = vld [vmem:[%s265 + $0x1a8] sm:$0xf]
        %v4524 = vld [vmem:[%s265 + $0x1ac] sm:$0xf]
        %v4525 = vld [vmem:[%s265 + $0x1b0] sm:$0xf]
        %v4526 = vld [vmem:[%s265 + $0x1b4] sm:$0xf]
        %v4527 = vld [vmem:[%s265 + $0x1b8] sm:$0xf]
        %v4528 = vld [vmem:[%s265 + $0x1bc] sm:$0xf]
        %v4529 = vld [vmem:[%s265 + $0x1c0] sm:$0xf]
        %v4530 = vld [vmem:[%s265 + $0x1c4] sm:$0xf]
        %v4531 = vld [vmem:[%s265 + $0x1c8] sm:$0xf]
        %v4532 = vld [vmem:[%s265 + $0x1cc] sm:$0xf]
        %v4533 = vld [vmem:[%s265 + $0x1d0] sm:$0xf]
        %v4534 = vld [vmem:[%s265 + $0x1d4] sm:$0xf]
        %v4535 = vld [vmem:[%s265 + $0x1d8] sm:$0xf]
        %v4536 = vld [vmem:[%s265 + $0x1dc] sm:$0xf]
        %v4537 = vld [vmem:[%s265 + $0x1e0] sm:$0xf]
        %v4538 = vld [vmem:[%s265 + $0x1e4] sm:$0xf]
        %v4539 = vld [vmem:[%s265 + $0x1e8] sm:$0xf]
        %v4540 = vld [vmem:[%s265 + $0x1ec] sm:$0xf]
        %v4541 = vld [vmem:[%s265 + $0x1f0] sm:$0xf]
        %v4542 = vld [vmem:[%s265 + $0x1f4] sm:$0xf]
        %v4543 = vld [vmem:[%s265 + $0x1f8] sm:$0xf]
        %v4544 = vld [vmem:[%s265 + $0x1fc] sm:$0xf]
        %v4545 = vld [vmem:[%s271] sm:$0xf]
        %v4546 = vld [vmem:[%s271 + $0x4] sm:$0xf]
        %v4547 = vld [vmem:[%s271 + $0x8] sm:$0xf]
        %v4548 = vld [vmem:[%s271 + $0xc] sm:$0xf]
        %v4549 = vld [vmem:[%s271 + $0x10] sm:$0xf]
        %v4550 = vld [vmem:[%s271 + $0x14] sm:$0xf]
        %v4551 = vld [vmem:[%s271 + $0x18] sm:$0xf]
        %v4552 = vld [vmem:[%s271 + $0x1c] sm:$0xf]
        %v4553 = vld [vmem:[%s271 + $0x20] sm:$0xf]
        %v4554 = vld [vmem:[%s271 + $0x24] sm:$0xf]
        %v4555 = vld [vmem:[%s271 + $0x28] sm:$0xf]
        %v4556 = vld [vmem:[%s271 + $0x2c] sm:$0xf]
        %v4557 = vld [vmem:[%s271 + $0x30] sm:$0xf]
        %v4558 = vld [vmem:[%s271 + $0x34] sm:$0xf]
        %v4559 = vld [vmem:[%s271 + $0x38] sm:$0xf]
        %v4560 = vld [vmem:[%s271 + $0x3c] sm:$0xf]
        %v4561 = vld [vmem:[%s271 + $0x40] sm:$0xf]
        %v4562 = vld [vmem:[%s271 + $0x44] sm:$0xf]
        %v4563 = vld [vmem:[%s271 + $0x48] sm:$0xf]
        %v4564 = vld [vmem:[%s271 + $0x4c] sm:$0xf]
        %v4565 = vld [vmem:[%s271 + $0x50] sm:$0xf]
        %v4566 = vld [vmem:[%s271 + $0x54] sm:$0xf]
        %v4567 = vld [vmem:[%s271 + $0x58] sm:$0xf]
        %v4568 = vld [vmem:[%s271 + $0x5c] sm:$0xf]
        %v4569 = vld [vmem:[%s271 + $0x60] sm:$0xf]
        %v4570 = vld [vmem:[%s271 + $0x64] sm:$0xf]
        %v4571 = vld [vmem:[%s271 + $0x68] sm:$0xf]
        %v4572 = vld [vmem:[%s271 + $0x6c] sm:$0xf]
        %v4573 = vld [vmem:[%s271 + $0x70] sm:$0xf]
        %v4574 = vld [vmem:[%s271 + $0x74] sm:$0xf]
        %v4575 = vld [vmem:[%s271 + $0x78] sm:$0xf]
        %v4576 = vld [vmem:[%s271 + $0x7c] sm:$0xf]
        %v4577 = vld [vmem:[%s271 + $0x80] sm:$0xf]
        %v4578 = vld [vmem:[%s271 + $0x84] sm:$0xf]
        %v4579 = vld [vmem:[%s271 + $0x88] sm:$0xf]
        %v4580 = vld [vmem:[%s271 + $0x8c] sm:$0xf]
        %v4581 = vld [vmem:[%s271 + $0x90] sm:$0xf]
        %v4582 = vld [vmem:[%s271 + $0x94] sm:$0xf]
        %v4583 = vld [vmem:[%s271 + $0x98] sm:$0xf]
        %v4584 = vld [vmem:[%s271 + $0x9c] sm:$0xf]
        %v4585 = vld [vmem:[%s271 + $0xa0] sm:$0xf]
        %v4586 = vld [vmem:[%s271 + $0xa4] sm:$0xf]
        %v4587 = vld [vmem:[%s271 + $0xa8] sm:$0xf]
        %v4588 = vld [vmem:[%s271 + $0xac] sm:$0xf]
        %v4589 = vld [vmem:[%s271 + $0xb0] sm:$0xf]
        %v4590 = vld [vmem:[%s271 + $0xb4] sm:$0xf]
        %v4591 = vld [vmem:[%s271 + $0xb8] sm:$0xf]
        %v4592 = vld [vmem:[%s271 + $0xbc] sm:$0xf]
        %v4593 = vld [vmem:[%s271 + $0xc0] sm:$0xf]
        %v4594 = vld [vmem:[%s271 + $0xc4] sm:$0xf]
        %v4595 = vld [vmem:[%s271 + $0xc8] sm:$0xf]
        %v4596 = vld [vmem:[%s271 + $0xcc] sm:$0xf]
        %v4597 = vld [vmem:[%s271 + $0xd0] sm:$0xf]
        %v4598 = vld [vmem:[%s271 + $0xd4] sm:$0xf]
        %v4599 = vld [vmem:[%s271 + $0xd8] sm:$0xf]
        %v4600 = vld [vmem:[%s271 + $0xdc] sm:$0xf]
        %v4601 = vld [vmem:[%s271 + $0xe0] sm:$0xf]
        %v4602 = vld [vmem:[%s271 + $0xe4] sm:$0xf]
        %v4603 = vld [vmem:[%s271 + $0xe8] sm:$0xf]
        %v4604 = vld [vmem:[%s271 + $0xec] sm:$0xf]
        %v4605 = vld [vmem:[%s271 + $0xf0] sm:$0xf]
        %v4606 = vld [vmem:[%s271 + $0xf4] sm:$0xf]
        %v4607 = vld [vmem:[%s271 + $0xf8] sm:$0xf]
        %v4608 = vld [vmem:[%s271 + $0xfc] sm:$0xf]
        %v4609 = vld [vmem:[%s271 + $0x100] sm:$0xf]
        %v4610 = vld [vmem:[%s271 + $0x104] sm:$0xf]
        %v4611 = vld [vmem:[%s271 + $0x108] sm:$0xf]
        %v4612 = vld [vmem:[%s271 + $0x10c] sm:$0xf]
        %v4613 = vld [vmem:[%s271 + $0x110] sm:$0xf]
        %v4614 = vld [vmem:[%s271 + $0x114] sm:$0xf]
        %v4615 = vld [vmem:[%s271 + $0x118] sm:$0xf]
        %v4616 = vld [vmem:[%s271 + $0x11c] sm:$0xf]
        %v4617 = vld [vmem:[%s271 + $0x120] sm:$0xf]
        %v4618 = vld [vmem:[%s271 + $0x124] sm:$0xf]
        %v4619 = vld [vmem:[%s271 + $0x128] sm:$0xf]
        %v4620 = vld [vmem:[%s271 + $0x12c] sm:$0xf]
        %v4621 = vld [vmem:[%s271 + $0x130] sm:$0xf]
        %v4622 = vld [vmem:[%s271 + $0x134] sm:$0xf]
        %v4623 = vld [vmem:[%s271 + $0x138] sm:$0xf]
        %v4624 = vld [vmem:[%s271 + $0x13c] sm:$0xf]
        %v4625 = vld [vmem:[%s271 + $0x140] sm:$0xf]
        %v4626 = vld [vmem:[%s271 + $0x144] sm:$0xf]
        %v4627 = vld [vmem:[%s271 + $0x148] sm:$0xf]
        %v4628 = vld [vmem:[%s271 + $0x14c] sm:$0xf]
        %v4629 = vld [vmem:[%s271 + $0x150] sm:$0xf]
        %v4630 = vld [vmem:[%s271 + $0x154] sm:$0xf]
        %v4631 = vld [vmem:[%s271 + $0x158] sm:$0xf]
        %v4632 = vld [vmem:[%s271 + $0x15c] sm:$0xf]
        %v4633 = vld [vmem:[%s271 + $0x160] sm:$0xf]
        %v4634 = vld [vmem:[%s271 + $0x164] sm:$0xf]
        %v4635 = vld [vmem:[%s271 + $0x168] sm:$0xf]
        %v4636 = vld [vmem:[%s271 + $0x16c] sm:$0xf]
        %v4637 = vld [vmem:[%s271 + $0x170] sm:$0xf]
        %v4638 = vld [vmem:[%s271 + $0x174] sm:$0xf]
        %v4639 = vld [vmem:[%s271 + $0x178] sm:$0xf]
        %v4640 = vld [vmem:[%s271 + $0x17c] sm:$0xf]
        %v4641 = vld [vmem:[%s271 + $0x180] sm:$0xf]
        %v4642 = vld [vmem:[%s271 + $0x184] sm:$0xf]
        %v4643 = vld [vmem:[%s271 + $0x188] sm:$0xf]
        %v4644 = vld [vmem:[%s271 + $0x18c] sm:$0xf]
        %v4645 = vld [vmem:[%s271 + $0x190] sm:$0xf]
        %v4646 = vld [vmem:[%s271 + $0x194] sm:$0xf]
        %v4647 = vld [vmem:[%s271 + $0x198] sm:$0xf]
        %v4648 = vld [vmem:[%s271 + $0x19c] sm:$0xf]
        %v4649 = vld [vmem:[%s271 + $0x1a0] sm:$0xf]
        %v4650 = vld [vmem:[%s271 + $0x1a4] sm:$0xf]
        %v4651 = vld [vmem:[%s271 + $0x1a8] sm:$0xf]
        %v4652 = vld [vmem:[%s271 + $0x1ac] sm:$0xf]
        %v4653 = vld [vmem:[%s271 + $0x1b0] sm:$0xf]
        %v4654 = vld [vmem:[%s271 + $0x1b4] sm:$0xf]
        %v4655 = vld [vmem:[%s271 + $0x1b8] sm:$0xf]
        %v4656 = vld [vmem:[%s271 + $0x1bc] sm:$0xf]
        %v4657 = vld [vmem:[%s271 + $0x1c0] sm:$0xf]
        %v4658 = vld [vmem:[%s271 + $0x1c4] sm:$0xf]
        %v4659 = vld [vmem:[%s271 + $0x1c8] sm:$0xf]
        %v4660 = vld [vmem:[%s271 + $0x1cc] sm:$0xf]
        %v4661 = vld [vmem:[%s271 + $0x1d0] sm:$0xf]
        %v4662 = vld [vmem:[%s271 + $0x1d4] sm:$0xf]
        %v4663 = vld [vmem:[%s271 + $0x1d8] sm:$0xf]
        %v4664 = vld [vmem:[%s271 + $0x1dc] sm:$0xf]
        %v4665 = vld [vmem:[%s271 + $0x1e0] sm:$0xf]
        %v4666 = vld [vmem:[%s271 + $0x1e4] sm:$0xf]
        %v4667 = vld [vmem:[%s271 + $0x1e8] sm:$0xf]
        %v4668 = vld [vmem:[%s271 + $0x1ec] sm:$0xf]
        %v4669 = vld [vmem:[%s271 + $0x1f0] sm:$0xf]
        %v4670 = vld [vmem:[%s271 + $0x1f4] sm:$0xf]
        %v4671 = vld [vmem:[%s271 + $0x1f8] sm:$0xf]
        %v4672 = vld [vmem:[%s271 + $0x1fc] sm:$0xf]
        %v4801 = vunpack.c.l.b16 %v4545
        %v4802 = vunpack.c.l.b16 %v4546
        %v4803 = vunpack.c.l.b16 %v4547
        %v4804 = vunpack.c.l.b16 %v4548
        %v4805 = vunpack.c.l.b16 %v4549
        %v4806 = vunpack.c.l.b16 %v4550
        %v4807 = vunpack.c.l.b16 %v4551
        %v4808 = vunpack.c.l.b16 %v4552
        %v4809 = vunpack.c.l.b16 %v4553
        %v4810 = vunpack.c.l.b16 %v4554
        %v4811 = vunpack.c.l.b16 %v4555
        %v4812 = vunpack.c.l.b16 %v4556
        %v4813 = vunpack.c.l.b16 %v4557
        %v4814 = vunpack.c.l.b16 %v4558
        %v4815 = vunpack.c.l.b16 %v4559
        %v4816 = vunpack.c.l.b16 %v4560
        %v4817 = vunpack.c.l.b16 %v4561
        %v4818 = vunpack.c.l.b16 %v4562
        %v4819 = vunpack.c.l.b16 %v4563
        %v4820 = vunpack.c.l.b16 %v4564
        %v4821 = vunpack.c.l.b16 %v4565
        %v4822 = vunpack.c.l.b16 %v4566
        %v4823 = vunpack.c.l.b16 %v4567
        %v4824 = vunpack.c.l.b16 %v4568
        %v4825 = vunpack.c.l.b16 %v4569
        %v4826 = vunpack.c.l.b16 %v4570
        %v4827 = vunpack.c.l.b16 %v4571
        %v4828 = vunpack.c.l.b16 %v4572
        %v4829 = vunpack.c.l.b16 %v4573
        %v4830 = vunpack.c.l.b16 %v4574
        %v4831 = vunpack.c.l.b16 %v4575
        %v4832 = vunpack.c.l.b16 %v4576
        %v4833 = vunpack.c.l.b16 %v4577
        %v4834 = vunpack.c.l.b16 %v4578
        %v4835 = vunpack.c.l.b16 %v4579
        %v4836 = vunpack.c.l.b16 %v4580
        %v4837 = vunpack.c.l.b16 %v4581
        %v4838 = vunpack.c.l.b16 %v4582
        %v4839 = vunpack.c.l.b16 %v4583
        %v4840 = vunpack.c.l.b16 %v4584
        %v4841 = vunpack.c.l.b16 %v4585
        %v4842 = vunpack.c.l.b16 %v4586
        %v4843 = vunpack.c.l.b16 %v4587
        %v4844 = vunpack.c.l.b16 %v4588
        %v4845 = vunpack.c.l.b16 %v4589
        %v4846 = vunpack.c.l.b16 %v4590
        %v4847 = vunpack.c.l.b16 %v4591
        %v4848 = vunpack.c.l.b16 %v4592
        %v4849 = vunpack.c.l.b16 %v4593
        %v4850 = vunpack.c.l.b16 %v4594
        %v4851 = vunpack.c.l.b16 %v4595
        %v4852 = vunpack.c.l.b16 %v4596
        %v4853 = vunpack.c.l.b16 %v4597
        %v4854 = vunpack.c.l.b16 %v4598
        %v4855 = vunpack.c.l.b16 %v4599
        %v4856 = vunpack.c.l.b16 %v4600
        %v4857 = vunpack.c.l.b16 %v4601
        %v4858 = vunpack.c.l.b16 %v4602
        %v4859 = vunpack.c.l.b16 %v4603
        %v4860 = vunpack.c.l.b16 %v4604
        %v4861 = vunpack.c.l.b16 %v4605
        %v4862 = vunpack.c.l.b16 %v4606
        %v4863 = vunpack.c.l.b16 %v4607
        %v4864 = vunpack.c.l.b16 %v4608
        %v4865 = vunpack.c.l.b16 %v4609
        %v4866 = vunpack.c.l.b16 %v4610
        %v4867 = vunpack.c.l.b16 %v4611
        %v4868 = vunpack.c.l.b16 %v4612
        %v4869 = vunpack.c.l.b16 %v4613
        %v4870 = vunpack.c.l.b16 %v4614
        %v4871 = vunpack.c.l.b16 %v4615
        %v4872 = vunpack.c.l.b16 %v4616
        %v4873 = vunpack.c.l.b16 %v4617
        %v4874 = vunpack.c.l.b16 %v4618
        %v4875 = vunpack.c.l.b16 %v4619
        %v4876 = vunpack.c.l.b16 %v4620
        %v4877 = vunpack.c.l.b16 %v4621
        %v4878 = vunpack.c.l.b16 %v4622
        %v4879 = vunpack.c.l.b16 %v4623
        %v4880 = vunpack.c.l.b16 %v4624
        %v4881 = vunpack.c.l.b16 %v4625
        %v4882 = vunpack.c.l.b16 %v4626
        %v4883 = vunpack.c.l.b16 %v4627
        %v4884 = vunpack.c.l.b16 %v4628
        %v4885 = vunpack.c.l.b16 %v4629
        %v4886 = vunpack.c.l.b16 %v4630
        %v4887 = vunpack.c.l.b16 %v4631
        %v4888 = vunpack.c.l.b16 %v4632
        %v4889 = vunpack.c.l.b16 %v4633
        %v4890 = vunpack.c.l.b16 %v4634
        %v4891 = vunpack.c.l.b16 %v4635
        %v4892 = vunpack.c.l.b16 %v4636
        %v4893 = vunpack.c.l.b16 %v4637
        %v4894 = vunpack.c.l.b16 %v4638
        %v4895 = vunpack.c.l.b16 %v4639
        %v4896 = vunpack.c.l.b16 %v4640
        %v4897 = vunpack.c.l.b16 %v4641
        %v4898 = vunpack.c.l.b16 %v4642
        %v4899 = vunpack.c.l.b16 %v4643
        %v4900 = vunpack.c.l.b16 %v4644
        %v4901 = vunpack.c.l.b16 %v4645
        %v4902 = vunpack.c.l.b16 %v4646
        %v4903 = vunpack.c.l.b16 %v4647
        %v4904 = vunpack.c.l.b16 %v4648
        %v4905 = vunpack.c.l.b16 %v4649
        %v4906 = vunpack.c.l.b16 %v4650
        %v4907 = vunpack.c.l.b16 %v4651
        %v4908 = vunpack.c.l.b16 %v4652
        %v4909 = vunpack.c.l.b16 %v4653
        %v4910 = vunpack.c.l.b16 %v4654
        %v4911 = vunpack.c.l.b16 %v4655
        %v4912 = vunpack.c.l.b16 %v4656
        %v4913 = vunpack.c.l.b16 %v4657
        %v4914 = vunpack.c.l.b16 %v4658
        %v4915 = vunpack.c.l.b16 %v4659
        %v4916 = vunpack.c.l.b16 %v4660
        %v4917 = vunpack.c.l.b16 %v4661
        %v4918 = vunpack.c.l.b16 %v4662
        %v4919 = vunpack.c.l.b16 %v4663
        %v4920 = vunpack.c.l.b16 %v4664
        %v4921 = vunpack.c.l.b16 %v4665
        %v4922 = vunpack.c.l.b16 %v4666
        %v4923 = vunpack.c.l.b16 %v4667
        %v4924 = vunpack.c.l.b16 %v4668
        %v4925 = vunpack.c.l.b16 %v4669
        %v4926 = vunpack.c.l.b16 %v4670
        %v4927 = vunpack.c.l.b16 %v4671
        %v4928 = vunpack.c.l.b16 %v4672
        %v4929 = vpack.c.b16 %v4802, %v4801
        %v4930 = vpack.c.b16 %v4804, %v4803
        %v4931 = vpack.c.b16 %v4806, %v4805
        %v4932 = vpack.c.b16 %v4808, %v4807
        %v4933 = vpack.c.b16 %v4810, %v4809
        %v4934 = vpack.c.b16 %v4812, %v4811
        %v4935 = vpack.c.b16 %v4814, %v4813
        %v4936 = vpack.c.b16 %v4816, %v4815
        %v4937 = vpack.c.b16 %v4818, %v4817
        %v4938 = vpack.c.b16 %v4820, %v4819
        %v4939 = vpack.c.b16 %v4822, %v4821
        %v4940 = vpack.c.b16 %v4824, %v4823
        %v4941 = vpack.c.b16 %v4826, %v4825
        %v4942 = vpack.c.b16 %v4828, %v4827
        %v4943 = vpack.c.b16 %v4830, %v4829
        %v4944 = vpack.c.b16 %v4832, %v4831
        %v4945 = vpack.c.b16 %v4834, %v4833
        %v4946 = vpack.c.b16 %v4836, %v4835
        %v4947 = vpack.c.b16 %v4838, %v4837
        %v4948 = vpack.c.b16 %v4840, %v4839
        %v4949 = vpack.c.b16 %v4842, %v4841
        %v4950 = vpack.c.b16 %v4844, %v4843
        %v4951 = vpack.c.b16 %v4846, %v4845
        %v4952 = vpack.c.b16 %v4848, %v4847
        %v4953 = vpack.c.b16 %v4850, %v4849
        %v4954 = vpack.c.b16 %v4852, %v4851
        %v4955 = vpack.c.b16 %v4854, %v4853
        %v4956 = vpack.c.b16 %v4856, %v4855
        %v4957 = vpack.c.b16 %v4858, %v4857
        %v4958 = vpack.c.b16 %v4860, %v4859
        %v4959 = vpack.c.b16 %v4862, %v4861
        %v4960 = vpack.c.b16 %v4864, %v4863
        %v4961 = vpack.c.b16 %v4866, %v4865
        %v4962 = vpack.c.b16 %v4868, %v4867
        %v4963 = vpack.c.b16 %v4870, %v4869
        %v4964 = vpack.c.b16 %v4872, %v4871
        %v4965 = vpack.c.b16 %v4874, %v4873
        %v4966 = vpack.c.b16 %v4876, %v4875
        %v4967 = vpack.c.b16 %v4878, %v4877
        %v4968 = vpack.c.b16 %v4880, %v4879
        %v4969 = vpack.c.b16 %v4882, %v4881
        %v4970 = vpack.c.b16 %v4884, %v4883
        %v4971 = vpack.c.b16 %v4886, %v4885
        %v4972 = vpack.c.b16 %v4888, %v4887
        %v4973 = vpack.c.b16 %v4890, %v4889
        %v4974 = vpack.c.b16 %v4892, %v4891
        %v4975 = vpack.c.b16 %v4894, %v4893
        %v4976 = vpack.c.b16 %v4896, %v4895
        %v4977 = vpack.c.b16 %v4898, %v4897
        %v4978 = vpack.c.b16 %v4900, %v4899
        %v4979 = vpack.c.b16 %v4902, %v4901
        %v4980 = vpack.c.b16 %v4904, %v4903
        %v4981 = vpack.c.b16 %v4906, %v4905
        %v4982 = vpack.c.b16 %v4908, %v4907
        %v4983 = vpack.c.b16 %v4910, %v4909
        %v4984 = vpack.c.b16 %v4912, %v4911
        %v4985 = vpack.c.b16 %v4914, %v4913
        %v4986 = vpack.c.b16 %v4916, %v4915
        %v4987 = vpack.c.b16 %v4918, %v4917
        %v4988 = vpack.c.b16 %v4920, %v4919
        %v4989 = vpack.c.b16 %v4922, %v4921
        %v4990 = vpack.c.b16 %v4924, %v4923
        %v4991 = vpack.c.b16 %v4926, %v4925
        %v4992 = vpack.c.b16 %v4928, %v4927
        %5057 = vmatprep.subr.bf16.mxu0 0
        %5058 = vmatpush1.bf16.msra.mxu0 %v4929
        %5059 = vmatprep.subr.bf16.mxu0 0
        %5060 = vmatpush1.bf16.msra.mxu0 %v4930
        %5061 = vmatprep.subr.bf16.mxu0 0
        %5062 = vmatpush1.bf16.msra.mxu0 %v4931
        %5063 = vmatprep.subr.bf16.mxu0 0
        %5064 = vmatpush1.bf16.msra.mxu0 %v4932
        %5065 = vmatprep.subr.bf16.mxu0 0
        %5066 = vmatpush1.bf16.msra.mxu0 %v4933
        %5067 = vmatprep.subr.bf16.mxu0 0
        %5068 = vmatpush1.bf16.msra.mxu0 %v4934
        %5069 = vmatprep.subr.bf16.mxu0 0
        %5070 = vmatpush1.bf16.msra.mxu0 %v4935
        %5071 = vmatprep.subr.bf16.mxu0 0
        %5072 = vmatpush1.bf16.msra.mxu0 %v4936
        %5073 = vmatprep.subr.bf16.mxu0 0
        %5074 = vmatpush1.bf16.msra.mxu0 %v4937
        %5075 = vmatprep.subr.bf16.mxu0 0
        %5076 = vmatpush1.bf16.msra.mxu0 %v4938
        %5077 = vmatprep.subr.bf16.mxu0 0
        %5078 = vmatpush1.bf16.msra.mxu0 %v4939
        %5079 = vmatprep.subr.bf16.mxu0 0
        %5080 = vmatpush1.bf16.msra.mxu0 %v4940
        %5081 = vmatprep.subr.bf16.mxu0 0
        %5082 = vmatpush1.bf16.msra.mxu0 %v4941
        %5083 = vmatprep.subr.bf16.mxu0 0
        %5084 = vmatpush1.bf16.msra.mxu0 %v4942
        %5085 = vmatprep.subr.bf16.mxu0 0
        %5086 = vmatpush1.bf16.msra.mxu0 %v4943
        %5087 = vmatprep.subr.bf16.mxu0 0
        %5088 = vmatpush1.bf16.msra.mxu0 %v4944
        %5089 = vmatprep.mubr.bf16.mxu0 %v4098
        %5090 = vmatmul.mubr.bf16.gmra.mrb[0].mxu0 %v4097
        %v5091 = vpop.f32.mrb[0].mxu0
        %v5092 = vadd.f32 0.0, %v5091
        %v5093 = vpop.f32.mrb[0].mxu0
        %v5094 = vpop.f32.mrb[0].mxu0
        %v5095 = vadd.f32 0.0, %v5094
        %v5096 = vpop.f32.mrb[0].mxu0
        %5097 = vmatprep.mubr.bf16.mxu0 %v4106
        %5098 = vmatmul.mubr.bf16.gmra.mrb[0].mxu0 %v4105
        %v5099 = vpop.f32.mrb[0].mxu0
        %v5100 = vadd.f32 0.0, %v5099
        %v5101 = vpop.f32.mrb[0].mxu0
        %v5102 = vpop.f32.mrb[0].mxu0
        %v5103 = vadd.f32 0.0, %v5102
        %v5104 = vpop.f32.mrb[0].mxu0
        %5105 = vmatprep.mubr.bf16.mxu0 %v4114
        %5106 = vmatmul.mubr.bf16.gmra.mrb[0].mxu0 %v4113
        %v5107 = vpop.f32.mrb[0].mxu0
        %v5108 = vadd.f32 0.0, %v5107
        %v5109 = vpop.f32.mrb[0].mxu0
        %v5110 = vpop.f32.mrb[0].mxu0
        %v5111 = vadd.f32 0.0, %v5110
        %v5112 = vpop.f32.mrb[0].mxu0
        %5113 = vmatprep.mubr.bf16.mxu0 %v4122
        %5114 = vmatmul.mubr.bf16.gmra.mrb[0].mxu0 %v4121
        %v5115 = vpop.f32.mrb[0].mxu0
        %v5116 = vadd.f32 0.0, %v5115
        %v5117 = vpop.f32.mrb[0].mxu0
        %v5118 = vpop.f32.mrb[0].mxu0
        %v5119 = vadd.f32 0.0, %v5118
        %v5120 = vpop.f32.mrb[0].mxu0
        %5121 = vmatprep.mubr.bf16.mxu0 %v4130
        %5122 = vmatmul.mubr.bf16.gmra.mrb[0].mxu0 %v4129
        %v5123 = vpop.f32.mrb[0].mxu0
        %v5124 = vadd.f32 0.0, %v5123
        %v5125 = vpop.f32.mrb[0].mxu0
        %v5126 = vpop.f32.mrb[0].mxu0
        %v5127 = vadd.f32 0.0, %v5126
        %v5128 = vpop.f32.mrb[0].mxu0
        %5129 = vmatprep.mubr.bf16.mxu0 %v4138
        %5130 = vmatmul.mubr.bf16.gmra.mrb[0].mxu0 %v4137
        %v5131 = vpop.f32.mrb[0].mxu0
        %v5132 = vadd.f32 0.0, %v5131
        %v5133 = vpop.f32.mrb[0].mxu0
        %v5134 = vpop.f32.mrb[0].mxu0
        %v5135 = vadd.f32 0.0, %v5134
        %v5136 = vpop.f32.mrb[0].mxu0
        %5137 = vmatprep.mubr.bf16.mxu0 %v4146
        %5138 = vmatmul.mubr.bf16.gmra.mrb[0].mxu0 %v4145
        %v5139 = vpop.f32.mrb[0].mxu0
        %v5140 = vadd.f32 0.0, %v5139
        %v5141 = vpop.f32.mrb[0].mxu0
        %v5142 = vpop.f32.mrb[0].mxu0
        %v5143 = vadd.f32 0.0, %v5142
        %v5144 = vpop.f32.mrb[0].mxu0
        %5145 = vmatprep.mubr.bf16.mxu0 %v4154
        %5146 = vmatmul.mubr.bf16.gmra.mrb[0].mxu0 %v4153
        %v5147 = vpop.f32.mrb[0].mxu0
        %v5148 = vadd.f32 0.0, %v5147
        %v5149 = vpop.f32.mrb[0].mxu0
        %v5150 = vpop.f32.mrb[0].mxu0
        %v5151 = vadd.f32 0.0, %v5150
        %v5152 = vpop.f32.mrb[0].mxu0
        %5153 = vmatprep.mubr.bf16.mxu0 %v4162
        %5154 = vmatmul.mubr.bf16.gmra.mrb[0].mxu0 %v4161
        %v5155 = vpop.f32.mrb[0].mxu0
        %v5156 = vadd.f32 0.0, %v5155
        %v5157 = vpop.f32.mrb[0].mxu0
        %v5158 = vpop.f32.mrb[0].mxu0
        %v5159 = vadd.f32 0.0, %v5158
        %v5160 = vpop.f32.mrb[0].mxu0
        %5161 = vmatprep.mubr.bf16.mxu0 %v4170
        %5162 = vmatmul.mubr.bf16.gmra.mrb[0].mxu0 %v4169
        %v5163 = vpop.f32.mrb[0].mxu0
        %v5164 = vadd.f32 0.0, %v5163
        %v5165 = vpop.f32.mrb[0].mxu0
        %v5166 = vpop.f32.mrb[0].mxu0
        %v5167 = vadd.f32 0.0, %v5166
        %v5168 = vpop.f32.mrb[0].mxu0
        %5169 = vmatprep.mubr.bf16.mxu0 %v4178
        %5170 = vmatmul.mubr.bf16.gmra.mrb[0].mxu0 %v4177
        %v5171 = vpop.f32.mrb[0].mxu0
        %v5172 = vadd.f32 0.0, %v5171
        %v5173 = vpop.f32.mrb[0].mxu0
        %v5174 = vpop.f32.mrb[0].mxu0
        %v5175 = vadd.f32 0.0, %v5174
        %v5176 = vpop.f32.mrb[0].mxu0
        %5177 = vmatprep.mubr.bf16.mxu0 %v4186
        %5178 = vmatmul.mubr.bf16.gmra.mrb[0].mxu0 %v4185
        %v5179 = vpop.f32.mrb[0].mxu0
        %v5180 = vadd.f32 0.0, %v5179
        %v5181 = vpop.f32.mrb[0].mxu0
        %v5182 = vpop.f32.mrb[0].mxu0
        %v5183 = vadd.f32 0.0, %v5182
        %v5184 = vpop.f32.mrb[0].mxu0
        %5185 = vmatprep.mubr.bf16.mxu0 %v4194
        %5186 = vmatmul.mubr.bf16.gmra.mrb[0].mxu0 %v4193
        %v5187 = vpop.f32.mrb[0].mxu0
        %v5188 = vadd.f32 0.0, %v5187
        %v5189 = vpop.f32.mrb[0].mxu0
        %v5190 = vpop.f32.mrb[0].mxu0
        %v5191 = vadd.f32 0.0, %v5190
        %v5192 = vpop.f32.mrb[0].mxu0
        %5193 = vmatprep.mubr.bf16.mxu0 %v4202
        %5194 = vmatmul.mubr.bf16.gmra.mrb[0].mxu0 %v4201
        %v5195 = vpop.f32.mrb[0].mxu0
        %v5196 = vadd.f32 0.0, %v5195
        %v5197 = vpop.f32.mrb[0].mxu0
        %v5198 = vpop.f32.mrb[0].mxu0
        %v5199 = vadd.f32 0.0, %v5198
        %v5200 = vpop.f32.mrb[0].mxu0
        %5201 = vmatprep.mubr.bf16.mxu0 %v4210
        %5202 = vmatmul.mubr.bf16.gmra.mrb[0].mxu0 %v4209
        %v5203 = vpop.f32.mrb[0].mxu0
        %v5204 = vadd.f32 0.0, %v5203
        %v5205 = vpop.f32.mrb[0].mxu0
        %v5206 = vpop.f32.mrb[0].mxu0
        %v5207 = vadd.f32 0.0, %v5206
        %v5208 = vpop.f32.mrb[0].mxu0
        %5209 = vmatprep.mubr.bf16.mxu0 %v4218
        %5210 = vmatmul.mubr.bf16.gmra.mrb[0].mxu0 %v4217
        %v5211 = vpop.f32.mrb[0].mxu0
        %v5212 = vadd.f32 0.0, %v5211
        %v5213 = vpop.f32.mrb[0].mxu0
        %v5214 = vpop.f32.mrb[0].mxu0
        %v5215 = vadd.f32 0.0, %v5214
        %v5216 = vpop.f32.mrb[0].mxu0
        %5217 = vmatprep.mubr.bf16.mxu0 %v4226
        %5218 = vmatmul.mubr.bf16.gmra.mrb[0].mxu0 %v4225
        %v5219 = vpop.f32.mrb[0].mxu0
        %v5220 = vadd.f32 0.0, %v5219
        %v5221 = vpop.f32.mrb[0].mxu0
        %v5222 = vpop.f32.mrb[0].mxu0
        %v5223 = vadd.f32 0.0, %v5222
        %v5224 = vpop.f32.mrb[0].mxu0
        %5225 = vmatprep.mubr.bf16.mxu0 %v4234
        %5226 = vmatmul.mubr.bf16.gmra.mrb[0].mxu0 %v4233
        %v5227 = vpop.f32.mrb[0].mxu0
        %v5228 = vadd.f32 0.0, %v5227
        %v5229 = vpop.f32.mrb[0].mxu0
        %v5230 = vpop.f32.mrb[0].mxu0
        %v5231 = vadd.f32 0.0, %v5230
        %v5232 = vpop.f32.mrb[0].mxu0
        %5233 = vmatprep.mubr.bf16.mxu0 %v4242
        %5234 = vmatmul.mubr.bf16.gmra.mrb[0].mxu0 %v4241
        %v5235 = vpop.f32.mrb[0].mxu0
        %v5236 = vadd.f32 0.0, %v5235
        %v5237 = vpop.f32.mrb[0].mxu0
        %v5238 = vpop.f32.mrb[0].mxu0
        %v5239 = vadd.f32 0.0, %v5238
        %v5240 = vpop.f32.mrb[0].mxu0
        %5241 = vmatprep.mubr.bf16.mxu0 %v4250
        %5242 = vmatmul.mubr.bf16.gmra.mrb[0].mxu0 %v4249
        %v5243 = vpop.f32.mrb[0].mxu0
        %v5244 = vadd.f32 0.0, %v5243
        %v5245 = vpop.f32.mrb[0].mxu0
        %v5246 = vpop.f32.mrb[0].mxu0
        %v5247 = vadd.f32 0.0, %v5246
        %v5248 = vpop.f32.mrb[0].mxu0
        %5249 = vmatprep.mubr.bf16.mxu0 %v4258
        %5250 = vmatmul.mubr.bf16.gmra.mrb[0].mxu0 %v4257
        %v5251 = vpop.f32.mrb[0].mxu0
        %v5252 = vadd.f32 0.0, %v5251
        %v5253 = vpop.f32.mrb[0].mxu0
        %v5254 = vpop.f32.mrb[0].mxu0
        %v5255 = vadd.f32 0.0, %v5254
        %v5256 = vpop.f32.mrb[0].mxu0
        %5257 = vmatprep.mubr.bf16.mxu0 %v4266
        %5258 = vmatmul.mubr.bf16.gmra.mrb[0].mxu0 %v4265
        %v5259 = vpop.f32.mrb[0].mxu0
        %v5260 = vadd.f32 0.0, %v5259
        %v5261 = vpop.f32.mrb[0].mxu0
        %v5262 = vpop.f32.mrb[0].mxu0
        %v5263 = vadd.f32 0.0, %v5262
        %v5264 = vpop.f32.mrb[0].mxu0
        %5265 = vmatprep.mubr.bf16.mxu0 %v4274
        %5266 = vmatmul.mubr.bf16.gmra.mrb[0].mxu0 %v4273
        %v5267 = vpop.f32.mrb[0].mxu0
        %v5268 = vadd.f32 0.0, %v5267
        %v5269 = vpop.f32.mrb[0].mxu0
        %v5270 = vpop.f32.mrb[0].mxu0
        %v5271 = vadd.f32 0.0, %v5270
        %v5272 = vpop.f32.mrb[0].mxu0
        %5273 = vmatprep.mubr.bf16.mxu0 %v4282
        %5274 = vmatmul.mubr.bf16.gmra.mrb[0].mxu0 %v4281
        %v5275 = vpop.f32.mrb[0].mxu0
        %v5276 = vadd.f32 0.0, %v5275
        %v5277 = vpop.f32.mrb[0].mxu0
        %v5278 = vpop.f32.mrb[0].mxu0
        %v5279 = vadd.f32 0.0, %v5278
        %v5280 = vpop.f32.mrb[0].mxu0
        %5281 = vmatprep.mubr.bf16.mxu0 %v4290
        %5282 = vmatmul.mubr.bf16.gmra.mrb[0].mxu0 %v4289
        %v5283 = vpop.f32.mrb[0].mxu0
        %v5284 = vadd.f32 0.0, %v5283
        %v5285 = vpop.f32.mrb[0].mxu0
        %v5286 = vpop.f32.mrb[0].mxu0
        %v5287 = vadd.f32 0.0, %v5286
        %v5288 = vpop.f32.mrb[0].mxu0
        %5289 = vmatprep.mubr.bf16.mxu0 %v4298
        %5290 = vmatmul.mubr.bf16.gmra.mrb[0].mxu0 %v4297
        %v5291 = vpop.f32.mrb[0].mxu0
        %v5292 = vadd.f32 0.0, %v5291
        %v5293 = vpop.f32.mrb[0].mxu0
        %v5294 = vpop.f32.mrb[0].mxu0
        %v5295 = vadd.f32 0.0, %v5294
        %v5296 = vpop.f32.mrb[0].mxu0
        %5297 = vmatprep.mubr.bf16.mxu0 %v4306
        %5298 = vmatmul.mubr.bf16.gmra.mrb[0].mxu0 %v4305
        %v5299 = vpop.f32.mrb[0].mxu0
        %v5300 = vadd.f32 0.0, %v5299
        %v5301 = vpop.f32.mrb[0].mxu0
        %v5302 = vpop.f32.mrb[0].mxu0
        %v5303 = vadd.f32 0.0, %v5302
        %v5304 = vpop.f32.mrb[0].mxu0
        %5305 = vmatprep.mubr.bf16.mxu0 %v4314
        %5306 = vmatmul.mubr.bf16.gmra.mrb[0].mxu0 %v4313
        %v5307 = vpop.f32.mrb[0].mxu0
        %v5308 = vadd.f32 0.0, %v5307
        %v5309 = vpop.f32.mrb[0].mxu0
        %v5310 = vpop.f32.mrb[0].mxu0
        %v5311 = vadd.f32 0.0, %v5310
        %v5312 = vpop.f32.mrb[0].mxu0
        %5313 = vmatprep.mubr.bf16.mxu0 %v4322
        %5314 = vmatmul.mubr.bf16.gmra.mrb[0].mxu0 %v4321
        %v5315 = vpop.f32.mrb[0].mxu0
        %v5316 = vadd.f32 0.0, %v5315
        %v5317 = vpop.f32.mrb[0].mxu0
        %v5318 = vpop.f32.mrb[0].mxu0
        %v5319 = vadd.f32 0.0, %v5318
        %v5320 = vpop.f32.mrb[0].mxu0
        %5321 = vmatprep.mubr.bf16.mxu0 %v4330
        %5322 = vmatmul.mubr.bf16.gmra.mrb[0].mxu0 %v4329
        %v5323 = vpop.f32.mrb[0].mxu0
        %v5324 = vadd.f32 0.0, %v5323
        %v5325 = vpop.f32.mrb[0].mxu0
        %v5326 = vpop.f32.mrb[0].mxu0
        %v5327 = vadd.f32 0.0, %v5326
        %v5328 = vpop.f32.mrb[0].mxu0
        %5329 = vmatprep.mubr.bf16.mxu0 %v4338
        %5330 = vmatmul.mubr.bf16.gmra.mrb[0].mxu0 %v4337
        %v5331 = vpop.f32.mrb[0].mxu0
        %v5332 = vadd.f32 0.0, %v5331
        %v5333 = vpop.f32.mrb[0].mxu0
        %v5334 = vpop.f32.mrb[0].mxu0
        %v5335 = vadd.f32 0.0, %v5334
        %v5336 = vpop.f32.mrb[0].mxu0
        %5337 = vmatprep.mubr.bf16.mxu0 %v4346
        %5338 = vmatmul.mubr.bf16.gmra.mrb[0].mxu0 %v4345
        %v5339 = vpop.f32.mrb[0].mxu0
        %v5340 = vadd.f32 0.0, %v5339
        %v5341 = vpop.f32.mrb[0].mxu0
        %v5342 = vpop.f32.mrb[0].mxu0
        %v5343 = vadd.f32 0.0, %v5342
        %v5344 = vpop.f32.mrb[0].mxu0
        %5345 = vdwg.mxu0
        %5346 = vmatprep.subr.bf16.mxu0 0
        %5347 = vmatpush1.bf16.msra.mxu0 %v4945
        %5348 = vmatprep.subr.bf16.mxu0 0
        %5349 = vmatpush1.bf16.msra.mxu0 %v4946
        %5350 = vmatprep.subr.bf16.mxu0 0
        %5351 = vmatpush1.bf16.msra.mxu0 %v4947
        %5352 = vmatprep.subr.bf16.mxu0 0
        %5353 = vmatpush1.bf16.msra.mxu0 %v4948
        %5354 = vmatprep.subr.bf16.mxu0 0
        %5355 = vmatpush1.bf16.msra.mxu0 %v4949
        %5356 = vmatprep.subr.bf16.mxu0 0
        %5357 = vmatpush1.bf16.msra.mxu0 %v4950
        %5358 = vmatprep.subr.bf16.mxu0 0
        %5359 = vmatpush1.bf16.msra.mxu0 %v4951
        %5360 = vmatprep.subr.bf16.mxu0 0
        %5361 = vmatpush1.bf16.msra.mxu0 %v4952
        %5362 = vmatprep.subr.bf16.mxu0 0
        %5363 = vmatpush1.bf16.msra.mxu0 %v4953
        %5364 = vmatprep.subr.bf16.mxu0 0
        %5365 = vmatpush1.bf16.msra.mxu0 %v4954
        %5366 = vmatprep.subr.bf16.mxu0 0
        %5367 = vmatpush1.bf16.msra.mxu0 %v4955
        %5368 = vmatprep.subr.bf16.mxu0 0
        %5369 = vmatpush1.bf16.msra.mxu0 %v4956
        %5370 = vmatprep.subr.bf16.mxu0 0
        %5371 = vmatpush1.bf16.msra.mxu0 %v4957
        %5372 = vmatprep.subr.bf16.mxu0 0
        %5373 = vmatpush1.bf16.msra.mxu0 %v4958
        %5374 = vmatprep.subr.bf16.mxu0 0
        %5375 = vmatpush1.bf16.msra.mxu0 %v4959
        %5376 = vmatprep.subr.bf16.mxu0 0
        %5377 = vmatpush1.bf16.msra.mxu0 %v4960
        %5378 = vmatprep.mubr.bf16.mxu0 %v4100
        %5379 = vmatmul.mubr.bf16.gmra.mrb[0].mxu0 %v4099
        %v5380 = vpop.f32.mrb[0].mxu0
        %v5381 = vadd.f32 %v5092, %v5380
        %v5382 = vpop.f32.mrb[0].mxu0
        %v5383 = vpop.f32.mrb[0].mxu0
        %v5384 = vadd.f32 %v5095, %v5383
        %v5385 = vpop.f32.mrb[0].mxu0
        %5386 = vmatprep.mubr.bf16.mxu0 %v4108
        %5387 = vmatmul.mubr.bf16.gmra.mrb[0].mxu0 %v4107
        %v5388 = vpop.f32.mrb[0].mxu0
        %v5389 = vadd.f32 %v5100, %v5388
        %v5390 = vpop.f32.mrb[0].mxu0
        %v5391 = vpop.f32.mrb[0].mxu0
        %v5392 = vadd.f32 %v5103, %v5391
        %v5393 = vpop.f32.mrb[0].mxu0
        %5394 = vmatprep.mubr.bf16.mxu0 %v4116
        %5395 = vmatmul.mubr.bf16.gmra.mrb[0].mxu0 %v4115
        %v5396 = vpop.f32.mrb[0].mxu0
        %v5397 = vadd.f32 %v5108, %v5396
        %v5398 = vpop.f32.mrb[0].mxu0
        %v5399 = vpop.f32.mrb[0].mxu0
        %v5400 = vadd.f32 %v5111, %v5399
        %v5401 = vpop.f32.mrb[0].mxu0
        %5402 = vmatprep.mubr.bf16.mxu0 %v4124
        %5403 = vmatmul.mubr.bf16.gmra.mrb[0].mxu0 %v4123
        %v5404 = vpop.f32.mrb[0].mxu0
        %v5405 = vadd.f32 %v5116, %v5404
        %v5406 = vpop.f32.mrb[0].mxu0
        %v5407 = vpop.f32.mrb[0].mxu0
        %v5408 = vadd.f32 %v5119, %v5407
        %v5409 = vpop.f32.mrb[0].mxu0
        %5410 = vmatprep.mubr.bf16.mxu0 %v4132
        %5411 = vmatmul.mubr.bf16.gmra.mrb[0].mxu0 %v4131
        %v5412 = vpop.f32.mrb[0].mxu0
        %v5413 = vadd.f32 %v5124, %v5412
        %v5414 = vpop.f32.mrb[0].mxu0
        %v5415 = vpop.f32.mrb[0].mxu0
        %v5416 = vadd.f32 %v5127, %v5415
        %v5417 = vpop.f32.mrb[0].mxu0
        %5418 = vmatprep.mubr.bf16.mxu0 %v4140
        %5419 = vmatmul.mubr.bf16.gmra.mrb[0].mxu0 %v4139
        %v5420 = vpop.f32.mrb[0].mxu0
        %v5421 = vadd.f32 %v5132, %v5420
        %v5422 = vpop.f32.mrb[0].mxu0
        %v5423 = vpop.f32.mrb[0].mxu0
        %v5424 = vadd.f32 %v5135, %v5423
        %v5425 = vpop.f32.mrb[0].mxu0
        %5426 = vmatprep.mubr.bf16.mxu0 %v4148
        %5427 = vmatmul.mubr.bf16.gmra.mrb[0].mxu0 %v4147
        %v5428 = vpop.f32.mrb[0].mxu0
        %v5429 = vadd.f32 %v5140, %v5428
        %v5430 = vpop.f32.mrb[0].mxu0
        %v5431 = vpop.f32.mrb[0].mxu0
        %v5432 = vadd.f32 %v5143, %v5431
        %v5433 = vpop.f32.mrb[0].mxu0
        %5434 = vmatprep.mubr.bf16.mxu0 %v4156
        %5435 = vmatmul.mubr.bf16.gmra.mrb[0].mxu0 %v4155
        %v5436 = vpop.f32.mrb[0].mxu0
        %v5437 = vadd.f32 %v5148, %v5436
        %v5438 = vpop.f32.mrb[0].mxu0
        %v5439 = vpop.f32.mrb[0].mxu0
        %v5440 = vadd.f32 %v5151, %v5439
        %v5441 = vpop.f32.mrb[0].mxu0
        %5442 = vmatprep.mubr.bf16.mxu0 %v4164
        %5443 = vmatmul.mubr.bf16.gmra.mrb[0].mxu0 %v4163
        %v5444 = vpop.f32.mrb[0].mxu0
        %v5445 = vadd.f32 %v5156, %v5444
        %v5446 = vpop.f32.mrb[0].mxu0
        %v5447 = vpop.f32.mrb[0].mxu0
        %v5448 = vadd.f32 %v5159, %v5447
        %v5449 = vpop.f32.mrb[0].mxu0
        %5450 = vmatprep.mubr.bf16.mxu0 %v4172
        %5451 = vmatmul.mubr.bf16.gmra.mrb[0].mxu0 %v4171
        %v5452 = vpop.f32.mrb[0].mxu0
        %v5453 = vadd.f32 %v5164, %v5452
        %v5454 = vpop.f32.mrb[0].mxu0
        %v5455 = vpop.f32.mrb[0].mxu0
        %v5456 = vadd.f32 %v5167, %v5455
        %v5457 = vpop.f32.mrb[0].mxu0
        %5458 = vmatprep.mubr.bf16.mxu0 %v4180
        %5459 = vmatmul.mubr.bf16.gmra.mrb[0].mxu0 %v4179
        %v5460 = vpop.f32.mrb[0].mxu0
        %v5461 = vadd.f32 %v5172, %v5460
        %v5462 = vpop.f32.mrb[0].mxu0
        %v5463 = vpop.f32.mrb[0].mxu0
        %v5464 = vadd.f32 %v5175, %v5463
        %v5465 = vpop.f32.mrb[0].mxu0
        %5466 = vmatprep.mubr.bf16.mxu0 %v4188
        %5467 = vmatmul.mubr.bf16.gmra.mrb[0].mxu0 %v4187
        %v5468 = vpop.f32.mrb[0].mxu0
        %v5469 = vadd.f32 %v5180, %v5468
        %v5470 = vpop.f32.mrb[0].mxu0
        %v5471 = vpop.f32.mrb[0].mxu0
        %v5472 = vadd.f32 %v5183, %v5471
        %v5473 = vpop.f32.mrb[0].mxu0
        %5474 = vmatprep.mubr.bf16.mxu0 %v4196
        %5475 = vmatmul.mubr.bf16.gmra.mrb[0].mxu0 %v4195
        %v5476 = vpop.f32.mrb[0].mxu0
        %v5477 = vadd.f32 %v5188, %v5476
        %v5478 = vpop.f32.mrb[0].mxu0
        %v5479 = vpop.f32.mrb[0].mxu0
        %v5480 = vadd.f32 %v5191, %v5479
        %v5481 = vpop.f32.mrb[0].mxu0
        %5482 = vmatprep.mubr.bf16.mxu0 %v4204
        %5483 = vmatmul.mubr.bf16.gmra.mrb[0].mxu0 %v4203
        %v5484 = vpop.f32.mrb[0].mxu0
        %v5485 = vadd.f32 %v5196, %v5484
        %v5486 = vpop.f32.mrb[0].mxu0
        %v5487 = vpop.f32.mrb[0].mxu0
        %v5488 = vadd.f32 %v5199, %v5487
        %v5489 = vpop.f32.mrb[0].mxu0
        %5490 = vmatprep.mubr.bf16.mxu0 %v4212
        %5491 = vmatmul.mubr.bf16.gmra.mrb[0].mxu0 %v4211
        %v5492 = vpop.f32.mrb[0].mxu0
        %v5493 = vadd.f32 %v5204, %v5492
        %v5494 = vpop.f32.mrb[0].mxu0
        %v5495 = vpop.f32.mrb[0].mxu0
        %v5496 = vadd.f32 %v5207, %v5495
        %v5497 = vpop.f32.mrb[0].mxu0
        %5498 = vmatprep.mubr.bf16.mxu0 %v4220
        %5499 = vmatmul.mubr.bf16.gmra.mrb[0].mxu0 %v4219
        %v5500 = vpop.f32.mrb[0].mxu0
        %v5501 = vadd.f32 %v5212, %v5500
        %v5502 = vpop.f32.mrb[0].mxu0
        %v5503 = vpop.f32.mrb[0].mxu0
        %v5504 = vadd.f32 %v5215, %v5503
        %v5505 = vpop.f32.mrb[0].mxu0
        %5506 = vmatprep.mubr.bf16.mxu0 %v4228
        %5507 = vmatmul.mubr.bf16.gmra.mrb[0].mxu0 %v4227
        %v5508 = vpop.f32.mrb[0].mxu0
        %v5509 = vadd.f32 %v5220, %v5508
        %v5510 = vpop.f32.mrb[0].mxu0
        %v5511 = vpop.f32.mrb[0].mxu0
        %v5512 = vadd.f32 %v5223, %v5511
        %v5513 = vpop.f32.mrb[0].mxu0
        %5514 = vmatprep.mubr.bf16.mxu0 %v4236
        %5515 = vmatmul.mubr.bf16.gmra.mrb[0].mxu0 %v4235
        %v5516 = vpop.f32.mrb[0].mxu0
        %v5517 = vadd.f32 %v5228, %v5516
        %v5518 = vpop.f32.mrb[0].mxu0
        %v5519 = vpop.f32.mrb[0].mxu0
        %v5520 = vadd.f32 %v5231, %v5519
        %v5521 = vpop.f32.mrb[0].mxu0
        %5522 = vmatprep.mubr.bf16.mxu0 %v4244
        %5523 = vmatmul.mubr.bf16.gmra.mrb[0].mxu0 %v4243
        %v5524 = vpop.f32.mrb[0].mxu0
        %v5525 = vadd.f32 %v5236, %v5524
        %v5526 = vpop.f32.mrb[0].mxu0
        %v5527 = vpop.f32.mrb[0].mxu0
        %v5528 = vadd.f32 %v5239, %v5527
        %v5529 = vpop.f32.mrb[0].mxu0
        %5530 = vmatprep.mubr.bf16.mxu0 %v4252
        %5531 = vmatmul.mubr.bf16.gmra.mrb[0].mxu0 %v4251
        %v5532 = vpop.f32.mrb[0].mxu0
        %v5533 = vadd.f32 %v5244, %v5532
        %v5534 = vpop.f32.mrb[0].mxu0
        %v5535 = vpop.f32.mrb[0].mxu0
        %v5536 = vadd.f32 %v5247, %v5535
        %v5537 = vpop.f32.mrb[0].mxu0
        %5538 = vmatprep.mubr.bf16.mxu0 %v4260
        %5539 = vmatmul.mubr.bf16.gmra.mrb[0].mxu0 %v4259
        %v5540 = vpop.f32.mrb[0].mxu0
        %v5541 = vadd.f32 %v5252, %v5540
        %v5542 = vpop.f32.mrb[0].mxu0
        %v5543 = vpop.f32.mrb[0].mxu0
        %v5544 = vadd.f32 %v5255, %v5543
        %v5545 = vpop.f32.mrb[0].mxu0
        %5546 = vmatprep.mubr.bf16.mxu0 %v4268
        %5547 = vmatmul.mubr.bf16.gmra.mrb[0].mxu0 %v4267
        %v5548 = vpop.f32.mrb[0].mxu0
        %v5549 = vadd.f32 %v5260, %v5548
        %v5550 = vpop.f32.mrb[0].mxu0
        %v5551 = vpop.f32.mrb[0].mxu0
        %v5552 = vadd.f32 %v5263, %v5551
        %v5553 = vpop.f32.mrb[0].mxu0
        %5554 = vmatprep.mubr.bf16.mxu0 %v4276
        %5555 = vmatmul.mubr.bf16.gmra.mrb[0].mxu0 %v4275
        %v5556 = vpop.f32.mrb[0].mxu0
        %v5557 = vadd.f32 %v5268, %v5556
        %v5558 = vpop.f32.mrb[0].mxu0
        %v5559 = vpop.f32.mrb[0].mxu0
        %v5560 = vadd.f32 %v5271, %v5559
        %v5561 = vpop.f32.mrb[0].mxu0
        %5562 = vmatprep.mubr.bf16.mxu0 %v4284
        %5563 = vmatmul.mubr.bf16.gmra.mrb[0].mxu0 %v4283
        %v5564 = vpop.f32.mrb[0].mxu0
        %v5565 = vadd.f32 %v5276, %v5564
        %v5566 = vpop.f32.mrb[0].mxu0
        %v5567 = vpop.f32.mrb[0].mxu0
        %v5568 = vadd.f32 %v5279, %v5567
        %v5569 = vpop.f32.mrb[0].mxu0
        %5570 = vmatprep.mubr.bf16.mxu0 %v4292
        %5571 = vmatmul.mubr.bf16.gmra.mrb[0].mxu0 %v4291
        %v5572 = vpop.f32.mrb[0].mxu0
        %v5573 = vadd.f32 %v5284, %v5572
        %v5574 = vpop.f32.mrb[0].mxu0
        %v5575 = vpop.f32.mrb[0].mxu0
        %v5576 = vadd.f32 %v5287, %v5575
        %v5577 = vpop.f32.mrb[0].mxu0
        %5578 = vmatprep.mubr.bf16.mxu0 %v4300
        %5579 = vmatmul.mubr.bf16.gmra.mrb[0].mxu0 %v4299
        %v5580 = vpop.f32.mrb[0].mxu0
        %v5581 = vadd.f32 %v5292, %v5580
        %v5582 = vpop.f32.mrb[0].mxu0
        %v5583 = vpop.f32.mrb[0].mxu0
        %v5584 = vadd.f32 %v5295, %v5583
        %v5585 = vpop.f32.mrb[0].mxu0
        %5586 = vmatprep.mubr.bf16.mxu0 %v4308
        %5587 = vmatmul.mubr.bf16.gmra.mrb[0].mxu0 %v4307
        %v5588 = vpop.f32.mrb[0].mxu0
        %v5589 = vadd.f32 %v5300, %v5588
        %v5590 = vpop.f32.mrb[0].mxu0
        %v5591 = vpop.f32.mrb[0].mxu0
        %v5592 = vadd.f32 %v5303, %v5591
        %v5593 = vpop.f32.mrb[0].mxu0
        %5594 = vmatprep.mubr.bf16.mxu0 %v4316
        %5595 = vmatmul.mubr.bf16.gmra.mrb[0].mxu0 %v4315
        %v5596 = vpop.f32.mrb[0].mxu0
        %v5597 = vadd.f32 %v5308, %v5596
        %v5598 = vpop.f32.mrb[0].mxu0
        %v5599 = vpop.f32.mrb[0].mxu0
        %v5600 = vadd.f32 %v5311, %v5599
        %v5601 = vpop.f32.mrb[0].mxu0
        %5602 = vmatprep.mubr.bf16.mxu0 %v4324
        %5603 = vmatmul.mubr.bf16.gmra.mrb[0].mxu0 %v4323
        %v5604 = vpop.f32.mrb[0].mxu0
        %v5605 = vadd.f32 %v5316, %v5604
        %v5606 = vpop.f32.mrb[0].mxu0
        %v5607 = vpop.f32.mrb[0].mxu0
        %v5608 = vadd.f32 %v5319, %v5607
        %v5609 = vpop.f32.mrb[0].mxu0
        %5610 = vmatprep.mubr.bf16.mxu0 %v4332
        %5611 = vmatmul.mubr.bf16.gmra.mrb[0].mxu0 %v4331
        %v5612 = vpop.f32.mrb[0].mxu0
        %v5613 = vadd.f32 %v5324, %v5612
        %v5614 = vpop.f32.mrb[0].mxu0
        %v5615 = vpop.f32.mrb[0].mxu0
        %v5616 = vadd.f32 %v5327, %v5615
        %v5617 = vpop.f32.mrb[0].mxu0
        %5618 = vmatprep.mubr.bf16.mxu0 %v4340
        %5619 = vmatmul.mubr.bf16.gmra.mrb[0].mxu0 %v4339
        %v5620 = vpop.f32.mrb[0].mxu0
        %v5621 = vadd.f32 %v5332, %v5620
        %v5622 = vpop.f32.mrb[0].mxu0
        %v5623 = vpop.f32.mrb[0].mxu0
        %v5624 = vadd.f32 %v5335, %v5623
        %v5625 = vpop.f32.mrb[0].mxu0
        %5626 = vmatprep.mubr.bf16.mxu0 %v4348
        %5627 = vmatmul.mubr.bf16.gmra.mrb[0].mxu0 %v4347
        %v5628 = vpop.f32.mrb[0].mxu0
        %v5629 = vadd.f32 %v5340, %v5628
        %v5630 = vpop.f32.mrb[0].mxu0
        %v5631 = vpop.f32.mrb[0].mxu0
        %v5632 = vadd.f32 %v5343, %v5631
        %v5633 = vpop.f32.mrb[0].mxu0
        %5634 = vdwg.mxu0
        %5635 = vmatprep.subr.bf16.mxu0 0
        %5636 = vmatpush1.bf16.msra.mxu0 %v4961
        %5637 = vmatprep.subr.bf16.mxu0 0
        %5638 = vmatpush1.bf16.msra.mxu0 %v4962
        %5639 = vmatprep.subr.bf16.mxu0 0
        %5640 = vmatpush1.bf16.msra.mxu0 %v4963
        %5641 = vmatprep.subr.bf16.mxu0 0
        %5642 = vmatpush1.bf16.msra.mxu0 %v4964
        %5643 = vmatprep.subr.bf16.mxu0 0
        %5644 = vmatpush1.bf16.msra.mxu0 %v4965
        %5645 = vmatprep.subr.bf16.mxu0 0
        %5646 = vmatpush1.bf16.msra.mxu0 %v4966
        %5647 = vmatprep.subr.bf16.mxu0 0
        %5648 = vmatpush1.bf16.msra.mxu0 %v4967
        %5649 = vmatprep.subr.bf16.mxu0 0
        %5650 = vmatpush1.bf16.msra.mxu0 %v4968
        %5651 = vmatprep.subr.bf16.mxu0 0
        %5652 = vmatpush1.bf16.msra.mxu0 %v4969
        %5653 = vmatprep.subr.bf16.mxu0 0
        %5654 = vmatpush1.bf16.msra.mxu0 %v4970
        %5655 = vmatprep.subr.bf16.mxu0 0
        %5656 = vmatpush1.bf16.msra.mxu0 %v4971
        %5657 = vmatprep.subr.bf16.mxu0 0
        %5658 = vmatpush1.bf16.msra.mxu0 %v4972
        %5659 = vmatprep.subr.bf16.mxu0 0
        %5660 = vmatpush1.bf16.msra.mxu0 %v4973
        %5661 = vmatprep.subr.bf16.mxu0 0
        %5662 = vmatpush1.bf16.msra.mxu0 %v4974
        %5663 = vmatprep.subr.bf16.mxu0 0
        %5664 = vmatpush1.bf16.msra.mxu0 %v4975
        %5665 = vmatprep.subr.bf16.mxu0 0
        %5666 = vmatpush1.bf16.msra.mxu0 %v4976
        %5667 = vmatprep.mubr.bf16.mxu0 %v4102
        %5668 = vmatmul.mubr.bf16.gmra.mrb[0].mxu0 %v4101
        %v5669 = vpop.f32.mrb[0].mxu0
        %v5670 = vadd.f32 %v5381, %v5669
        %v5671 = vpop.f32.mrb[0].mxu0
        %v5672 = vpop.f32.mrb[0].mxu0
        %v5673 = vadd.f32 %v5384, %v5672
        %v5674 = vpop.f32.mrb[0].mxu0
        %5675 = vmatprep.mubr.bf16.mxu0 %v4110
        %5676 = vmatmul.mubr.bf16.gmra.mrb[0].mxu0 %v4109
        %v5677 = vpop.f32.mrb[0].mxu0
        %v5678 = vadd.f32 %v5389, %v5677
        %v5679 = vpop.f32.mrb[0].mxu0
        %v5680 = vpop.f32.mrb[0].mxu0
        %v5681 = vadd.f32 %v5392, %v5680
        %v5682 = vpop.f32.mrb[0].mxu0
        %5683 = vmatprep.mubr.bf16.mxu0 %v4118
        %5684 = vmatmul.mubr.bf16.gmra.mrb[0].mxu0 %v4117
        %v5685 = vpop.f32.mrb[0].mxu0
        %v5686 = vadd.f32 %v5397, %v5685
        %v5687 = vpop.f32.mrb[0].mxu0
        %v5688 = vpop.f32.mrb[0].mxu0
        %v5689 = vadd.f32 %v5400, %v5688
        %v5690 = vpop.f32.mrb[0].mxu0
        %5691 = vmatprep.mubr.bf16.mxu0 %v4126
        %5692 = vmatmul.mubr.bf16.gmra.mrb[0].mxu0 %v4125
        %v5693 = vpop.f32.mrb[0].mxu0
        %v5694 = vadd.f32 %v5405, %v5693
        %v5695 = vpop.f32.mrb[0].mxu0
        %v5696 = vpop.f32.mrb[0].mxu0
        %v5697 = vadd.f32 %v5408, %v5696
        %v5698 = vpop.f32.mrb[0].mxu0
        %5699 = vmatprep.mubr.bf16.mxu0 %v4134
        %5700 = vmatmul.mubr.bf16.gmra.mrb[0].mxu0 %v4133
        %v5701 = vpop.f32.mrb[0].mxu0
        %v5702 = vadd.f32 %v5413, %v5701
        %v5703 = vpop.f32.mrb[0].mxu0
        %v5704 = vpop.f32.mrb[0].mxu0
        %v5705 = vadd.f32 %v5416, %v5704
        %v5706 = vpop.f32.mrb[0].mxu0
        %5707 = vmatprep.mubr.bf16.mxu0 %v4142
        %5708 = vmatmul.mubr.bf16.gmra.mrb[0].mxu0 %v4141
        %v5709 = vpop.f32.mrb[0].mxu0
        %v5710 = vadd.f32 %v5421, %v5709
        %v5711 = vpop.f32.mrb[0].mxu0
        %v5712 = vpop.f32.mrb[0].mxu0
        %v5713 = vadd.f32 %v5424, %v5712
        %v5714 = vpop.f32.mrb[0].mxu0
        %5715 = vmatprep.mubr.bf16.mxu0 %v4150
        %5716 = vmatmul.mubr.bf16.gmra.mrb[0].mxu0 %v4149
        %v5717 = vpop.f32.mrb[0].mxu0
        %v5718 = vadd.f32 %v5429, %v5717
        %v5719 = vpop.f32.mrb[0].mxu0
        %v5720 = vpop.f32.mrb[0].mxu0
        %v5721 = vadd.f32 %v5432, %v5720
        %v5722 = vpop.f32.mrb[0].mxu0
        %5723 = vmatprep.mubr.bf16.mxu0 %v4158
        %5724 = vmatmul.mubr.bf16.gmra.mrb[0].mxu0 %v4157
        %v5725 = vpop.f32.mrb[0].mxu0
        %v5726 = vadd.f32 %v5437, %v5725
        %v5727 = vpop.f32.mrb[0].mxu0
        %v5728 = vpop.f32.mrb[0].mxu0
        %v5729 = vadd.f32 %v5440, %v5728
        %v5730 = vpop.f32.mrb[0].mxu0
        %5731 = vmatprep.mubr.bf16.mxu0 %v4166
        %5732 = vmatmul.mubr.bf16.gmra.mrb[0].mxu0 %v4165
        %v5733 = vpop.f32.mrb[0].mxu0
        %v5734 = vadd.f32 %v5445, %v5733
        %v5735 = vpop.f32.mrb[0].mxu0
        %v5736 = vpop.f32.mrb[0].mxu0
        %v5737 = vadd.f32 %v5448, %v5736
        %v5738 = vpop.f32.mrb[0].mxu0
        %5739 = vmatprep.mubr.bf16.mxu0 %v4174
        %5740 = vmatmul.mubr.bf16.gmra.mrb[0].mxu0 %v4173
        %v5741 = vpop.f32.mrb[0].mxu0
        %v5742 = vadd.f32 %v5453, %v5741
        %v5743 = vpop.f32.mrb[0].mxu0
        %v5744 = vpop.f32.mrb[0].mxu0
        %v5745 = vadd.f32 %v5456, %v5744
        %v5746 = vpop.f32.mrb[0].mxu0
        %5747 = vmatprep.mubr.bf16.mxu0 %v4182
        %5748 = vmatmul.mubr.bf16.gmra.mrb[0].mxu0 %v4181
        %v5749 = vpop.f32.mrb[0].mxu0
        %v5750 = vadd.f32 %v5461, %v5749
        %v5751 = vpop.f32.mrb[0].mxu0
        %v5752 = vpop.f32.mrb[0].mxu0
        %v5753 = vadd.f32 %v5464, %v5752
        %v5754 = vpop.f32.mrb[0].mxu0
        %5755 = vmatprep.mubr.bf16.mxu0 %v4190
        %5756 = vmatmul.mubr.bf16.gmra.mrb[0].mxu0 %v4189
        %v5757 = vpop.f32.mrb[0].mxu0
        %v5758 = vadd.f32 %v5469, %v5757
        %v5759 = vpop.f32.mrb[0].mxu0
        %v5760 = vpop.f32.mrb[0].mxu0
        %v5761 = vadd.f32 %v5472, %v5760
        %v5762 = vpop.f32.mrb[0].mxu0
        %5763 = vmatprep.mubr.bf16.mxu0 %v4198
        %5764 = vmatmul.mubr.bf16.gmra.mrb[0].mxu0 %v4197
        %v5765 = vpop.f32.mrb[0].mxu0
        %v5766 = vadd.f32 %v5477, %v5765
        %v5767 = vpop.f32.mrb[0].mxu0
        %v5768 = vpop.f32.mrb[0].mxu0
        %v5769 = vadd.f32 %v5480, %v5768
        %v5770 = vpop.f32.mrb[0].mxu0
        %5771 = vmatprep.mubr.bf16.mxu0 %v4206
        %5772 = vmatmul.mubr.bf16.gmra.mrb[0].mxu0 %v4205
        %v5773 = vpop.f32.mrb[0].mxu0
        %v5774 = vadd.f32 %v5485, %v5773
        %v5775 = vpop.f32.mrb[0].mxu0
        %v5776 = vpop.f32.mrb[0].mxu0
        %v5777 = vadd.f32 %v5488, %v5776
        %v5778 = vpop.f32.mrb[0].mxu0
        %5779 = vmatprep.mubr.bf16.mxu0 %v4214
        %5780 = vmatmul.mubr.bf16.gmra.mrb[0].mxu0 %v4213
        %v5781 = vpop.f32.mrb[0].mxu0
        %v5782 = vadd.f32 %v5493, %v5781
        %v5783 = vpop.f32.mrb[0].mxu0
        %v5784 = vpop.f32.mrb[0].mxu0
        %v5785 = vadd.f32 %v5496, %v5784
        %v5786 = vpop.f32.mrb[0].mxu0
        %5787 = vmatprep.mubr.bf16.mxu0 %v4222
        %5788 = vmatmul.mubr.bf16.gmra.mrb[0].mxu0 %v4221
        %v5789 = vpop.f32.mrb[0].mxu0
        %v5790 = vadd.f32 %v5501, %v5789
        %v5791 = vpop.f32.mrb[0].mxu0
        %v5792 = vpop.f32.mrb[0].mxu0
        %v5793 = vadd.f32 %v5504, %v5792
        %v5794 = vpop.f32.mrb[0].mxu0
        %5795 = vmatprep.mubr.bf16.mxu0 %v4230
        %5796 = vmatmul.mubr.bf16.gmra.mrb[0].mxu0 %v4229
        %v5797 = vpop.f32.mrb[0].mxu0
        %v5798 = vadd.f32 %v5509, %v5797
        %v5799 = vpop.f32.mrb[0].mxu0
        %v5800 = vpop.f32.mrb[0].mxu0
        %v5801 = vadd.f32 %v5512, %v5800
        %v5802 = vpop.f32.mrb[0].mxu0
        %5803 = vmatprep.mubr.bf16.mxu0 %v4238
        %5804 = vmatmul.mubr.bf16.gmra.mrb[0].mxu0 %v4237
        %v5805 = vpop.f32.mrb[0].mxu0
        %v5806 = vadd.f32 %v5517, %v5805
        %v5807 = vpop.f32.mrb[0].mxu0
        %v5808 = vpop.f32.mrb[0].mxu0
        %v5809 = vadd.f32 %v5520, %v5808
        %v5810 = vpop.f32.mrb[0].mxu0
        %5811 = vmatprep.mubr.bf16.mxu0 %v4246
        %5812 = vmatmul.mubr.bf16.gmra.mrb[0].mxu0 %v4245
        %v5813 = vpop.f32.mrb[0].mxu0
        %v5814 = vadd.f32 %v5525, %v5813
        %v5815 = vpop.f32.mrb[0].mxu0
        %v5816 = vpop.f32.mrb[0].mxu0
        %v5817 = vadd.f32 %v5528, %v5816
        %v5818 = vpop.f32.mrb[0].mxu0
        %5819 = vmatprep.mubr.bf16.mxu0 %v4254
        %5820 = vmatmul.mubr.bf16.gmra.mrb[0].mxu0 %v4253
        %v5821 = vpop.f32.mrb[0].mxu0
        %v5822 = vadd.f32 %v5533, %v5821
        %v5823 = vpop.f32.mrb[0].mxu0
        %v5824 = vpop.f32.mrb[0].mxu0
        %v5825 = vadd.f32 %v5536, %v5824
        %v5826 = vpop.f32.mrb[0].mxu0
        %5827 = vmatprep.mubr.bf16.mxu0 %v4262
        %5828 = vmatmul.mubr.bf16.gmra.mrb[0].mxu0 %v4261
        %v5829 = vpop.f32.mrb[0].mxu0
        %v5830 = vadd.f32 %v5541, %v5829
        %v5831 = vpop.f32.mrb[0].mxu0
        %v5832 = vpop.f32.mrb[0].mxu0
        %v5833 = vadd.f32 %v5544, %v5832
        %v5834 = vpop.f32.mrb[0].mxu0
        %5835 = vmatprep.mubr.bf16.mxu0 %v4270
        %5836 = vmatmul.mubr.bf16.gmra.mrb[0].mxu0 %v4269
        %v5837 = vpop.f32.mrb[0].mxu0
        %v5838 = vadd.f32 %v5549, %v5837
        %v5839 = vpop.f32.mrb[0].mxu0
        %v5840 = vpop.f32.mrb[0].mxu0
        %v5841 = vadd.f32 %v5552, %v5840
        %v5842 = vpop.f32.mrb[0].mxu0
        %5843 = vmatprep.mubr.bf16.mxu0 %v4278
        %5844 = vmatmul.mubr.bf16.gmra.mrb[0].mxu0 %v4277
        %v5845 = vpop.f32.mrb[0].mxu0
        %v5846 = vadd.f32 %v5557, %v5845
        %v5847 = vpop.f32.mrb[0].mxu0
        %v5848 = vpop.f32.mrb[0].mxu0
        %v5849 = vadd.f32 %v5560, %v5848
        %v5850 = vpop.f32.mrb[0].mxu0
        %5851 = vmatprep.mubr.bf16.mxu0 %v4286
        %5852 = vmatmul.mubr.bf16.gmra.mrb[0].mxu0 %v4285
        %v5853 = vpop.f32.mrb[0].mxu0
        %v5854 = vadd.f32 %v5565, %v5853
        %v5855 = vpop.f32.mrb[0].mxu0
        %v5856 = vpop.f32.mrb[0].mxu0
        %v5857 = vadd.f32 %v5568, %v5856
        %v5858 = vpop.f32.mrb[0].mxu0
        %5859 = vmatprep.mubr.bf16.mxu0 %v4294
        %5860 = vmatmul.mubr.bf16.gmra.mrb[0].mxu0 %v4293
        %v5861 = vpop.f32.mrb[0].mxu0
        %v5862 = vadd.f32 %v5573, %v5861
        %v5863 = vpop.f32.mrb[0].mxu0
        %v5864 = vpop.f32.mrb[0].mxu0
        %v5865 = vadd.f32 %v5576, %v5864
        %v5866 = vpop.f32.mrb[0].mxu0
        %5867 = vmatprep.mubr.bf16.mxu0 %v4302
        %5868 = vmatmul.mubr.bf16.gmra.mrb[0].mxu0 %v4301
        %v5869 = vpop.f32.mrb[0].mxu0
        %v5870 = vadd.f32 %v5581, %v5869
        %v5871 = vpop.f32.mrb[0].mxu0
        %v5872 = vpop.f32.mrb[0].mxu0
        %v5873 = vadd.f32 %v5584, %v5872
        %v5874 = vpop.f32.mrb[0].mxu0
        %5875 = vmatprep.mubr.bf16.mxu0 %v4310
        %5876 = vmatmul.mubr.bf16.gmra.mrb[0].mxu0 %v4309
        %v5877 = vpop.f32.mrb[0].mxu0
        %v5878 = vadd.f32 %v5589, %v5877
        %v5879 = vpop.f32.mrb[0].mxu0
        %v5880 = vpop.f32.mrb[0].mxu0
        %v5881 = vadd.f32 %v5592, %v5880
        %v5882 = vpop.f32.mrb[0].mxu0
        %5883 = vmatprep.mubr.bf16.mxu0 %v4318
        %5884 = vmatmul.mubr.bf16.gmra.mrb[0].mxu0 %v4317
        %v5885 = vpop.f32.mrb[0].mxu0
        %v5886 = vadd.f32 %v5597, %v5885
        %v5887 = vpop.f32.mrb[0].mxu0
        %v5888 = vpop.f32.mrb[0].mxu0
        %v5889 = vadd.f32 %v5600, %v5888
        %v5890 = vpop.f32.mrb[0].mxu0
        %5891 = vmatprep.mubr.bf16.mxu0 %v4326
        %5892 = vmatmul.mubr.bf16.gmra.mrb[0].mxu0 %v4325
        %v5893 = vpop.f32.mrb[0].mxu0
        %v5894 = vadd.f32 %v5605, %v5893
        %v5895 = vpop.f32.mrb[0].mxu0
        %v5896 = vpop.f32.mrb[0].mxu0
        %v5897 = vadd.f32 %v5608, %v5896
        %v5898 = vpop.f32.mrb[0].mxu0
        %5899 = vmatprep.mubr.bf16.mxu0 %v4334
        %5900 = vmatmul.mubr.bf16.gmra.mrb[0].mxu0 %v4333
        %v5901 = vpop.f32.mrb[0].mxu0
        %v5902 = vadd.f32 %v5613, %v5901
        %v5903 = vpop.f32.mrb[0].mxu0
        %v5904 = vpop.f32.mrb[0].mxu0
        %v5905 = vadd.f32 %v5616, %v5904
        %v5906 = vpop.f32.mrb[0].mxu0
        %5907 = vmatprep.mubr.bf16.mxu0 %v4342
        %5908 = vmatmul.mubr.bf16.gmra.mrb[0].mxu0 %v4341
        %v5909 = vpop.f32.mrb[0].mxu0
        %v5910 = vadd.f32 %v5621, %v5909
        %v5911 = vpop.f32.mrb[0].mxu0
        %v5912 = vpop.f32.mrb[0].mxu0
        %v5913 = vadd.f32 %v5624, %v5912
        %v5914 = vpop.f32.mrb[0].mxu0
        %5915 = vmatprep.mubr.bf16.mxu0 %v4350
        %5916 = vmatmul.mubr.bf16.gmra.mrb[0].mxu0 %v4349
        %v5917 = vpop.f32.mrb[0].mxu0
        %v5918 = vadd.f32 %v5629, %v5917
        %v5919 = vpop.f32.mrb[0].mxu0
        %v5920 = vpop.f32.mrb[0].mxu0
        %v5921 = vadd.f32 %v5632, %v5920
        %v5922 = vpop.f32.mrb[0].mxu0
        %5923 = vdwg.mxu0
        %5924 = vmatprep.subr.bf16.mxu0 0
        %5925 = vmatpush1.bf16.msra.mxu0 %v4977
        %5926 = vmatprep.subr.bf16.mxu0 0
        %5927 = vmatpush1.bf16.msra.mxu0 %v4978
        %5928 = vmatprep.subr.bf16.mxu0 0
        %5929 = vmatpush1.bf16.msra.mxu0 %v4979
        %5930 = vmatprep.subr.bf16.mxu0 0
        %5931 = vmatpush1.bf16.msra.mxu0 %v4980
        %5932 = vmatprep.subr.bf16.mxu0 0
        %5933 = vmatpush1.bf16.msra.mxu0 %v4981
        %5934 = vmatprep.subr.bf16.mxu0 0
        %5935 = vmatpush1.bf16.msra.mxu0 %v4982
        %5936 = vmatprep.subr.bf16.mxu0 0
        %5937 = vmatpush1.bf16.msra.mxu0 %v4983
        %5938 = vmatprep.subr.bf16.mxu0 0
        %5939 = vmatpush1.bf16.msra.mxu0 %v4984
        %5940 = vmatprep.subr.bf16.mxu0 0
        %5941 = vmatpush1.bf16.msra.mxu0 %v4985
        %5942 = vmatprep.subr.bf16.mxu0 0
        %5943 = vmatpush1.bf16.msra.mxu0 %v4986
        %5944 = vmatprep.subr.bf16.mxu0 0
        %5945 = vmatpush1.bf16.msra.mxu0 %v4987
        %5946 = vmatprep.subr.bf16.mxu0 0
        %5947 = vmatpush1.bf16.msra.mxu0 %v4988
        %5948 = vmatprep.subr.bf16.mxu0 0
        %5949 = vmatpush1.bf16.msra.mxu0 %v4989
        %5950 = vmatprep.subr.bf16.mxu0 0
        %5951 = vmatpush1.bf16.msra.mxu0 %v4990
        %5952 = vmatprep.subr.bf16.mxu0 0
        %5953 = vmatpush1.bf16.msra.mxu0 %v4991
        %5954 = vmatprep.subr.bf16.mxu0 0
        %5955 = vmatpush1.bf16.msra.mxu0 %v4992
        %5956 = vmatprep.mubr.bf16.mxu0 %v4104
        %5957 = vmatmul.mubr.bf16.gmra.mrb[0].mxu0 %v4103
        %v5958 = vpop.f32.mrb[0].mxu0
        %v5959 = vadd.f32 %v5670, %v5958
        %v5960 = vpop.f32.mrb[0].mxu0
        %v5961 = vpop.f32.mrb[0].mxu0
        %v5962 = vadd.f32 %v5673, %v5961
        %v5963 = vpop.f32.mrb[0].mxu0
        %5964 = vmatprep.mubr.bf16.mxu0 %v4112
        %5965 = vmatmul.mubr.bf16.gmra.mrb[0].mxu0 %v4111
        %v5966 = vpop.f32.mrb[0].mxu0
        %v5967 = vadd.f32 %v5678, %v5966
        %v5968 = vpop.f32.mrb[0].mxu0
        %v5969 = vpop.f32.mrb[0].mxu0
        %v5970 = vadd.f32 %v5681, %v5969
        %v5971 = vpop.f32.mrb[0].mxu0
        %5972 = vmatprep.mubr.bf16.mxu0 %v4120
        %5973 = vmatmul.mubr.bf16.gmra.mrb[0].mxu0 %v4119
        %v5974 = vpop.f32.mrb[0].mxu0
        %v5975 = vadd.f32 %v5686, %v5974
        %v5976 = vpop.f32.mrb[0].mxu0
        %v5977 = vpop.f32.mrb[0].mxu0
        %v5978 = vadd.f32 %v5689, %v5977
        %v5979 = vpop.f32.mrb[0].mxu0
        %5980 = vmatprep.mubr.bf16.mxu0 %v4128
        %5981 = vmatmul.mubr.bf16.gmra.mrb[0].mxu0 %v4127
        %v5982 = vpop.f32.mrb[0].mxu0
        %v5983 = vadd.f32 %v5694, %v5982
        %v5984 = vpop.f32.mrb[0].mxu0
        %v5985 = vpop.f32.mrb[0].mxu0
        %v5986 = vadd.f32 %v5697, %v5985
        %v5987 = vpop.f32.mrb[0].mxu0
        %5988 = vmatprep.mubr.bf16.mxu0 %v4136
        %5989 = vmatmul.mubr.bf16.gmra.mrb[0].mxu0 %v4135
        %v5990 = vpop.f32.mrb[0].mxu0
        %v5991 = vadd.f32 %v5702, %v5990
        %v5992 = vpop.f32.mrb[0].mxu0
        %v5993 = vpop.f32.mrb[0].mxu0
        %v5994 = vadd.f32 %v5705, %v5993
        %v5995 = vpop.f32.mrb[0].mxu0
        %5996 = vmatprep.mubr.bf16.mxu0 %v4144
        %5997 = vmatmul.mubr.bf16.gmra.mrb[0].mxu0 %v4143
        %v5998 = vpop.f32.mrb[0].mxu0
        %v5999 = vadd.f32 %v5710, %v5998
        %v6000 = vpop.f32.mrb[0].mxu0
        %v6001 = vpop.f32.mrb[0].mxu0
        %v6002 = vadd.f32 %v5713, %v6001
        %v6003 = vpop.f32.mrb[0].mxu0
        %6004 = vmatprep.mubr.bf16.mxu0 %v4152
        %6005 = vmatmul.mubr.bf16.gmra.mrb[0].mxu0 %v4151
        %v6006 = vpop.f32.mrb[0].mxu0
        %v6007 = vadd.f32 %v5718, %v6006
        %v6008 = vpop.f32.mrb[0].mxu0
        %v6009 = vpop.f32.mrb[0].mxu0
        %v6010 = vadd.f32 %v5721, %v6009
        %v6011 = vpop.f32.mrb[0].mxu0
        %6012 = vmatprep.mubr.bf16.mxu0 %v4160
        %6013 = vmatmul.mubr.bf16.gmra.mrb[0].mxu0 %v4159
        %v6014 = vpop.f32.mrb[0].mxu0
        %v6015 = vadd.f32 %v5726, %v6014
        %v6016 = vpop.f32.mrb[0].mxu0
        %v6017 = vpop.f32.mrb[0].mxu0
        %v6018 = vadd.f32 %v5729, %v6017
        %v6019 = vpop.f32.mrb[0].mxu0
        %6020 = vmatprep.mubr.bf16.mxu0 %v4168
        %6021 = vmatmul.mubr.bf16.gmra.mrb[0].mxu0 %v4167
        %v6022 = vpop.f32.mrb[0].mxu0
        %v6023 = vadd.f32 %v5734, %v6022
        %v6024 = vpop.f32.mrb[0].mxu0
        %v6025 = vpop.f32.mrb[0].mxu0
        %v6026 = vadd.f32 %v5737, %v6025
        %v6027 = vpop.f32.mrb[0].mxu0
        %6028 = vmatprep.mubr.bf16.mxu0 %v4176
        %6029 = vmatmul.mubr.bf16.gmra.mrb[0].mxu0 %v4175
        %v6030 = vpop.f32.mrb[0].mxu0
        %v6031 = vadd.f32 %v5742, %v6030
        %v6032 = vpop.f32.mrb[0].mxu0
        %v6033 = vpop.f32.mrb[0].mxu0
        %v6034 = vadd.f32 %v5745, %v6033
        %v6035 = vpop.f32.mrb[0].mxu0
        %6036 = vmatprep.mubr.bf16.mxu0 %v4184
        %6037 = vmatmul.mubr.bf16.gmra.mrb[0].mxu0 %v4183
        %v6038 = vpop.f32.mrb[0].mxu0
        %v6039 = vadd.f32 %v5750, %v6038
        %v6040 = vpop.f32.mrb[0].mxu0
        %v6041 = vpop.f32.mrb[0].mxu0
        %v6042 = vadd.f32 %v5753, %v6041
        %v6043 = vpop.f32.mrb[0].mxu0
        %6044 = vmatprep.mubr.bf16.mxu0 %v4192
        %6045 = vmatmul.mubr.bf16.gmra.mrb[0].mxu0 %v4191
        %v6046 = vpop.f32.mrb[0].mxu0
        %v6047 = vadd.f32 %v5758, %v6046
        %v6048 = vpop.f32.mrb[0].mxu0
        %v6049 = vpop.f32.mrb[0].mxu0
        %v6050 = vadd.f32 %v5761, %v6049
        %v6051 = vpop.f32.mrb[0].mxu0
        %6052 = vmatprep.mubr.bf16.mxu0 %v4200
        %6053 = vmatmul.mubr.bf16.gmra.mrb[0].mxu0 %v4199
        %v6054 = vpop.f32.mrb[0].mxu0
        %v6055 = vadd.f32 %v5766, %v6054
        %v6056 = vpop.f32.mrb[0].mxu0
        %v6057 = vpop.f32.mrb[0].mxu0
        %v6058 = vadd.f32 %v5769, %v6057
        %v6059 = vpop.f32.mrb[0].mxu0
        %6060 = vmatprep.mubr.bf16.mxu0 %v4208
        %6061 = vmatmul.mubr.bf16.gmra.mrb[0].mxu0 %v4207
        %v6062 = vpop.f32.mrb[0].mxu0
        %v6063 = vadd.f32 %v5774, %v6062
        %v6064 = vpop.f32.mrb[0].mxu0
        %v6065 = vpop.f32.mrb[0].mxu0
        %v6066 = vadd.f32 %v5777, %v6065
        %v6067 = vpop.f32.mrb[0].mxu0
        %6068 = vmatprep.mubr.bf16.mxu0 %v4216
        %6069 = vmatmul.mubr.bf16.gmra.mrb[0].mxu0 %v4215
        %v6070 = vpop.f32.mrb[0].mxu0
        %v6071 = vadd.f32 %v5782, %v6070
        %v6072 = vpop.f32.mrb[0].mxu0
        %v6073 = vpop.f32.mrb[0].mxu0
        %v6074 = vadd.f32 %v5785, %v6073
        %v6075 = vpop.f32.mrb[0].mxu0
        %6076 = vmatprep.mubr.bf16.mxu0 %v4224
        %6077 = vmatmul.mubr.bf16.gmra.mrb[0].mxu0 %v4223
        %v6078 = vpop.f32.mrb[0].mxu0
        %v6079 = vadd.f32 %v5790, %v6078
        %v6080 = vpop.f32.mrb[0].mxu0
        %v6081 = vpop.f32.mrb[0].mxu0
        %v6082 = vadd.f32 %v5793, %v6081
        %v6083 = vpop.f32.mrb[0].mxu0
        %6084 = vmatprep.mubr.bf16.mxu0 %v4232
        %6085 = vmatmul.mubr.bf16.gmra.mrb[0].mxu0 %v4231
        %v6086 = vpop.f32.mrb[0].mxu0
        %v6087 = vadd.f32 %v5798, %v6086
        %v6088 = vpop.f32.mrb[0].mxu0
        %v6089 = vpop.f32.mrb[0].mxu0
        %v6090 = vadd.f32 %v5801, %v6089
        %v6091 = vpop.f32.mrb[0].mxu0
        %6092 = vmatprep.mubr.bf16.mxu0 %v4240
        %6093 = vmatmul.mubr.bf16.gmra.mrb[0].mxu0 %v4239
        %v6094 = vpop.f32.mrb[0].mxu0
        %v6095 = vadd.f32 %v5806, %v6094
        %v6096 = vpop.f32.mrb[0].mxu0
        %v6097 = vpop.f32.mrb[0].mxu0
        %v6098 = vadd.f32 %v5809, %v6097
        %v6099 = vpop.f32.mrb[0].mxu0
        %6100 = vmatprep.mubr.bf16.mxu0 %v4248
        %6101 = vmatmul.mubr.bf16.gmra.mrb[0].mxu0 %v4247
        %v6102 = vpop.f32.mrb[0].mxu0
        %v6103 = vadd.f32 %v5814, %v6102
        %v6104 = vpop.f32.mrb[0].mxu0
        %v6105 = vpop.f32.mrb[0].mxu0
        %v6106 = vadd.f32 %v5817, %v6105
        %v6107 = vpop.f32.mrb[0].mxu0
        %6108 = vmatprep.mubr.bf16.mxu0 %v4256
        %6109 = vmatmul.mubr.bf16.gmra.mrb[0].mxu0 %v4255
        %v6110 = vpop.f32.mrb[0].mxu0
        %v6111 = vadd.f32 %v5822, %v6110
        %v6112 = vpop.f32.mrb[0].mxu0
        %v6113 = vpop.f32.mrb[0].mxu0
        %v6114 = vadd.f32 %v5825, %v6113
        %v6115 = vpop.f32.mrb[0].mxu0
        %6116 = vmatprep.mubr.bf16.mxu0 %v4264
        %6117 = vmatmul.mubr.bf16.gmra.mrb[0].mxu0 %v4263
        %v6118 = vpop.f32.mrb[0].mxu0
        %v6119 = vadd.f32 %v5830, %v6118
        %v6120 = vpop.f32.mrb[0].mxu0
        %v6121 = vpop.f32.mrb[0].mxu0
        %v6122 = vadd.f32 %v5833, %v6121
        %v6123 = vpop.f32.mrb[0].mxu0
        %6124 = vmatprep.mubr.bf16.mxu0 %v4272
        %6125 = vmatmul.mubr.bf16.gmra.mrb[0].mxu0 %v4271
        %v6126 = vpop.f32.mrb[0].mxu0
        %v6127 = vadd.f32 %v5838, %v6126
        %v6128 = vpop.f32.mrb[0].mxu0
        %v6129 = vpop.f32.mrb[0].mxu0
        %v6130 = vadd.f32 %v5841, %v6129
        %v6131 = vpop.f32.mrb[0].mxu0
        %6132 = vmatprep.mubr.bf16.mxu0 %v4280
        %6133 = vmatmul.mubr.bf16.gmra.mrb[0].mxu0 %v4279
        %v6134 = vpop.f32.mrb[0].mxu0
        %v6135 = vadd.f32 %v5846, %v6134
        %v6136 = vpop.f32.mrb[0].mxu0
        %v6137 = vpop.f32.mrb[0].mxu0
        %v6138 = vadd.f32 %v5849, %v6137
        %v6139 = vpop.f32.mrb[0].mxu0
        %6140 = vmatprep.mubr.bf16.mxu0 %v4288
        %6141 = vmatmul.mubr.bf16.gmra.mrb[0].mxu0 %v4287
        %v6142 = vpop.f32.mrb[0].mxu0
        %v6143 = vadd.f32 %v5854, %v6142
        %v6144 = vpop.f32.mrb[0].mxu0
        %v6145 = vpop.f32.mrb[0].mxu0
        %v6146 = vadd.f32 %v5857, %v6145
        %v6147 = vpop.f32.mrb[0].mxu0
        %6148 = vmatprep.mubr.bf16.mxu0 %v4296
        %6149 = vmatmul.mubr.bf16.gmra.mrb[0].mxu0 %v4295
        %v6150 = vpop.f32.mrb[0].mxu0
        %v6151 = vadd.f32 %v5862, %v6150
        %v6152 = vpop.f32.mrb[0].mxu0
        %v6153 = vpop.f32.mrb[0].mxu0
        %v6154 = vadd.f32 %v5865, %v6153
        %v6155 = vpop.f32.mrb[0].mxu0
        %6156 = vmatprep.mubr.bf16.mxu0 %v4304
        %6157 = vmatmul.mubr.bf16.gmra.mrb[0].mxu0 %v4303
        %v6158 = vpop.f32.mrb[0].mxu0
        %v6159 = vadd.f32 %v5870, %v6158
        %v6160 = vpop.f32.mrb[0].mxu0
        %v6161 = vpop.f32.mrb[0].mxu0
        %v6162 = vadd.f32 %v5873, %v6161
        %v6163 = vpop.f32.mrb[0].mxu0
        %6164 = vmatprep.mubr.bf16.mxu0 %v4312
        %6165 = vmatmul.mubr.bf16.gmra.mrb[0].mxu0 %v4311
        %v6166 = vpop.f32.mrb[0].mxu0
        %v6167 = vadd.f32 %v5878, %v6166
        %v6168 = vpop.f32.mrb[0].mxu0
        %v6169 = vpop.f32.mrb[0].mxu0
        %v6170 = vadd.f32 %v5881, %v6169
        %v6171 = vpop.f32.mrb[0].mxu0
        %6172 = vmatprep.mubr.bf16.mxu0 %v4320
        %6173 = vmatmul.mubr.bf16.gmra.mrb[0].mxu0 %v4319
        %v6174 = vpop.f32.mrb[0].mxu0
        %v6175 = vadd.f32 %v5886, %v6174
        %v6176 = vpop.f32.mrb[0].mxu0
        %v6177 = vpop.f32.mrb[0].mxu0
        %v6178 = vadd.f32 %v5889, %v6177
        %v6179 = vpop.f32.mrb[0].mxu0
        %6180 = vmatprep.mubr.bf16.mxu0 %v4328
        %6181 = vmatmul.mubr.bf16.gmra.mrb[0].mxu0 %v4327
        %v6182 = vpop.f32.mrb[0].mxu0
        %v6183 = vadd.f32 %v5894, %v6182
        %v6184 = vpop.f32.mrb[0].mxu0
        %v6185 = vpop.f32.mrb[0].mxu0
        %v6186 = vadd.f32 %v5897, %v6185
        %v6187 = vpop.f32.mrb[0].mxu0
        %6188 = vmatprep.mubr.bf16.mxu0 %v4336
        %6189 = vmatmul.mubr.bf16.gmra.mrb[0].mxu0 %v4335
        %v6190 = vpop.f32.mrb[0].mxu0
        %v6191 = vadd.f32 %v5902, %v6190
        %v6192 = vpop.f32.mrb[0].mxu0
        %v6193 = vpop.f32.mrb[0].mxu0
        %v6194 = vadd.f32 %v5905, %v6193
        %v6195 = vpop.f32.mrb[0].mxu0
        %6196 = vmatprep.mubr.bf16.mxu0 %v4344
        %6197 = vmatmul.mubr.bf16.gmra.mrb[0].mxu0 %v4343
        %v6198 = vpop.f32.mrb[0].mxu0
        %v6199 = vadd.f32 %v5910, %v6198
        %v6200 = vpop.f32.mrb[0].mxu0
        %v6201 = vpop.f32.mrb[0].mxu0
        %v6202 = vadd.f32 %v5913, %v6201
        %v6203 = vpop.f32.mrb[0].mxu0
        %6204 = vmatprep.mubr.bf16.mxu0 %v4352
        %6205 = vmatmul.mubr.bf16.gmra.mrb[0].mxu0 %v4351
        %v6206 = vpop.f32.mrb[0].mxu0
        %v6207 = vadd.f32 %v5918, %v6206
        %v6208 = vpop.f32.mrb[0].mxu0
        %v6209 = vpop.f32.mrb[0].mxu0
        %v6210 = vadd.f32 %v5921, %v6209
        %v6211 = vpop.f32.mrb[0].mxu0
        %6212 = vdwg.mxu0
        %v6341 = vunpack.c.l.b16 %v4417
        %v6342 = vunpack.c.l.b16 %v4418
        %v6343 = vunpack.c.l.b16 %v4419
        %v6344 = vunpack.c.l.b16 %v4420
        %v6345 = vunpack.c.l.b16 %v4421
        %v6346 = vunpack.c.l.b16 %v4422
        %v6347 = vunpack.c.l.b16 %v4423
        %v6348 = vunpack.c.l.b16 %v4424
        %v6349 = vunpack.c.l.b16 %v4425
        %v6350 = vunpack.c.l.b16 %v4426
        %v6351 = vunpack.c.l.b16 %v4427
        %v6352 = vunpack.c.l.b16 %v4428
        %v6353 = vunpack.c.l.b16 %v4429
        %v6354 = vunpack.c.l.b16 %v4430
        %v6355 = vunpack.c.l.b16 %v4431
        %v6356 = vunpack.c.l.b16 %v4432
        %v6357 = vunpack.c.l.b16 %v4433
        %v6358 = vunpack.c.l.b16 %v4434
        %v6359 = vunpack.c.l.b16 %v4435
        %v6360 = vunpack.c.l.b16 %v4436
        %v6361 = vunpack.c.l.b16 %v4437
        %v6362 = vunpack.c.l.b16 %v4438
        %v6363 = vunpack.c.l.b16 %v4439
        %v6364 = vunpack.c.l.b16 %v4440
        %v6365 = vunpack.c.l.b16 %v4441
        %v6366 = vunpack.c.l.b16 %v4442
        %v6367 = vunpack.c.l.b16 %v4443
        %v6368 = vunpack.c.l.b16 %v4444
        %v6369 = vunpack.c.l.b16 %v4445
        %v6370 = vunpack.c.l.b16 %v4446
        %v6371 = vunpack.c.l.b16 %v4447
        %v6372 = vunpack.c.l.b16 %v4448
        %v6373 = vunpack.c.l.b16 %v4449
        %v6374 = vunpack.c.l.b16 %v4450
        %v6375 = vunpack.c.l.b16 %v4451
        %v6376 = vunpack.c.l.b16 %v4452
        %v6377 = vunpack.c.l.b16 %v4453
        %v6378 = vunpack.c.l.b16 %v4454
        %v6379 = vunpack.c.l.b16 %v4455
        %v6380 = vunpack.c.l.b16 %v4456
        %v6381 = vunpack.c.l.b16 %v4457
        %v6382 = vunpack.c.l.b16 %v4458
        %v6383 = vunpack.c.l.b16 %v4459
        %v6384 = vunpack.c.l.b16 %v4460
        %v6385 = vunpack.c.l.b16 %v4461
        %v6386 = vunpack.c.l.b16 %v4462
        %v6387 = vunpack.c.l.b16 %v4463
        %v6388 = vunpack.c.l.b16 %v4464
        %v6389 = vunpack.c.l.b16 %v4465
        %v6390 = vunpack.c.l.b16 %v4466
        %v6391 = vunpack.c.l.b16 %v4467
        %v6392 = vunpack.c.l.b16 %v4468
        %v6393 = vunpack.c.l.b16 %v4469
        %v6394 = vunpack.c.l.b16 %v4470
        %v6395 = vunpack.c.l.b16 %v4471
        %v6396 = vunpack.c.l.b16 %v4472
        %v6397 = vunpack.c.l.b16 %v4473
        %v6398 = vunpack.c.l.b16 %v4474
        %v6399 = vunpack.c.l.b16 %v4475
        %v6400 = vunpack.c.l.b16 %v4476
        %v6401 = vunpack.c.l.b16 %v4477
        %v6402 = vunpack.c.l.b16 %v4478
        %v6403 = vunpack.c.l.b16 %v4479
        %v6404 = vunpack.c.l.b16 %v4480
        %v6405 = vunpack.c.l.b16 %v4481
        %v6406 = vunpack.c.l.b16 %v4482
        %v6407 = vunpack.c.l.b16 %v4483
        %v6408 = vunpack.c.l.b16 %v4484
        %v6409 = vunpack.c.l.b16 %v4485
        %v6410 = vunpack.c.l.b16 %v4486
        %v6411 = vunpack.c.l.b16 %v4487
        %v6412 = vunpack.c.l.b16 %v4488
        %v6413 = vunpack.c.l.b16 %v4489
        %v6414 = vunpack.c.l.b16 %v4490
        %v6415 = vunpack.c.l.b16 %v4491
        %v6416 = vunpack.c.l.b16 %v4492
        %v6417 = vunpack.c.l.b16 %v4493
        %v6418 = vunpack.c.l.b16 %v4494
        %v6419 = vunpack.c.l.b16 %v4495
        %v6420 = vunpack.c.l.b16 %v4496
        %v6421 = vunpack.c.l.b16 %v4497
        %v6422 = vunpack.c.l.b16 %v4498
        %v6423 = vunpack.c.l.b16 %v4499
        %v6424 = vunpack.c.l.b16 %v4500
        %v6425 = vunpack.c.l.b16 %v4501
        %v6426 = vunpack.c.l.b16 %v4502
        %v6427 = vunpack.c.l.b16 %v4503
        %v6428 = vunpack.c.l.b16 %v4504
        %v6429 = vunpack.c.l.b16 %v4505
        %v6430 = vunpack.c.l.b16 %v4506
        %v6431 = vunpack.c.l.b16 %v4507
        %v6432 = vunpack.c.l.b16 %v4508
        %v6433 = vunpack.c.l.b16 %v4509
        %v6434 = vunpack.c.l.b16 %v4510
        %v6435 = vunpack.c.l.b16 %v4511
        %v6436 = vunpack.c.l.b16 %v4512
        %v6437 = vunpack.c.l.b16 %v4513
        %v6438 = vunpack.c.l.b16 %v4514
        %v6439 = vunpack.c.l.b16 %v4515
        %v6440 = vunpack.c.l.b16 %v4516
        %v6441 = vunpack.c.l.b16 %v4517
        %v6442 = vunpack.c.l.b16 %v4518
        %v6443 = vunpack.c.l.b16 %v4519
        %v6444 = vunpack.c.l.b16 %v4520
        %v6445 = vunpack.c.l.b16 %v4521
        %v6446 = vunpack.c.l.b16 %v4522
        %v6447 = vunpack.c.l.b16 %v4523
        %v6448 = vunpack.c.l.b16 %v4524
        %v6449 = vunpack.c.l.b16 %v4525
        %v6450 = vunpack.c.l.b16 %v4526
        %v6451 = vunpack.c.l.b16 %v4527
        %v6452 = vunpack.c.l.b16 %v4528
        %v6453 = vunpack.c.l.b16 %v4529
        %v6454 = vunpack.c.l.b16 %v4530
        %v6455 = vunpack.c.l.b16 %v4531
        %v6456 = vunpack.c.l.b16 %v4532
        %v6457 = vunpack.c.l.b16 %v4533
        %v6458 = vunpack.c.l.b16 %v4534
        %v6459 = vunpack.c.l.b16 %v4535
        %v6460 = vunpack.c.l.b16 %v4536
        %v6461 = vunpack.c.l.b16 %v4537
        %v6462 = vunpack.c.l.b16 %v4538
        %v6463 = vunpack.c.l.b16 %v4539
        %v6464 = vunpack.c.l.b16 %v4540
        %v6465 = vunpack.c.l.b16 %v4541
        %v6466 = vunpack.c.l.b16 %v4542
        %v6467 = vunpack.c.l.b16 %v4543
        %v6468 = vunpack.c.l.b16 %v4544
        %v6469 = vpack.c.b16 %v6342, %v6341
        %v6470 = vpack.c.b16 %v6344, %v6343
        %v6471 = vpack.c.b16 %v6346, %v6345
        %v6472 = vpack.c.b16 %v6348, %v6347
        %v6473 = vpack.c.b16 %v6350, %v6349
        %v6474 = vpack.c.b16 %v6352, %v6351
        %v6475 = vpack.c.b16 %v6354, %v6353
        %v6476 = vpack.c.b16 %v6356, %v6355
        %v6477 = vpack.c.b16 %v6358, %v6357
        %v6478 = vpack.c.b16 %v6360, %v6359
        %v6479 = vpack.c.b16 %v6362, %v6361
        %v6480 = vpack.c.b16 %v6364, %v6363
        %v6481 = vpack.c.b16 %v6366, %v6365
        %v6482 = vpack.c.b16 %v6368, %v6367
        %v6483 = vpack.c.b16 %v6370, %v6369
        %v6484 = vpack.c.b16 %v6372, %v6371
        %v6485 = vpack.c.b16 %v6374, %v6373
        %v6486 = vpack.c.b16 %v6376, %v6375
        %v6487 = vpack.c.b16 %v6378, %v6377
        %v6488 = vpack.c.b16 %v6380, %v6379
        %v6489 = vpack.c.b16 %v6382, %v6381
        %v6490 = vpack.c.b16 %v6384, %v6383
        %v6491 = vpack.c.b16 %v6386, %v6385
        %v6492 = vpack.c.b16 %v6388, %v6387
        %v6493 = vpack.c.b16 %v6390, %v6389
        %v6494 = vpack.c.b16 %v6392, %v6391
        %v6495 = vpack.c.b16 %v6394, %v6393
        %v6496 = vpack.c.b16 %v6396, %v6395
        %v6497 = vpack.c.b16 %v6398, %v6397
        %v6498 = vpack.c.b16 %v6400, %v6399
        %v6499 = vpack.c.b16 %v6402, %v6401
        %v6500 = vpack.c.b16 %v6404, %v6403
        %v6501 = vpack.c.b16 %v6406, %v6405
        %v6502 = vpack.c.b16 %v6408, %v6407
        %v6503 = vpack.c.b16 %v6410, %v6409
        %v6504 = vpack.c.b16 %v6412, %v6411
        %v6505 = vpack.c.b16 %v6414, %v6413
        %v6506 = vpack.c.b16 %v6416, %v6415
        %v6507 = vpack.c.b16 %v6418, %v6417
        %v6508 = vpack.c.b16 %v6420, %v6419
        %v6509 = vpack.c.b16 %v6422, %v6421
        %v6510 = vpack.c.b16 %v6424, %v6423
        %v6511 = vpack.c.b16 %v6426, %v6425
        %v6512 = vpack.c.b16 %v6428, %v6427
        %v6513 = vpack.c.b16 %v6430, %v6429
        %v6514 = vpack.c.b16 %v6432, %v6431
        %v6515 = vpack.c.b16 %v6434, %v6433
        %v6516 = vpack.c.b16 %v6436, %v6435
        %v6517 = vpack.c.b16 %v6438, %v6437
        %v6518 = vpack.c.b16 %v6440, %v6439
        %v6519 = vpack.c.b16 %v6442, %v6441
        %v6520 = vpack.c.b16 %v6444, %v6443
        %v6521 = vpack.c.b16 %v6446, %v6445
        %v6522 = vpack.c.b16 %v6448, %v6447
        %v6523 = vpack.c.b16 %v6450, %v6449
        %v6524 = vpack.c.b16 %v6452, %v6451
        %v6525 = vpack.c.b16 %v6454, %v6453
        %v6526 = vpack.c.b16 %v6456, %v6455
        %v6527 = vpack.c.b16 %v6458, %v6457
        %v6528 = vpack.c.b16 %v6460, %v6459
        %v6529 = vpack.c.b16 %v6462, %v6461
        %v6530 = vpack.c.b16 %v6464, %v6463
        %v6531 = vpack.c.b16 %v6466, %v6465
        %v6532 = vpack.c.b16 %v6468, %v6467
        %6597 = vmatprep.subr.bf16.mxu0 0
        %6598 = vmatpush1.bf16.msra.mxu0 %v6469
        %6599 = vmatprep.subr.bf16.mxu0 0
        %6600 = vmatpush1.bf16.msra.mxu0 %v6470
        %6601 = vmatprep.subr.bf16.mxu0 0
        %6602 = vmatpush1.bf16.msra.mxu0 %v6471
        %6603 = vmatprep.subr.bf16.mxu0 0
        %6604 = vmatpush1.bf16.msra.mxu0 %v6472
        %6605 = vmatprep.subr.bf16.mxu0 0
        %6606 = vmatpush1.bf16.msra.mxu0 %v6473
        %6607 = vmatprep.subr.bf16.mxu0 0
        %6608 = vmatpush1.bf16.msra.mxu0 %v6474
        %6609 = vmatprep.subr.bf16.mxu0 0
        %6610 = vmatpush1.bf16.msra.mxu0 %v6475
        %6611 = vmatprep.subr.bf16.mxu0 0
        %6612 = vmatpush1.bf16.msra.mxu0 %v6476
        %6613 = vmatprep.subr.bf16.mxu0 0
        %6614 = vmatpush1.bf16.msra.mxu0 %v6477
        %6615 = vmatprep.subr.bf16.mxu0 0
        %6616 = vmatpush1.bf16.msra.mxu0 %v6478
        %6617 = vmatprep.subr.bf16.mxu0 0
        %6618 = vmatpush1.bf16.msra.mxu0 %v6479
        %6619 = vmatprep.subr.bf16.mxu0 0
        %6620 = vmatpush1.bf16.msra.mxu0 %v6480
        %6621 = vmatprep.subr.bf16.mxu0 0
        %6622 = vmatpush1.bf16.msra.mxu0 %v6481
        %6623 = vmatprep.subr.bf16.mxu0 0
        %6624 = vmatpush1.bf16.msra.mxu0 %v6482
        %6625 = vmatprep.subr.bf16.mxu0 0
        %6626 = vmatpush1.bf16.msra.mxu0 %v6483
        %6627 = vmatprep.subr.bf16.mxu0 0
        %6628 = vmatpush1.bf16.msra.mxu0 %v6484
        %6629 = vmatprep.mubr.bf16.mxu0 %v2306
        %6630 = vmatmul.mubr.bf16.gmra.mrb[0].mxu0 %v2305
        %v6631 = vpop.f32.mrb[0].mxu0
        %v6632 = vadd.f32 %v5959, %v6631
        %v6633 = vpop.f32.mrb[0].mxu0
        %v6634 = vpop.f32.mrb[0].mxu0
        %v6635 = vadd.f32 %v5962, %v6634
        %v6636 = vpop.f32.mrb[0].mxu0
        %6637 = vmatprep.mubr.bf16.mxu0 %v2314
        %6638 = vmatmul.mubr.bf16.gmra.mrb[0].mxu0 %v2313
        %v6639 = vpop.f32.mrb[0].mxu0
        %v6640 = vadd.f32 %v5967, %v6639
        %v6641 = vpop.f32.mrb[0].mxu0
        %v6642 = vpop.f32.mrb[0].mxu0
        %v6643 = vadd.f32 %v5970, %v6642
        %v6644 = vpop.f32.mrb[0].mxu0
        %6645 = vmatprep.mubr.bf16.mxu0 %v2322
        %6646 = vmatmul.mubr.bf16.gmra.mrb[0].mxu0 %v2321
        %v6647 = vpop.f32.mrb[0].mxu0
        %v6648 = vadd.f32 %v5975, %v6647
        %v6649 = vpop.f32.mrb[0].mxu0
        %v6650 = vpop.f32.mrb[0].mxu0
        %v6651 = vadd.f32 %v5978, %v6650
        %v6652 = vpop.f32.mrb[0].mxu0
        %6653 = vmatprep.mubr.bf16.mxu0 %v2330
        %6654 = vmatmul.mubr.bf16.gmra.mrb[0].mxu0 %v2329
        %v6655 = vpop.f32.mrb[0].mxu0
        %v6656 = vadd.f32 %v5983, %v6655
        %v6657 = vpop.f32.mrb[0].mxu0
        %v6658 = vpop.f32.mrb[0].mxu0
        %v6659 = vadd.f32 %v5986, %v6658
        %v6660 = vpop.f32.mrb[0].mxu0
        %6661 = vmatprep.mubr.bf16.mxu0 %v2338
        %6662 = vmatmul.mubr.bf16.gmra.mrb[0].mxu0 %v2337
        %v6663 = vpop.f32.mrb[0].mxu0
        %v6664 = vadd.f32 %v5991, %v6663
        %v6665 = vpop.f32.mrb[0].mxu0
        %v6666 = vpop.f32.mrb[0].mxu0
        %v6667 = vadd.f32 %v5994, %v6666
        %v6668 = vpop.f32.mrb[0].mxu0
        %6669 = vmatprep.mubr.bf16.mxu0 %v2346
        %6670 = vmatmul.mubr.bf16.gmra.mrb[0].mxu0 %v2345
        %v6671 = vpop.f32.mrb[0].mxu0
        %v6672 = vadd.f32 %v5999, %v6671
        %v6673 = vpop.f32.mrb[0].mxu0
        %v6674 = vpop.f32.mrb[0].mxu0
        %v6675 = vadd.f32 %v6002, %v6674
        %v6676 = vpop.f32.mrb[0].mxu0
        %6677 = vmatprep.mubr.bf16.mxu0 %v2354
        %6678 = vmatmul.mubr.bf16.gmra.mrb[0].mxu0 %v2353
        %v6679 = vpop.f32.mrb[0].mxu0
        %v6680 = vadd.f32 %v6007, %v6679
        %v6681 = vpop.f32.mrb[0].mxu0
        %v6682 = vpop.f32.mrb[0].mxu0
        %v6683 = vadd.f32 %v6010, %v6682
        %v6684 = vpop.f32.mrb[0].mxu0
        %6685 = vmatprep.mubr.bf16.mxu0 %v2362
        %6686 = vmatmul.mubr.bf16.gmra.mrb[0].mxu0 %v2361
        %v6687 = vpop.f32.mrb[0].mxu0
        %v6688 = vadd.f32 %v6015, %v6687
        %v6689 = vpop.f32.mrb[0].mxu0
        %v6690 = vpop.f32.mrb[0].mxu0
        %v6691 = vadd.f32 %v6018, %v6690
        %v6692 = vpop.f32.mrb[0].mxu0
        %6693 = vmatprep.mubr.bf16.mxu0 %v2370
        %6694 = vmatmul.mubr.bf16.gmra.mrb[0].mxu0 %v2369
        %v6695 = vpop.f32.mrb[0].mxu0
        %v6696 = vadd.f32 %v6023, %v6695
        %v6697 = vpop.f32.mrb[0].mxu0
        %v6698 = vpop.f32.mrb[0].mxu0
        %v6699 = vadd.f32 %v6026, %v6698
        %v6700 = vpop.f32.mrb[0].mxu0
        %6701 = vmatprep.mubr.bf16.mxu0 %v2378
        %6702 = vmatmul.mubr.bf16.gmra.mrb[0].mxu0 %v2377
        %v6703 = vpop.f32.mrb[0].mxu0
        %v6704 = vadd.f32 %v6031, %v6703
        %v6705 = vpop.f32.mrb[0].mxu0
        %v6706 = vpop.f32.mrb[0].mxu0
        %v6707 = vadd.f32 %v6034, %v6706
        %v6708 = vpop.f32.mrb[0].mxu0
        %6709 = vmatprep.mubr.bf16.mxu0 %v2386
        %6710 = vmatmul.mubr.bf16.gmra.mrb[0].mxu0 %v2385
        %v6711 = vpop.f32.mrb[0].mxu0
        %v6712 = vadd.f32 %v6039, %v6711
        %v6713 = vpop.f32.mrb[0].mxu0
        %v6714 = vpop.f32.mrb[0].mxu0
        %v6715 = vadd.f32 %v6042, %v6714
        %v6716 = vpop.f32.mrb[0].mxu0
        %6717 = vmatprep.mubr.bf16.mxu0 %v2394
        %6718 = vmatmul.mubr.bf16.gmra.mrb[0].mxu0 %v2393
        %v6719 = vpop.f32.mrb[0].mxu0
        %v6720 = vadd.f32 %v6047, %v6719
        %v6721 = vpop.f32.mrb[0].mxu0
        %v6722 = vpop.f32.mrb[0].mxu0
        %v6723 = vadd.f32 %v6050, %v6722
        %v6724 = vpop.f32.mrb[0].mxu0
        %6725 = vmatprep.mubr.bf16.mxu0 %v2402
        %6726 = vmatmul.mubr.bf16.gmra.mrb[0].mxu0 %v2401
        %v6727 = vpop.f32.mrb[0].mxu0
        %v6728 = vadd.f32 %v6055, %v6727
        %v6729 = vpop.f32.mrb[0].mxu0
        %v6730 = vpop.f32.mrb[0].mxu0
        %v6731 = vadd.f32 %v6058, %v6730
        %v6732 = vpop.f32.mrb[0].mxu0
        %6733 = vmatprep.mubr.bf16.mxu0 %v2410
        %6734 = vmatmul.mubr.bf16.gmra.mrb[0].mxu0 %v2409
        %v6735 = vpop.f32.mrb[0].mxu0
        %v6736 = vadd.f32 %v6063, %v6735
        %v6737 = vpop.f32.mrb[0].mxu0
        %v6738 = vpop.f32.mrb[0].mxu0
        %v6739 = vadd.f32 %v6066, %v6738
        %v6740 = vpop.f32.mrb[0].mxu0
        %6741 = vmatprep.mubr.bf16.mxu0 %v2418
        %6742 = vmatmul.mubr.bf16.gmra.mrb[0].mxu0 %v2417
        %v6743 = vpop.f32.mrb[0].mxu0
        %v6744 = vadd.f32 %v6071, %v6743
        %v6745 = vpop.f32.mrb[0].mxu0
        %v6746 = vpop.f32.mrb[0].mxu0
        %v6747 = vadd.f32 %v6074, %v6746
        %v6748 = vpop.f32.mrb[0].mxu0
        %6749 = vmatprep.mubr.bf16.mxu0 %v2426
        %6750 = vmatmul.mubr.bf16.gmra.mrb[0].mxu0 %v2425
        %v6751 = vpop.f32.mrb[0].mxu0
        %v6752 = vadd.f32 %v6079, %v6751
        %v6753 = vpop.f32.mrb[0].mxu0
        %v6754 = vpop.f32.mrb[0].mxu0
        %v6755 = vadd.f32 %v6082, %v6754
        %v6756 = vpop.f32.mrb[0].mxu0
        %6757 = vmatprep.mubr.bf16.mxu0 %v2434
        %6758 = vmatmul.mubr.bf16.gmra.mrb[0].mxu0 %v2433
        %v6759 = vpop.f32.mrb[0].mxu0
        %v6760 = vadd.f32 %v6087, %v6759
        %v6761 = vpop.f32.mrb[0].mxu0
        %v6762 = vpop.f32.mrb[0].mxu0
        %v6763 = vadd.f32 %v6090, %v6762
        %v6764 = vpop.f32.mrb[0].mxu0
        %6765 = vmatprep.mubr.bf16.mxu0 %v2442
        %6766 = vmatmul.mubr.bf16.gmra.mrb[0].mxu0 %v2441
        %v6767 = vpop.f32.mrb[0].mxu0
        %v6768 = vadd.f32 %v6095, %v6767
        %v6769 = vpop.f32.mrb[0].mxu0
        %v6770 = vpop.f32.mrb[0].mxu0
        %v6771 = vadd.f32 %v6098, %v6770
        %v6772 = vpop.f32.mrb[0].mxu0
        %6773 = vmatprep.mubr.bf16.mxu0 %v2450
        %6774 = vmatmul.mubr.bf16.gmra.mrb[0].mxu0 %v2449
        %v6775 = vpop.f32.mrb[0].mxu0
        %v6776 = vadd.f32 %v6103, %v6775
        %v6777 = vpop.f32.mrb[0].mxu0
        %v6778 = vpop.f32.mrb[0].mxu0
        %v6779 = vadd.f32 %v6106, %v6778
        %v6780 = vpop.f32.mrb[0].mxu0
        %6781 = vmatprep.mubr.bf16.mxu0 %v2458
        %6782 = vmatmul.mubr.bf16.gmra.mrb[0].mxu0 %v2457
        %v6783 = vpop.f32.mrb[0].mxu0
        %v6784 = vadd.f32 %v6111, %v6783
        %v6785 = vpop.f32.mrb[0].mxu0
        %v6786 = vpop.f32.mrb[0].mxu0
        %v6787 = vadd.f32 %v6114, %v6786
        %v6788 = vpop.f32.mrb[0].mxu0
        %6789 = vmatprep.mubr.bf16.mxu0 %v2466
        %6790 = vmatmul.mubr.bf16.gmra.mrb[0].mxu0 %v2465
        %v6791 = vpop.f32.mrb[0].mxu0
        %v6792 = vadd.f32 %v6119, %v6791
        %v6793 = vpop.f32.mrb[0].mxu0
        %v6794 = vpop.f32.mrb[0].mxu0
        %v6795 = vadd.f32 %v6122, %v6794
        %v6796 = vpop.f32.mrb[0].mxu0
        %6797 = vmatprep.mubr.bf16.mxu0 %v2474
        %6798 = vmatmul.mubr.bf16.gmra.mrb[0].mxu0 %v2473
        %v6799 = vpop.f32.mrb[0].mxu0
        %v6800 = vadd.f32 %v6127, %v6799
        %v6801 = vpop.f32.mrb[0].mxu0
        %v6802 = vpop.f32.mrb[0].mxu0
        %v6803 = vadd.f32 %v6130, %v6802
        %v6804 = vpop.f32.mrb[0].mxu0
        %6805 = vmatprep.mubr.bf16.mxu0 %v2482
        %6806 = vmatmul.mubr.bf16.gmra.mrb[0].mxu0 %v2481
        %v6807 = vpop.f32.mrb[0].mxu0
        %v6808 = vadd.f32 %v6135, %v6807
        %v6809 = vpop.f32.mrb[0].mxu0
        %v6810 = vpop.f32.mrb[0].mxu0
        %v6811 = vadd.f32 %v6138, %v6810
        %v6812 = vpop.f32.mrb[0].mxu0
        %6813 = vmatprep.mubr.bf16.mxu0 %v2490
        %6814 = vmatmul.mubr.bf16.gmra.mrb[0].mxu0 %v2489
        %v6815 = vpop.f32.mrb[0].mxu0
        %v6816 = vadd.f32 %v6143, %v6815
        %v6817 = vpop.f32.mrb[0].mxu0
        %v6818 = vpop.f32.mrb[0].mxu0
        %v6819 = vadd.f32 %v6146, %v6818
        %v6820 = vpop.f32.mrb[0].mxu0
        %6821 = vmatprep.mubr.bf16.mxu0 %v2498
        %6822 = vmatmul.mubr.bf16.gmra.mrb[0].mxu0 %v2497
        %v6823 = vpop.f32.mrb[0].mxu0
        %v6824 = vadd.f32 %v6151, %v6823
        %v6825 = vpop.f32.mrb[0].mxu0
        %v6826 = vpop.f32.mrb[0].mxu0
        %v6827 = vadd.f32 %v6154, %v6826
        %v6828 = vpop.f32.mrb[0].mxu0
        %6829 = vmatprep.mubr.bf16.mxu0 %v2506
        %6830 = vmatmul.mubr.bf16.gmra.mrb[0].mxu0 %v2505
        %v6831 = vpop.f32.mrb[0].mxu0
        %v6832 = vadd.f32 %v6159, %v6831
        %v6833 = vpop.f32.mrb[0].mxu0
        %v6834 = vpop.f32.mrb[0].mxu0
        %v6835 = vadd.f32 %v6162, %v6834
        %v6836 = vpop.f32.mrb[0].mxu0
        %6837 = vmatprep.mubr.bf16.mxu0 %v2514
        %6838 = vmatmul.mubr.bf16.gmra.mrb[0].mxu0 %v2513
        %v6839 = vpop.f32.mrb[0].mxu0
        %v6840 = vadd.f32 %v6167, %v6839
        %v6841 = vpop.f32.mrb[0].mxu0
        %v6842 = vpop.f32.mrb[0].mxu0
        %v6843 = vadd.f32 %v6170, %v6842
        %v6844 = vpop.f32.mrb[0].mxu0
        %6845 = vmatprep.mubr.bf16.mxu0 %v2522
        %6846 = vmatmul.mubr.bf16.gmra.mrb[0].mxu0 %v2521
        %v6847 = vpop.f32.mrb[0].mxu0
        %v6848 = vadd.f32 %v6175, %v6847
        %v6849 = vpop.f32.mrb[0].mxu0
        %v6850 = vpop.f32.mrb[0].mxu0
        %v6851 = vadd.f32 %v6178, %v6850
        %v6852 = vpop.f32.mrb[0].mxu0
        %6853 = vmatprep.mubr.bf16.mxu0 %v2530
        %6854 = vmatmul.mubr.bf16.gmra.mrb[0].mxu0 %v2529
        %v6855 = vpop.f32.mrb[0].mxu0
        %v6856 = vadd.f32 %v6183, %v6855
        %v6857 = vpop.f32.mrb[0].mxu0
        %v6858 = vpop.f32.mrb[0].mxu0
        %v6859 = vadd.f32 %v6186, %v6858
        %v6860 = vpop.f32.mrb[0].mxu0
        %6861 = vmatprep.mubr.bf16.mxu0 %v2538
        %6862 = vmatmul.mubr.bf16.gmra.mrb[0].mxu0 %v2537
        %v6863 = vpop.f32.mrb[0].mxu0
        %v6864 = vadd.f32 %v6191, %v6863
        %v6865 = vpop.f32.mrb[0].mxu0
        %v6866 = vpop.f32.mrb[0].mxu0
        %v6867 = vadd.f32 %v6194, %v6866
        %v6868 = vpop.f32.mrb[0].mxu0
        %6869 = vmatprep.mubr.bf16.mxu0 %v2546
        %6870 = vmatmul.mubr.bf16.gmra.mrb[0].mxu0 %v2545
        %v6871 = vpop.f32.mrb[0].mxu0
        %v6872 = vadd.f32 %v6199, %v6871
        %v6873 = vpop.f32.mrb[0].mxu0
        %v6874 = vpop.f32.mrb[0].mxu0
        %v6875 = vadd.f32 %v6202, %v6874
        %v6876 = vpop.f32.mrb[0].mxu0
        %6877 = vmatprep.mubr.bf16.mxu0 %v2554
        %6878 = vmatmul.mubr.bf16.gmra.mrb[0].mxu0 %v2553
        %v6879 = vpop.f32.mrb[0].mxu0
        %v6880 = vadd.f32 %v6207, %v6879
        %v6881 = vpop.f32.mrb[0].mxu0
        %v6882 = vpop.f32.mrb[0].mxu0
        %v6883 = vadd.f32 %v6210, %v6882
        %v6884 = vpop.f32.mrb[0].mxu0
        %6885 = vdwg.mxu0
        %6886 = vmatprep.subr.bf16.mxu0 0
        %6887 = vmatpush1.bf16.msra.mxu0 %v6485
        %6888 = vmatprep.subr.bf16.mxu0 0
        %6889 = vmatpush1.bf16.msra.mxu0 %v6486
        %6890 = vmatprep.subr.bf16.mxu0 0
        %6891 = vmatpush1.bf16.msra.mxu0 %v6487
        %6892 = vmatprep.subr.bf16.mxu0 0
        %6893 = vmatpush1.bf16.msra.mxu0 %v6488
        %6894 = vmatprep.subr.bf16.mxu0 0
        %6895 = vmatpush1.bf16.msra.mxu0 %v6489
        %6896 = vmatprep.subr.bf16.mxu0 0
        %6897 = vmatpush1.bf16.msra.mxu0 %v6490
        %6898 = vmatprep.subr.bf16.mxu0 0
        %6899 = vmatpush1.bf16.msra.mxu0 %v6491
        %6900 = vmatprep.subr.bf16.mxu0 0
        %6901 = vmatpush1.bf16.msra.mxu0 %v6492
        %6902 = vmatprep.subr.bf16.mxu0 0
        %6903 = vmatpush1.bf16.msra.mxu0 %v6493
        %6904 = vmatprep.subr.bf16.mxu0 0
        %6905 = vmatpush1.bf16.msra.mxu0 %v6494
        %6906 = vmatprep.subr.bf16.mxu0 0
        %6907 = vmatpush1.bf16.msra.mxu0 %v6495
        %6908 = vmatprep.subr.bf16.mxu0 0
        %6909 = vmatpush1.bf16.msra.mxu0 %v6496
        %6910 = vmatprep.subr.bf16.mxu0 0
        %6911 = vmatpush1.bf16.msra.mxu0 %v6497
        %6912 = vmatprep.subr.bf16.mxu0 0
        %6913 = vmatpush1.bf16.msra.mxu0 %v6498
        %6914 = vmatprep.subr.bf16.mxu0 0
        %6915 = vmatpush1.bf16.msra.mxu0 %v6499
        %6916 = vmatprep.subr.bf16.mxu0 0
        %6917 = vmatpush1.bf16.msra.mxu0 %v6500
        %6918 = vmatprep.mubr.bf16.mxu0 %v2308
        %6919 = vmatmul.mubr.bf16.gmra.mrb[0].mxu0 %v2307
        %v6920 = vpop.f32.mrb[0].mxu0
        %v6921 = vadd.f32 %v6632, %v6920
        %v6922 = vpop.f32.mrb[0].mxu0
        %v6923 = vpop.f32.mrb[0].mxu0
        %v6924 = vadd.f32 %v6635, %v6923
        %v6925 = vpop.f32.mrb[0].mxu0
        %6926 = vmatprep.mubr.bf16.mxu0 %v2316
        %6927 = vmatmul.mubr.bf16.gmra.mrb[0].mxu0 %v2315
        %v6928 = vpop.f32.mrb[0].mxu0
        %v6929 = vadd.f32 %v6640, %v6928
        %v6930 = vpop.f32.mrb[0].mxu0
        %v6931 = vpop.f32.mrb[0].mxu0
        %v6932 = vadd.f32 %v6643, %v6931
        %v6933 = vpop.f32.mrb[0].mxu0
        %6934 = vmatprep.mubr.bf16.mxu0 %v2324
        %6935 = vmatmul.mubr.bf16.gmra.mrb[0].mxu0 %v2323
        %v6936 = vpop.f32.mrb[0].mxu0
        %v6937 = vadd.f32 %v6648, %v6936
        %v6938 = vpop.f32.mrb[0].mxu0
        %v6939 = vpop.f32.mrb[0].mxu0
        %v6940 = vadd.f32 %v6651, %v6939
        %v6941 = vpop.f32.mrb[0].mxu0
        %6942 = vmatprep.mubr.bf16.mxu0 %v2332
        %6943 = vmatmul.mubr.bf16.gmra.mrb[0].mxu0 %v2331
        %v6944 = vpop.f32.mrb[0].mxu0
        %v6945 = vadd.f32 %v6656, %v6944
        %v6946 = vpop.f32.mrb[0].mxu0
        %v6947 = vpop.f32.mrb[0].mxu0
        %v6948 = vadd.f32 %v6659, %v6947
        %v6949 = vpop.f32.mrb[0].mxu0
        %6950 = vmatprep.mubr.bf16.mxu0 %v2340
        %6951 = vmatmul.mubr.bf16.gmra.mrb[0].mxu0 %v2339
        %v6952 = vpop.f32.mrb[0].mxu0
        %v6953 = vadd.f32 %v6664, %v6952
        %v6954 = vpop.f32.mrb[0].mxu0
        %v6955 = vpop.f32.mrb[0].mxu0
        %v6956 = vadd.f32 %v6667, %v6955
        %v6957 = vpop.f32.mrb[0].mxu0
        %6958 = vmatprep.mubr.bf16.mxu0 %v2348
        %6959 = vmatmul.mubr.bf16.gmra.mrb[0].mxu0 %v2347
        %v6960 = vpop.f32.mrb[0].mxu0
        %v6961 = vadd.f32 %v6672, %v6960
        %v6962 = vpop.f32.mrb[0].mxu0
        %v6963 = vpop.f32.mrb[0].mxu0
        %v6964 = vadd.f32 %v6675, %v6963
        %v6965 = vpop.f32.mrb[0].mxu0
        %6966 = vmatprep.mubr.bf16.mxu0 %v2356
        %6967 = vmatmul.mubr.bf16.gmra.mrb[0].mxu0 %v2355
        %v6968 = vpop.f32.mrb[0].mxu0
        %v6969 = vadd.f32 %v6680, %v6968
        %v6970 = vpop.f32.mrb[0].mxu0
        %v6971 = vpop.f32.mrb[0].mxu0
        %v6972 = vadd.f32 %v6683, %v6971
        %v6973 = vpop.f32.mrb[0].mxu0
        %6974 = vmatprep.mubr.bf16.mxu0 %v2364
        %6975 = vmatmul.mubr.bf16.gmra.mrb[0].mxu0 %v2363
        %v6976 = vpop.f32.mrb[0].mxu0
        %v6977 = vadd.f32 %v6688, %v6976
        %v6978 = vpop.f32.mrb[0].mxu0
        %v6979 = vpop.f32.mrb[0].mxu0
        %v6980 = vadd.f32 %v6691, %v6979
        %v6981 = vpop.f32.mrb[0].mxu0
        %6982 = vmatprep.mubr.bf16.mxu0 %v2372
        %6983 = vmatmul.mubr.bf16.gmra.mrb[0].mxu0 %v2371
        %v6984 = vpop.f32.mrb[0].mxu0
        %v6985 = vadd.f32 %v6696, %v6984
        %v6986 = vpop.f32.mrb[0].mxu0
        %v6987 = vpop.f32.mrb[0].mxu0
        %v6988 = vadd.f32 %v6699, %v6987
        %v6989 = vpop.f32.mrb[0].mxu0
        %6990 = vmatprep.mubr.bf16.mxu0 %v2380
        %6991 = vmatmul.mubr.bf16.gmra.mrb[0].mxu0 %v2379
        %v6992 = vpop.f32.mrb[0].mxu0
        %v6993 = vadd.f32 %v6704, %v6992
        %v6994 = vpop.f32.mrb[0].mxu0
        %v6995 = vpop.f32.mrb[0].mxu0
        %v6996 = vadd.f32 %v6707, %v6995
        %v6997 = vpop.f32.mrb[0].mxu0
        %6998 = vmatprep.mubr.bf16.mxu0 %v2388
        %6999 = vmatmul.mubr.bf16.gmra.mrb[0].mxu0 %v2387
        %v7000 = vpop.f32.mrb[0].mxu0
        %v7001 = vadd.f32 %v6712, %v7000
        %v7002 = vpop.f32.mrb[0].mxu0
        %v7003 = vpop.f32.mrb[0].mxu0
        %v7004 = vadd.f32 %v6715, %v7003
        %v7005 = vpop.f32.mrb[0].mxu0
        %7006 = vmatprep.mubr.bf16.mxu0 %v2396
        %7007 = vmatmul.mubr.bf16.gmra.mrb[0].mxu0 %v2395
        %v7008 = vpop.f32.mrb[0].mxu0
        %v7009 = vadd.f32 %v6720, %v7008
        %v7010 = vpop.f32.mrb[0].mxu0
        %v7011 = vpop.f32.mrb[0].mxu0
        %v7012 = vadd.f32 %v6723, %v7011
        %v7013 = vpop.f32.mrb[0].mxu0
        %7014 = vmatprep.mubr.bf16.mxu0 %v2404
        %7015 = vmatmul.mubr.bf16.gmra.mrb[0].mxu0 %v2403
        %v7016 = vpop.f32.mrb[0].mxu0
        %v7017 = vadd.f32 %v6728, %v7016
        %v7018 = vpop.f32.mrb[0].mxu0
        %v7019 = vpop.f32.mrb[0].mxu0
        %v7020 = vadd.f32 %v6731, %v7019
        %v7021 = vpop.f32.mrb[0].mxu0
        %7022 = vmatprep.mubr.bf16.mxu0 %v2412
        %7023 = vmatmul.mubr.bf16.gmra.mrb[0].mxu0 %v2411
        %v7024 = vpop.f32.mrb[0].mxu0
        %v7025 = vadd.f32 %v6736, %v7024
        %v7026 = vpop.f32.mrb[0].mxu0
        %v7027 = vpop.f32.mrb[0].mxu0
        %v7028 = vadd.f32 %v6739, %v7027
        %v7029 = vpop.f32.mrb[0].mxu0
        %7030 = vmatprep.mubr.bf16.mxu0 %v2420
        %7031 = vmatmul.mubr.bf16.gmra.mrb[0].mxu0 %v2419
        %v7032 = vpop.f32.mrb[0].mxu0
        %v7033 = vadd.f32 %v6744, %v7032
        %v7034 = vpop.f32.mrb[0].mxu0
        %v7035 = vpop.f32.mrb[0].mxu0
        %v7036 = vadd.f32 %v6747, %v7035
        %v7037 = vpop.f32.mrb[0].mxu0
        %7038 = vmatprep.mubr.bf16.mxu0 %v2428
        %7039 = vmatmul.mubr.bf16.gmra.mrb[0].mxu0 %v2427
        %v7040 = vpop.f32.mrb[0].mxu0
        %v7041 = vadd.f32 %v6752, %v7040
        %v7042 = vpop.f32.mrb[0].mxu0
        %v7043 = vpop.f32.mrb[0].mxu0
        %v7044 = vadd.f32 %v6755, %v7043
        %v7045 = vpop.f32.mrb[0].mxu0
        %7046 = vmatprep.mubr.bf16.mxu0 %v2436
        %7047 = vmatmul.mubr.bf16.gmra.mrb[0].mxu0 %v2435
        %v7048 = vpop.f32.mrb[0].mxu0
        %v7049 = vadd.f32 %v6760, %v7048
        %v7050 = vpop.f32.mrb[0].mxu0
        %v7051 = vpop.f32.mrb[0].mxu0
        %v7052 = vadd.f32 %v6763, %v7051
        %v7053 = vpop.f32.mrb[0].mxu0
        %7054 = vmatprep.mubr.bf16.mxu0 %v2444
        %7055 = vmatmul.mubr.bf16.gmra.mrb[0].mxu0 %v2443
        %v7056 = vpop.f32.mrb[0].mxu0
        %v7057 = vadd.f32 %v6768, %v7056
        %v7058 = vpop.f32.mrb[0].mxu0
        %v7059 = vpop.f32.mrb[0].mxu0
        %v7060 = vadd.f32 %v6771, %v7059
        %v7061 = vpop.f32.mrb[0].mxu0
        %7062 = vmatprep.mubr.bf16.mxu0 %v2452
        %7063 = vmatmul.mubr.bf16.gmra.mrb[0].mxu0 %v2451
        %v7064 = vpop.f32.mrb[0].mxu0
        %v7065 = vadd.f32 %v6776, %v7064
        %v7066 = vpop.f32.mrb[0].mxu0
        %v7067 = vpop.f32.mrb[0].mxu0
        %v7068 = vadd.f32 %v6779, %v7067
        %v7069 = vpop.f32.mrb[0].mxu0
        %7070 = vmatprep.mubr.bf16.mxu0 %v2460
        %7071 = vmatmul.mubr.bf16.gmra.mrb[0].mxu0 %v2459
        %v7072 = vpop.f32.mrb[0].mxu0
        %v7073 = vadd.f32 %v6784, %v7072
        %v7074 = vpop.f32.mrb[0].mxu0
        %v7075 = vpop.f32.mrb[0].mxu0
        %v7076 = vadd.f32 %v6787, %v7075
        %v7077 = vpop.f32.mrb[0].mxu0
        %7078 = vmatprep.mubr.bf16.mxu0 %v2468
        %7079 = vmatmul.mubr.bf16.gmra.mrb[0].mxu0 %v2467
        %v7080 = vpop.f32.mrb[0].mxu0
        %v7081 = vadd.f32 %v6792, %v7080
        %v7082 = vpop.f32.mrb[0].mxu0
        %v7083 = vpop.f32.mrb[0].mxu0
        %v7084 = vadd.f32 %v6795, %v7083
        %v7085 = vpop.f32.mrb[0].mxu0
        %7086 = vmatprep.mubr.bf16.mxu0 %v2476
        %7087 = vmatmul.mubr.bf16.gmra.mrb[0].mxu0 %v2475
        %v7088 = vpop.f32.mrb[0].mxu0
        %v7089 = vadd.f32 %v6800, %v7088
        %v7090 = vpop.f32.mrb[0].mxu0
        %v7091 = vpop.f32.mrb[0].mxu0
        %v7092 = vadd.f32 %v6803, %v7091
        %v7093 = vpop.f32.mrb[0].mxu0
        %7094 = vmatprep.mubr.bf16.mxu0 %v2484
        %7095 = vmatmul.mubr.bf16.gmra.mrb[0].mxu0 %v2483
        %v7096 = vpop.f32.mrb[0].mxu0
        %v7097 = vadd.f32 %v6808, %v7096
        %v7098 = vpop.f32.mrb[0].mxu0
        %v7099 = vpop.f32.mrb[0].mxu0
        %v7100 = vadd.f32 %v6811, %v7099
        %v7101 = vpop.f32.mrb[0].mxu0
        %7102 = vmatprep.mubr.bf16.mxu0 %v2492
        %7103 = vmatmul.mubr.bf16.gmra.mrb[0].mxu0 %v2491
        %v7104 = vpop.f32.mrb[0].mxu0
        %v7105 = vadd.f32 %v6816, %v7104
        %v7106 = vpop.f32.mrb[0].mxu0
        %v7107 = vpop.f32.mrb[0].mxu0
        %v7108 = vadd.f32 %v6819, %v7107
        %v7109 = vpop.f32.mrb[0].mxu0
        %7110 = vmatprep.mubr.bf16.mxu0 %v2500
        %7111 = vmatmul.mubr.bf16.gmra.mrb[0].mxu0 %v2499
        %v7112 = vpop.f32.mrb[0].mxu0
        %v7113 = vadd.f32 %v6824, %v7112
        %v7114 = vpop.f32.mrb[0].mxu0
        %v7115 = vpop.f32.mrb[0].mxu0
        %v7116 = vadd.f32 %v6827, %v7115
        %v7117 = vpop.f32.mrb[0].mxu0
        %7118 = vmatprep.mubr.bf16.mxu0 %v2508
        %7119 = vmatmul.mubr.bf16.gmra.mrb[0].mxu0 %v2507
        %v7120 = vpop.f32.mrb[0].mxu0
        %v7121 = vadd.f32 %v6832, %v7120
        %v7122 = vpop.f32.mrb[0].mxu0
        %v7123 = vpop.f32.mrb[0].mxu0
        %v7124 = vadd.f32 %v6835, %v7123
        %v7125 = vpop.f32.mrb[0].mxu0
        %7126 = vmatprep.mubr.bf16.mxu0 %v2516
        %7127 = vmatmul.mubr.bf16.gmra.mrb[0].mxu0 %v2515
        %v7128 = vpop.f32.mrb[0].mxu0
        %v7129 = vadd.f32 %v6840, %v7128
        %v7130 = vpop.f32.mrb[0].mxu0
        %v7131 = vpop.f32.mrb[0].mxu0
        %v7132 = vadd.f32 %v6843, %v7131
        %v7133 = vpop.f32.mrb[0].mxu0
        %7134 = vmatprep.mubr.bf16.mxu0 %v2524
        %7135 = vmatmul.mubr.bf16.gmra.mrb[0].mxu0 %v2523
        %v7136 = vpop.f32.mrb[0].mxu0
        %v7137 = vadd.f32 %v6848, %v7136
        %v7138 = vpop.f32.mrb[0].mxu0
        %v7139 = vpop.f32.mrb[0].mxu0
        %v7140 = vadd.f32 %v6851, %v7139
        %v7141 = vpop.f32.mrb[0].mxu0
        %7142 = vmatprep.mubr.bf16.mxu0 %v2532
        %7143 = vmatmul.mubr.bf16.gmra.mrb[0].mxu0 %v2531
        %v7144 = vpop.f32.mrb[0].mxu0
        %v7145 = vadd.f32 %v6856, %v7144
        %v7146 = vpop.f32.mrb[0].mxu0
        %v7147 = vpop.f32.mrb[0].mxu0
        %v7148 = vadd.f32 %v6859, %v7147
        %v7149 = vpop.f32.mrb[0].mxu0
        %7150 = vmatprep.mubr.bf16.mxu0 %v2540
        %7151 = vmatmul.mubr.bf16.gmra.mrb[0].mxu0 %v2539
        %v7152 = vpop.f32.mrb[0].mxu0
        %v7153 = vadd.f32 %v6864, %v7152
        %v7154 = vpop.f32.mrb[0].mxu0
        %v7155 = vpop.f32.mrb[0].mxu0
        %v7156 = vadd.f32 %v6867, %v7155
        %v7157 = vpop.f32.mrb[0].mxu0
        %7158 = vmatprep.mubr.bf16.mxu0 %v2548
        %7159 = vmatmul.mubr.bf16.gmra.mrb[0].mxu0 %v2547
        %v7160 = vpop.f32.mrb[0].mxu0
        %v7161 = vadd.f32 %v6872, %v7160
        %v7162 = vpop.f32.mrb[0].mxu0
        %v7163 = vpop.f32.mrb[0].mxu0
        %v7164 = vadd.f32 %v6875, %v7163
        %v7165 = vpop.f32.mrb[0].mxu0
        %7166 = vmatprep.mubr.bf16.mxu0 %v2556
        %7167 = vmatmul.mubr.bf16.gmra.mrb[0].mxu0 %v2555
        %v7168 = vpop.f32.mrb[0].mxu0
        %v7169 = vadd.f32 %v6880, %v7168
        %v7170 = vpop.f32.mrb[0].mxu0
        %v7171 = vpop.f32.mrb[0].mxu0
        %v7172 = vadd.f32 %v6883, %v7171
        %v7173 = vpop.f32.mrb[0].mxu0
        %7174 = vdwg.mxu0
        %7175 = vmatprep.subr.bf16.mxu0 0
        %7176 = vmatpush1.bf16.msra.mxu0 %v6501
        %7177 = vmatprep.subr.bf16.mxu0 0
        %7178 = vmatpush1.bf16.msra.mxu0 %v6502
        %7179 = vmatprep.subr.bf16.mxu0 0
        %7180 = vmatpush1.bf16.msra.mxu0 %v6503
        %7181 = vmatprep.subr.bf16.mxu0 0
        %7182 = vmatpush1.bf16.msra.mxu0 %v6504
        %7183 = vmatprep.subr.bf16.mxu0 0
        %7184 = vmatpush1.bf16.msra.mxu0 %v6505
        %7185 = vmatprep.subr.bf16.mxu0 0
        %7186 = vmatpush1.bf16.msra.mxu0 %v6506
        %7187 = vmatprep.subr.bf16.mxu0 0
        %7188 = vmatpush1.bf16.msra.mxu0 %v6507
        %7189 = vmatprep.subr.bf16.mxu0 0
        %7190 = vmatpush1.bf16.msra.mxu0 %v6508
        %7191 = vmatprep.subr.bf16.mxu0 0
        %7192 = vmatpush1.bf16.msra.mxu0 %v6509
        %7193 = vmatprep.subr.bf16.mxu0 0
        %7194 = vmatpush1.bf16.msra.mxu0 %v6510
        %7195 = vmatprep.subr.bf16.mxu0 0
        %7196 = vmatpush1.bf16.msra.mxu0 %v6511
        %7197 = vmatprep.subr.bf16.mxu0 0
        %7198 = vmatpush1.bf16.msra.mxu0 %v6512
        %7199 = vmatprep.subr.bf16.mxu0 0
        %7200 = vmatpush1.bf16.msra.mxu0 %v6513
        %7201 = vmatprep.subr.bf16.mxu0 0
        %7202 = vmatpush1.bf16.msra.mxu0 %v6514
        %7203 = vmatprep.subr.bf16.mxu0 0
        %7204 = vmatpush1.bf16.msra.mxu0 %v6515
        %7205 = vmatprep.subr.bf16.mxu0 0
        %7206 = vmatpush1.bf16.msra.mxu0 %v6516
        %7207 = vmatprep.mubr.bf16.mxu0 %v2310
        %7208 = vmatmul.mubr.bf16.gmra.mrb[0].mxu0 %v2309
        %v7209 = vpop.f32.mrb[0].mxu0
        %v7210 = vadd.f32 %v6921, %v7209
        %v7211 = vpop.f32.mrb[0].mxu0
        %v7212 = vpop.f32.mrb[0].mxu0
        %v7213 = vadd.f32 %v6924, %v7212
        %v7214 = vpop.f32.mrb[0].mxu0
        %7215 = vmatprep.mubr.bf16.mxu0 %v2318
        %7216 = vmatmul.mubr.bf16.gmra.mrb[0].mxu0 %v2317
        %v7217 = vpop.f32.mrb[0].mxu0
        %v7218 = vadd.f32 %v6929, %v7217
        %v7219 = vpop.f32.mrb[0].mxu0
        %v7220 = vpop.f32.mrb[0].mxu0
        %v7221 = vadd.f32 %v6932, %v7220
        %v7222 = vpop.f32.mrb[0].mxu0
        %7223 = vmatprep.mubr.bf16.mxu0 %v2326
        %7224 = vmatmul.mubr.bf16.gmra.mrb[0].mxu0 %v2325
        %v7225 = vpop.f32.mrb[0].mxu0
        %v7226 = vadd.f32 %v6937, %v7225
        %v7227 = vpop.f32.mrb[0].mxu0
        %v7228 = vpop.f32.mrb[0].mxu0
        %v7229 = vadd.f32 %v6940, %v7228
        %v7230 = vpop.f32.mrb[0].mxu0
        %7231 = vmatprep.mubr.bf16.mxu0 %v2334
        %7232 = vmatmul.mubr.bf16.gmra.mrb[0].mxu0 %v2333
        %v7233 = vpop.f32.mrb[0].mxu0
        %v7234 = vadd.f32 %v6945, %v7233
        %v7235 = vpop.f32.mrb[0].mxu0
        %v7236 = vpop.f32.mrb[0].mxu0
        %v7237 = vadd.f32 %v6948, %v7236
        %v7238 = vpop.f32.mrb[0].mxu0
        %7239 = vmatprep.mubr.bf16.mxu0 %v2342
        %7240 = vmatmul.mubr.bf16.gmra.mrb[0].mxu0 %v2341
        %v7241 = vpop.f32.mrb[0].mxu0
        %v7242 = vadd.f32 %v6953, %v7241
        %v7243 = vpop.f32.mrb[0].mxu0
        %v7244 = vpop.f32.mrb[0].mxu0
        %v7245 = vadd.f32 %v6956, %v7244
        %v7246 = vpop.f32.mrb[0].mxu0
        %7247 = vmatprep.mubr.bf16.mxu0 %v2350
        %7248 = vmatmul.mubr.bf16.gmra.mrb[0].mxu0 %v2349
        %v7249 = vpop.f32.mrb[0].mxu0
        %v7250 = vadd.f32 %v6961, %v7249
        %v7251 = vpop.f32.mrb[0].mxu0
        %v7252 = vpop.f32.mrb[0].mxu0
        %v7253 = vadd.f32 %v6964, %v7252
        %v7254 = vpop.f32.mrb[0].mxu0
        %7255 = vmatprep.mubr.bf16.mxu0 %v2358
        %7256 = vmatmul.mubr.bf16.gmra.mrb[0].mxu0 %v2357
        %v7257 = vpop.f32.mrb[0].mxu0
        %v7258 = vadd.f32 %v6969, %v7257
        %v7259 = vpop.f32.mrb[0].mxu0
        %v7260 = vpop.f32.mrb[0].mxu0
        %v7261 = vadd.f32 %v6972, %v7260
        %v7262 = vpop.f32.mrb[0].mxu0
        %7263 = vmatprep.mubr.bf16.mxu0 %v2366
        %7264 = vmatmul.mubr.bf16.gmra.mrb[0].mxu0 %v2365
        %v7265 = vpop.f32.mrb[0].mxu0
        %v7266 = vadd.f32 %v6977, %v7265
        %v7267 = vpop.f32.mrb[0].mxu0
        %v7268 = vpop.f32.mrb[0].mxu0
        %v7269 = vadd.f32 %v6980, %v7268
        %v7270 = vpop.f32.mrb[0].mxu0
        %7271 = vmatprep.mubr.bf16.mxu0 %v2374
        %7272 = vmatmul.mubr.bf16.gmra.mrb[0].mxu0 %v2373
        %v7273 = vpop.f32.mrb[0].mxu0
        %v7274 = vadd.f32 %v6985, %v7273
        %v7275 = vpop.f32.mrb[0].mxu0
        %v7276 = vpop.f32.mrb[0].mxu0
        %v7277 = vadd.f32 %v6988, %v7276
        %v7278 = vpop.f32.mrb[0].mxu0
        %7279 = vmatprep.mubr.bf16.mxu0 %v2382
        %7280 = vmatmul.mubr.bf16.gmra.mrb[0].mxu0 %v2381
        %v7281 = vpop.f32.mrb[0].mxu0
        %v7282 = vadd.f32 %v6993, %v7281
        %v7283 = vpop.f32.mrb[0].mxu0
        %v7284 = vpop.f32.mrb[0].mxu0
        %v7285 = vadd.f32 %v6996, %v7284
        %v7286 = vpop.f32.mrb[0].mxu0
        %7287 = vmatprep.mubr.bf16.mxu0 %v2390
        %7288 = vmatmul.mubr.bf16.gmra.mrb[0].mxu0 %v2389
        %v7289 = vpop.f32.mrb[0].mxu0
        %v7290 = vadd.f32 %v7001, %v7289
        %v7291 = vpop.f32.mrb[0].mxu0
        %v7292 = vpop.f32.mrb[0].mxu0
        %v7293 = vadd.f32 %v7004, %v7292
        %v7294 = vpop.f32.mrb[0].mxu0
        %7295 = vmatprep.mubr.bf16.mxu0 %v2398
        %7296 = vmatmul.mubr.bf16.gmra.mrb[0].mxu0 %v2397
        %v7297 = vpop.f32.mrb[0].mxu0
        %v7298 = vadd.f32 %v7009, %v7297
        %v7299 = vpop.f32.mrb[0].mxu0
        %v7300 = vpop.f32.mrb[0].mxu0
        %v7301 = vadd.f32 %v7012, %v7300
        %v7302 = vpop.f32.mrb[0].mxu0
        %7303 = vmatprep.mubr.bf16.mxu0 %v2406
        %7304 = vmatmul.mubr.bf16.gmra.mrb[0].mxu0 %v2405
        %v7305 = vpop.f32.mrb[0].mxu0
        %v7306 = vadd.f32 %v7017, %v7305
        %v7307 = vpop.f32.mrb[0].mxu0
        %v7308 = vpop.f32.mrb[0].mxu0
        %v7309 = vadd.f32 %v7020, %v7308
        %v7310 = vpop.f32.mrb[0].mxu0
        %7311 = vmatprep.mubr.bf16.mxu0 %v2414
        %7312 = vmatmul.mubr.bf16.gmra.mrb[0].mxu0 %v2413
        %v7313 = vpop.f32.mrb[0].mxu0
        %v7314 = vadd.f32 %v7025, %v7313
        %v7315 = vpop.f32.mrb[0].mxu0
        %v7316 = vpop.f32.mrb[0].mxu0
        %v7317 = vadd.f32 %v7028, %v7316
        %v7318 = vpop.f32.mrb[0].mxu0
        %7319 = vmatprep.mubr.bf16.mxu0 %v2422
        %7320 = vmatmul.mubr.bf16.gmra.mrb[0].mxu0 %v2421
        %v7321 = vpop.f32.mrb[0].mxu0
        %v7322 = vadd.f32 %v7033, %v7321
        %v7323 = vpop.f32.mrb[0].mxu0
        %v7324 = vpop.f32.mrb[0].mxu0
        %v7325 = vadd.f32 %v7036, %v7324
        %v7326 = vpop.f32.mrb[0].mxu0
        %7327 = vmatprep.mubr.bf16.mxu0 %v2430
        %7328 = vmatmul.mubr.bf16.gmra.mrb[0].mxu0 %v2429
        %v7329 = vpop.f32.mrb[0].mxu0
        %v7330 = vadd.f32 %v7041, %v7329
        %v7331 = vpop.f32.mrb[0].mxu0
        %v7332 = vpop.f32.mrb[0].mxu0
        %v7333 = vadd.f32 %v7044, %v7332
        %v7334 = vpop.f32.mrb[0].mxu0
        %7335 = vmatprep.mubr.bf16.mxu0 %v2438
        %7336 = vmatmul.mubr.bf16.gmra.mrb[0].mxu0 %v2437
        %v7337 = vpop.f32.mrb[0].mxu0
        %v7338 = vadd.f32 %v7049, %v7337
        %v7339 = vpop.f32.mrb[0].mxu0
        %v7340 = vpop.f32.mrb[0].mxu0
        %v7341 = vadd.f32 %v7052, %v7340
        %v7342 = vpop.f32.mrb[0].mxu0
        %7343 = vmatprep.mubr.bf16.mxu0 %v2446
        %7344 = vmatmul.mubr.bf16.gmra.mrb[0].mxu0 %v2445
        %v7345 = vpop.f32.mrb[0].mxu0
        %v7346 = vadd.f32 %v7057, %v7345
        %v7347 = vpop.f32.mrb[0].mxu0
        %v7348 = vpop.f32.mrb[0].mxu0
        %v7349 = vadd.f32 %v7060, %v7348
        %v7350 = vpop.f32.mrb[0].mxu0
        %7351 = vmatprep.mubr.bf16.mxu0 %v2454
        %7352 = vmatmul.mubr.bf16.gmra.mrb[0].mxu0 %v2453
        %v7353 = vpop.f32.mrb[0].mxu0
        %v7354 = vadd.f32 %v7065, %v7353
        %v7355 = vpop.f32.mrb[0].mxu0
        %v7356 = vpop.f32.mrb[0].mxu0
        %v7357 = vadd.f32 %v7068, %v7356
        %v7358 = vpop.f32.mrb[0].mxu0
        %7359 = vmatprep.mubr.bf16.mxu0 %v2462
        %7360 = vmatmul.mubr.bf16.gmra.mrb[0].mxu0 %v2461
        %v7361 = vpop.f32.mrb[0].mxu0
        %v7362 = vadd.f32 %v7073, %v7361
        %v7363 = vpop.f32.mrb[0].mxu0
        %v7364 = vpop.f32.mrb[0].mxu0
        %v7365 = vadd.f32 %v7076, %v7364
        %v7366 = vpop.f32.mrb[0].mxu0
        %7367 = vmatprep.mubr.bf16.mxu0 %v2470
        %7368 = vmatmul.mubr.bf16.gmra.mrb[0].mxu0 %v2469
        %v7369 = vpop.f32.mrb[0].mxu0
        %v7370 = vadd.f32 %v7081, %v7369
        %v7371 = vpop.f32.mrb[0].mxu0
        %v7372 = vpop.f32.mrb[0].mxu0
        %v7373 = vadd.f32 %v7084, %v7372
        %v7374 = vpop.f32.mrb[0].mxu0
        %7375 = vmatprep.mubr.bf16.mxu0 %v2478
        %7376 = vmatmul.mubr.bf16.gmra.mrb[0].mxu0 %v2477
        %v7377 = vpop.f32.mrb[0].mxu0
        %v7378 = vadd.f32 %v7089, %v7377
        %v7379 = vpop.f32.mrb[0].mxu0
        %v7380 = vpop.f32.mrb[0].mxu0
        %v7381 = vadd.f32 %v7092, %v7380
        %v7382 = vpop.f32.mrb[0].mxu0
        %7383 = vmatprep.mubr.bf16.mxu0 %v2486
        %7384 = vmatmul.mubr.bf16.gmra.mrb[0].mxu0 %v2485
        %v7385 = vpop.f32.mrb[0].mxu0
        %v7386 = vadd.f32 %v7097, %v7385
        %v7387 = vpop.f32.mrb[0].mxu0
        %v7388 = vpop.f32.mrb[0].mxu0
        %v7389 = vadd.f32 %v7100, %v7388
        %v7390 = vpop.f32.mrb[0].mxu0
        %7391 = vmatprep.mubr.bf16.mxu0 %v2494
        %7392 = vmatmul.mubr.bf16.gmra.mrb[0].mxu0 %v2493
        %v7393 = vpop.f32.mrb[0].mxu0
        %v7394 = vadd.f32 %v7105, %v7393
        %v7395 = vpop.f32.mrb[0].mxu0
        %v7396 = vpop.f32.mrb[0].mxu0
        %v7397 = vadd.f32 %v7108, %v7396
        %v7398 = vpop.f32.mrb[0].mxu0
        %7399 = vmatprep.mubr.bf16.mxu0 %v2502
        %7400 = vmatmul.mubr.bf16.gmra.mrb[0].mxu0 %v2501
        %v7401 = vpop.f32.mrb[0].mxu0
        %v7402 = vadd.f32 %v7113, %v7401
        %v7403 = vpop.f32.mrb[0].mxu0
        %v7404 = vpop.f32.mrb[0].mxu0
        %v7405 = vadd.f32 %v7116, %v7404
        %v7406 = vpop.f32.mrb[0].mxu0
        %7407 = vmatprep.mubr.bf16.mxu0 %v2510
        %7408 = vmatmul.mubr.bf16.gmra.mrb[0].mxu0 %v2509
        %v7409 = vpop.f32.mrb[0].mxu0
        %v7410 = vadd.f32 %v7121, %v7409
        %v7411 = vpop.f32.mrb[0].mxu0
        %v7412 = vpop.f32.mrb[0].mxu0
        %v7413 = vadd.f32 %v7124, %v7412
        %v7414 = vpop.f32.mrb[0].mxu0
        %7415 = vmatprep.mubr.bf16.mxu0 %v2518
        %7416 = vmatmul.mubr.bf16.gmra.mrb[0].mxu0 %v2517
        %v7417 = vpop.f32.mrb[0].mxu0
        %v7418 = vadd.f32 %v7129, %v7417
        %v7419 = vpop.f32.mrb[0].mxu0
        %v7420 = vpop.f32.mrb[0].mxu0
        %v7421 = vadd.f32 %v7132, %v7420
        %v7422 = vpop.f32.mrb[0].mxu0
        %7423 = vmatprep.mubr.bf16.mxu0 %v2526
        %7424 = vmatmul.mubr.bf16.gmra.mrb[0].mxu0 %v2525
        %v7425 = vpop.f32.mrb[0].mxu0
        %v7426 = vadd.f32 %v7137, %v7425
        %v7427 = vpop.f32.mrb[0].mxu0
        %v7428 = vpop.f32.mrb[0].mxu0
        %v7429 = vadd.f32 %v7140, %v7428
        %v7430 = vpop.f32.mrb[0].mxu0
        %7431 = vmatprep.mubr.bf16.mxu0 %v2534
        %7432 = vmatmul.mubr.bf16.gmra.mrb[0].mxu0 %v2533
        %v7433 = vpop.f32.mrb[0].mxu0
        %v7434 = vadd.f32 %v7145, %v7433
        %v7435 = vpop.f32.mrb[0].mxu0
        %v7436 = vpop.f32.mrb[0].mxu0
        %v7437 = vadd.f32 %v7148, %v7436
        %v7438 = vpop.f32.mrb[0].mxu0
        %7439 = vmatprep.mubr.bf16.mxu0 %v2542
        %7440 = vmatmul.mubr.bf16.gmra.mrb[0].mxu0 %v2541
        %v7441 = vpop.f32.mrb[0].mxu0
        %v7442 = vadd.f32 %v7153, %v7441
        %v7443 = vpop.f32.mrb[0].mxu0
        %v7444 = vpop.f32.mrb[0].mxu0
        %v7445 = vadd.f32 %v7156, %v7444
        %v7446 = vpop.f32.mrb[0].mxu0
        %7447 = vmatprep.mubr.bf16.mxu0 %v2550
        %7448 = vmatmul.mubr.bf16.gmra.mrb[0].mxu0 %v2549
        %v7449 = vpop.f32.mrb[0].mxu0
        %v7450 = vadd.f32 %v7161, %v7449
        %v7451 = vpop.f32.mrb[0].mxu0
        %v7452 = vpop.f32.mrb[0].mxu0
        %v7453 = vadd.f32 %v7164, %v7452
        %v7454 = vpop.f32.mrb[0].mxu0
        %7455 = vmatprep.mubr.bf16.mxu0 %v2558
        %7456 = vmatmul.mubr.bf16.gmra.mrb[0].mxu0 %v2557
        %v7457 = vpop.f32.mrb[0].mxu0
        %v7458 = vadd.f32 %v7169, %v7457
        %v7459 = vpop.f32.mrb[0].mxu0
        %v7460 = vpop.f32.mrb[0].mxu0
        %v7461 = vadd.f32 %v7172, %v7460
        %v7462 = vpop.f32.mrb[0].mxu0
        %7463 = vdwg.mxu0
        %7464 = vmatprep.subr.bf16.mxu0 0
        %7465 = vmatpush1.bf16.msra.mxu0 %v6517
        %7466 = vmatprep.subr.bf16.mxu0 0
        %7467 = vmatpush1.bf16.msra.mxu0 %v6518
        %7468 = vmatprep.subr.bf16.mxu0 0
        %7469 = vmatpush1.bf16.msra.mxu0 %v6519
        %7470 = vmatprep.subr.bf16.mxu0 0
        %7471 = vmatpush1.bf16.msra.mxu0 %v6520
        %7472 = vmatprep.subr.bf16.mxu0 0
        %7473 = vmatpush1.bf16.msra.mxu0 %v6521
        %7474 = vmatprep.subr.bf16.mxu0 0
        %7475 = vmatpush1.bf16.msra.mxu0 %v6522
        %7476 = vmatprep.subr.bf16.mxu0 0
        %7477 = vmatpush1.bf16.msra.mxu0 %v6523
        %7478 = vmatprep.subr.bf16.mxu0 0
        %7479 = vmatpush1.bf16.msra.mxu0 %v6524
        %7480 = vmatprep.subr.bf16.mxu0 0
        %7481 = vmatpush1.bf16.msra.mxu0 %v6525
        %7482 = vmatprep.subr.bf16.mxu0 0
        %7483 = vmatpush1.bf16.msra.mxu0 %v6526
        %7484 = vmatprep.subr.bf16.mxu0 0
        %7485 = vmatpush1.bf16.msra.mxu0 %v6527
        %7486 = vmatprep.subr.bf16.mxu0 0
        %7487 = vmatpush1.bf16.msra.mxu0 %v6528
        %7488 = vmatprep.subr.bf16.mxu0 0
        %7489 = vmatpush1.bf16.msra.mxu0 %v6529
        %7490 = vmatprep.subr.bf16.mxu0 0
        %7491 = vmatpush1.bf16.msra.mxu0 %v6530
        %7492 = vmatprep.subr.bf16.mxu0 0
        %7493 = vmatpush1.bf16.msra.mxu0 %v6531
        %7494 = vmatprep.subr.bf16.mxu0 0
        %7495 = vmatpush1.bf16.msra.mxu0 %v6532
        %7496 = vmatprep.mubr.bf16.mxu0 %v2312
        %7497 = vmatmul.mubr.bf16.gmra.mrb[0].mxu0 %v2311
        %v7498 = vpop.f32.mrb[0].mxu0
        %v7499 = vadd.f32 %v7210, %v7498
        %v7500 = vpop.f32.mrb[0].mxu0
        %v7501 = vpop.f32.mrb[0].mxu0
        %v7502 = vadd.f32 %v7213, %v7501
        %v7503 = vpop.f32.mrb[0].mxu0
        %7504 = vmatprep.mubr.bf16.mxu0 %v2320
        %7505 = vmatmul.mubr.bf16.gmra.mrb[0].mxu0 %v2319
        %v7506 = vpop.f32.mrb[0].mxu0
        %v7507 = vadd.f32 %v7218, %v7506
        %v7508 = vpop.f32.mrb[0].mxu0
        %v7509 = vpop.f32.mrb[0].mxu0
        %v7510 = vadd.f32 %v7221, %v7509
        %v7511 = vpop.f32.mrb[0].mxu0
        %7512 = vmatprep.mubr.bf16.mxu0 %v2328
        %7513 = vmatmul.mubr.bf16.gmra.mrb[0].mxu0 %v2327
        %v7514 = vpop.f32.mrb[0].mxu0
        %v7515 = vadd.f32 %v7226, %v7514
        %v7516 = vpop.f32.mrb[0].mxu0
        %v7517 = vpop.f32.mrb[0].mxu0
        %v7518 = vadd.f32 %v7229, %v7517
        %v7519 = vpop.f32.mrb[0].mxu0
        %7520 = vmatprep.mubr.bf16.mxu0 %v2336
        %7521 = vmatmul.mubr.bf16.gmra.mrb[0].mxu0 %v2335
        %v7522 = vpop.f32.mrb[0].mxu0
        %v7523 = vadd.f32 %v7234, %v7522
        %v7524 = vpop.f32.mrb[0].mxu0
        %v7525 = vpop.f32.mrb[0].mxu0
        %v7526 = vadd.f32 %v7237, %v7525
        %v7527 = vpop.f32.mrb[0].mxu0
        %7528 = vmatprep.mubr.bf16.mxu0 %v2344
        %7529 = vmatmul.mubr.bf16.gmra.mrb[0].mxu0 %v2343
        %v7530 = vpop.f32.mrb[0].mxu0
        %v7531 = vadd.f32 %v7242, %v7530
        %v7532 = vpop.f32.mrb[0].mxu0
        %v7533 = vpop.f32.mrb[0].mxu0
        %v7534 = vadd.f32 %v7245, %v7533
        %v7535 = vpop.f32.mrb[0].mxu0
        %7536 = vmatprep.mubr.bf16.mxu0 %v2352
        %7537 = vmatmul.mubr.bf16.gmra.mrb[0].mxu0 %v2351
        %v7538 = vpop.f32.mrb[0].mxu0
        %v7539 = vadd.f32 %v7250, %v7538
        %v7540 = vpop.f32.mrb[0].mxu0
        %v7541 = vpop.f32.mrb[0].mxu0
        %v7542 = vadd.f32 %v7253, %v7541
        %v7543 = vpop.f32.mrb[0].mxu0
        %7544 = vmatprep.mubr.bf16.mxu0 %v2360
        %7545 = vmatmul.mubr.bf16.gmra.mrb[0].mxu0 %v2359
        %v7546 = vpop.f32.mrb[0].mxu0
        %v7547 = vadd.f32 %v7258, %v7546
        %v7548 = vpop.f32.mrb[0].mxu0
        %v7549 = vpop.f32.mrb[0].mxu0
        %v7550 = vadd.f32 %v7261, %v7549
        %v7551 = vpop.f32.mrb[0].mxu0
        %7552 = vmatprep.mubr.bf16.mxu0 %v2368
        %7553 = vmatmul.mubr.bf16.gmra.mrb[0].mxu0 %v2367
        %v7554 = vpop.f32.mrb[0].mxu0
        %v7555 = vadd.f32 %v7266, %v7554
        %v7556 = vpop.f32.mrb[0].mxu0
        %v7557 = vpop.f32.mrb[0].mxu0
        %v7558 = vadd.f32 %v7269, %v7557
        %v7559 = vpop.f32.mrb[0].mxu0
        %7560 = vmatprep.mubr.bf16.mxu0 %v2376
        %7561 = vmatmul.mubr.bf16.gmra.mrb[0].mxu0 %v2375
        %v7562 = vpop.f32.mrb[0].mxu0
        %v7563 = vadd.f32 %v7274, %v7562
        %v7564 = vpop.f32.mrb[0].mxu0
        %v7565 = vpop.f32.mrb[0].mxu0
        %v7566 = vadd.f32 %v7277, %v7565
        %v7567 = vpop.f32.mrb[0].mxu0
        %7568 = vmatprep.mubr.bf16.mxu0 %v2384
        %7569 = vmatmul.mubr.bf16.gmra.mrb[0].mxu0 %v2383
        %v7570 = vpop.f32.mrb[0].mxu0
        %v7571 = vadd.f32 %v7282, %v7570
        %v7572 = vpop.f32.mrb[0].mxu0
        %v7573 = vpop.f32.mrb[0].mxu0
        %v7574 = vadd.f32 %v7285, %v7573
        %v7575 = vpop.f32.mrb[0].mxu0
        %7576 = vmatprep.mubr.bf16.mxu0 %v2392
        %7577 = vmatmul.mubr.bf16.gmra.mrb[0].mxu0 %v2391
        %v7578 = vpop.f32.mrb[0].mxu0
        %v7579 = vadd.f32 %v7290, %v7578
        %v7580 = vpop.f32.mrb[0].mxu0
        %v7581 = vpop.f32.mrb[0].mxu0
        %v7582 = vadd.f32 %v7293, %v7581
        %v7583 = vpop.f32.mrb[0].mxu0
        %7584 = vmatprep.mubr.bf16.mxu0 %v2400
        %7585 = vmatmul.mubr.bf16.gmra.mrb[0].mxu0 %v2399
        %v7586 = vpop.f32.mrb[0].mxu0
        %v7587 = vadd.f32 %v7298, %v7586
        %v7588 = vpop.f32.mrb[0].mxu0
        %v7589 = vpop.f32.mrb[0].mxu0
        %v7590 = vadd.f32 %v7301, %v7589
        %v7591 = vpop.f32.mrb[0].mxu0
        %7592 = vmatprep.mubr.bf16.mxu0 %v2408
        %7593 = vmatmul.mubr.bf16.gmra.mrb[0].mxu0 %v2407
        %v7594 = vpop.f32.mrb[0].mxu0
        %v7595 = vadd.f32 %v7306, %v7594
        %v7596 = vpop.f32.mrb[0].mxu0
        %v7597 = vpop.f32.mrb[0].mxu0
        %v7598 = vadd.f32 %v7309, %v7597
        %v7599 = vpop.f32.mrb[0].mxu0
        %7600 = vmatprep.mubr.bf16.mxu0 %v2416
        %7601 = vmatmul.mubr.bf16.gmra.mrb[0].mxu0 %v2415
        %v7602 = vpop.f32.mrb[0].mxu0
        %v7603 = vadd.f32 %v7314, %v7602
        %v7604 = vpop.f32.mrb[0].mxu0
        %v7605 = vpop.f32.mrb[0].mxu0
        %v7606 = vadd.f32 %v7317, %v7605
        %v7607 = vpop.f32.mrb[0].mxu0
        %7608 = vmatprep.mubr.bf16.mxu0 %v2424
        %7609 = vmatmul.mubr.bf16.gmra.mrb[0].mxu0 %v2423
        %v7610 = vpop.f32.mrb[0].mxu0
        %v7611 = vadd.f32 %v7322, %v7610
        %v7612 = vpop.f32.mrb[0].mxu0
        %v7613 = vpop.f32.mrb[0].mxu0
        %v7614 = vadd.f32 %v7325, %v7613
        %v7615 = vpop.f32.mrb[0].mxu0
        %7616 = vmatprep.mubr.bf16.mxu0 %v2432
        %7617 = vmatmul.mubr.bf16.gmra.mrb[0].mxu0 %v2431
        %v7618 = vpop.f32.mrb[0].mxu0
        %v7619 = vadd.f32 %v7330, %v7618
        %v7620 = vpop.f32.mrb[0].mxu0
        %v7621 = vpop.f32.mrb[0].mxu0
        %v7622 = vadd.f32 %v7333, %v7621
        %v7623 = vpop.f32.mrb[0].mxu0
        %7624 = vmatprep.mubr.bf16.mxu0 %v2440
        %7625 = vmatmul.mubr.bf16.gmra.mrb[0].mxu0 %v2439
        %v7626 = vpop.f32.mrb[0].mxu0
        %v7627 = vadd.f32 %v7338, %v7626
        %v7628 = vpop.f32.mrb[0].mxu0
        %v7629 = vpop.f32.mrb[0].mxu0
        %v7630 = vadd.f32 %v7341, %v7629
        %v7631 = vpop.f32.mrb[0].mxu0
        %7632 = vmatprep.mubr.bf16.mxu0 %v2448
        %7633 = vmatmul.mubr.bf16.gmra.mrb[0].mxu0 %v2447
        %v7634 = vpop.f32.mrb[0].mxu0
        %v7635 = vadd.f32 %v7346, %v7634
        %v7636 = vpop.f32.mrb[0].mxu0
        %v7637 = vpop.f32.mrb[0].mxu0
        %v7638 = vadd.f32 %v7349, %v7637
        %v7639 = vpop.f32.mrb[0].mxu0
        %7640 = vmatprep.mubr.bf16.mxu0 %v2456
        %7641 = vmatmul.mubr.bf16.gmra.mrb[0].mxu0 %v2455
        %v7642 = vpop.f32.mrb[0].mxu0
        %v7643 = vadd.f32 %v7354, %v7642
        %v7644 = vpop.f32.mrb[0].mxu0
        %v7645 = vpop.f32.mrb[0].mxu0
        %v7646 = vadd.f32 %v7357, %v7645
        %v7647 = vpop.f32.mrb[0].mxu0
        %7648 = vmatprep.mubr.bf16.mxu0 %v2464
        %7649 = vmatmul.mubr.bf16.gmra.mrb[0].mxu0 %v2463
        %v7650 = vpop.f32.mrb[0].mxu0
        %v7651 = vadd.f32 %v7362, %v7650
        %v7652 = vpop.f32.mrb[0].mxu0
        %v7653 = vpop.f32.mrb[0].mxu0
        %v7654 = vadd.f32 %v7365, %v7653
        %v7655 = vpop.f32.mrb[0].mxu0
        %7656 = vmatprep.mubr.bf16.mxu0 %v2472
        %7657 = vmatmul.mubr.bf16.gmra.mrb[0].mxu0 %v2471
        %v7658 = vpop.f32.mrb[0].mxu0
        %v7659 = vadd.f32 %v7370, %v7658
        %v7660 = vpop.f32.mrb[0].mxu0
        %v7661 = vpop.f32.mrb[0].mxu0
        %v7662 = vadd.f32 %v7373, %v7661
        %v7663 = vpop.f32.mrb[0].mxu0
        %7664 = vmatprep.mubr.bf16.mxu0 %v2480
        %7665 = vmatmul.mubr.bf16.gmra.mrb[0].mxu0 %v2479
        %v7666 = vpop.f32.mrb[0].mxu0
        %v7667 = vadd.f32 %v7378, %v7666
        %v7668 = vpop.f32.mrb[0].mxu0
        %v7669 = vpop.f32.mrb[0].mxu0
        %v7670 = vadd.f32 %v7381, %v7669
        %v7671 = vpop.f32.mrb[0].mxu0
        %7672 = vmatprep.mubr.bf16.mxu0 %v2488
        %7673 = vmatmul.mubr.bf16.gmra.mrb[0].mxu0 %v2487
        %v7674 = vpop.f32.mrb[0].mxu0
        %v7675 = vadd.f32 %v7386, %v7674
        %v7676 = vpop.f32.mrb[0].mxu0
        %v7677 = vpop.f32.mrb[0].mxu0
        %v7678 = vadd.f32 %v7389, %v7677
        %v7679 = vpop.f32.mrb[0].mxu0
        %7680 = vmatprep.mubr.bf16.mxu0 %v2496
        %7681 = vmatmul.mubr.bf16.gmra.mrb[0].mxu0 %v2495
        %v7682 = vpop.f32.mrb[0].mxu0
        %v7683 = vadd.f32 %v7394, %v7682
        %v7684 = vpop.f32.mrb[0].mxu0
        %v7685 = vpop.f32.mrb[0].mxu0
        %v7686 = vadd.f32 %v7397, %v7685
        %v7687 = vpop.f32.mrb[0].mxu0
        %7688 = vmatprep.mubr.bf16.mxu0 %v2504
        %7689 = vmatmul.mubr.bf16.gmra.mrb[0].mxu0 %v2503
        %v7690 = vpop.f32.mrb[0].mxu0
        %v7691 = vadd.f32 %v7402, %v7690
        %v7692 = vpop.f32.mrb[0].mxu0
        %v7693 = vpop.f32.mrb[0].mxu0
        %v7694 = vadd.f32 %v7405, %v7693
        %v7695 = vpop.f32.mrb[0].mxu0
        %7696 = vmatprep.mubr.bf16.mxu0 %v2512
        %7697 = vmatmul.mubr.bf16.gmra.mrb[0].mxu0 %v2511
        %v7698 = vpop.f32.mrb[0].mxu0
        %v7699 = vadd.f32 %v7410, %v7698
        %v7700 = vpop.f32.mrb[0].mxu0
        %v7701 = vpop.f32.mrb[0].mxu0
        %v7702 = vadd.f32 %v7413, %v7701
        %v7703 = vpop.f32.mrb[0].mxu0
        %7704 = vmatprep.mubr.bf16.mxu0 %v2520
        %7705 = vmatmul.mubr.bf16.gmra.mrb[0].mxu0 %v2519
        %v7706 = vpop.f32.mrb[0].mxu0
        %v7707 = vadd.f32 %v7418, %v7706
        %v7708 = vpop.f32.mrb[0].mxu0
        %v7709 = vpop.f32.mrb[0].mxu0
        %v7710 = vadd.f32 %v7421, %v7709
        %v7711 = vpop.f32.mrb[0].mxu0
        %7712 = vmatprep.mubr.bf16.mxu0 %v2528
        %7713 = vmatmul.mubr.bf16.gmra.mrb[0].mxu0 %v2527
        %v7714 = vpop.f32.mrb[0].mxu0
        %v7715 = vadd.f32 %v7426, %v7714
        %v7716 = vpop.f32.mrb[0].mxu0
        %v7717 = vpop.f32.mrb[0].mxu0
        %v7718 = vadd.f32 %v7429, %v7717
        %v7719 = vpop.f32.mrb[0].mxu0
        %7720 = vmatprep.mubr.bf16.mxu0 %v2536
        %7721 = vmatmul.mubr.bf16.gmra.mrb[0].mxu0 %v2535
        %v7722 = vpop.f32.mrb[0].mxu0
        %v7723 = vadd.f32 %v7434, %v7722
        %v7724 = vpop.f32.mrb[0].mxu0
        %v7725 = vpop.f32.mrb[0].mxu0
        %v7726 = vadd.f32 %v7437, %v7725
        %v7727 = vpop.f32.mrb[0].mxu0
        %7728 = vmatprep.mubr.bf16.mxu0 %v2544
        %7729 = vmatmul.mubr.bf16.gmra.mrb[0].mxu0 %v2543
        %v7730 = vpop.f32.mrb[0].mxu0
        %v7731 = vadd.f32 %v7442, %v7730
        %v7732 = vpop.f32.mrb[0].mxu0
        %v7733 = vpop.f32.mrb[0].mxu0
        %v7734 = vadd.f32 %v7445, %v7733
        %v7735 = vpop.f32.mrb[0].mxu0
        %7736 = vmatprep.mubr.bf16.mxu0 %v2552
        %7737 = vmatmul.mubr.bf16.gmra.mrb[0].mxu0 %v2551
        %v7738 = vpop.f32.mrb[0].mxu0
        %v7739 = vadd.f32 %v7450, %v7738
        %v7740 = vpop.f32.mrb[0].mxu0
        %v7741 = vpop.f32.mrb[0].mxu0
        %v7742 = vadd.f32 %v7453, %v7741
        %v7743 = vpop.f32.mrb[0].mxu0
        %7744 = vmatprep.mubr.bf16.mxu0 %v2560
        %7745 = vmatmul.mubr.bf16.gmra.mrb[0].mxu0 %v2559
        %v7746 = vpop.f32.mrb[0].mxu0
        %v7747 = vadd.f32 %v7458, %v7746
        %v7748 = vpop.f32.mrb[0].mxu0
        %v7749 = vpop.f32.mrb[0].mxu0
        %v7750 = vadd.f32 %v7461, %v7749
        %v7751 = vpop.f32.mrb[0].mxu0
        %7752 = vdwg.mxu0
        %v7753 = vadd.f32 %v4353, %v7499
        %v7754 = vadd.f32 %v4354, %v7502
        %v7755 = vadd.f32 %v4355, %v7507
        %v7756 = vadd.f32 %v4356, %v7510
        %v7757 = vadd.f32 %v4357, %v7515
        %v7758 = vadd.f32 %v4358, %v7518
        %v7759 = vadd.f32 %v4359, %v7523
        %v7760 = vadd.f32 %v4360, %v7526
        %v7761 = vadd.f32 %v4361, %v7531
        %v7762 = vadd.f32 %v4362, %v7534
        %v7763 = vadd.f32 %v4363, %v7539
        %v7764 = vadd.f32 %v4364, %v7542
        %v7765 = vadd.f32 %v4365, %v7547
        %v7766 = vadd.f32 %v4366, %v7550
        %v7767 = vadd.f32 %v4367, %v7555
        %v7768 = vadd.f32 %v4368, %v7558
        %v7769 = vadd.f32 %v4369, %v7563
        %v7770 = vadd.f32 %v4370, %v7566
        %v7771 = vadd.f32 %v4371, %v7571
        %v7772 = vadd.f32 %v4372, %v7574
        %v7773 = vadd.f32 %v4373, %v7579
        %v7774 = vadd.f32 %v4374, %v7582
        %v7775 = vadd.f32 %v4375, %v7587
        %v7776 = vadd.f32 %v4376, %v7590
        %v7777 = vadd.f32 %v4377, %v7595
        %v7778 = vadd.f32 %v4378, %v7598
        %v7779 = vadd.f32 %v4379, %v7603
        %v7780 = vadd.f32 %v4380, %v7606
        %v7781 = vadd.f32 %v4381, %v7611
        %v7782 = vadd.f32 %v4382, %v7614
        %v7783 = vadd.f32 %v4383, %v7619
        %v7784 = vadd.f32 %v4384, %v7622
        %v7785 = vadd.f32 %v4385, %v7627
        %v7786 = vadd.f32 %v4386, %v7630
        %v7787 = vadd.f32 %v4387, %v7635
        %v7788 = vadd.f32 %v4388, %v7638
        %v7789 = vadd.f32 %v4389, %v7643
        %v7790 = vadd.f32 %v4390, %v7646
        %v7791 = vadd.f32 %v4391, %v7651
        %v7792 = vadd.f32 %v4392, %v7654
        %v7793 = vadd.f32 %v4393, %v7659
        %v7794 = vadd.f32 %v4394, %v7662
        %v7795 = vadd.f32 %v4395, %v7667
        %v7796 = vadd.f32 %v4396, %v7670
        %v7797 = vadd.f32 %v4397, %v7675
        %v7798 = vadd.f32 %v4398, %v7678
        %v7799 = vadd.f32 %v4399, %v7683
        %v7800 = vadd.f32 %v4400, %v7686
        %v7801 = vadd.f32 %v4401, %v7691
        %v7802 = vadd.f32 %v4402, %v7694
        %v7803 = vadd.f32 %v4403, %v7699
        %v7804 = vadd.f32 %v4404, %v7702
        %v7805 = vadd.f32 %v4405, %v7707
        %v7806 = vadd.f32 %v4406, %v7710
        %v7807 = vadd.f32 %v4407, %v7715
        %v7808 = vadd.f32 %v4408, %v7718
        %v7809 = vadd.f32 %v4409, %v7723
        %v7810 = vadd.f32 %v4410, %v7726
        %v7811 = vadd.f32 %v4411, %v7731
        %v7812 = vadd.f32 %v4412, %v7734
        %v7813 = vadd.f32 %v4413, %v7739
        %v7814 = vadd.f32 %v4414, %v7742
        %v7815 = vadd.f32 %v4415, %v7747
        %v7816 = vadd.f32 %v4416, %v7750
        %7817 = vst [vmem:[%s249] sm:$0xff] %v7753
        %7818 = vst [vmem:[%s249 + $0x8] sm:$0xff] %v7754
        %7819 = vst [vmem:[%s249 + $0x10] sm:$0xff] %v7755
        %7820 = vst [vmem:[%s249 + $0x18] sm:$0xff] %v7756
        %7821 = vst [vmem:[%s249 + $0x20] sm:$0xff] %v7757
        %7822 = vst [vmem:[%s249 + $0x28] sm:$0xff] %v7758
        %7823 = vst [vmem:[%s249 + $0x30] sm:$0xff] %v7759
        %7824 = vst [vmem:[%s249 + $0x38] sm:$0xff] %v7760
        %7825 = vst [vmem:[%s249 + $0x40] sm:$0xff] %v7761
        %7826 = vst [vmem:[%s249 + $0x48] sm:$0xff] %v7762
        %7827 = vst [vmem:[%s249 + $0x50] sm:$0xff] %v7763
        %7828 = vst [vmem:[%s249 + $0x58] sm:$0xff] %v7764
        %7829 = vst [vmem:[%s249 + $0x60] sm:$0xff] %v7765
        %7830 = vst [vmem:[%s249 + $0x68] sm:$0xff] %v7766
        %7831 = vst [vmem:[%s249 + $0x70] sm:$0xff] %v7767
        %7832 = vst [vmem:[%s249 + $0x78] sm:$0xff] %v7768
        %7833 = vst [vmem:[%s249 + $0x80] sm:$0xff] %v7769
        %7834 = vst [vmem:[%s249 + $0x88] sm:$0xff] %v7770
        %7835 = vst [vmem:[%s249 + $0x90] sm:$0xff] %v7771
        %7836 = vst [vmem:[%s249 + $0x98] sm:$0xff] %v7772
        %7837 = vst [vmem:[%s249 + $0xa0] sm:$0xff] %v7773
        %7838 = vst [vmem:[%s249 + $0xa8] sm:$0xff] %v7774
        %7839 = vst [vmem:[%s249 + $0xb0] sm:$0xff] %v7775
        %7840 = vst [vmem:[%s249 + $0xb8] sm:$0xff] %v7776
        %7841 = vst [vmem:[%s249 + $0xc0] sm:$0xff] %v7777
        %7842 = vst [vmem:[%s249 + $0xc8] sm:$0xff] %v7778
        %7843 = vst [vmem:[%s249 + $0xd0] sm:$0xff] %v7779
        %7844 = vst [vmem:[%s249 + $0xd8] sm:$0xff] %v7780
        %7845 = vst [vmem:[%s249 + $0xe0] sm:$0xff] %v7781
        %7846 = vst [vmem:[%s249 + $0xe8] sm:$0xff] %v7782
        %7847 = vst [vmem:[%s249 + $0xf0] sm:$0xff] %v7783
        %7848 = vst [vmem:[%s249 + $0xf8] sm:$0xff] %v7784
        %7849 = vst [vmem:[%s249 + $0x100] sm:$0xff] %v7785
        %7850 = vst [vmem:[%s249 + $0x108] sm:$0xff] %v7786
        %7851 = vst [vmem:[%s249 + $0x110] sm:$0xff] %v7787
        %7852 = vst [vmem:[%s249 + $0x118] sm:$0xff] %v7788
        %7853 = vst [vmem:[%s249 + $0x120] sm:$0xff] %v7789
        %7854 = vst [vmem:[%s249 + $0x128] sm:$0xff] %v7790
        %7855 = vst [vmem:[%s249 + $0x130] sm:$0xff] %v7791
        %7856 = vst [vmem:[%s249 + $0x138] sm:$0xff] %v7792
        %7857 = vst [vmem:[%s249 + $0x140] sm:$0xff] %v7793
        %7858 = vst [vmem:[%s249 + $0x148] sm:$0xff] %v7794
        %7859 = vst [vmem:[%s249 + $0x150] sm:$0xff] %v7795
        %7860 = vst [vmem:[%s249 + $0x158] sm:$0xff] %v7796
        %7861 = vst [vmem:[%s249 + $0x160] sm:$0xff] %v7797
        %7862 = vst [vmem:[%s249 + $0x168] sm:$0xff] %v7798
        %7863 = vst [vmem:[%s249 + $0x170] sm:$0xff] %v7799
        %7864 = vst [vmem:[%s249 + $0x178] sm:$0xff] %v7800
        %7865 = vst [vmem:[%s249 + $0x180] sm:$0xff] %v7801
        %7866 = vst [vmem:[%s249 + $0x188] sm:$0xff] %v7802
        %7867 = vst [vmem:[%s249 + $0x190] sm:$0xff] %v7803
        %7868 = vst [vmem:[%s249 + $0x198] sm:$0xff] %v7804
        %7869 = vst [vmem:[%s249 + $0x1a0] sm:$0xff] %v7805
        %7870 = vst [vmem:[%s249 + $0x1a8] sm:$0xff] %v7806
        %7871 = vst [vmem:[%s249 + $0x1b0] sm:$0xff] %v7807
        %7872 = vst [vmem:[%s249 + $0x1b8] sm:$0xff] %v7808
        %7873 = vst [vmem:[%s249 + $0x1c0] sm:$0xff] %v7809
        %7874 = vst [vmem:[%s249 + $0x1c8] sm:$0xff] %v7810
        %7875 = vst [vmem:[%s249 + $0x1d0] sm:$0xff] %v7811
        %7876 = vst [vmem:[%s249 + $0x1d8] sm:$0xff] %v7812
        %7877 = vst [vmem:[%s249 + $0x1e0] sm:$0xff] %v7813
        %7878 = vst [vmem:[%s249 + $0x1e8] sm:$0xff] %v7814
        %7879 = vst [vmem:[%s249 + $0x1f0] sm:$0xff] %v7815
        %7880 = vst [vmem:[%s249 + $0x1f8] sm:$0xff] %v7816
        %s7881 = sand.u32 %s142, 1
        %s7882 = scalar_lea.sflag [#allocation3], %s7881
        %s7883 = sand.u32 %s142, 1
        %s7884 = smul.addr %s7883, 512
        %s7885 = scalar_lea.vmem [#allocation2], %s7884
        // Predicated region
        $region41: #{tpu_custom_call.1} parent=35 // pred_check
          %p7886 = pneg %p152
        $region42: #{tpu_custom_call.1} parent=35 // pred_check_branch
          %7888 = sbr.rel (%p7886) target = $region44
        $region43: #{tpu_custom_call.1} parent=35 // pred_region
          %s7889 = smul.u32 64, %s22
          %s7891 = ssub.s32 8192, 8192
          %7892 = vsyncadd %s7882, %s7891
          %s7893 = smul.addr %s7889, 128
          %s7894 = scalar_lea.hbm %s4, %s7893
          %s7895 = sshll.u32 %s7885, 4
          %s7896 = int_to_ptr.vmem [resolvable:$true] %s7895
          %7901 = dma.vmem_to_hbm [thread:$0]  %s7896, 8192, %s7894, %s7882, 128, 128, 8
        $region44: #{tpu_custom_call.1} parent=35 // pred_fallthru
          _
      $region36: #{tpu_custom_call.1} parent=5 // pred_fallthru
        _
      %p7902 = scmp.le.s32.totalorder 2, %s13
      // Predicated region
      $region45: #{tpu_custom_call.1} parent=5 // pred_check
        %p7903 = pneg %p7902
      $region46: #{tpu_custom_call.1} parent=5 // pred_check_branch
        %7905 = sbr.rel (%p7903) target = $region48
      $region47: #{tpu_custom_call.1} parent=5 // pred_region
        %s7906 = ssub.s32 %s13, 2
        // Predicated region
        $region49: #{tpu_custom_call.1} parent=47 // pred_check
          %p7907 = pneg %p158
        $region50: #{tpu_custom_call.1} parent=47 // pred_check_branch
          %7909 = sbr.rel (%p7907) target = $region52
        $region51: #{tpu_custom_call.1} parent=47 // pred_region
          %s7910 = sand.u32 %s143, 1
          %s7911 = scalar_lea.sflag [#allocation3], %s7910
          %s7912 = sand.u32 %s143, 1
          %s7913 = smul.addr %s7912, 512
          %s7914 = scalar_lea.vmem [#allocation2], %s7913
          %7915 = dma.done %s7911, 8192
        $region52: #{tpu_custom_call.1} parent=47 // pred_fallthru
          _
      $region48: #{tpu_custom_call.1} parent=5 // pred_fallthru
        _
    $region6: #{tpu_custom_call.1} parent=1 // loop_footer
      %s17 = sadd.s32 1, %s13
    $region7: #{tpu_custom_call.1} parent=1 // loop_footer_branch
      %12 = sbr.rel target = $region3
    $region8: #{tpu_custom_call.1} parent=1 // loop_exit
      _
    %7916 = vsyncpa [#allocation3], 1
    %s7917 = scalar_lea.sflag [#allocation3], 1
    %7918 = vsyncpa %s7917, 1

</llo_original>
